<compile_context>
chip_gen: v7x
topology: tpu7x:2x2x1
jax: 0.10.0
libtpu: 0.0.40
codegen_flags: <defaults>
</compile_context>

<pallas_src>
import jax
import jax.numpy as jnp
from jax.experimental import pallas as pl
from jax.experimental.pallas import tpu as pltpu  # noqa: F401  (kept for TPU backend import)

EPS = 1e-5


def _fused_bn_add_relu_conv_kernel(x_ref, r_ref, g_ref, b_ref, w_ref, o_ref):
    """Single-step fused kernel: BN batch stats + affine + add + ReLU + 1x1 conv."""
    x = x_ref[...]                                            # (C, M) f32, VMEM-resident
    m = x.shape[1]
    inv_n = jnp.float32(1.0 / m)

    # Two-pass batch statistics (numerically safe: var >= 0 by construction).
    mean = jnp.sum(x, axis=1, keepdims=True) * inv_n          # (C, 1)
    xc = x - mean
    var = jnp.sum(xc * xc, axis=1, keepdims=True) * inv_n     # (C, 1)
    inv_std = jax.lax.rsqrt(var + jnp.float32(EPS))
    scale = g_ref[...] * inv_std                              # gamma / sqrt(var + eps)

    # Normalize + affine + residual add + ReLU, all in f32 on the VPU.
    y = xc * scale + b_ref[...]                               # (C, M)
    y = jnp.maximum(y + r_ref[...], jnp.float32(0.0))

    # 1x1 conv == (Cout, Cin) @ (Cin, M): bf16 operands, f32 MXU accumulation.
    out = jnp.dot(w_ref[...], y.astype(jnp.bfloat16),
                  preferred_element_type=jnp.float32)         # (Cout, M)
    o_ref[...] = out.astype(o_ref.dtype)


def fused_forward(x75, x68, gamma, beta, conv_w):
    """x75, x68: (1, C, H, W) f32; gamma/beta: (C,); conv_w: (Cout, Cin, 1, 1)."""
    N, C, H, W = x75.shape
    assert N == 1, "free (C, M) view requires N == 1 (spec batch size)"
    Cout = conv_w.shape[0]
    M = H * W

    # Free reshapes only -- no HBM transpose traffic.
    x = x75.reshape(C, M)
    r = x68.reshape(C, M)
    g = gamma.reshape(C, 1)
    b = beta.reshape(C, 1)
    w = conv_w.reshape(Cout, C).astype(jnp.bfloat16)          # (Cout, Cin) bf16

    # Single grid step: every operand is a full-array block (exempt from the
    # (8,128) tiling constraint), so all HBM traffic happens exactly once.
    out = pl.pallas_call(
        _fused_bn_add_relu_conv_kernel,
        out_shape=jax.ShapeDtypeStruct((Cout, M), jnp.float32),
        grid=(1,),
        in_specs=[
            pl.BlockSpec((C, M), lambda i: (0, 0)),
            pl.BlockSpec((C, M), lambda i: (0, 0)),
            pl.BlockSpec((C, 1), lambda i: (0, 0)),
            pl.BlockSpec((C, 1), lambda i: (0, 0)),
            pl.BlockSpec((Cout, C), lambda i: (0, 0)),
        ],
        out_specs=pl.BlockSpec((Cout, M), lambda i: (0, 0)),
    )(x, r, g, b, w)

    # TODO(synk): on v7x, a 2-way "parallel" split over M (two-phase structure)
    # could engage both TensorCores; for this ~5 MB workload the single-step
    # fused kernel is expected to win, so it is the shipped variant.

    # Free reshape back to NCHW (N == 1).
    return out.reshape(N, Cout, H, W)


# TODO(synk): BatchNorm2d running_mean/running_var update (momentum=0.1) is not
# emitted; this kernel computes training-mode batch statistics for the forward
# value only.

if __name__ == "__main__":
    # Channels are fixed at 512 by BatchNorm2d(512)/Conv2d(512, 512); the spec
    # input is batch 1, spatial 28x28.
    N, C, H, W = 1, 512, 28, 28
    Cout = 512

    key = jax.random.PRNGKey(0)
    k1, k2, k3, k4, k5 = jax.random.split(key, 5)

    x75 = jax.random.normal(k1, (N, C, H, W), dtype=jnp.float32)
    x68 = jax.random.normal(k2, (N, C, H, W), dtype=jnp.float32)
    gamma = 1.0 + 0.05 * jax.random.normal(k3, (C,), dtype=jnp.float32)
    beta = 0.05 * jax.random.normal(k4, (C,), dtype=jnp.float32)
    conv_w = (jax.random.normal(k5, (Cout, C, 1, 1), dtype=jnp.float32)
              * (1.0 / jnp.sqrt(jnp.float32(C))))

    fused = jax.jit(fused_forward)
    out = fused(x75, x68, gamma, beta, conv_w)
    jax.block_until_ready(out)
    assert out.shape == (N, Cout, H, W)

    # Pure-JAX reference (f32 matmul) -- tolerance covers the bf16 MXU operands.
    def ref(x75, x68, gamma, beta, w):
        xm = x75.reshape(C, -1)
        mean = jnp.mean(xm, axis=1, keepdims=True)
        var = jnp.var(xm, axis=1, keepdims=True)
        y = (xm - mean) * (gamma.reshape(C, 1) / jnp.sqrt(var + EPS)) + beta.reshape(C, 1)
        y = jnp.maximum(y + x68.reshape(C, -1), 0.0)
        return (w.reshape(Cout, C) @ y).reshape(N, Cout, H, W)

    expected = ref(x75, x68, gamma, beta, conv_w)
    rel_err = jnp.max(jnp.abs(out - expected)) / (jnp.max(jnp.abs(expected)) + 1e-6)
    assert rel_err < 5e-2, f"max relative error too large: {rel_err}"
    print("KERNEL_OK")
</pallas_src>

<mosaic_0001>
module attributes {stable_mosaic.version = 11 : i64} {
  func.func @_fused_bn_add_relu_conv_kernel(%arg0: i32, %arg1: memref<512x784xf32, #tpu.memory_space<vmem>>, %arg2: memref<512x784xf32, #tpu.memory_space<vmem>>, %arg3: memref<512x1xf32, #tpu.memory_space<vmem>>, %arg4: memref<512x1xf32, #tpu.memory_space<vmem>>, %arg5: memref<512x512xbf16, #tpu.memory_space<vmem>>, %arg6: memref<512x784xf32, #tpu.memory_space<vmem>>) attributes {dimension_semantics = [#tpu.dimension_semantics<arbitrary>], iteration_bounds = array<i64: 1>, scalar_prefetch = 0 : i64, scratch_operands = 0 : i64, tpu.core_type = #tpu.core_type<tc>, window_params = [{pipeline_mode = #tpu.pipeline_mode<synchronous>, transform_indices = @transform_0, window_bounds = array<i64: 512, 784>}, {pipeline_mode = #tpu.pipeline_mode<synchronous>, transform_indices = @transform_1, window_bounds = array<i64: 512, 784>}, {pipeline_mode = #tpu.pipeline_mode<synchronous>, transform_indices = @transform_2, window_bounds = array<i64: 512, 1>}, {pipeline_mode = #tpu.pipeline_mode<synchronous>, transform_indices = @transform_3, window_bounds = array<i64: 512, 1>}, {pipeline_mode = #tpu.pipeline_mode<synchronous>, transform_indices = @transform_4, window_bounds = array<i64: 512, 512>}, {pipeline_mode = #tpu.pipeline_mode<synchronous>, transform_indices = @transform_5, window_bounds = array<i64: 512, 784>}]} {
    %c0 = arith.constant 0 : index
    %c0_0 = arith.constant 0 : index
    %0 = vector.load %arg1[%c0, %c0_0] : memref<512x784xf32, #tpu.memory_space<vmem>>, vector<512x784xf32>
    %cst = arith.constant dense<0.000000e+00> : vector<512xf32>
    %1 = vector.multi_reduction <add>, %0, %cst [1] : vector<512x784xf32> to vector<512xf32>
    %2 = vector.shape_cast %1 : vector<512xf32> to vector<512x1xf32>
    %cst_1 = arith.constant 0.00127551018 : f32
    %3 = vector.broadcast %cst_1 : f32 to vector<512x1xf32>
    %4 = arith.mulf %2, %3 : vector<512x1xf32>
    %5 = vector.broadcast %4 : vector<512x1xf32> to vector<512x784xf32>
    %6 = arith.subf %0, %5 : vector<512x784xf32>
    %7 = arith.mulf %6, %6 : vector<512x784xf32>
    %cst_2 = arith.constant dense<0.000000e+00> : vector<512xf32>
    %8 = vector.multi_reduction <add>, %7, %cst_2 [1] : vector<512x784xf32> to vector<512xf32>
    %9 = vector.shape_cast %8 : vector<512xf32> to vector<512x1xf32>
    %cst_3 = arith.constant 0.00127551018 : f32
    %10 = vector.broadcast %cst_3 : f32 to vector<512x1xf32>
    %11 = arith.mulf %9, %10 : vector<512x1xf32>
    %cst_4 = arith.constant 9.99999974E-6 : f32
    %12 = vector.broadcast %cst_4 : f32 to vector<512x1xf32>
    %13 = arith.addf %11, %12 : vector<512x1xf32>
    %14 = math.rsqrt %13 : vector<512x1xf32>
    %c0_5 = arith.constant 0 : index
    %c0_6 = arith.constant 0 : index
    %15 = vector.load %arg3[%c0_5, %c0_6] : memref<512x1xf32, #tpu.memory_space<vmem>>, vector<512x1xf32>
    %16 = arith.mulf %15, %14 : vector<512x1xf32>
    %17 = vector.broadcast %16 : vector<512x1xf32> to vector<512x784xf32>
    %18 = arith.mulf %6, %17 : vector<512x784xf32>
    %c0_7 = arith.constant 0 : index
    %c0_8 = arith.constant 0 : index
    %19 = vector.load %arg4[%c0_7, %c0_8] : memref<512x1xf32, #tpu.memory_space<vmem>>, vector<512x1xf32>
    %20 = vector.broadcast %19 : vector<512x1xf32> to vector<512x784xf32>
    %21 = arith.addf %18, %20 : vector<512x784xf32>
    %c0_9 = arith.constant 0 : index
    %c0_10 = arith.constant 0 : index
    %22 = vector.load %arg2[%c0_9, %c0_10] : memref<512x784xf32, #tpu.memory_space<vmem>>, vector<512x784xf32>
    %23 = arith.addf %21, %22 : vector<512x784xf32>
    %cst_11 = arith.constant 0.000000e+00 : f32
    %24 = vector.broadcast %cst_11 : f32 to vector<512x784xf32>
    %25 = arith.maximumf %23, %24 : vector<512x784xf32>
    %c0_12 = arith.constant 0 : index
    %c0_13 = arith.constant 0 : index
    %26 = vector.load %arg5[%c0_12, %c0_13] : memref<512x512xbf16, #tpu.memory_space<vmem>>, vector<512x512xbf16>
    %27 = arith.truncf %25 : vector<512x784xf32> to vector<512x784xbf16>
    %cst_14 = arith.constant dense<0.000000e+00> : vector<512x784xf32>
    %28 = tpu.matmul %26, %27, %cst_14 {dimension_numbers = #tpu.dot_dimension_numbers<[1], [0], [0], [1], [0, 0, 1, 1], [], []>} : vector<512x512xbf16>, vector<512x784xbf16>, vector<512x784xf32> -> vector<512x784xf32>
    %c0_15 = arith.constant 0 : index
    %c0_16 = arith.constant 0 : index
    %29 = vector.load %arg6[%c0_15, %c0_16] : memref<512x784xf32, #tpu.memory_space<vmem>>, vector<512x784xf32>
    tpu.vector_store %arg6[%c0_15, %c0_16], %28 {strides = array<i32>} : memref<512x784xf32, #tpu.memory_space<vmem>>, vector<512x784xf32>,
    return
  }
  func.func @transform_0(%arg0: i32) -> (i32, i32) {
    %c0_i32 = arith.constant 0 : i32
    %c0_i32_0 = arith.constant 0 : i32
    %c0_i32_1 = arith.constant 0 : i32
    return %c0_i32, %c0_i32_0 : i32, i32
  }
  func.func @transform_1(%arg0: i32) -> (i32, i32) {
    %c0_i32 = arith.constant 0 : i32
    %c0_i32_0 = arith.constant 0 : i32
    %c0_i32_1 = arith.constant 0 : i32
    return %c0_i32, %c0_i32_0 : i32, i32
  }
  func.func @transform_2(%arg0: i32) -> (i32, i32) {
    %c0_i32 = arith.constant 0 : i32
    %c0_i32_0 = arith.constant 0 : i32
    %c0_i32_1 = arith.constant 0 : i32
    return %c0_i32, %c0_i32_0 : i32, i32
  }
  func.func @transform_3(%arg0: i32) -> (i32, i32) {
    %c0_i32 = arith.constant 0 : i32
    %c0_i32_0 = arith.constant 0 : i32
    %c0_i32_1 = arith.constant 0 : i32
    return %c0_i32, %c0_i32_0 : i32, i32
  }
  func.func @transform_4(%arg0: i32) -> (i32, i32) {
    %c0_i32 = arith.constant 0 : i32
    %c0_i32_0 = arith.constant 0 : i32
    %c0_i32_1 = arith.constant 0 : i32
    return %c0_i32, %c0_i32_0 : i32, i32
  }
  func.func @transform_5(%arg0: i32) -> (i32, i32) {
    %c0_i32 = arith.constant 0 : i32
    %c0_i32_0 = arith.constant 0 : i32
    %c0_i32_1 = arith.constant 0 : i32
    return %c0_i32, %c0_i32_0 : i32, i32
  }
}

</mosaic_0001>

<llo_original>
// kernel: fused_forward.1
$region0: #{fused_forward.1}
  #allocation0 [shape = 'u32[]', space=smem, size = 0x4, offset = 0x4, fixed_abs, tag = 'smem constant byte address 0x4 - core index']
  #allocation1 [shape = 'u32[144,128]{1,0:T(1,128)}', space=vmem, size = 0x12000, scoped, tag = 'internal scratch']
  %s0 = inlined_call_operand.vmem [shape: f32[512,784], index: 0, kind: input, shape index: {}]
  %s1 = inlined_call_operand.vmem [shape: f32[512,784], index: 1, kind: input, shape index: {}]
  %s2 = inlined_call_operand.vmem [shape: f32[512,1], index: 2, kind: input, shape index: {}]
  %s3 = inlined_call_operand.vmem [shape: f32[512,1], index: 3, kind: input, shape index: {}]
  %s4 = inlined_call_operand.vmem [shape: bf16[512,512], index: 4, kind: input, shape index: {}]
  %s5 = inlined_call_operand.vmem [shape: f32[512,784], index: 5, kind: output, shape index: {}]
  %s6 = sld [smem:[#allocation0]]
  $region30: #{fused_forward.1} parent=0
    _
  %s8 = ssub.s32 1, %s6
  %s9 = scalar_select 0, %s8, %s6
  // Predicated region
  $region2: #{fused_forward.1} parent=0 // pred_check
    _
  $region3: #{fused_forward.1} parent=0 // pred_check_branch
    %11 = sbr.rel (0) target = $region5
  $region4: #{fused_forward.1} parent=0 // pred_region
    _
  $region5: #{fused_forward.1} parent=0 // pred_fallthru
    _
  // Predicated region
  $region6: #{fused_forward.1} parent=0 // pred_check
    _
  $region7: #{fused_forward.1} parent=0 // pred_check_branch
    %13 = sbr.rel (0) target = $region9
  $region8: #{fused_forward.1} parent=0 // pred_region
    _
  $region9: #{fused_forward.1} parent=0 // pred_fallthru
    _
  // Predicated region
  $region10: #{fused_forward.1} parent=0 // pred_check
    _
  $region11: #{fused_forward.1} parent=0 // pred_check_branch
    %15 = sbr.rel (0) target = $region13
  $region12: #{fused_forward.1} parent=0 // pred_region
    _
  $region13: #{fused_forward.1} parent=0 // pred_fallthru
    _
  // Predicated region
  $region14: #{fused_forward.1} parent=0 // pred_check
    _
  $region15: #{fused_forward.1} parent=0 // pred_check_branch
    %17 = sbr.rel (0) target = $region17
  $region16: #{fused_forward.1} parent=0 // pred_region
    _
  $region17: #{fused_forward.1} parent=0 // pred_fallthru
    _
  // Predicated region
  $region18: #{fused_forward.1} parent=0 // pred_check
    _
  $region19: #{fused_forward.1} parent=0 // pred_check_branch
    %19 = sbr.rel (0) target = $region21
  $region20: #{fused_forward.1} parent=0 // pred_region
    _
  $region21: #{fused_forward.1} parent=0 // pred_fallthru
    _
  %v21 = vld [vmem:[%s0] sm:$0xff]
  %v22 = vld [vmem:[%s0 + $0x8] sm:$0xff]
  %v23 = vld [vmem:[%s0 + $0x10] sm:$0xff]
  %v24 = vld [vmem:[%s0 + $0x18] sm:$0xff]
  %v25 = vld [vmem:[%s0 + $0x20] sm:$0xff]
  %v26 = vld [vmem:[%s0 + $0x28] sm:$0xff]
  %v27 = vld [vmem:[%s0 + $0x30] sm:$0xff]
  %v28 = vld [vmem:[%s0 + $0x38] sm:$0xff]
  %v29 = vld [vmem:[%s0 + $0x40] sm:$0xff]
  %v30 = vld [vmem:[%s0 + $0x48] sm:$0xff]
  %v31 = vld [vmem:[%s0 + $0x50] sm:$0xff]
  %v32 = vld [vmem:[%s0 + $0x58] sm:$0xff]
  %v33 = vld [vmem:[%s0 + $0x60] sm:$0xff]
  %v34 = vld [vmem:[%s0 + $0x68] sm:$0xff]
  %v35 = vld [vmem:[%s0 + $0x70] sm:$0xff]
  %v36 = vld [vmem:[%s0 + $0x78] sm:$0xff]
  %v37 = vld [vmem:[%s0 + $0x80] sm:$0xff]
  %v38 = vld [vmem:[%s0 + $0x88] sm:$0xff]
  %v39 = vld [vmem:[%s0 + $0x90] sm:$0xff]
  %v40 = vld [vmem:[%s0 + $0x98] sm:$0xff]
  %v41 = vld [vmem:[%s0 + $0xa0] sm:$0xff]
  %v42 = vld [vmem:[%s0 + $0xa8] sm:$0xff]
  %v43 = vld [vmem:[%s0 + $0xb0] sm:$0xff]
  %v44 = vld [vmem:[%s0 + $0xb8] sm:$0xff]
  %v45 = vld [vmem:[%s0 + $0xc0] sm:$0xff]
  %v46 = vld [vmem:[%s0 + $0xc8] sm:$0xff]
  %v47 = vld [vmem:[%s0 + $0xd0] sm:$0xff]
  %v48 = vld [vmem:[%s0 + $0xd8] sm:$0xff]
  %v49 = vld [vmem:[%s0 + $0xe0] sm:$0xff]
  %v50 = vld [vmem:[%s0 + $0xe8] sm:$0xff]
  %v51 = vld [vmem:[%s0 + $0xf0] sm:$0xff]
  %v52 = vld [vmem:[%s0 + $0xf8] sm:$0xff]
  %v53 = vld [vmem:[%s0 + $0x100] sm:$0xff]
  %v54 = vld [vmem:[%s0 + $0x108] sm:$0xff]
  %v55 = vld [vmem:[%s0 + $0x110] sm:$0xff]
  %v56 = vld [vmem:[%s0 + $0x118] sm:$0xff]
  %v57 = vld [vmem:[%s0 + $0x120] sm:$0xff]
  %v58 = vld [vmem:[%s0 + $0x128] sm:$0xff]
  %v59 = vld [vmem:[%s0 + $0x130] sm:$0xff]
  %v60 = vld [vmem:[%s0 + $0x138] sm:$0xff]
  %v61 = vld [vmem:[%s0 + $0x140] sm:$0xff]
  %v62 = vld [vmem:[%s0 + $0x148] sm:$0xff]
  %v63 = vld [vmem:[%s0 + $0x150] sm:$0xff]
  %v64 = vld [vmem:[%s0 + $0x158] sm:$0xff]
  %v65 = vld [vmem:[%s0 + $0x160] sm:$0xff]
  %v66 = vld [vmem:[%s0 + $0x168] sm:$0xff]
  %v67 = vld [vmem:[%s0 + $0x170] sm:$0xff]
  %v68 = vld [vmem:[%s0 + $0x178] sm:$0xff]
  %v69 = vld [vmem:[%s0 + $0x180] sm:$0xff]
  %v70 = vld [vmem:[%s0 + $0x188] sm:$0xff]
  %v71 = vld [vmem:[%s0 + $0x190] sm:$0xff]
  %v72 = vld [vmem:[%s0 + $0x198] sm:$0xff]
  %v73 = vld [vmem:[%s0 + $0x1a0] sm:$0xff]
  %v74 = vld [vmem:[%s0 + $0x1a8] sm:$0xff]
  %v75 = vld [vmem:[%s0 + $0x1b0] sm:$0xff]
  %v76 = vld [vmem:[%s0 + $0x1b8] sm:$0xff]
  %v77 = vld [vmem:[%s0 + $0x1c0] sm:$0xff]
  %v78 = vld [vmem:[%s0 + $0x1c8] sm:$0xff]
  %v79 = vld [vmem:[%s0 + $0x1d0] sm:$0xff]
  %v80 = vld [vmem:[%s0 + $0x1d8] sm:$0xff]
  %v81 = vld [vmem:[%s0 + $0x1e0] sm:$0xff]
  %v82 = vld [vmem:[%s0 + $0x1e8] sm:$0xff]
  %v83 = vld [vmem:[%s0 + $0x1f0] sm:$0xff]
  %v84 = vld [vmem:[%s0 + $0x1f8] sm:$0xff]
  %v85 = vld [vmem:[%s0 + $0x200] sm:$0xff]
  %v86 = vld [vmem:[%s0 + $0x208] sm:$0xff]
  %v87 = vld [vmem:[%s0 + $0x210] sm:$0xff]
  %v88 = vld [vmem:[%s0 + $0x218] sm:$0xff]
  %v89 = vld [vmem:[%s0 + $0x220] sm:$0xff]
  %v90 = vld [vmem:[%s0 + $0x228] sm:$0xff]
  %v91 = vld [vmem:[%s0 + $0x230] sm:$0xff]
  %v92 = vld [vmem:[%s0 + $0x238] sm:$0xff]
  %v93 = vld [vmem:[%s0 + $0x240] sm:$0xff]
  %v94 = vld [vmem:[%s0 + $0x248] sm:$0xff]
  %v95 = vld [vmem:[%s0 + $0x250] sm:$0xff]
  %v96 = vld [vmem:[%s0 + $0x258] sm:$0xff]
  %v97 = vld [vmem:[%s0 + $0x260] sm:$0xff]
  %v98 = vld [vmem:[%s0 + $0x268] sm:$0xff]
  %v99 = vld [vmem:[%s0 + $0x270] sm:$0xff]
  %v100 = vld [vmem:[%s0 + $0x278] sm:$0xff]
  %v101 = vld [vmem:[%s0 + $0x280] sm:$0xff]
  %v102 = vld [vmem:[%s0 + $0x288] sm:$0xff]
  %v103 = vld [vmem:[%s0 + $0x290] sm:$0xff]
  %v104 = vld [vmem:[%s0 + $0x298] sm:$0xff]
  %v105 = vld [vmem:[%s0 + $0x2a0] sm:$0xff]
  %v106 = vld [vmem:[%s0 + $0x2a8] sm:$0xff]
  %v107 = vld [vmem:[%s0 + $0x2b0] sm:$0xff]
  %v108 = vld [vmem:[%s0 + $0x2b8] sm:$0xff]
  %v109 = vld [vmem:[%s0 + $0x2c0] sm:$0xff]
  %v110 = vld [vmem:[%s0 + $0x2c8] sm:$0xff]
  %v111 = vld [vmem:[%s0 + $0x2d0] sm:$0xff]
  %v112 = vld [vmem:[%s0 + $0x2d8] sm:$0xff]
  %v113 = vld [vmem:[%s0 + $0x2e0] sm:$0xff]
  %v114 = vld [vmem:[%s0 + $0x2e8] sm:$0xff]
  %v115 = vld [vmem:[%s0 + $0x2f0] sm:$0xff]
  %v116 = vld [vmem:[%s0 + $0x2f8] sm:$0xff]
  %v117 = vld [vmem:[%s0 + $0x300] sm:$0xff]
  %v118 = vld [vmem:[%s0 + $0x308] sm:$0xff]
  %v119 = vld [vmem:[%s0 + $0x310] sm:$0xff]
  %v120 = vld [vmem:[%s0 + $0x318] sm:$0xff]
  %v121 = vld [vmem:[%s0 + $0x320] sm:$0xff]
  %v122 = vld [vmem:[%s0 + $0x328] sm:$0xff]
  %v123 = vld [vmem:[%s0 + $0x330] sm:$0xff]
  %v124 = vld [vmem:[%s0 + $0x338] sm:$0xff]
  %v125 = vld [vmem:[%s0 + $0x340] sm:$0xff]
  %v126 = vld [vmem:[%s0 + $0x348] sm:$0xff]
  %v127 = vld [vmem:[%s0 + $0x350] sm:$0xff]
  %v128 = vld [vmem:[%s0 + $0x358] sm:$0xff]
  %v129 = vld [vmem:[%s0 + $0x360] sm:$0xff]
  %v130 = vld [vmem:[%s0 + $0x368] sm:$0xff]
  %v131 = vld [vmem:[%s0 + $0x370] sm:$0xff]
  %v132 = vld [vmem:[%s0 + $0x378] sm:$0xff]
  %v133 = vld [vmem:[%s0 + $0x380] sm:$0xff]
  %v134 = vld [vmem:[%s0 + $0x388] sm:$0xff]
  %v135 = vld [vmem:[%s0 + $0x390] sm:$0xff]
  %v136 = vld [vmem:[%s0 + $0x398] sm:$0xff]
  %v137 = vld [vmem:[%s0 + $0x3a0] sm:$0xff]
  %v138 = vld [vmem:[%s0 + $0x3a8] sm:$0xff]
  %v139 = vld [vmem:[%s0 + $0x3b0] sm:$0xff]
  %v140 = vld [vmem:[%s0 + $0x3b8] sm:$0xff]
  %v141 = vld [vmem:[%s0 + $0x3c0] sm:$0xff]
  %v142 = vld [vmem:[%s0 + $0x3c8] sm:$0xff]
  %v143 = vld [vmem:[%s0 + $0x3d0] sm:$0xff]
  %v144 = vld [vmem:[%s0 + $0x3d8] sm:$0xff]
  %v145 = vld [vmem:[%s0 + $0x3e0] sm:$0xff]
  %v146 = vld [vmem:[%s0 + $0x3e8] sm:$0xff]
  %v147 = vld [vmem:[%s0 + $0x3f0] sm:$0xff]
  %v148 = vld [vmem:[%s0 + $0x3f8] sm:$0xff]
  %v149 = vld [vmem:[%s0 + $0x400] sm:$0xff]
  %v150 = vld [vmem:[%s0 + $0x408] sm:$0xff]
  %v151 = vld [vmem:[%s0 + $0x410] sm:$0xff]
  %v152 = vld [vmem:[%s0 + $0x418] sm:$0xff]
  %v153 = vld [vmem:[%s0 + $0x420] sm:$0xff]
  %v154 = vld [vmem:[%s0 + $0x428] sm:$0xff]
  %v155 = vld [vmem:[%s0 + $0x430] sm:$0xff]
  %v156 = vld [vmem:[%s0 + $0x438] sm:$0xff]
  %v157 = vld [vmem:[%s0 + $0x440] sm:$0xff]
  %v158 = vld [vmem:[%s0 + $0x448] sm:$0xff]
  %v159 = vld [vmem:[%s0 + $0x450] sm:$0xff]
  %v160 = vld [vmem:[%s0 + $0x458] sm:$0xff]
  %v161 = vld [vmem:[%s0 + $0x460] sm:$0xff]
  %v162 = vld [vmem:[%s0 + $0x468] sm:$0xff]
  %v163 = vld [vmem:[%s0 + $0x470] sm:$0xff]
  %v164 = vld [vmem:[%s0 + $0x478] sm:$0xff]
  %v165 = vld [vmem:[%s0 + $0x480] sm:$0xff]
  %v166 = vld [vmem:[%s0 + $0x488] sm:$0xff]
  %v167 = vld [vmem:[%s0 + $0x490] sm:$0xff]
  %v168 = vld [vmem:[%s0 + $0x498] sm:$0xff]
  %v169 = vld [vmem:[%s0 + $0x4a0] sm:$0xff]
  %v170 = vld [vmem:[%s0 + $0x4a8] sm:$0xff]
  %v171 = vld [vmem:[%s0 + $0x4b0] sm:$0xff]
  %v172 = vld [vmem:[%s0 + $0x4b8] sm:$0xff]
  %v173 = vld [vmem:[%s0 + $0x4c0] sm:$0xff]
  %v174 = vld [vmem:[%s0 + $0x4c8] sm:$0xff]
  %v175 = vld [vmem:[%s0 + $0x4d0] sm:$0xff]
  %v176 = vld [vmem:[%s0 + $0x4d8] sm:$0xff]
  %v177 = vld [vmem:[%s0 + $0x4e0] sm:$0xff]
  %v178 = vld [vmem:[%s0 + $0x4e8] sm:$0xff]
  %v179 = vld [vmem:[%s0 + $0x4f0] sm:$0xff]
  %v180 = vld [vmem:[%s0 + $0x4f8] sm:$0xff]
  %v181 = vld [vmem:[%s0 + $0x500] sm:$0xff]
  %v182 = vld [vmem:[%s0 + $0x508] sm:$0xff]
  %v183 = vld [vmem:[%s0 + $0x510] sm:$0xff]
  %v184 = vld [vmem:[%s0 + $0x518] sm:$0xff]
  %v185 = vld [vmem:[%s0 + $0x520] sm:$0xff]
  %v186 = vld [vmem:[%s0 + $0x528] sm:$0xff]
  %v187 = vld [vmem:[%s0 + $0x530] sm:$0xff]
  %v188 = vld [vmem:[%s0 + $0x538] sm:$0xff]
  %v189 = vld [vmem:[%s0 + $0x540] sm:$0xff]
  %v190 = vld [vmem:[%s0 + $0x548] sm:$0xff]
  %v191 = vld [vmem:[%s0 + $0x550] sm:$0xff]
  %v192 = vld [vmem:[%s0 + $0x558] sm:$0xff]
  %v193 = vld [vmem:[%s0 + $0x560] sm:$0xff]
  %v194 = vld [vmem:[%s0 + $0x568] sm:$0xff]
  %v195 = vld [vmem:[%s0 + $0x570] sm:$0xff]
  %v196 = vld [vmem:[%s0 + $0x578] sm:$0xff]
  %v197 = vld [vmem:[%s0 + $0x580] sm:$0xff]
  %v198 = vld [vmem:[%s0 + $0x588] sm:$0xff]
  %v199 = vld [vmem:[%s0 + $0x590] sm:$0xff]
  %v200 = vld [vmem:[%s0 + $0x598] sm:$0xff]
  %v201 = vld [vmem:[%s0 + $0x5a0] sm:$0xff]
  %v202 = vld [vmem:[%s0 + $0x5a8] sm:$0xff]
  %v203 = vld [vmem:[%s0 + $0x5b0] sm:$0xff]
  %v204 = vld [vmem:[%s0 + $0x5b8] sm:$0xff]
  %v205 = vld [vmem:[%s0 + $0x5c0] sm:$0xff]
  %v206 = vld [vmem:[%s0 + $0x5c8] sm:$0xff]
  %v207 = vld [vmem:[%s0 + $0x5d0] sm:$0xff]
  %v208 = vld [vmem:[%s0 + $0x5d8] sm:$0xff]
  %v209 = vld [vmem:[%s0 + $0x5e0] sm:$0xff]
  %v210 = vld [vmem:[%s0 + $0x5e8] sm:$0xff]
  %v211 = vld [vmem:[%s0 + $0x5f0] sm:$0xff]
  %v212 = vld [vmem:[%s0 + $0x5f8] sm:$0xff]
  %v213 = vld [vmem:[%s0 + $0x600] sm:$0xff]
  %v214 = vld [vmem:[%s0 + $0x608] sm:$0xff]
  %v215 = vld [vmem:[%s0 + $0x610] sm:$0xff]
  %v216 = vld [vmem:[%s0 + $0x618] sm:$0xff]
  %v217 = vld [vmem:[%s0 + $0x620] sm:$0xff]
  %v218 = vld [vmem:[%s0 + $0x628] sm:$0xff]
  %v219 = vld [vmem:[%s0 + $0x630] sm:$0xff]
  %v220 = vld [vmem:[%s0 + $0x638] sm:$0xff]
  %v221 = vld [vmem:[%s0 + $0x640] sm:$0xff]
  %v222 = vld [vmem:[%s0 + $0x648] sm:$0xff]
  %v223 = vld [vmem:[%s0 + $0x650] sm:$0xff]
  %v224 = vld [vmem:[%s0 + $0x658] sm:$0xff]
  %v225 = vld [vmem:[%s0 + $0x660] sm:$0xff]
  %v226 = vld [vmem:[%s0 + $0x668] sm:$0xff]
  %v227 = vld [vmem:[%s0 + $0x670] sm:$0xff]
  %v228 = vld [vmem:[%s0 + $0x678] sm:$0xff]
  %v229 = vld [vmem:[%s0 + $0x680] sm:$0xff]
  %v230 = vld [vmem:[%s0 + $0x688] sm:$0xff]
  %v231 = vld [vmem:[%s0 + $0x690] sm:$0xff]
  %v232 = vld [vmem:[%s0 + $0x698] sm:$0xff]
  %v233 = vld [vmem:[%s0 + $0x6a0] sm:$0xff]
  %v234 = vld [vmem:[%s0 + $0x6a8] sm:$0xff]
  %v235 = vld [vmem:[%s0 + $0x6b0] sm:$0xff]
  %v236 = vld [vmem:[%s0 + $0x6b8] sm:$0xff]
  %v237 = vld [vmem:[%s0 + $0x6c0] sm:$0xff]
  %v238 = vld [vmem:[%s0 + $0x6c8] sm:$0xff]
  %v239 = vld [vmem:[%s0 + $0x6d0] sm:$0xff]
  %v240 = vld [vmem:[%s0 + $0x6d8] sm:$0xff]
  %v241 = vld [vmem:[%s0 + $0x6e0] sm:$0xff]
  %v242 = vld [vmem:[%s0 + $0x6e8] sm:$0xff]
  %v243 = vld [vmem:[%s0 + $0x6f0] sm:$0xff]
  %v244 = vld [vmem:[%s0 + $0x6f8] sm:$0xff]
  %v245 = vld [vmem:[%s0 + $0x700] sm:$0xff]
  %v246 = vld [vmem:[%s0 + $0x708] sm:$0xff]
  %v247 = vld [vmem:[%s0 + $0x710] sm:$0xff]
  %v248 = vld [vmem:[%s0 + $0x718] sm:$0xff]
  %v249 = vld [vmem:[%s0 + $0x720] sm:$0xff]
  %v250 = vld [vmem:[%s0 + $0x728] sm:$0xff]
  %v251 = vld [vmem:[%s0 + $0x730] sm:$0xff]
  %v252 = vld [vmem:[%s0 + $0x738] sm:$0xff]
  %v253 = vld [vmem:[%s0 + $0x740] sm:$0xff]
  %v254 = vld [vmem:[%s0 + $0x748] sm:$0xff]
  %v255 = vld [vmem:[%s0 + $0x750] sm:$0xff]
  %v256 = vld [vmem:[%s0 + $0x758] sm:$0xff]
  %v257 = vld [vmem:[%s0 + $0x760] sm:$0xff]
  %v258 = vld [vmem:[%s0 + $0x768] sm:$0xff]
  %v259 = vld [vmem:[%s0 + $0x770] sm:$0xff]
  %v260 = vld [vmem:[%s0 + $0x778] sm:$0xff]
  %v261 = vld [vmem:[%s0 + $0x780] sm:$0xff]
  %v262 = vld [vmem:[%s0 + $0x788] sm:$0xff]
  %v263 = vld [vmem:[%s0 + $0x790] sm:$0xff]
  %v264 = vld [vmem:[%s0 + $0x798] sm:$0xff]
  %v265 = vld [vmem:[%s0 + $0x7a0] sm:$0xff]
  %v266 = vld [vmem:[%s0 + $0x7a8] sm:$0xff]
  %v267 = vld [vmem:[%s0 + $0x7b0] sm:$0xff]
  %v268 = vld [vmem:[%s0 + $0x7b8] sm:$0xff]
  %v269 = vld [vmem:[%s0 + $0x7c0] sm:$0xff]
  %v270 = vld [vmem:[%s0 + $0x7c8] sm:$0xff]
  %v271 = vld [vmem:[%s0 + $0x7d0] sm:$0xff]
  %v272 = vld [vmem:[%s0 + $0x7d8] sm:$0xff]
  %v273 = vld [vmem:[%s0 + $0x7e0] sm:$0xff]
  %v274 = vld [vmem:[%s0 + $0x7e8] sm:$0xff]
  %v275 = vld [vmem:[%s0 + $0x7f0] sm:$0xff]
  %v276 = vld [vmem:[%s0 + $0x7f8] sm:$0xff]
  %v277 = vld [vmem:[%s0 + $0x800] sm:$0xff]
  %v278 = vld [vmem:[%s0 + $0x808] sm:$0xff]
  %v279 = vld [vmem:[%s0 + $0x810] sm:$0xff]
  %v280 = vld [vmem:[%s0 + $0x818] sm:$0xff]
  %v281 = vld [vmem:[%s0 + $0x820] sm:$0xff]
  %v282 = vld [vmem:[%s0 + $0x828] sm:$0xff]
  %v283 = vld [vmem:[%s0 + $0x830] sm:$0xff]
  %v284 = vld [vmem:[%s0 + $0x838] sm:$0xff]
  %v285 = vld [vmem:[%s0 + $0x840] sm:$0xff]
  %v286 = vld [vmem:[%s0 + $0x848] sm:$0xff]
  %v287 = vld [vmem:[%s0 + $0x850] sm:$0xff]
  %v288 = vld [vmem:[%s0 + $0x858] sm:$0xff]
  %v289 = vld [vmem:[%s0 + $0x860] sm:$0xff]
  %v290 = vld [vmem:[%s0 + $0x868] sm:$0xff]
  %v291 = vld [vmem:[%s0 + $0x870] sm:$0xff]
  %v292 = vld [vmem:[%s0 + $0x878] sm:$0xff]
  %v293 = vld [vmem:[%s0 + $0x880] sm:$0xff]
  %v294 = vld [vmem:[%s0 + $0x888] sm:$0xff]
  %v295 = vld [vmem:[%s0 + $0x890] sm:$0xff]
  %v296 = vld [vmem:[%s0 + $0x898] sm:$0xff]
  %v297 = vld [vmem:[%s0 + $0x8a0] sm:$0xff]
  %v298 = vld [vmem:[%s0 + $0x8a8] sm:$0xff]
  %v299 = vld [vmem:[%s0 + $0x8b0] sm:$0xff]
  %v300 = vld [vmem:[%s0 + $0x8b8] sm:$0xff]
  %v301 = vld [vmem:[%s0 + $0x8c0] sm:$0xff]
  %v302 = vld [vmem:[%s0 + $0x8c8] sm:$0xff]
  %v303 = vld [vmem:[%s0 + $0x8d0] sm:$0xff]
  %v304 = vld [vmem:[%s0 + $0x8d8] sm:$0xff]
  %v305 = vld [vmem:[%s0 + $0x8e0] sm:$0xff]
  %v306 = vld [vmem:[%s0 + $0x8e8] sm:$0xff]
  %v307 = vld [vmem:[%s0 + $0x8f0] sm:$0xff]
  %v308 = vld [vmem:[%s0 + $0x8f8] sm:$0xff]
  %v309 = vld [vmem:[%s0 + $0x900] sm:$0xff]
  %v310 = vld [vmem:[%s0 + $0x908] sm:$0xff]
  %v311 = vld [vmem:[%s0 + $0x910] sm:$0xff]
  %v312 = vld [vmem:[%s0 + $0x918] sm:$0xff]
  %v313 = vld [vmem:[%s0 + $0x920] sm:$0xff]
  %v314 = vld [vmem:[%s0 + $0x928] sm:$0xff]
  %v315 = vld [vmem:[%s0 + $0x930] sm:$0xff]
  %v316 = vld [vmem:[%s0 + $0x938] sm:$0xff]
  %v317 = vld [vmem:[%s0 + $0x940] sm:$0xff]
  %v318 = vld [vmem:[%s0 + $0x948] sm:$0xff]
  %v319 = vld [vmem:[%s0 + $0x950] sm:$0xff]
  %v320 = vld [vmem:[%s0 + $0x958] sm:$0xff]
  %v321 = vld [vmem:[%s0 + $0x960] sm:$0xff]
  %v322 = vld [vmem:[%s0 + $0x968] sm:$0xff]
  %v323 = vld [vmem:[%s0 + $0x970] sm:$0xff]
  %v324 = vld [vmem:[%s0 + $0x978] sm:$0xff]
  %v325 = vld [vmem:[%s0 + $0x980] sm:$0xff]
  %v326 = vld [vmem:[%s0 + $0x988] sm:$0xff]
  %v327 = vld [vmem:[%s0 + $0x990] sm:$0xff]
  %v328 = vld [vmem:[%s0 + $0x998] sm:$0xff]
  %v329 = vld [vmem:[%s0 + $0x9a0] sm:$0xff]
  %v330 = vld [vmem:[%s0 + $0x9a8] sm:$0xff]
  %v331 = vld [vmem:[%s0 + $0x9b0] sm:$0xff]
  %v332 = vld [vmem:[%s0 + $0x9b8] sm:$0xff]
  %v333 = vld [vmem:[%s0 + $0x9c0] sm:$0xff]
  %v334 = vld [vmem:[%s0 + $0x9c8] sm:$0xff]
  %v335 = vld [vmem:[%s0 + $0x9d0] sm:$0xff]
  %v336 = vld [vmem:[%s0 + $0x9d8] sm:$0xff]
  %v337 = vld [vmem:[%s0 + $0x9e0] sm:$0xff]
  %v338 = vld [vmem:[%s0 + $0x9e8] sm:$0xff]
  %v339 = vld [vmem:[%s0 + $0x9f0] sm:$0xff]
  %v340 = vld [vmem:[%s0 + $0x9f8] sm:$0xff]
  %v341 = vld [vmem:[%s0 + $0xa00] sm:$0xff]
  %v342 = vld [vmem:[%s0 + $0xa08] sm:$0xff]
  %v343 = vld [vmem:[%s0 + $0xa10] sm:$0xff]
  %v344 = vld [vmem:[%s0 + $0xa18] sm:$0xff]
  %v345 = vld [vmem:[%s0 + $0xa20] sm:$0xff]
  %v346 = vld [vmem:[%s0 + $0xa28] sm:$0xff]
  %v347 = vld [vmem:[%s0 + $0xa30] sm:$0xff]
  %v348 = vld [vmem:[%s0 + $0xa38] sm:$0xff]
  %v349 = vld [vmem:[%s0 + $0xa40] sm:$0xff]
  %v350 = vld [vmem:[%s0 + $0xa48] sm:$0xff]
  %v351 = vld [vmem:[%s0 + $0xa50] sm:$0xff]
  %v352 = vld [vmem:[%s0 + $0xa58] sm:$0xff]
  %v353 = vld [vmem:[%s0 + $0xa60] sm:$0xff]
  %v354 = vld [vmem:[%s0 + $0xa68] sm:$0xff]
  %v355 = vld [vmem:[%s0 + $0xa70] sm:$0xff]
  %v356 = vld [vmem:[%s0 + $0xa78] sm:$0xff]
  %v357 = vld [vmem:[%s0 + $0xa80] sm:$0xff]
  %v358 = vld [vmem:[%s0 + $0xa88] sm:$0xff]
  %v359 = vld [vmem:[%s0 + $0xa90] sm:$0xff]
  %v360 = vld [vmem:[%s0 + $0xa98] sm:$0xff]
  %v361 = vld [vmem:[%s0 + $0xaa0] sm:$0xff]
  %v362 = vld [vmem:[%s0 + $0xaa8] sm:$0xff]
  %v363 = vld [vmem:[%s0 + $0xab0] sm:$0xff]
  %v364 = vld [vmem:[%s0 + $0xab8] sm:$0xff]
  %v365 = vld [vmem:[%s0 + $0xac0] sm:$0xff]
  %v366 = vld [vmem:[%s0 + $0xac8] sm:$0xff]
  %v367 = vld [vmem:[%s0 + $0xad0] sm:$0xff]
  %v368 = vld [vmem:[%s0 + $0xad8] sm:$0xff]
  %v369 = vld [vmem:[%s0 + $0xae0] sm:$0xff]
  %v370 = vld [vmem:[%s0 + $0xae8] sm:$0xff]
  %v371 = vld [vmem:[%s0 + $0xaf0] sm:$0xff]
  %v372 = vld [vmem:[%s0 + $0xaf8] sm:$0xff]
  %v373 = vld [vmem:[%s0 + $0xb00] sm:$0xff]
  %v374 = vld [vmem:[%s0 + $0xb08] sm:$0xff]
  %v375 = vld [vmem:[%s0 + $0xb10] sm:$0xff]
  %v376 = vld [vmem:[%s0 + $0xb18] sm:$0xff]
  %v377 = vld [vmem:[%s0 + $0xb20] sm:$0xff]
  %v378 = vld [vmem:[%s0 + $0xb28] sm:$0xff]
  %v379 = vld [vmem:[%s0 + $0xb30] sm:$0xff]
  %v380 = vld [vmem:[%s0 + $0xb38] sm:$0xff]
  %v381 = vld [vmem:[%s0 + $0xb40] sm:$0xff]
  %v382 = vld [vmem:[%s0 + $0xb48] sm:$0xff]
  %v383 = vld [vmem:[%s0 + $0xb50] sm:$0xff]
  %v384 = vld [vmem:[%s0 + $0xb58] sm:$0xff]
  %v385 = vld [vmem:[%s0 + $0xb60] sm:$0xff]
  %v386 = vld [vmem:[%s0 + $0xb68] sm:$0xff]
  %v387 = vld [vmem:[%s0 + $0xb70] sm:$0xff]
  %v388 = vld [vmem:[%s0 + $0xb78] sm:$0xff]
  %v389 = vld [vmem:[%s0 + $0xb80] sm:$0xff]
  %v390 = vld [vmem:[%s0 + $0xb88] sm:$0xff]
  %v391 = vld [vmem:[%s0 + $0xb90] sm:$0xff]
  %v392 = vld [vmem:[%s0 + $0xb98] sm:$0xff]
  %v393 = vld [vmem:[%s0 + $0xba0] sm:$0xff]
  %v394 = vld [vmem:[%s0 + $0xba8] sm:$0xff]
  %v395 = vld [vmem:[%s0 + $0xbb0] sm:$0xff]
  %v396 = vld [vmem:[%s0 + $0xbb8] sm:$0xff]
  %v397 = vld [vmem:[%s0 + $0xbc0] sm:$0xff]
  %v398 = vld [vmem:[%s0 + $0xbc8] sm:$0xff]
  %v399 = vld [vmem:[%s0 + $0xbd0] sm:$0xff]
  %v400 = vld [vmem:[%s0 + $0xbd8] sm:$0xff]
  %v401 = vld [vmem:[%s0 + $0xbe0] sm:$0xff]
  %v402 = vld [vmem:[%s0 + $0xbe8] sm:$0xff]
  %v403 = vld [vmem:[%s0 + $0xbf0] sm:$0xff]
  %v404 = vld [vmem:[%s0 + $0xbf8] sm:$0xff]
  %v405 = vld [vmem:[%s0 + $0xc00] sm:$0xff]
  %v406 = vld [vmem:[%s0 + $0xc08] sm:$0xff]
  %v407 = vld [vmem:[%s0 + $0xc10] sm:$0xff]
  %v408 = vld [vmem:[%s0 + $0xc18] sm:$0xff]
  %v409 = vld [vmem:[%s0 + $0xc20] sm:$0xff]
  %v410 = vld [vmem:[%s0 + $0xc28] sm:$0xff]
  %v411 = vld [vmem:[%s0 + $0xc30] sm:$0xff]
  %v412 = vld [vmem:[%s0 + $0xc38] sm:$0xff]
  %v413 = vld [vmem:[%s0 + $0xc40] sm:$0xff]
  %v414 = vld [vmem:[%s0 + $0xc48] sm:$0xff]
  %v415 = vld [vmem:[%s0 + $0xc50] sm:$0xff]
  %v416 = vld [vmem:[%s0 + $0xc58] sm:$0xff]
  %v417 = vld [vmem:[%s0 + $0xc60] sm:$0xff]
  %v418 = vld [vmem:[%s0 + $0xc68] sm:$0xff]
  %v419 = vld [vmem:[%s0 + $0xc70] sm:$0xff]
  %v420 = vld [vmem:[%s0 + $0xc78] sm:$0xff]
  %v421 = vld [vmem:[%s0 + $0xc80] sm:$0xff]
  %v422 = vld [vmem:[%s0 + $0xc88] sm:$0xff]
  %v423 = vld [vmem:[%s0 + $0xc90] sm:$0xff]
  %v424 = vld [vmem:[%s0 + $0xc98] sm:$0xff]
  %v425 = vld [vmem:[%s0 + $0xca0] sm:$0xff]
  %v426 = vld [vmem:[%s0 + $0xca8] sm:$0xff]
  %v427 = vld [vmem:[%s0 + $0xcb0] sm:$0xff]
  %v428 = vld [vmem:[%s0 + $0xcb8] sm:$0xff]
  %v429 = vld [vmem:[%s0 + $0xcc0] sm:$0xff]
  %v430 = vld [vmem:[%s0 + $0xcc8] sm:$0xff]
  %v431 = vld [vmem:[%s0 + $0xcd0] sm:$0xff]
  %v432 = vld [vmem:[%s0 + $0xcd8] sm:$0xff]
  %v433 = vld [vmem:[%s0 + $0xce0] sm:$0xff]
  %v434 = vld [vmem:[%s0 + $0xce8] sm:$0xff]
  %v435 = vld [vmem:[%s0 + $0xcf0] sm:$0xff]
  %v436 = vld [vmem:[%s0 + $0xcf8] sm:$0xff]
  %v437 = vld [vmem:[%s0 + $0xd00] sm:$0xff]
  %v438 = vld [vmem:[%s0 + $0xd08] sm:$0xff]
  %v439 = vld [vmem:[%s0 + $0xd10] sm:$0xff]
  %v440 = vld [vmem:[%s0 + $0xd18] sm:$0xff]
  %v441 = vld [vmem:[%s0 + $0xd20] sm:$0xff]
  %v442 = vld [vmem:[%s0 + $0xd28] sm:$0xff]
  %v443 = vld [vmem:[%s0 + $0xd30] sm:$0xff]
  %v444 = vld [vmem:[%s0 + $0xd38] sm:$0xff]
  %v445 = vld [vmem:[%s0 + $0xd40] sm:$0xff]
  %v446 = vld [vmem:[%s0 + $0xd48] sm:$0xff]
  %v447 = vld [vmem:[%s0 + $0xd50] sm:$0xff]
  %v448 = vld [vmem:[%s0 + $0xd58] sm:$0xff]
  %v449 = vld [vmem:[%s0 + $0xd60] sm:$0xff]
  %v450 = vld [vmem:[%s0 + $0xd68] sm:$0xff]
  %v451 = vld [vmem:[%s0 + $0xd70] sm:$0xff]
  %v452 = vld [vmem:[%s0 + $0xd78] sm:$0xff]
  %v453 = vld [vmem:[%s0 + $0xd80] sm:$0xff]
  %v454 = vld [vmem:[%s0 + $0xd88] sm:$0xff]
  %v455 = vld [vmem:[%s0 + $0xd90] sm:$0xff]
  %v456 = vld [vmem:[%s0 + $0xd98] sm:$0xff]
  %v457 = vld [vmem:[%s0 + $0xda0] sm:$0xff]
  %v458 = vld [vmem:[%s0 + $0xda8] sm:$0xff]
  %v459 = vld [vmem:[%s0 + $0xdb0] sm:$0xff]
  %v460 = vld [vmem:[%s0 + $0xdb8] sm:$0xff]
  %v461 = vld [vmem:[%s0 + $0xdc0] sm:$0xff]
  %v462 = vld [vmem:[%s0 + $0xdc8] sm:$0xff]
  %v463 = vld [vmem:[%s0 + $0xdd0] sm:$0xff]
  %v464 = vld [vmem:[%s0 + $0xdd8] sm:$0xff]
  %v465 = vld [vmem:[%s0 + $0xde0] sm:$0xff]
  %v466 = vld [vmem:[%s0 + $0xde8] sm:$0xff]
  %v467 = vld [vmem:[%s0 + $0xdf0] sm:$0xff]
  %v468 = vld [vmem:[%s0 + $0xdf8] sm:$0xff]
  %v469 = vadd.f32 %v21, %v22
  %v470 = vadd.f32 %v469, %v23
  %v471 = vadd.f32 %v470, %v24
  %v472 = vadd.f32 %v471, %v25
  %v473 = vadd.f32 %v472, %v26
  %vm474 = vcmask 130048
  %v475 = vsel %vm474, %v27, 0.0
  %v476 = vadd.f32 %v473, %v475
  %477 = vadd.xlane.f32.xlu0 %v476
  %v478 = vpop.xlane.xlu0 %477
  %v479 = vadd.f32 %v28, %v29
  %v480 = vadd.f32 %v479, %v30
  %v481 = vadd.f32 %v480, %v31
  %v482 = vadd.f32 %v481, %v32
  %v483 = vadd.f32 %v482, %v33
  %v484 = vsel %vm474, %v34, 0.0
  %v485 = vadd.f32 %v483, %v484
  %486 = vadd.xlane.f32.xlu0 %v485
  %v487 = vpop.xlane.xlu0 %486
  %v488 = vadd.f32 %v35, %v36
  %v489 = vadd.f32 %v488, %v37
  %v490 = vadd.f32 %v489, %v38
  %v491 = vadd.f32 %v490, %v39
  %v492 = vadd.f32 %v491, %v40
  %v493 = vsel %vm474, %v41, 0.0
  %v494 = vadd.f32 %v492, %v493
  %495 = vadd.xlane.f32.xlu0 %v494
  %v496 = vpop.xlane.xlu0 %495
  %v497 = vadd.f32 %v42, %v43
  %v498 = vadd.f32 %v497, %v44
  %v499 = vadd.f32 %v498, %v45
  %v500 = vadd.f32 %v499, %v46
  %v501 = vadd.f32 %v500, %v47
  %v502 = vsel %vm474, %v48, 0.0
  %v503 = vadd.f32 %v501, %v502
  %504 = vadd.xlane.f32.xlu0 %v503
  %v505 = vpop.xlane.xlu0 %504
  %v506 = vadd.f32 %v49, %v50
  %v507 = vadd.f32 %v506, %v51
  %v508 = vadd.f32 %v507, %v52
  %v509 = vadd.f32 %v508, %v53
  %v510 = vadd.f32 %v509, %v54
  %v511 = vsel %vm474, %v55, 0.0
  %v512 = vadd.f32 %v510, %v511
  %513 = vadd.xlane.f32.xlu0 %v512
  %v514 = vpop.xlane.xlu0 %513
  %v515 = vadd.f32 %v56, %v57
  %v516 = vadd.f32 %v515, %v58
  %v517 = vadd.f32 %v516, %v59
  %v518 = vadd.f32 %v517, %v60
  %v519 = vadd.f32 %v518, %v61
  %v520 = vsel %vm474, %v62, 0.0
  %v521 = vadd.f32 %v519, %v520
  %522 = vadd.xlane.f32.xlu0 %v521
  %v523 = vpop.xlane.xlu0 %522
  %v524 = vadd.f32 %v63, %v64
  %v525 = vadd.f32 %v524, %v65
  %v526 = vadd.f32 %v525, %v66
  %v527 = vadd.f32 %v526, %v67
  %v528 = vadd.f32 %v527, %v68
  %v529 = vsel %vm474, %v69, 0.0
  %v530 = vadd.f32 %v528, %v529
  %531 = vadd.xlane.f32.xlu0 %v530
  %v532 = vpop.xlane.xlu0 %531
  %v533 = vadd.f32 %v70, %v71
  %v534 = vadd.f32 %v533, %v72
  %v535 = vadd.f32 %v534, %v73
  %v536 = vadd.f32 %v535, %v74
  %v537 = vadd.f32 %v536, %v75
  %v538 = vsel %vm474, %v76, 0.0
  %v539 = vadd.f32 %v537, %v538
  %540 = vadd.xlane.f32.xlu0 %v539
  %v541 = vpop.xlane.xlu0 %540
  %v542 = vadd.f32 %v77, %v78
  %v543 = vadd.f32 %v542, %v79
  %v544 = vadd.f32 %v543, %v80
  %v545 = vadd.f32 %v544, %v81
  %v546 = vadd.f32 %v545, %v82
  %v547 = vsel %vm474, %v83, 0.0
  %v548 = vadd.f32 %v546, %v547
  %549 = vadd.xlane.f32.xlu0 %v548
  %v550 = vpop.xlane.xlu0 %549
  %v551 = vadd.f32 %v84, %v85
  %v552 = vadd.f32 %v551, %v86
  %v553 = vadd.f32 %v552, %v87
  %v554 = vadd.f32 %v553, %v88
  %v555 = vadd.f32 %v554, %v89
  %v556 = vsel %vm474, %v90, 0.0
  %v557 = vadd.f32 %v555, %v556
  %558 = vadd.xlane.f32.xlu0 %v557
  %v559 = vpop.xlane.xlu0 %558
  %v560 = vadd.f32 %v91, %v92
  %v561 = vadd.f32 %v560, %v93
  %v562 = vadd.f32 %v561, %v94
  %v563 = vadd.f32 %v562, %v95
  %v564 = vadd.f32 %v563, %v96
  %v565 = vsel %vm474, %v97, 0.0
  %v566 = vadd.f32 %v564, %v565
  %567 = vadd.xlane.f32.xlu0 %v566
  %v568 = vpop.xlane.xlu0 %567
  %v569 = vadd.f32 %v98, %v99
  %v570 = vadd.f32 %v569, %v100
  %v571 = vadd.f32 %v570, %v101
  %v572 = vadd.f32 %v571, %v102
  %v573 = vadd.f32 %v572, %v103
  %v574 = vsel %vm474, %v104, 0.0
  %v575 = vadd.f32 %v573, %v574
  %576 = vadd.xlane.f32.xlu0 %v575
  %v577 = vpop.xlane.xlu0 %576
  %v578 = vadd.f32 %v105, %v106
  %v579 = vadd.f32 %v578, %v107
  %v580 = vadd.f32 %v579, %v108
  %v581 = vadd.f32 %v580, %v109
  %v582 = vadd.f32 %v581, %v110
  %v583 = vsel %vm474, %v111, 0.0
  %v584 = vadd.f32 %v582, %v583
  %585 = vadd.xlane.f32.xlu0 %v584
  %v586 = vpop.xlane.xlu0 %585
  %v587 = vadd.f32 %v112, %v113
  %v588 = vadd.f32 %v587, %v114
  %v589 = vadd.f32 %v588, %v115
  %v590 = vadd.f32 %v589, %v116
  %v591 = vadd.f32 %v590, %v117
  %v592 = vsel %vm474, %v118, 0.0
  %v593 = vadd.f32 %v591, %v592
  %594 = vadd.xlane.f32.xlu0 %v593
  %v595 = vpop.xlane.xlu0 %594
  %v596 = vadd.f32 %v119, %v120
  %v597 = vadd.f32 %v596, %v121
  %v598 = vadd.f32 %v597, %v122
  %v599 = vadd.f32 %v598, %v123
  %v600 = vadd.f32 %v599, %v124
  %v601 = vsel %vm474, %v125, 0.0
  %v602 = vadd.f32 %v600, %v601
  %603 = vadd.xlane.f32.xlu0 %v602
  %v604 = vpop.xlane.xlu0 %603
  %v605 = vadd.f32 %v126, %v127
  %v606 = vadd.f32 %v605, %v128
  %v607 = vadd.f32 %v606, %v129
  %v608 = vadd.f32 %v607, %v130
  %v609 = vadd.f32 %v608, %v131
  %v610 = vsel %vm474, %v132, 0.0
  %v611 = vadd.f32 %v609, %v610
  %612 = vadd.xlane.f32.xlu0 %v611
  %v613 = vpop.xlane.xlu0 %612
  %v614 = vadd.f32 %v133, %v134
  %v615 = vadd.f32 %v614, %v135
  %v616 = vadd.f32 %v615, %v136
  %v617 = vadd.f32 %v616, %v137
  %v618 = vadd.f32 %v617, %v138
  %v619 = vsel %vm474, %v139, 0.0
  %v620 = vadd.f32 %v618, %v619
  %621 = vadd.xlane.f32.xlu0 %v620
  %v622 = vpop.xlane.xlu0 %621
  %v623 = vadd.f32 %v140, %v141
  %v624 = vadd.f32 %v623, %v142
  %v625 = vadd.f32 %v624, %v143
  %v626 = vadd.f32 %v625, %v144
  %v627 = vadd.f32 %v626, %v145
  %v628 = vsel %vm474, %v146, 0.0
  %v629 = vadd.f32 %v627, %v628
  %630 = vadd.xlane.f32.xlu0 %v629
  %v631 = vpop.xlane.xlu0 %630
  %v632 = vadd.f32 %v147, %v148
  %v633 = vadd.f32 %v632, %v149
  %v634 = vadd.f32 %v633, %v150
  %v635 = vadd.f32 %v634, %v151
  %v636 = vadd.f32 %v635, %v152
  %v637 = vsel %vm474, %v153, 0.0
  %v638 = vadd.f32 %v636, %v637
  %639 = vadd.xlane.f32.xlu0 %v638
  %v640 = vpop.xlane.xlu0 %639
  %v641 = vadd.f32 %v154, %v155
  %v642 = vadd.f32 %v641, %v156
  %v643 = vadd.f32 %v642, %v157
  %v644 = vadd.f32 %v643, %v158
  %v645 = vadd.f32 %v644, %v159
  %v646 = vsel %vm474, %v160, 0.0
  %v647 = vadd.f32 %v645, %v646
  %648 = vadd.xlane.f32.xlu0 %v647
  %v649 = vpop.xlane.xlu0 %648
  %v650 = vadd.f32 %v161, %v162
  %v651 = vadd.f32 %v650, %v163
  %v652 = vadd.f32 %v651, %v164
  %v653 = vadd.f32 %v652, %v165
  %v654 = vadd.f32 %v653, %v166
  %v655 = vsel %vm474, %v167, 0.0
  %v656 = vadd.f32 %v654, %v655
  %657 = vadd.xlane.f32.xlu0 %v656
  %v658 = vpop.xlane.xlu0 %657
  %v659 = vadd.f32 %v168, %v169
  %v660 = vadd.f32 %v659, %v170
  %v661 = vadd.f32 %v660, %v171
  %v662 = vadd.f32 %v661, %v172
  %v663 = vadd.f32 %v662, %v173
  %v664 = vsel %vm474, %v174, 0.0
  %v665 = vadd.f32 %v663, %v664
  %666 = vadd.xlane.f32.xlu0 %v665
  %v667 = vpop.xlane.xlu0 %666
  %v668 = vadd.f32 %v175, %v176
  %v669 = vadd.f32 %v668, %v177
  %v670 = vadd.f32 %v669, %v178
  %v671 = vadd.f32 %v670, %v179
  %v672 = vadd.f32 %v671, %v180
  %v673 = vsel %vm474, %v181, 0.0
  %v674 = vadd.f32 %v672, %v673
  %675 = vadd.xlane.f32.xlu0 %v674
  %v676 = vpop.xlane.xlu0 %675
  %v677 = vadd.f32 %v182, %v183
  %v678 = vadd.f32 %v677, %v184
  %v679 = vadd.f32 %v678, %v185
  %v680 = vadd.f32 %v679, %v186
  %v681 = vadd.f32 %v680, %v187
  %v682 = vsel %vm474, %v188, 0.0
  %v683 = vadd.f32 %v681, %v682
  %684 = vadd.xlane.f32.xlu0 %v683
  %v685 = vpop.xlane.xlu0 %684
  %v686 = vadd.f32 %v189, %v190
  %v687 = vadd.f32 %v686, %v191
  %v688 = vadd.f32 %v687, %v192
  %v689 = vadd.f32 %v688, %v193
  %v690 = vadd.f32 %v689, %v194
  %v691 = vsel %vm474, %v195, 0.0
  %v692 = vadd.f32 %v690, %v691
  %693 = vadd.xlane.f32.xlu0 %v692
  %v694 = vpop.xlane.xlu0 %693
  %v695 = vadd.f32 %v196, %v197
  %v696 = vadd.f32 %v695, %v198
  %v697 = vadd.f32 %v696, %v199
  %v698 = vadd.f32 %v697, %v200
  %v699 = vadd.f32 %v698, %v201
  %v700 = vsel %vm474, %v202, 0.0
  %v701 = vadd.f32 %v699, %v700
  %702 = vadd.xlane.f32.xlu0 %v701
  %v703 = vpop.xlane.xlu0 %702
  %v704 = vadd.f32 %v203, %v204
  %v705 = vadd.f32 %v704, %v205
  %v706 = vadd.f32 %v705, %v206
  %v707 = vadd.f32 %v706, %v207
  %v708 = vadd.f32 %v707, %v208
  %v709 = vsel %vm474, %v209, 0.0
  %v710 = vadd.f32 %v708, %v709
  %711 = vadd.xlane.f32.xlu0 %v710
  %v712 = vpop.xlane.xlu0 %711
  %v713 = vadd.f32 %v210, %v211
  %v714 = vadd.f32 %v713, %v212
  %v715 = vadd.f32 %v714, %v213
  %v716 = vadd.f32 %v715, %v214
  %v717 = vadd.f32 %v716, %v215
  %v718 = vsel %vm474, %v216, 0.0
  %v719 = vadd.f32 %v717, %v718
  %720 = vadd.xlane.f32.xlu0 %v719
  %v721 = vpop.xlane.xlu0 %720
  %v722 = vadd.f32 %v217, %v218
  %v723 = vadd.f32 %v722, %v219
  %v724 = vadd.f32 %v723, %v220
  %v725 = vadd.f32 %v724, %v221
  %v726 = vadd.f32 %v725, %v222
  %v727 = vsel %vm474, %v223, 0.0
  %v728 = vadd.f32 %v726, %v727
  %729 = vadd.xlane.f32.xlu0 %v728
  %v730 = vpop.xlane.xlu0 %729
  %v731 = vadd.f32 %v224, %v225
  %v732 = vadd.f32 %v731, %v226
  %v733 = vadd.f32 %v732, %v227
  %v734 = vadd.f32 %v733, %v228
  %v735 = vadd.f32 %v734, %v229
  %v736 = vsel %vm474, %v230, 0.0
  %v737 = vadd.f32 %v735, %v736
  %738 = vadd.xlane.f32.xlu0 %v737
  %v739 = vpop.xlane.xlu0 %738
  %v740 = vadd.f32 %v231, %v232
  %v741 = vadd.f32 %v740, %v233
  %v742 = vadd.f32 %v741, %v234
  %v743 = vadd.f32 %v742, %v235
  %v744 = vadd.f32 %v743, %v236
  %v745 = vsel %vm474, %v237, 0.0
  %v746 = vadd.f32 %v744, %v745
  %747 = vadd.xlane.f32.xlu0 %v746
  %v748 = vpop.xlane.xlu0 %747
  %v749 = vadd.f32 %v238, %v239
  %v750 = vadd.f32 %v749, %v240
  %v751 = vadd.f32 %v750, %v241
  %v752 = vadd.f32 %v751, %v242
  %v753 = vadd.f32 %v752, %v243
  %v754 = vsel %vm474, %v244, 0.0
  %v755 = vadd.f32 %v753, %v754
  %756 = vadd.xlane.f32.xlu0 %v755
  %v757 = vpop.xlane.xlu0 %756
  %v758 = vadd.f32 %v245, %v246
  %v759 = vadd.f32 %v758, %v247
  %v760 = vadd.f32 %v759, %v248
  %v761 = vadd.f32 %v760, %v249
  %v762 = vadd.f32 %v761, %v250
  %v763 = vsel %vm474, %v251, 0.0
  %v764 = vadd.f32 %v762, %v763
  %765 = vadd.xlane.f32.xlu0 %v764
  %v766 = vpop.xlane.xlu0 %765
  %v767 = vadd.f32 %v252, %v253
  %v768 = vadd.f32 %v767, %v254
  %v769 = vadd.f32 %v768, %v255
  %v770 = vadd.f32 %v769, %v256
  %v771 = vadd.f32 %v770, %v257
  %v772 = vsel %vm474, %v258, 0.0
  %v773 = vadd.f32 %v771, %v772
  %774 = vadd.xlane.f32.xlu0 %v773
  %v775 = vpop.xlane.xlu0 %774
  %v776 = vadd.f32 %v259, %v260
  %v777 = vadd.f32 %v776, %v261
  %v778 = vadd.f32 %v777, %v262
  %v779 = vadd.f32 %v778, %v263
  %v780 = vadd.f32 %v779, %v264
  %v781 = vsel %vm474, %v265, 0.0
  %v782 = vadd.f32 %v780, %v781
  %783 = vadd.xlane.f32.xlu0 %v782
  %v784 = vpop.xlane.xlu0 %783
  %v785 = vadd.f32 %v266, %v267
  %v786 = vadd.f32 %v785, %v268
  %v787 = vadd.f32 %v786, %v269
  %v788 = vadd.f32 %v787, %v270
  %v789 = vadd.f32 %v788, %v271
  %v790 = vsel %vm474, %v272, 0.0
  %v791 = vadd.f32 %v789, %v790
  %792 = vadd.xlane.f32.xlu0 %v791
  %v793 = vpop.xlane.xlu0 %792
  %v794 = vadd.f32 %v273, %v274
  %v795 = vadd.f32 %v794, %v275
  %v796 = vadd.f32 %v795, %v276
  %v797 = vadd.f32 %v796, %v277
  %v798 = vadd.f32 %v797, %v278
  %v799 = vsel %vm474, %v279, 0.0
  %v800 = vadd.f32 %v798, %v799
  %801 = vadd.xlane.f32.xlu0 %v800
  %v802 = vpop.xlane.xlu0 %801
  %v803 = vadd.f32 %v280, %v281
  %v804 = vadd.f32 %v803, %v282
  %v805 = vadd.f32 %v804, %v283
  %v806 = vadd.f32 %v805, %v284
  %v807 = vadd.f32 %v806, %v285
  %v808 = vsel %vm474, %v286, 0.0
  %v809 = vadd.f32 %v807, %v808
  %810 = vadd.xlane.f32.xlu0 %v809
  %v811 = vpop.xlane.xlu0 %810
  %v812 = vadd.f32 %v287, %v288
  %v813 = vadd.f32 %v812, %v289
  %v814 = vadd.f32 %v813, %v290
  %v815 = vadd.f32 %v814, %v291
  %v816 = vadd.f32 %v815, %v292
  %v817 = vsel %vm474, %v293, 0.0
  %v818 = vadd.f32 %v816, %v817
  %819 = vadd.xlane.f32.xlu0 %v818
  %v820 = vpop.xlane.xlu0 %819
  %v821 = vadd.f32 %v294, %v295
  %v822 = vadd.f32 %v821, %v296
  %v823 = vadd.f32 %v822, %v297
  %v824 = vadd.f32 %v823, %v298
  %v825 = vadd.f32 %v824, %v299
  %v826 = vsel %vm474, %v300, 0.0
  %v827 = vadd.f32 %v825, %v826
  %828 = vadd.xlane.f32.xlu0 %v827
  %v829 = vpop.xlane.xlu0 %828
  %v830 = vadd.f32 %v301, %v302
  %v831 = vadd.f32 %v830, %v303
  %v832 = vadd.f32 %v831, %v304
  %v833 = vadd.f32 %v832, %v305
  %v834 = vadd.f32 %v833, %v306
  %v835 = vsel %vm474, %v307, 0.0
  %v836 = vadd.f32 %v834, %v835
  %837 = vadd.xlane.f32.xlu0 %v836
  %v838 = vpop.xlane.xlu0 %837
  %v839 = vadd.f32 %v308, %v309
  %v840 = vadd.f32 %v839, %v310
  %v841 = vadd.f32 %v840, %v311
  %v842 = vadd.f32 %v841, %v312
  %v843 = vadd.f32 %v842, %v313
  %v844 = vsel %vm474, %v314, 0.0
  %v845 = vadd.f32 %v843, %v844
  %846 = vadd.xlane.f32.xlu0 %v845
  %v847 = vpop.xlane.xlu0 %846
  %v848 = vadd.f32 %v315, %v316
  %v849 = vadd.f32 %v848, %v317
  %v850 = vadd.f32 %v849, %v318
  %v851 = vadd.f32 %v850, %v319
  %v852 = vadd.f32 %v851, %v320
  %v853 = vsel %vm474, %v321, 0.0
  %v854 = vadd.f32 %v852, %v853
  %855 = vadd.xlane.f32.xlu0 %v854
  %v856 = vpop.xlane.xlu0 %855
  %v857 = vadd.f32 %v322, %v323
  %v858 = vadd.f32 %v857, %v324
  %v859 = vadd.f32 %v858, %v325
  %v860 = vadd.f32 %v859, %v326
  %v861 = vadd.f32 %v860, %v327
  %v862 = vsel %vm474, %v328, 0.0
  %v863 = vadd.f32 %v861, %v862
  %864 = vadd.xlane.f32.xlu0 %v863
  %v865 = vpop.xlane.xlu0 %864
  %v866 = vadd.f32 %v329, %v330
  %v867 = vadd.f32 %v866, %v331
  %v868 = vadd.f32 %v867, %v332
  %v869 = vadd.f32 %v868, %v333
  %v870 = vadd.f32 %v869, %v334
  %v871 = vsel %vm474, %v335, 0.0
  %v872 = vadd.f32 %v870, %v871
  %873 = vadd.xlane.f32.xlu0 %v872
  %v874 = vpop.xlane.xlu0 %873
  %v875 = vadd.f32 %v336, %v337
  %v876 = vadd.f32 %v875, %v338
  %v877 = vadd.f32 %v876, %v339
  %v878 = vadd.f32 %v877, %v340
  %v879 = vadd.f32 %v878, %v341
  %v880 = vsel %vm474, %v342, 0.0
  %v881 = vadd.f32 %v879, %v880
  %882 = vadd.xlane.f32.xlu0 %v881
  %v883 = vpop.xlane.xlu0 %882
  %v884 = vadd.f32 %v343, %v344
  %v885 = vadd.f32 %v884, %v345
  %v886 = vadd.f32 %v885, %v346
  %v887 = vadd.f32 %v886, %v347
  %v888 = vadd.f32 %v887, %v348
  %v889 = vsel %vm474, %v349, 0.0
  %v890 = vadd.f32 %v888, %v889
  %891 = vadd.xlane.f32.xlu0 %v890
  %v892 = vpop.xlane.xlu0 %891
  %v893 = vadd.f32 %v350, %v351
  %v894 = vadd.f32 %v893, %v352
  %v895 = vadd.f32 %v894, %v353
  %v896 = vadd.f32 %v895, %v354
  %v897 = vadd.f32 %v896, %v355
  %v898 = vsel %vm474, %v356, 0.0
  %v899 = vadd.f32 %v897, %v898
  %900 = vadd.xlane.f32.xlu0 %v899
  %v901 = vpop.xlane.xlu0 %900
  %v902 = vadd.f32 %v357, %v358
  %v903 = vadd.f32 %v902, %v359
  %v904 = vadd.f32 %v903, %v360
  %v905 = vadd.f32 %v904, %v361
  %v906 = vadd.f32 %v905, %v362
  %v907 = vsel %vm474, %v363, 0.0
  %v908 = vadd.f32 %v906, %v907
  %909 = vadd.xlane.f32.xlu0 %v908
  %v910 = vpop.xlane.xlu0 %909
  %v911 = vadd.f32 %v364, %v365
  %v912 = vadd.f32 %v911, %v366
  %v913 = vadd.f32 %v912, %v367
  %v914 = vadd.f32 %v913, %v368
  %v915 = vadd.f32 %v914, %v369
  %v916 = vsel %vm474, %v370, 0.0
  %v917 = vadd.f32 %v915, %v916
  %918 = vadd.xlane.f32.xlu0 %v917
  %v919 = vpop.xlane.xlu0 %918
  %v920 = vadd.f32 %v371, %v372
  %v921 = vadd.f32 %v920, %v373
  %v922 = vadd.f32 %v921, %v374
  %v923 = vadd.f32 %v922, %v375
  %v924 = vadd.f32 %v923, %v376
  %v925 = vsel %vm474, %v377, 0.0
  %v926 = vadd.f32 %v924, %v925
  %927 = vadd.xlane.f32.xlu0 %v926
  %v928 = vpop.xlane.xlu0 %927
  %v929 = vadd.f32 %v378, %v379
  %v930 = vadd.f32 %v929, %v380
  %v931 = vadd.f32 %v930, %v381
  %v932 = vadd.f32 %v931, %v382
  %v933 = vadd.f32 %v932, %v383
  %v934 = vsel %vm474, %v384, 0.0
  %v935 = vadd.f32 %v933, %v934
  %936 = vadd.xlane.f32.xlu0 %v935
  %v937 = vpop.xlane.xlu0 %936
  %v938 = vadd.f32 %v385, %v386
  %v939 = vadd.f32 %v938, %v387
  %v940 = vadd.f32 %v939, %v388
  %v941 = vadd.f32 %v940, %v389
  %v942 = vadd.f32 %v941, %v390
  %v943 = vsel %vm474, %v391, 0.0
  %v944 = vadd.f32 %v942, %v943
  %945 = vadd.xlane.f32.xlu0 %v944
  %v946 = vpop.xlane.xlu0 %945
  %v947 = vadd.f32 %v392, %v393
  %v948 = vadd.f32 %v947, %v394
  %v949 = vadd.f32 %v948, %v395
  %v950 = vadd.f32 %v949, %v396
  %v951 = vadd.f32 %v950, %v397
  %v952 = vsel %vm474, %v398, 0.0
  %v953 = vadd.f32 %v951, %v952
  %954 = vadd.xlane.f32.xlu0 %v953
  %v955 = vpop.xlane.xlu0 %954
  %v956 = vadd.f32 %v399, %v400
  %v957 = vadd.f32 %v956, %v401
  %v958 = vadd.f32 %v957, %v402
  %v959 = vadd.f32 %v958, %v403
  %v960 = vadd.f32 %v959, %v404
  %v961 = vsel %vm474, %v405, 0.0
  %v962 = vadd.f32 %v960, %v961
  %963 = vadd.xlane.f32.xlu0 %v962
  %v964 = vpop.xlane.xlu0 %963
  %v965 = vadd.f32 %v406, %v407
  %v966 = vadd.f32 %v965, %v408
  %v967 = vadd.f32 %v966, %v409
  %v968 = vadd.f32 %v967, %v410
  %v969 = vadd.f32 %v968, %v411
  %v970 = vsel %vm474, %v412, 0.0
  %v971 = vadd.f32 %v969, %v970
  %972 = vadd.xlane.f32.xlu0 %v971
  %v973 = vpop.xlane.xlu0 %972
  %v974 = vadd.f32 %v413, %v414
  %v975 = vadd.f32 %v974, %v415
  %v976 = vadd.f32 %v975, %v416
  %v977 = vadd.f32 %v976, %v417
  %v978 = vadd.f32 %v977, %v418
  %v979 = vsel %vm474, %v419, 0.0
  %v980 = vadd.f32 %v978, %v979
  %981 = vadd.xlane.f32.xlu0 %v980
  %v982 = vpop.xlane.xlu0 %981
  %v983 = vadd.f32 %v420, %v421
  %v984 = vadd.f32 %v983, %v422
  %v985 = vadd.f32 %v984, %v423
  %v986 = vadd.f32 %v985, %v424
  %v987 = vadd.f32 %v986, %v425
  %v988 = vsel %vm474, %v426, 0.0
  %v989 = vadd.f32 %v987, %v988
  %990 = vadd.xlane.f32.xlu0 %v989
  %v991 = vpop.xlane.xlu0 %990
  %v992 = vadd.f32 %v427, %v428
  %v993 = vadd.f32 %v992, %v429
  %v994 = vadd.f32 %v993, %v430
  %v995 = vadd.f32 %v994, %v431
  %v996 = vadd.f32 %v995, %v432
  %v997 = vsel %vm474, %v433, 0.0
  %v998 = vadd.f32 %v996, %v997
  %999 = vadd.xlane.f32.xlu0 %v998
  %v1000 = vpop.xlane.xlu0 %999
  %v1001 = vadd.f32 %v434, %v435
  %v1002 = vadd.f32 %v1001, %v436
  %v1003 = vadd.f32 %v1002, %v437
  %v1004 = vadd.f32 %v1003, %v438
  %v1005 = vadd.f32 %v1004, %v439
  %v1006 = vsel %vm474, %v440, 0.0
  %v1007 = vadd.f32 %v1005, %v1006
  %1008 = vadd.xlane.f32.xlu0 %v1007
  %v1009 = vpop.xlane.xlu0 %1008
  %v1010 = vadd.f32 %v441, %v442
  %v1011 = vadd.f32 %v1010, %v443
  %v1012 = vadd.f32 %v1011, %v444
  %v1013 = vadd.f32 %v1012, %v445
  %v1014 = vadd.f32 %v1013, %v446
  %v1015 = vsel %vm474, %v447, 0.0
  %v1016 = vadd.f32 %v1014, %v1015
  %1017 = vadd.xlane.f32.xlu0 %v1016
  %v1018 = vpop.xlane.xlu0 %1017
  %v1019 = vadd.f32 %v448, %v449
  %v1020 = vadd.f32 %v1019, %v450
  %v1021 = vadd.f32 %v1020, %v451
  %v1022 = vadd.f32 %v1021, %v452
  %v1023 = vadd.f32 %v1022, %v453
  %v1024 = vsel %vm474, %v454, 0.0
  %v1025 = vadd.f32 %v1023, %v1024
  %1026 = vadd.xlane.f32.xlu0 %v1025
  %v1027 = vpop.xlane.xlu0 %1026
  %v1028 = vadd.f32 %v455, %v456
  %v1029 = vadd.f32 %v1028, %v457
  %v1030 = vadd.f32 %v1029, %v458
  %v1031 = vadd.f32 %v1030, %v459
  %v1032 = vadd.f32 %v1031, %v460
  %v1033 = vsel %vm474, %v461, 0.0
  %v1034 = vadd.f32 %v1032, %v1033
  %1035 = vadd.xlane.f32.xlu0 %v1034
  %v1036 = vpop.xlane.xlu0 %1035
  %v1037 = vadd.f32 %v462, %v463
  %v1038 = vadd.f32 %v1037, %v464
  %v1039 = vadd.f32 %v1038, %v465
  %v1040 = vadd.f32 %v1039, %v466
  %v1041 = vadd.f32 %v1040, %v467
  %v1042 = vsel %vm474, %v468, 0.0
  %v1043 = vadd.f32 %v1041, %v1042
  %1044 = vadd.xlane.f32.xlu0 %v1043
  %v1045 = vpop.xlane.xlu0 %1044
  %v1046 = vmul.f32 %v478, 0.0012755102
  %v1047 = vmul.f32 %v487, 0.0012755102
  %v1048 = vmul.f32 %v496, 0.0012755102
  %v1049 = vmul.f32 %v505, 0.0012755102
  %v1050 = vmul.f32 %v514, 0.0012755102
  %v1051 = vmul.f32 %v523, 0.0012755102
  %v1052 = vmul.f32 %v532, 0.0012755102
  %v1053 = vmul.f32 %v541, 0.0012755102
  %v1054 = vmul.f32 %v550, 0.0012755102
  %v1055 = vmul.f32 %v559, 0.0012755102
  %v1056 = vmul.f32 %v568, 0.0012755102
  %v1057 = vmul.f32 %v577, 0.0012755102
  %v1058 = vmul.f32 %v586, 0.0012755102
  %v1059 = vmul.f32 %v595, 0.0012755102
  %v1060 = vmul.f32 %v604, 0.0012755102
  %v1061 = vmul.f32 %v613, 0.0012755102
  %v1062 = vmul.f32 %v622, 0.0012755102
  %v1063 = vmul.f32 %v631, 0.0012755102
  %v1064 = vmul.f32 %v640, 0.0012755102
  %v1065 = vmul.f32 %v649, 0.0012755102
  %v1066 = vmul.f32 %v658, 0.0012755102
  %v1067 = vmul.f32 %v667, 0.0012755102
  %v1068 = vmul.f32 %v676, 0.0012755102
  %v1069 = vmul.f32 %v685, 0.0012755102
  %v1070 = vmul.f32 %v694, 0.0012755102
  %v1071 = vmul.f32 %v703, 0.0012755102
  %v1072 = vmul.f32 %v712, 0.0012755102
  %v1073 = vmul.f32 %v721, 0.0012755102
  %v1074 = vmul.f32 %v730, 0.0012755102
  %v1075 = vmul.f32 %v739, 0.0012755102
  %v1076 = vmul.f32 %v748, 0.0012755102
  %v1077 = vmul.f32 %v757, 0.0012755102
  %v1078 = vmul.f32 %v766, 0.0012755102
  %v1079 = vmul.f32 %v775, 0.0012755102
  %v1080 = vmul.f32 %v784, 0.0012755102
  %v1081 = vmul.f32 %v793, 0.0012755102
  %v1082 = vmul.f32 %v802, 0.0012755102
  %v1083 = vmul.f32 %v811, 0.0012755102
  %v1084 = vmul.f32 %v820, 0.0012755102
  %v1085 = vmul.f32 %v829, 0.0012755102
  %v1086 = vmul.f32 %v838, 0.0012755102
  %v1087 = vmul.f32 %v847, 0.0012755102
  %v1088 = vmul.f32 %v856, 0.0012755102
  %v1089 = vmul.f32 %v865, 0.0012755102
  %v1090 = vmul.f32 %v874, 0.0012755102
  %v1091 = vmul.f32 %v883, 0.0012755102
  %v1092 = vmul.f32 %v892, 0.0012755102
  %v1093 = vmul.f32 %v901, 0.0012755102
  %v1094 = vmul.f32 %v910, 0.0012755102
  %v1095 = vmul.f32 %v919, 0.0012755102
  %v1096 = vmul.f32 %v928, 0.0012755102
  %v1097 = vmul.f32 %v937, 0.0012755102
  %v1098 = vmul.f32 %v946, 0.0012755102
  %v1099 = vmul.f32 %v955, 0.0012755102
  %v1100 = vmul.f32 %v964, 0.0012755102
  %v1101 = vmul.f32 %v973, 0.0012755102
  %v1102 = vmul.f32 %v982, 0.0012755102
  %v1103 = vmul.f32 %v991, 0.0012755102
  %v1104 = vmul.f32 %v1000, 0.0012755102
  %v1105 = vmul.f32 %v1009, 0.0012755102
  %v1106 = vmul.f32 %v1018, 0.0012755102
  %v1107 = vmul.f32 %v1027, 0.0012755102
  %v1108 = vmul.f32 %v1036, 0.0012755102
  %v1109 = vmul.f32 %v1045, 0.0012755102
  %v1110 = vsub.f32 %v21, %v1046
  %v1111 = vsub.f32 %v22, %v1046
  %v1112 = vsub.f32 %v23, %v1046
  %v1113 = vsub.f32 %v24, %v1046
  %v1114 = vsub.f32 %v25, %v1046
  %v1115 = vsub.f32 %v26, %v1046
  %v1116 = vsub.f32 %v27, %v1046
  %v1117 = vsub.f32 %v28, %v1047
  %v1118 = vsub.f32 %v29, %v1047
  %v1119 = vsub.f32 %v30, %v1047
  %v1120 = vsub.f32 %v31, %v1047
  %v1121 = vsub.f32 %v32, %v1047
  %v1122 = vsub.f32 %v33, %v1047
  %v1123 = vsub.f32 %v34, %v1047
  %v1124 = vsub.f32 %v35, %v1048
  %v1125 = vsub.f32 %v36, %v1048
  %v1126 = vsub.f32 %v37, %v1048
  %v1127 = vsub.f32 %v38, %v1048
  %v1128 = vsub.f32 %v39, %v1048
  %v1129 = vsub.f32 %v40, %v1048
  %v1130 = vsub.f32 %v41, %v1048
  %v1131 = vsub.f32 %v42, %v1049
  %v1132 = vsub.f32 %v43, %v1049
  %v1133 = vsub.f32 %v44, %v1049
  %v1134 = vsub.f32 %v45, %v1049
  %v1135 = vsub.f32 %v46, %v1049
  %v1136 = vsub.f32 %v47, %v1049
  %v1137 = vsub.f32 %v48, %v1049
  %v1138 = vsub.f32 %v49, %v1050
  %v1139 = vsub.f32 %v50, %v1050
  %v1140 = vsub.f32 %v51, %v1050
  %v1141 = vsub.f32 %v52, %v1050
  %v1142 = vsub.f32 %v53, %v1050
  %v1143 = vsub.f32 %v54, %v1050
  %v1144 = vsub.f32 %v55, %v1050
  %v1145 = vsub.f32 %v56, %v1051
  %v1146 = vsub.f32 %v57, %v1051
  %v1147 = vsub.f32 %v58, %v1051
  %v1148 = vsub.f32 %v59, %v1051
  %v1149 = vsub.f32 %v60, %v1051
  %v1150 = vsub.f32 %v61, %v1051
  %v1151 = vsub.f32 %v62, %v1051
  %v1152 = vsub.f32 %v63, %v1052
  %v1153 = vsub.f32 %v64, %v1052
  %v1154 = vsub.f32 %v65, %v1052
  %v1155 = vsub.f32 %v66, %v1052
  %v1156 = vsub.f32 %v67, %v1052
  %v1157 = vsub.f32 %v68, %v1052
  %v1158 = vsub.f32 %v69, %v1052
  %v1159 = vsub.f32 %v70, %v1053
  %v1160 = vsub.f32 %v71, %v1053
  %v1161 = vsub.f32 %v72, %v1053
  %v1162 = vsub.f32 %v73, %v1053
  %v1163 = vsub.f32 %v74, %v1053
  %v1164 = vsub.f32 %v75, %v1053
  %v1165 = vsub.f32 %v76, %v1053
  %v1166 = vsub.f32 %v77, %v1054
  %v1167 = vsub.f32 %v78, %v1054
  %v1168 = vsub.f32 %v79, %v1054
  %v1169 = vsub.f32 %v80, %v1054
  %v1170 = vsub.f32 %v81, %v1054
  %v1171 = vsub.f32 %v82, %v1054
  %v1172 = vsub.f32 %v83, %v1054
  %v1173 = vsub.f32 %v84, %v1055
  %v1174 = vsub.f32 %v85, %v1055
  %v1175 = vsub.f32 %v86, %v1055
  %v1176 = vsub.f32 %v87, %v1055
  %v1177 = vsub.f32 %v88, %v1055
  %v1178 = vsub.f32 %v89, %v1055
  %v1179 = vsub.f32 %v90, %v1055
  %v1180 = vsub.f32 %v91, %v1056
  %v1181 = vsub.f32 %v92, %v1056
  %v1182 = vsub.f32 %v93, %v1056
  %v1183 = vsub.f32 %v94, %v1056
  %v1184 = vsub.f32 %v95, %v1056
  %v1185 = vsub.f32 %v96, %v1056
  %v1186 = vsub.f32 %v97, %v1056
  %v1187 = vsub.f32 %v98, %v1057
  %v1188 = vsub.f32 %v99, %v1057
  %v1189 = vsub.f32 %v100, %v1057
  %v1190 = vsub.f32 %v101, %v1057
  %v1191 = vsub.f32 %v102, %v1057
  %v1192 = vsub.f32 %v103, %v1057
  %v1193 = vsub.f32 %v104, %v1057
  %v1194 = vsub.f32 %v105, %v1058
  %v1195 = vsub.f32 %v106, %v1058
  %v1196 = vsub.f32 %v107, %v1058
  %v1197 = vsub.f32 %v108, %v1058
  %v1198 = vsub.f32 %v109, %v1058
  %v1199 = vsub.f32 %v110, %v1058
  %v1200 = vsub.f32 %v111, %v1058
  %v1201 = vsub.f32 %v112, %v1059
  %v1202 = vsub.f32 %v113, %v1059
  %v1203 = vsub.f32 %v114, %v1059
  %v1204 = vsub.f32 %v115, %v1059
  %v1205 = vsub.f32 %v116, %v1059
  %v1206 = vsub.f32 %v117, %v1059
  %v1207 = vsub.f32 %v118, %v1059
  %v1208 = vsub.f32 %v119, %v1060
  %v1209 = vsub.f32 %v120, %v1060
  %v1210 = vsub.f32 %v121, %v1060
  %v1211 = vsub.f32 %v122, %v1060
  %v1212 = vsub.f32 %v123, %v1060
  %v1213 = vsub.f32 %v124, %v1060
  %v1214 = vsub.f32 %v125, %v1060
  %v1215 = vsub.f32 %v126, %v1061
  %v1216 = vsub.f32 %v127, %v1061
  %v1217 = vsub.f32 %v128, %v1061
  %v1218 = vsub.f32 %v129, %v1061
  %v1219 = vsub.f32 %v130, %v1061
  %v1220 = vsub.f32 %v131, %v1061
  %v1221 = vsub.f32 %v132, %v1061
  %v1222 = vsub.f32 %v133, %v1062
  %v1223 = vsub.f32 %v134, %v1062
  %v1224 = vsub.f32 %v135, %v1062
  %v1225 = vsub.f32 %v136, %v1062
  %v1226 = vsub.f32 %v137, %v1062
  %v1227 = vsub.f32 %v138, %v1062
  %v1228 = vsub.f32 %v139, %v1062
  %v1229 = vsub.f32 %v140, %v1063
  %v1230 = vsub.f32 %v141, %v1063
  %v1231 = vsub.f32 %v142, %v1063
  %v1232 = vsub.f32 %v143, %v1063
  %v1233 = vsub.f32 %v144, %v1063
  %v1234 = vsub.f32 %v145, %v1063
  %v1235 = vsub.f32 %v146, %v1063
  %v1236 = vsub.f32 %v147, %v1064
  %v1237 = vsub.f32 %v148, %v1064
  %v1238 = vsub.f32 %v149, %v1064
  %v1239 = vsub.f32 %v150, %v1064
  %v1240 = vsub.f32 %v151, %v1064
  %v1241 = vsub.f32 %v152, %v1064
  %v1242 = vsub.f32 %v153, %v1064
  %v1243 = vsub.f32 %v154, %v1065
  %v1244 = vsub.f32 %v155, %v1065
  %v1245 = vsub.f32 %v156, %v1065
  %v1246 = vsub.f32 %v157, %v1065
  %v1247 = vsub.f32 %v158, %v1065
  %v1248 = vsub.f32 %v159, %v1065
  %v1249 = vsub.f32 %v160, %v1065
  %v1250 = vsub.f32 %v161, %v1066
  %v1251 = vsub.f32 %v162, %v1066
  %v1252 = vsub.f32 %v163, %v1066
  %v1253 = vsub.f32 %v164, %v1066
  %v1254 = vsub.f32 %v165, %v1066
  %v1255 = vsub.f32 %v166, %v1066
  %v1256 = vsub.f32 %v167, %v1066
  %v1257 = vsub.f32 %v168, %v1067
  %v1258 = vsub.f32 %v169, %v1067
  %v1259 = vsub.f32 %v170, %v1067
  %v1260 = vsub.f32 %v171, %v1067
  %v1261 = vsub.f32 %v172, %v1067
  %v1262 = vsub.f32 %v173, %v1067
  %v1263 = vsub.f32 %v174, %v1067
  %v1264 = vsub.f32 %v175, %v1068
  %v1265 = vsub.f32 %v176, %v1068
  %v1266 = vsub.f32 %v177, %v1068
  %v1267 = vsub.f32 %v178, %v1068
  %v1268 = vsub.f32 %v179, %v1068
  %v1269 = vsub.f32 %v180, %v1068
  %v1270 = vsub.f32 %v181, %v1068
  %v1271 = vsub.f32 %v182, %v1069
  %v1272 = vsub.f32 %v183, %v1069
  %v1273 = vsub.f32 %v184, %v1069
  %v1274 = vsub.f32 %v185, %v1069
  %v1275 = vsub.f32 %v186, %v1069
  %v1276 = vsub.f32 %v187, %v1069
  %v1277 = vsub.f32 %v188, %v1069
  %v1278 = vsub.f32 %v189, %v1070
  %v1279 = vsub.f32 %v190, %v1070
  %v1280 = vsub.f32 %v191, %v1070
  %v1281 = vsub.f32 %v192, %v1070
  %v1282 = vsub.f32 %v193, %v1070
  %v1283 = vsub.f32 %v194, %v1070
  %v1284 = vsub.f32 %v195, %v1070
  %v1285 = vsub.f32 %v196, %v1071
  %v1286 = vsub.f32 %v197, %v1071
  %v1287 = vsub.f32 %v198, %v1071
  %v1288 = vsub.f32 %v199, %v1071
  %v1289 = vsub.f32 %v200, %v1071
  %v1290 = vsub.f32 %v201, %v1071
  %v1291 = vsub.f32 %v202, %v1071
  %v1292 = vsub.f32 %v203, %v1072
  %v1293 = vsub.f32 %v204, %v1072
  %v1294 = vsub.f32 %v205, %v1072
  %v1295 = vsub.f32 %v206, %v1072
  %v1296 = vsub.f32 %v207, %v1072
  %v1297 = vsub.f32 %v208, %v1072
  %v1298 = vsub.f32 %v209, %v1072
  %v1299 = vsub.f32 %v210, %v1073
  %v1300 = vsub.f32 %v211, %v1073
  %v1301 = vsub.f32 %v212, %v1073
  %v1302 = vsub.f32 %v213, %v1073
  %v1303 = vsub.f32 %v214, %v1073
  %v1304 = vsub.f32 %v215, %v1073
  %v1305 = vsub.f32 %v216, %v1073
  %v1306 = vsub.f32 %v217, %v1074
  %v1307 = vsub.f32 %v218, %v1074
  %v1308 = vsub.f32 %v219, %v1074
  %v1309 = vsub.f32 %v220, %v1074
  %v1310 = vsub.f32 %v221, %v1074
  %v1311 = vsub.f32 %v222, %v1074
  %v1312 = vsub.f32 %v223, %v1074
  %v1313 = vsub.f32 %v224, %v1075
  %v1314 = vsub.f32 %v225, %v1075
  %v1315 = vsub.f32 %v226, %v1075
  %v1316 = vsub.f32 %v227, %v1075
  %v1317 = vsub.f32 %v228, %v1075
  %v1318 = vsub.f32 %v229, %v1075
  %v1319 = vsub.f32 %v230, %v1075
  %v1320 = vsub.f32 %v231, %v1076
  %v1321 = vsub.f32 %v232, %v1076
  %v1322 = vsub.f32 %v233, %v1076
  %v1323 = vsub.f32 %v234, %v1076
  %v1324 = vsub.f32 %v235, %v1076
  %v1325 = vsub.f32 %v236, %v1076
  %v1326 = vsub.f32 %v237, %v1076
  %v1327 = vsub.f32 %v238, %v1077
  %v1328 = vsub.f32 %v239, %v1077
  %v1329 = vsub.f32 %v240, %v1077
  %v1330 = vsub.f32 %v241, %v1077
  %v1331 = vsub.f32 %v242, %v1077
  %v1332 = vsub.f32 %v243, %v1077
  %v1333 = vsub.f32 %v244, %v1077
  %v1334 = vsub.f32 %v245, %v1078
  %v1335 = vsub.f32 %v246, %v1078
  %v1336 = vsub.f32 %v247, %v1078
  %v1337 = vsub.f32 %v248, %v1078
  %v1338 = vsub.f32 %v249, %v1078
  %v1339 = vsub.f32 %v250, %v1078
  %v1340 = vsub.f32 %v251, %v1078
  %v1341 = vsub.f32 %v252, %v1079
  %v1342 = vsub.f32 %v253, %v1079
  %v1343 = vsub.f32 %v254, %v1079
  %v1344 = vsub.f32 %v255, %v1079
  %v1345 = vsub.f32 %v256, %v1079
  %v1346 = vsub.f32 %v257, %v1079
  %v1347 = vsub.f32 %v258, %v1079
  %v1348 = vsub.f32 %v259, %v1080
  %v1349 = vsub.f32 %v260, %v1080
  %v1350 = vsub.f32 %v261, %v1080
  %v1351 = vsub.f32 %v262, %v1080
  %v1352 = vsub.f32 %v263, %v1080
  %v1353 = vsub.f32 %v264, %v1080
  %v1354 = vsub.f32 %v265, %v1080
  %v1355 = vsub.f32 %v266, %v1081
  %v1356 = vsub.f32 %v267, %v1081
  %v1357 = vsub.f32 %v268, %v1081
  %v1358 = vsub.f32 %v269, %v1081
  %v1359 = vsub.f32 %v270, %v1081
  %v1360 = vsub.f32 %v271, %v1081
  %v1361 = vsub.f32 %v272, %v1081
  %v1362 = vsub.f32 %v273, %v1082
  %v1363 = vsub.f32 %v274, %v1082
  %v1364 = vsub.f32 %v275, %v1082
  %v1365 = vsub.f32 %v276, %v1082
  %v1366 = vsub.f32 %v277, %v1082
  %v1367 = vsub.f32 %v278, %v1082
  %v1368 = vsub.f32 %v279, %v1082
  %v1369 = vsub.f32 %v280, %v1083
  %v1370 = vsub.f32 %v281, %v1083
  %v1371 = vsub.f32 %v282, %v1083
  %v1372 = vsub.f32 %v283, %v1083
  %v1373 = vsub.f32 %v284, %v1083
  %v1374 = vsub.f32 %v285, %v1083
  %v1375 = vsub.f32 %v286, %v1083
  %v1376 = vsub.f32 %v287, %v1084
  %v1377 = vsub.f32 %v288, %v1084
  %v1378 = vsub.f32 %v289, %v1084
  %v1379 = vsub.f32 %v290, %v1084
  %v1380 = vsub.f32 %v291, %v1084
  %v1381 = vsub.f32 %v292, %v1084
  %v1382 = vsub.f32 %v293, %v1084
  %v1383 = vsub.f32 %v294, %v1085
  %v1384 = vsub.f32 %v295, %v1085
  %v1385 = vsub.f32 %v296, %v1085
  %v1386 = vsub.f32 %v297, %v1085
  %v1387 = vsub.f32 %v298, %v1085
  %v1388 = vsub.f32 %v299, %v1085
  %v1389 = vsub.f32 %v300, %v1085
  %v1390 = vsub.f32 %v301, %v1086
  %v1391 = vsub.f32 %v302, %v1086
  %v1392 = vsub.f32 %v303, %v1086
  %v1393 = vsub.f32 %v304, %v1086
  %v1394 = vsub.f32 %v305, %v1086
  %v1395 = vsub.f32 %v306, %v1086
  %v1396 = vsub.f32 %v307, %v1086
  %v1397 = vsub.f32 %v308, %v1087
  %v1398 = vsub.f32 %v309, %v1087
  %v1399 = vsub.f32 %v310, %v1087
  %v1400 = vsub.f32 %v311, %v1087
  %v1401 = vsub.f32 %v312, %v1087
  %v1402 = vsub.f32 %v313, %v1087
  %v1403 = vsub.f32 %v314, %v1087
  %v1404 = vsub.f32 %v315, %v1088
  %v1405 = vsub.f32 %v316, %v1088
  %v1406 = vsub.f32 %v317, %v1088
  %v1407 = vsub.f32 %v318, %v1088
  %v1408 = vsub.f32 %v319, %v1088
  %v1409 = vsub.f32 %v320, %v1088
  %v1410 = vsub.f32 %v321, %v1088
  %v1411 = vsub.f32 %v322, %v1089
  %v1412 = vsub.f32 %v323, %v1089
  %v1413 = vsub.f32 %v324, %v1089
  %v1414 = vsub.f32 %v325, %v1089
  %v1415 = vsub.f32 %v326, %v1089
  %v1416 = vsub.f32 %v327, %v1089
  %v1417 = vsub.f32 %v328, %v1089
  %v1418 = vsub.f32 %v329, %v1090
  %v1419 = vsub.f32 %v330, %v1090
  %v1420 = vsub.f32 %v331, %v1090
  %v1421 = vsub.f32 %v332, %v1090
  %v1422 = vsub.f32 %v333, %v1090
  %v1423 = vsub.f32 %v334, %v1090
  %v1424 = vsub.f32 %v335, %v1090
  %v1425 = vsub.f32 %v336, %v1091
  %v1426 = vsub.f32 %v337, %v1091
  %v1427 = vsub.f32 %v338, %v1091
  %v1428 = vsub.f32 %v339, %v1091
  %v1429 = vsub.f32 %v340, %v1091
  %v1430 = vsub.f32 %v341, %v1091
  %v1431 = vsub.f32 %v342, %v1091
  %v1432 = vsub.f32 %v343, %v1092
  %v1433 = vsub.f32 %v344, %v1092
  %v1434 = vsub.f32 %v345, %v1092
  %v1435 = vsub.f32 %v346, %v1092
  %v1436 = vsub.f32 %v347, %v1092
  %v1437 = vsub.f32 %v348, %v1092
  %v1438 = vsub.f32 %v349, %v1092
  %v1439 = vsub.f32 %v350, %v1093
  %v1440 = vsub.f32 %v351, %v1093
  %v1441 = vsub.f32 %v352, %v1093
  %v1442 = vsub.f32 %v353, %v1093
  %v1443 = vsub.f32 %v354, %v1093
  %v1444 = vsub.f32 %v355, %v1093
  %v1445 = vsub.f32 %v356, %v1093
  %v1446 = vsub.f32 %v357, %v1094
  %v1447 = vsub.f32 %v358, %v1094
  %v1448 = vsub.f32 %v359, %v1094
  %v1449 = vsub.f32 %v360, %v1094
  %v1450 = vsub.f32 %v361, %v1094
  %v1451 = vsub.f32 %v362, %v1094
  %v1452 = vsub.f32 %v363, %v1094
  %v1453 = vsub.f32 %v364, %v1095
  %v1454 = vsub.f32 %v365, %v1095
  %v1455 = vsub.f32 %v366, %v1095
  %v1456 = vsub.f32 %v367, %v1095
  %v1457 = vsub.f32 %v368, %v1095
  %v1458 = vsub.f32 %v369, %v1095
  %v1459 = vsub.f32 %v370, %v1095
  %v1460 = vsub.f32 %v371, %v1096
  %v1461 = vsub.f32 %v372, %v1096
  %v1462 = vsub.f32 %v373, %v1096
  %v1463 = vsub.f32 %v374, %v1096
  %v1464 = vsub.f32 %v375, %v1096
  %v1465 = vsub.f32 %v376, %v1096
  %v1466 = vsub.f32 %v377, %v1096
  %v1467 = vsub.f32 %v378, %v1097
  %v1468 = vsub.f32 %v379, %v1097
  %v1469 = vsub.f32 %v380, %v1097
  %v1470 = vsub.f32 %v381, %v1097
  %v1471 = vsub.f32 %v382, %v1097
  %v1472 = vsub.f32 %v383, %v1097
  %v1473 = vsub.f32 %v384, %v1097
  %v1474 = vsub.f32 %v385, %v1098
  %v1475 = vsub.f32 %v386, %v1098
  %v1476 = vsub.f32 %v387, %v1098
  %v1477 = vsub.f32 %v388, %v1098
  %v1478 = vsub.f32 %v389, %v1098
  %v1479 = vsub.f32 %v390, %v1098
  %v1480 = vsub.f32 %v391, %v1098
  %v1481 = vsub.f32 %v392, %v1099
  %v1482 = vsub.f32 %v393, %v1099
  %v1483 = vsub.f32 %v394, %v1099
  %v1484 = vsub.f32 %v395, %v1099
  %v1485 = vsub.f32 %v396, %v1099
  %v1486 = vsub.f32 %v397, %v1099
  %v1487 = vsub.f32 %v398, %v1099
  %v1488 = vsub.f32 %v399, %v1100
  %v1489 = vsub.f32 %v400, %v1100
  %v1490 = vsub.f32 %v401, %v1100
  %v1491 = vsub.f32 %v402, %v1100
  %v1492 = vsub.f32 %v403, %v1100
  %v1493 = vsub.f32 %v404, %v1100
  %v1494 = vsub.f32 %v405, %v1100
  %v1495 = vsub.f32 %v406, %v1101
  %v1496 = vsub.f32 %v407, %v1101
  %v1497 = vsub.f32 %v408, %v1101
  %v1498 = vsub.f32 %v409, %v1101
  %v1499 = vsub.f32 %v410, %v1101
  %v1500 = vsub.f32 %v411, %v1101
  %v1501 = vsub.f32 %v412, %v1101
  %v1502 = vsub.f32 %v413, %v1102
  %v1503 = vsub.f32 %v414, %v1102
  %v1504 = vsub.f32 %v415, %v1102
  %v1505 = vsub.f32 %v416, %v1102
  %v1506 = vsub.f32 %v417, %v1102
  %v1507 = vsub.f32 %v418, %v1102
  %v1508 = vsub.f32 %v419, %v1102
  %v1509 = vsub.f32 %v420, %v1103
  %v1510 = vsub.f32 %v421, %v1103
  %v1511 = vsub.f32 %v422, %v1103
  %v1512 = vsub.f32 %v423, %v1103
  %v1513 = vsub.f32 %v424, %v1103
  %v1514 = vsub.f32 %v425, %v1103
  %v1515 = vsub.f32 %v426, %v1103
  %v1516 = vsub.f32 %v427, %v1104
  %v1517 = vsub.f32 %v428, %v1104
  %v1518 = vsub.f32 %v429, %v1104
  %v1519 = vsub.f32 %v430, %v1104
  %v1520 = vsub.f32 %v431, %v1104
  %v1521 = vsub.f32 %v432, %v1104
  %v1522 = vsub.f32 %v433, %v1104
  %v1523 = vsub.f32 %v434, %v1105
  %v1524 = vsub.f32 %v435, %v1105
  %v1525 = vsub.f32 %v436, %v1105
  %v1526 = vsub.f32 %v437, %v1105
  %v1527 = vsub.f32 %v438, %v1105
  %v1528 = vsub.f32 %v439, %v1105
  %v1529 = vsub.f32 %v440, %v1105
  %v1530 = vsub.f32 %v441, %v1106
  %v1531 = vsub.f32 %v442, %v1106
  %v1532 = vsub.f32 %v443, %v1106
  %v1533 = vsub.f32 %v444, %v1106
  %v1534 = vsub.f32 %v445, %v1106
  %v1535 = vsub.f32 %v446, %v1106
  %v1536 = vsub.f32 %v447, %v1106
  %v1537 = vsub.f32 %v448, %v1107
  %v1538 = vsub.f32 %v449, %v1107
  %v1539 = vsub.f32 %v450, %v1107
  %v1540 = vsub.f32 %v451, %v1107
  %v1541 = vsub.f32 %v452, %v1107
  %v1542 = vsub.f32 %v453, %v1107
  %v1543 = vsub.f32 %v454, %v1107
  %v1544 = vsub.f32 %v455, %v1108
  %v1545 = vsub.f32 %v456, %v1108
  %v1546 = vsub.f32 %v457, %v1108
  %v1547 = vsub.f32 %v458, %v1108
  %v1548 = vsub.f32 %v459, %v1108
  %v1549 = vsub.f32 %v460, %v1108
  %v1550 = vsub.f32 %v461, %v1108
  %v1551 = vsub.f32 %v462, %v1109
  %v1552 = vsub.f32 %v463, %v1109
  %v1553 = vsub.f32 %v464, %v1109
  %v1554 = vsub.f32 %v465, %v1109
  %v1555 = vsub.f32 %v466, %v1109
  %v1556 = vsub.f32 %v467, %v1109
  %v1557 = vsub.f32 %v468, %v1109
  %v1558 = vmul.f32 %v1110, %v1110
  %v1559 = vmul.f32 %v1111, %v1111
  %v1560 = vmul.f32 %v1112, %v1112
  %v1561 = vmul.f32 %v1113, %v1113
  %v1562 = vmul.f32 %v1114, %v1114
  %v1563 = vmul.f32 %v1115, %v1115
  %v1564 = vmul.f32 %v1116, %v1116
  %v1565 = vmul.f32 %v1117, %v1117
  %v1566 = vmul.f32 %v1118, %v1118
  %v1567 = vmul.f32 %v1119, %v1119
  %v1568 = vmul.f32 %v1120, %v1120
  %v1569 = vmul.f32 %v1121, %v1121
  %v1570 = vmul.f32 %v1122, %v1122
  %v1571 = vmul.f32 %v1123, %v1123
  %v1572 = vmul.f32 %v1124, %v1124
  %v1573 = vmul.f32 %v1125, %v1125
  %v1574 = vmul.f32 %v1126, %v1126
  %v1575 = vmul.f32 %v1127, %v1127
  %v1576 = vmul.f32 %v1128, %v1128
  %v1577 = vmul.f32 %v1129, %v1129
  %v1578 = vmul.f32 %v1130, %v1130
  %v1579 = vmul.f32 %v1131, %v1131
  %v1580 = vmul.f32 %v1132, %v1132
  %v1581 = vmul.f32 %v1133, %v1133
  %v1582 = vmul.f32 %v1134, %v1134
  %v1583 = vmul.f32 %v1135, %v1135
  %v1584 = vmul.f32 %v1136, %v1136
  %v1585 = vmul.f32 %v1137, %v1137
  %v1586 = vmul.f32 %v1138, %v1138
  %v1587 = vmul.f32 %v1139, %v1139
  %v1588 = vmul.f32 %v1140, %v1140
  %v1589 = vmul.f32 %v1141, %v1141
  %v1590 = vmul.f32 %v1142, %v1142
  %v1591 = vmul.f32 %v1143, %v1143
  %v1592 = vmul.f32 %v1144, %v1144
  %v1593 = vmul.f32 %v1145, %v1145
  %v1594 = vmul.f32 %v1146, %v1146
  %v1595 = vmul.f32 %v1147, %v1147
  %v1596 = vmul.f32 %v1148, %v1148
  %v1597 = vmul.f32 %v1149, %v1149
  %v1598 = vmul.f32 %v1150, %v1150
  %v1599 = vmul.f32 %v1151, %v1151
  %v1600 = vmul.f32 %v1152, %v1152
  %v1601 = vmul.f32 %v1153, %v1153
  %v1602 = vmul.f32 %v1154, %v1154
  %v1603 = vmul.f32 %v1155, %v1155
  %v1604 = vmul.f32 %v1156, %v1156
  %v1605 = vmul.f32 %v1157, %v1157
  %v1606 = vmul.f32 %v1158, %v1158
  %v1607 = vmul.f32 %v1159, %v1159
  %v1608 = vmul.f32 %v1160, %v1160
  %v1609 = vmul.f32 %v1161, %v1161
  %v1610 = vmul.f32 %v1162, %v1162
  %v1611 = vmul.f32 %v1163, %v1163
  %v1612 = vmul.f32 %v1164, %v1164
  %v1613 = vmul.f32 %v1165, %v1165
  %v1614 = vmul.f32 %v1166, %v1166
  %v1615 = vmul.f32 %v1167, %v1167
  %v1616 = vmul.f32 %v1168, %v1168
  %v1617 = vmul.f32 %v1169, %v1169
  %v1618 = vmul.f32 %v1170, %v1170
  %v1619 = vmul.f32 %v1171, %v1171
  %v1620 = vmul.f32 %v1172, %v1172
  %v1621 = vmul.f32 %v1173, %v1173
  %v1622 = vmul.f32 %v1174, %v1174
  %v1623 = vmul.f32 %v1175, %v1175
  %v1624 = vmul.f32 %v1176, %v1176
  %v1625 = vmul.f32 %v1177, %v1177
  %v1626 = vmul.f32 %v1178, %v1178
  %v1627 = vmul.f32 %v1179, %v1179
  %v1628 = vmul.f32 %v1180, %v1180
  %v1629 = vmul.f32 %v1181, %v1181
  %v1630 = vmul.f32 %v1182, %v1182
  %v1631 = vmul.f32 %v1183, %v1183
  %v1632 = vmul.f32 %v1184, %v1184
  %v1633 = vmul.f32 %v1185, %v1185
  %v1634 = vmul.f32 %v1186, %v1186
  %v1635 = vmul.f32 %v1187, %v1187
  %v1636 = vmul.f32 %v1188, %v1188
  %v1637 = vmul.f32 %v1189, %v1189
  %v1638 = vmul.f32 %v1190, %v1190
  %v1639 = vmul.f32 %v1191, %v1191
  %v1640 = vmul.f32 %v1192, %v1192
  %v1641 = vmul.f32 %v1193, %v1193
  %v1642 = vmul.f32 %v1194, %v1194
  %v1643 = vmul.f32 %v1195, %v1195
  %v1644 = vmul.f32 %v1196, %v1196
  %v1645 = vmul.f32 %v1197, %v1197
  %v1646 = vmul.f32 %v1198, %v1198
  %v1647 = vmul.f32 %v1199, %v1199
  %v1648 = vmul.f32 %v1200, %v1200
  %v1649 = vmul.f32 %v1201, %v1201
  %v1650 = vmul.f32 %v1202, %v1202
  %v1651 = vmul.f32 %v1203, %v1203
  %v1652 = vmul.f32 %v1204, %v1204
  %v1653 = vmul.f32 %v1205, %v1205
  %v1654 = vmul.f32 %v1206, %v1206
  %v1655 = vmul.f32 %v1207, %v1207
  %v1656 = vmul.f32 %v1208, %v1208
  %v1657 = vmul.f32 %v1209, %v1209
  %v1658 = vmul.f32 %v1210, %v1210
  %v1659 = vmul.f32 %v1211, %v1211
  %v1660 = vmul.f32 %v1212, %v1212
  %v1661 = vmul.f32 %v1213, %v1213
  %v1662 = vmul.f32 %v1214, %v1214
  %v1663 = vmul.f32 %v1215, %v1215
  %v1664 = vmul.f32 %v1216, %v1216
  %v1665 = vmul.f32 %v1217, %v1217
  %v1666 = vmul.f32 %v1218, %v1218
  %v1667 = vmul.f32 %v1219, %v1219
  %v1668 = vmul.f32 %v1220, %v1220
  %v1669 = vmul.f32 %v1221, %v1221
  %v1670 = vmul.f32 %v1222, %v1222
  %v1671 = vmul.f32 %v1223, %v1223
  %v1672 = vmul.f32 %v1224, %v1224
  %v1673 = vmul.f32 %v1225, %v1225
  %v1674 = vmul.f32 %v1226, %v1226
  %v1675 = vmul.f32 %v1227, %v1227
  %v1676 = vmul.f32 %v1228, %v1228
  %v1677 = vmul.f32 %v1229, %v1229
  %v1678 = vmul.f32 %v1230, %v1230
  %v1679 = vmul.f32 %v1231, %v1231
  %v1680 = vmul.f32 %v1232, %v1232
  %v1681 = vmul.f32 %v1233, %v1233
  %v1682 = vmul.f32 %v1234, %v1234
  %v1683 = vmul.f32 %v1235, %v1235
  %v1684 = vmul.f32 %v1236, %v1236
  %v1685 = vmul.f32 %v1237, %v1237
  %v1686 = vmul.f32 %v1238, %v1238
  %v1687 = vmul.f32 %v1239, %v1239
  %v1688 = vmul.f32 %v1240, %v1240
  %v1689 = vmul.f32 %v1241, %v1241
  %v1690 = vmul.f32 %v1242, %v1242
  %v1691 = vmul.f32 %v1243, %v1243
  %v1692 = vmul.f32 %v1244, %v1244
  %v1693 = vmul.f32 %v1245, %v1245
  %v1694 = vmul.f32 %v1246, %v1246
  %v1695 = vmul.f32 %v1247, %v1247
  %v1696 = vmul.f32 %v1248, %v1248
  %v1697 = vmul.f32 %v1249, %v1249
  %v1698 = vmul.f32 %v1250, %v1250
  %v1699 = vmul.f32 %v1251, %v1251
  %v1700 = vmul.f32 %v1252, %v1252
  %v1701 = vmul.f32 %v1253, %v1253
  %v1702 = vmul.f32 %v1254, %v1254
  %v1703 = vmul.f32 %v1255, %v1255
  %v1704 = vmul.f32 %v1256, %v1256
  %v1705 = vmul.f32 %v1257, %v1257
  %v1706 = vmul.f32 %v1258, %v1258
  %v1707 = vmul.f32 %v1259, %v1259
  %v1708 = vmul.f32 %v1260, %v1260
  %v1709 = vmul.f32 %v1261, %v1261
  %v1710 = vmul.f32 %v1262, %v1262
  %v1711 = vmul.f32 %v1263, %v1263
  %v1712 = vmul.f32 %v1264, %v1264
  %v1713 = vmul.f32 %v1265, %v1265
  %v1714 = vmul.f32 %v1266, %v1266
  %v1715 = vmul.f32 %v1267, %v1267
  %v1716 = vmul.f32 %v1268, %v1268
  %v1717 = vmul.f32 %v1269, %v1269
  %v1718 = vmul.f32 %v1270, %v1270
  %v1719 = vmul.f32 %v1271, %v1271
  %v1720 = vmul.f32 %v1272, %v1272
  %v1721 = vmul.f32 %v1273, %v1273
  %v1722 = vmul.f32 %v1274, %v1274
  %v1723 = vmul.f32 %v1275, %v1275
  %v1724 = vmul.f32 %v1276, %v1276
  %v1725 = vmul.f32 %v1277, %v1277
  %v1726 = vmul.f32 %v1278, %v1278
  %v1727 = vmul.f32 %v1279, %v1279
  %v1728 = vmul.f32 %v1280, %v1280
  %v1729 = vmul.f32 %v1281, %v1281
  %v1730 = vmul.f32 %v1282, %v1282
  %v1731 = vmul.f32 %v1283, %v1283
  %v1732 = vmul.f32 %v1284, %v1284
  %v1733 = vmul.f32 %v1285, %v1285
  %v1734 = vmul.f32 %v1286, %v1286
  %v1735 = vmul.f32 %v1287, %v1287
  %v1736 = vmul.f32 %v1288, %v1288
  %v1737 = vmul.f32 %v1289, %v1289
  %v1738 = vmul.f32 %v1290, %v1290
  %v1739 = vmul.f32 %v1291, %v1291
  %v1740 = vmul.f32 %v1292, %v1292
  %v1741 = vmul.f32 %v1293, %v1293
  %v1742 = vmul.f32 %v1294, %v1294
  %v1743 = vmul.f32 %v1295, %v1295
  %v1744 = vmul.f32 %v1296, %v1296
  %v1745 = vmul.f32 %v1297, %v1297
  %v1746 = vmul.f32 %v1298, %v1298
  %v1747 = vmul.f32 %v1299, %v1299
  %v1748 = vmul.f32 %v1300, %v1300
  %v1749 = vmul.f32 %v1301, %v1301
  %v1750 = vmul.f32 %v1302, %v1302
  %v1751 = vmul.f32 %v1303, %v1303
  %v1752 = vmul.f32 %v1304, %v1304
  %v1753 = vmul.f32 %v1305, %v1305
  %v1754 = vmul.f32 %v1306, %v1306
  %v1755 = vmul.f32 %v1307, %v1307
  %v1756 = vmul.f32 %v1308, %v1308
  %v1757 = vmul.f32 %v1309, %v1309
  %v1758 = vmul.f32 %v1310, %v1310
  %v1759 = vmul.f32 %v1311, %v1311
  %v1760 = vmul.f32 %v1312, %v1312
  %v1761 = vmul.f32 %v1313, %v1313
  %v1762 = vmul.f32 %v1314, %v1314
  %v1763 = vmul.f32 %v1315, %v1315
  %v1764 = vmul.f32 %v1316, %v1316
  %v1765 = vmul.f32 %v1317, %v1317
  %v1766 = vmul.f32 %v1318, %v1318
  %v1767 = vmul.f32 %v1319, %v1319
  %v1768 = vmul.f32 %v1320, %v1320
  %v1769 = vmul.f32 %v1321, %v1321
  %v1770 = vmul.f32 %v1322, %v1322
  %v1771 = vmul.f32 %v1323, %v1323
  %v1772 = vmul.f32 %v1324, %v1324
  %v1773 = vmul.f32 %v1325, %v1325
  %v1774 = vmul.f32 %v1326, %v1326
  %v1775 = vmul.f32 %v1327, %v1327
  %v1776 = vmul.f32 %v1328, %v1328
  %v1777 = vmul.f32 %v1329, %v1329
  %v1778 = vmul.f32 %v1330, %v1330
  %v1779 = vmul.f32 %v1331, %v1331
  %v1780 = vmul.f32 %v1332, %v1332
  %v1781 = vmul.f32 %v1333, %v1333
  %v1782 = vmul.f32 %v1334, %v1334
  %v1783 = vmul.f32 %v1335, %v1335
  %v1784 = vmul.f32 %v1336, %v1336
  %v1785 = vmul.f32 %v1337, %v1337
  %v1786 = vmul.f32 %v1338, %v1338
  %v1787 = vmul.f32 %v1339, %v1339
  %v1788 = vmul.f32 %v1340, %v1340
  %v1789 = vmul.f32 %v1341, %v1341
  %v1790 = vmul.f32 %v1342, %v1342
  %v1791 = vmul.f32 %v1343, %v1343
  %v1792 = vmul.f32 %v1344, %v1344
  %v1793 = vmul.f32 %v1345, %v1345
  %v1794 = vmul.f32 %v1346, %v1346
  %v1795 = vmul.f32 %v1347, %v1347
  %v1796 = vmul.f32 %v1348, %v1348
  %v1797 = vmul.f32 %v1349, %v1349
  %v1798 = vmul.f32 %v1350, %v1350
  %v1799 = vmul.f32 %v1351, %v1351
  %v1800 = vmul.f32 %v1352, %v1352
  %v1801 = vmul.f32 %v1353, %v1353
  %v1802 = vmul.f32 %v1354, %v1354
  %v1803 = vmul.f32 %v1355, %v1355
  %v1804 = vmul.f32 %v1356, %v1356
  %v1805 = vmul.f32 %v1357, %v1357
  %v1806 = vmul.f32 %v1358, %v1358
  %v1807 = vmul.f32 %v1359, %v1359
  %v1808 = vmul.f32 %v1360, %v1360
  %v1809 = vmul.f32 %v1361, %v1361
  %v1810 = vmul.f32 %v1362, %v1362
  %v1811 = vmul.f32 %v1363, %v1363
  %v1812 = vmul.f32 %v1364, %v1364
  %v1813 = vmul.f32 %v1365, %v1365
  %v1814 = vmul.f32 %v1366, %v1366
  %v1815 = vmul.f32 %v1367, %v1367
  %v1816 = vmul.f32 %v1368, %v1368
  %v1817 = vmul.f32 %v1369, %v1369
  %v1818 = vmul.f32 %v1370, %v1370
  %v1819 = vmul.f32 %v1371, %v1371
  %v1820 = vmul.f32 %v1372, %v1372
  %v1821 = vmul.f32 %v1373, %v1373
  %v1822 = vmul.f32 %v1374, %v1374
  %v1823 = vmul.f32 %v1375, %v1375
  %v1824 = vmul.f32 %v1376, %v1376
  %v1825 = vmul.f32 %v1377, %v1377
  %v1826 = vmul.f32 %v1378, %v1378
  %v1827 = vmul.f32 %v1379, %v1379
  %v1828 = vmul.f32 %v1380, %v1380
  %v1829 = vmul.f32 %v1381, %v1381
  %v1830 = vmul.f32 %v1382, %v1382
  %v1831 = vmul.f32 %v1383, %v1383
  %v1832 = vmul.f32 %v1384, %v1384
  %v1833 = vmul.f32 %v1385, %v1385
  %v1834 = vmul.f32 %v1386, %v1386
  %v1835 = vmul.f32 %v1387, %v1387
  %v1836 = vmul.f32 %v1388, %v1388
  %v1837 = vmul.f32 %v1389, %v1389
  %v1838 = vmul.f32 %v1390, %v1390
  %v1839 = vmul.f32 %v1391, %v1391
  %v1840 = vmul.f32 %v1392, %v1392
  %v1841 = vmul.f32 %v1393, %v1393
  %v1842 = vmul.f32 %v1394, %v1394
  %v1843 = vmul.f32 %v1395, %v1395
  %v1844 = vmul.f32 %v1396, %v1396
  %v1845 = vmul.f32 %v1397, %v1397
  %v1846 = vmul.f32 %v1398, %v1398
  %v1847 = vmul.f32 %v1399, %v1399
  %v1848 = vmul.f32 %v1400, %v1400
  %v1849 = vmul.f32 %v1401, %v1401
  %v1850 = vmul.f32 %v1402, %v1402
  %v1851 = vmul.f32 %v1403, %v1403
  %v1852 = vmul.f32 %v1404, %v1404
  %v1853 = vmul.f32 %v1405, %v1405
  %v1854 = vmul.f32 %v1406, %v1406
  %v1855 = vmul.f32 %v1407, %v1407
  %v1856 = vmul.f32 %v1408, %v1408
  %v1857 = vmul.f32 %v1409, %v1409
  %v1858 = vmul.f32 %v1410, %v1410
  %v1859 = vmul.f32 %v1411, %v1411
  %v1860 = vmul.f32 %v1412, %v1412
  %v1861 = vmul.f32 %v1413, %v1413
  %v1862 = vmul.f32 %v1414, %v1414
  %v1863 = vmul.f32 %v1415, %v1415
  %v1864 = vmul.f32 %v1416, %v1416
  %v1865 = vmul.f32 %v1417, %v1417
  %v1866 = vmul.f32 %v1418, %v1418
  %v1867 = vmul.f32 %v1419, %v1419
  %v1868 = vmul.f32 %v1420, %v1420
  %v1869 = vmul.f32 %v1421, %v1421
  %v1870 = vmul.f32 %v1422, %v1422
  %v1871 = vmul.f32 %v1423, %v1423
  %v1872 = vmul.f32 %v1424, %v1424
  %v1873 = vmul.f32 %v1425, %v1425
  %v1874 = vmul.f32 %v1426, %v1426
  %v1875 = vmul.f32 %v1427, %v1427
  %v1876 = vmul.f32 %v1428, %v1428
  %v1877 = vmul.f32 %v1429, %v1429
  %v1878 = vmul.f32 %v1430, %v1430
  %v1879 = vmul.f32 %v1431, %v1431
  %v1880 = vmul.f32 %v1432, %v1432
  %v1881 = vmul.f32 %v1433, %v1433
  %v1882 = vmul.f32 %v1434, %v1434
  %v1883 = vmul.f32 %v1435, %v1435
  %v1884 = vmul.f32 %v1436, %v1436
  %v1885 = vmul.f32 %v1437, %v1437
  %v1886 = vmul.f32 %v1438, %v1438
  %v1887 = vmul.f32 %v1439, %v1439
  %v1888 = vmul.f32 %v1440, %v1440
  %v1889 = vmul.f32 %v1441, %v1441
  %v1890 = vmul.f32 %v1442, %v1442
  %v1891 = vmul.f32 %v1443, %v1443
  %v1892 = vmul.f32 %v1444, %v1444
  %v1893 = vmul.f32 %v1445, %v1445
  %v1894 = vmul.f32 %v1446, %v1446
  %v1895 = vmul.f32 %v1447, %v1447
  %v1896 = vmul.f32 %v1448, %v1448
  %v1897 = vmul.f32 %v1449, %v1449
  %v1898 = vmul.f32 %v1450, %v1450
  %v1899 = vmul.f32 %v1451, %v1451
  %v1900 = vmul.f32 %v1452, %v1452
  %v1901 = vmul.f32 %v1453, %v1453
  %v1902 = vmul.f32 %v1454, %v1454
  %v1903 = vmul.f32 %v1455, %v1455
  %v1904 = vmul.f32 %v1456, %v1456
  %v1905 = vmul.f32 %v1457, %v1457
  %v1906 = vmul.f32 %v1458, %v1458
  %v1907 = vmul.f32 %v1459, %v1459
  %v1908 = vmul.f32 %v1460, %v1460
  %v1909 = vmul.f32 %v1461, %v1461
  %v1910 = vmul.f32 %v1462, %v1462
  %v1911 = vmul.f32 %v1463, %v1463
  %v1912 = vmul.f32 %v1464, %v1464
  %v1913 = vmul.f32 %v1465, %v1465
  %v1914 = vmul.f32 %v1466, %v1466
  %v1915 = vmul.f32 %v1467, %v1467
  %v1916 = vmul.f32 %v1468, %v1468
  %v1917 = vmul.f32 %v1469, %v1469
  %v1918 = vmul.f32 %v1470, %v1470
  %v1919 = vmul.f32 %v1471, %v1471
  %v1920 = vmul.f32 %v1472, %v1472
  %v1921 = vmul.f32 %v1473, %v1473
  %v1922 = vmul.f32 %v1474, %v1474
  %v1923 = vmul.f32 %v1475, %v1475
  %v1924 = vmul.f32 %v1476, %v1476
  %v1925 = vmul.f32 %v1477, %v1477
  %v1926 = vmul.f32 %v1478, %v1478
  %v1927 = vmul.f32 %v1479, %v1479
  %v1928 = vmul.f32 %v1480, %v1480
  %v1929 = vmul.f32 %v1481, %v1481
  %v1930 = vmul.f32 %v1482, %v1482
  %v1931 = vmul.f32 %v1483, %v1483
  %v1932 = vmul.f32 %v1484, %v1484
  %v1933 = vmul.f32 %v1485, %v1485
  %v1934 = vmul.f32 %v1486, %v1486
  %v1935 = vmul.f32 %v1487, %v1487
  %v1936 = vmul.f32 %v1488, %v1488
  %v1937 = vmul.f32 %v1489, %v1489
  %v1938 = vmul.f32 %v1490, %v1490
  %v1939 = vmul.f32 %v1491, %v1491
  %v1940 = vmul.f32 %v1492, %v1492
  %v1941 = vmul.f32 %v1493, %v1493
  %v1942 = vmul.f32 %v1494, %v1494
  %v1943 = vmul.f32 %v1495, %v1495
  %v1944 = vmul.f32 %v1496, %v1496
  %v1945 = vmul.f32 %v1497, %v1497
  %v1946 = vmul.f32 %v1498, %v1498
  %v1947 = vmul.f32 %v1499, %v1499
  %v1948 = vmul.f32 %v1500, %v1500
  %v1949 = vmul.f32 %v1501, %v1501
  %v1950 = vmul.f32 %v1502, %v1502
  %v1951 = vmul.f32 %v1503, %v1503
  %v1952 = vmul.f32 %v1504, %v1504
  %v1953 = vmul.f32 %v1505, %v1505
  %v1954 = vmul.f32 %v1506, %v1506
  %v1955 = vmul.f32 %v1507, %v1507
  %v1956 = vmul.f32 %v1508, %v1508
  %v1957 = vmul.f32 %v1509, %v1509
  %v1958 = vmul.f32 %v1510, %v1510
  %v1959 = vmul.f32 %v1511, %v1511
  %v1960 = vmul.f32 %v1512, %v1512
  %v1961 = vmul.f32 %v1513, %v1513
  %v1962 = vmul.f32 %v1514, %v1514
  %v1963 = vmul.f32 %v1515, %v1515
  %v1964 = vmul.f32 %v1516, %v1516
  %v1965 = vmul.f32 %v1517, %v1517
  %v1966 = vmul.f32 %v1518, %v1518
  %v1967 = vmul.f32 %v1519, %v1519
  %v1968 = vmul.f32 %v1520, %v1520
  %v1969 = vmul.f32 %v1521, %v1521
  %v1970 = vmul.f32 %v1522, %v1522
  %v1971 = vmul.f32 %v1523, %v1523
  %v1972 = vmul.f32 %v1524, %v1524
  %v1973 = vmul.f32 %v1525, %v1525
  %v1974 = vmul.f32 %v1526, %v1526
  %v1975 = vmul.f32 %v1527, %v1527
  %v1976 = vmul.f32 %v1528, %v1528
  %v1977 = vmul.f32 %v1529, %v1529
  %v1978 = vmul.f32 %v1530, %v1530
  %v1979 = vmul.f32 %v1531, %v1531
  %v1980 = vmul.f32 %v1532, %v1532
  %v1981 = vmul.f32 %v1533, %v1533
  %v1982 = vmul.f32 %v1534, %v1534
  %v1983 = vmul.f32 %v1535, %v1535
  %v1984 = vmul.f32 %v1536, %v1536
  %v1985 = vmul.f32 %v1537, %v1537
  %v1986 = vmul.f32 %v1538, %v1538
  %v1987 = vmul.f32 %v1539, %v1539
  %v1988 = vmul.f32 %v1540, %v1540
  %v1989 = vmul.f32 %v1541, %v1541
  %v1990 = vmul.f32 %v1542, %v1542
  %v1991 = vmul.f32 %v1543, %v1543
  %v1992 = vmul.f32 %v1544, %v1544
  %v1993 = vmul.f32 %v1545, %v1545
  %v1994 = vmul.f32 %v1546, %v1546
  %v1995 = vmul.f32 %v1547, %v1547
  %v1996 = vmul.f32 %v1548, %v1548
  %v1997 = vmul.f32 %v1549, %v1549
  %v1998 = vmul.f32 %v1550, %v1550
  %v1999 = vmul.f32 %v1551, %v1551
  %v2000 = vmul.f32 %v1552, %v1552
  %v2001 = vmul.f32 %v1553, %v1553
  %v2002 = vmul.f32 %v1554, %v1554
  %v2003 = vmul.f32 %v1555, %v1555
  %v2004 = vmul.f32 %v1556, %v1556
  %v2005 = vmul.f32 %v1557, %v1557
  %v2006 = vadd.f32 %v1558, %v1559
  %v2007 = vadd.f32 %v2006, %v1560
  %v2008 = vadd.f32 %v2007, %v1561
  %v2009 = vadd.f32 %v2008, %v1562
  %v2010 = vadd.f32 %v2009, %v1563
  %v2011 = vsel %vm474, %v1564, 0.0
  %v2012 = vadd.f32 %v2010, %v2011
  %2013 = vadd.xlane.f32.xlu0 %v2012
  %v2014 = vpop.xlane.xlu0 %2013
  %v2015 = vadd.f32 %v1565, %v1566
  %v2016 = vadd.f32 %v2015, %v1567
  %v2017 = vadd.f32 %v2016, %v1568
  %v2018 = vadd.f32 %v2017, %v1569
  %v2019 = vadd.f32 %v2018, %v1570
  %v2020 = vsel %vm474, %v1571, 0.0
  %v2021 = vadd.f32 %v2019, %v2020
  %2022 = vadd.xlane.f32.xlu0 %v2021
  %v2023 = vpop.xlane.xlu0 %2022
  %v2024 = vadd.f32 %v1572, %v1573
  %v2025 = vadd.f32 %v2024, %v1574
  %v2026 = vadd.f32 %v2025, %v1575
  %v2027 = vadd.f32 %v2026, %v1576
  %v2028 = vadd.f32 %v2027, %v1577
  %v2029 = vsel %vm474, %v1578, 0.0
  %v2030 = vadd.f32 %v2028, %v2029
  %2031 = vadd.xlane.f32.xlu0 %v2030
  %v2032 = vpop.xlane.xlu0 %2031
  %v2033 = vadd.f32 %v1579, %v1580
  %v2034 = vadd.f32 %v2033, %v1581
  %v2035 = vadd.f32 %v2034, %v1582
  %v2036 = vadd.f32 %v2035, %v1583
  %v2037 = vadd.f32 %v2036, %v1584
  %v2038 = vsel %vm474, %v1585, 0.0
  %v2039 = vadd.f32 %v2037, %v2038
  %2040 = vadd.xlane.f32.xlu0 %v2039
  %v2041 = vpop.xlane.xlu0 %2040
  %v2042 = vadd.f32 %v1586, %v1587
  %v2043 = vadd.f32 %v2042, %v1588
  %v2044 = vadd.f32 %v2043, %v1589
  %v2045 = vadd.f32 %v2044, %v1590
  %v2046 = vadd.f32 %v2045, %v1591
  %v2047 = vsel %vm474, %v1592, 0.0
  %v2048 = vadd.f32 %v2046, %v2047
  %2049 = vadd.xlane.f32.xlu0 %v2048
  %v2050 = vpop.xlane.xlu0 %2049
  %v2051 = vadd.f32 %v1593, %v1594
  %v2052 = vadd.f32 %v2051, %v1595
  %v2053 = vadd.f32 %v2052, %v1596
  %v2054 = vadd.f32 %v2053, %v1597
  %v2055 = vadd.f32 %v2054, %v1598
  %v2056 = vsel %vm474, %v1599, 0.0
  %v2057 = vadd.f32 %v2055, %v2056
  %2058 = vadd.xlane.f32.xlu0 %v2057
  %v2059 = vpop.xlane.xlu0 %2058
  %v2060 = vadd.f32 %v1600, %v1601
  %v2061 = vadd.f32 %v2060, %v1602
  %v2062 = vadd.f32 %v2061, %v1603
  %v2063 = vadd.f32 %v2062, %v1604
  %v2064 = vadd.f32 %v2063, %v1605
  %v2065 = vsel %vm474, %v1606, 0.0
  %v2066 = vadd.f32 %v2064, %v2065
  %2067 = vadd.xlane.f32.xlu0 %v2066
  %v2068 = vpop.xlane.xlu0 %2067
  %v2069 = vadd.f32 %v1607, %v1608
  %v2070 = vadd.f32 %v2069, %v1609
  %v2071 = vadd.f32 %v2070, %v1610
  %v2072 = vadd.f32 %v2071, %v1611
  %v2073 = vadd.f32 %v2072, %v1612
  %v2074 = vsel %vm474, %v1613, 0.0
  %v2075 = vadd.f32 %v2073, %v2074
  %2076 = vadd.xlane.f32.xlu0 %v2075
  %v2077 = vpop.xlane.xlu0 %2076
  %v2078 = vadd.f32 %v1614, %v1615
  %v2079 = vadd.f32 %v2078, %v1616
  %v2080 = vadd.f32 %v2079, %v1617
  %v2081 = vadd.f32 %v2080, %v1618
  %v2082 = vadd.f32 %v2081, %v1619
  %v2083 = vsel %vm474, %v1620, 0.0
  %v2084 = vadd.f32 %v2082, %v2083
  %2085 = vadd.xlane.f32.xlu0 %v2084
  %v2086 = vpop.xlane.xlu0 %2085
  %v2087 = vadd.f32 %v1621, %v1622
  %v2088 = vadd.f32 %v2087, %v1623
  %v2089 = vadd.f32 %v2088, %v1624
  %v2090 = vadd.f32 %v2089, %v1625
  %v2091 = vadd.f32 %v2090, %v1626
  %v2092 = vsel %vm474, %v1627, 0.0
  %v2093 = vadd.f32 %v2091, %v2092
  %2094 = vadd.xlane.f32.xlu0 %v2093
  %v2095 = vpop.xlane.xlu0 %2094
  %v2096 = vadd.f32 %v1628, %v1629
  %v2097 = vadd.f32 %v2096, %v1630
  %v2098 = vadd.f32 %v2097, %v1631
  %v2099 = vadd.f32 %v2098, %v1632
  %v2100 = vadd.f32 %v2099, %v1633
  %v2101 = vsel %vm474, %v1634, 0.0
  %v2102 = vadd.f32 %v2100, %v2101
  %2103 = vadd.xlane.f32.xlu0 %v2102
  %v2104 = vpop.xlane.xlu0 %2103
  %v2105 = vadd.f32 %v1635, %v1636
  %v2106 = vadd.f32 %v2105, %v1637
  %v2107 = vadd.f32 %v2106, %v1638
  %v2108 = vadd.f32 %v2107, %v1639
  %v2109 = vadd.f32 %v2108, %v1640
  %v2110 = vsel %vm474, %v1641, 0.0
  %v2111 = vadd.f32 %v2109, %v2110
  %2112 = vadd.xlane.f32.xlu0 %v2111
  %v2113 = vpop.xlane.xlu0 %2112
  %v2114 = vadd.f32 %v1642, %v1643
  %v2115 = vadd.f32 %v2114, %v1644
  %v2116 = vadd.f32 %v2115, %v1645
  %v2117 = vadd.f32 %v2116, %v1646
  %v2118 = vadd.f32 %v2117, %v1647
  %v2119 = vsel %vm474, %v1648, 0.0
  %v2120 = vadd.f32 %v2118, %v2119
  %2121 = vadd.xlane.f32.xlu0 %v2120
  %v2122 = vpop.xlane.xlu0 %2121
  %v2123 = vadd.f32 %v1649, %v1650
  %v2124 = vadd.f32 %v2123, %v1651
  %v2125 = vadd.f32 %v2124, %v1652
  %v2126 = vadd.f32 %v2125, %v1653
  %v2127 = vadd.f32 %v2126, %v1654
  %v2128 = vsel %vm474, %v1655, 0.0
  %v2129 = vadd.f32 %v2127, %v2128
  %2130 = vadd.xlane.f32.xlu0 %v2129
  %v2131 = vpop.xlane.xlu0 %2130
  %v2132 = vadd.f32 %v1656, %v1657
  %v2133 = vadd.f32 %v2132, %v1658
  %v2134 = vadd.f32 %v2133, %v1659
  %v2135 = vadd.f32 %v2134, %v1660
  %v2136 = vadd.f32 %v2135, %v1661
  %v2137 = vsel %vm474, %v1662, 0.0
  %v2138 = vadd.f32 %v2136, %v2137
  %2139 = vadd.xlane.f32.xlu0 %v2138
  %v2140 = vpop.xlane.xlu0 %2139
  %v2141 = vadd.f32 %v1663, %v1664
  %v2142 = vadd.f32 %v2141, %v1665
  %v2143 = vadd.f32 %v2142, %v1666
  %v2144 = vadd.f32 %v2143, %v1667
  %v2145 = vadd.f32 %v2144, %v1668
  %v2146 = vsel %vm474, %v1669, 0.0
  %v2147 = vadd.f32 %v2145, %v2146
  %2148 = vadd.xlane.f32.xlu0 %v2147
  %v2149 = vpop.xlane.xlu0 %2148
  %v2150 = vadd.f32 %v1670, %v1671
  %v2151 = vadd.f32 %v2150, %v1672
  %v2152 = vadd.f32 %v2151, %v1673
  %v2153 = vadd.f32 %v2152, %v1674
  %v2154 = vadd.f32 %v2153, %v1675
  %v2155 = vsel %vm474, %v1676, 0.0
  %v2156 = vadd.f32 %v2154, %v2155
  %2157 = vadd.xlane.f32.xlu0 %v2156
  %v2158 = vpop.xlane.xlu0 %2157
  %v2159 = vadd.f32 %v1677, %v1678
  %v2160 = vadd.f32 %v2159, %v1679
  %v2161 = vadd.f32 %v2160, %v1680
  %v2162 = vadd.f32 %v2161, %v1681
  %v2163 = vadd.f32 %v2162, %v1682
  %v2164 = vsel %vm474, %v1683, 0.0
  %v2165 = vadd.f32 %v2163, %v2164
  %2166 = vadd.xlane.f32.xlu0 %v2165
  %v2167 = vpop.xlane.xlu0 %2166
  %v2168 = vadd.f32 %v1684, %v1685
  %v2169 = vadd.f32 %v2168, %v1686
  %v2170 = vadd.f32 %v2169, %v1687
  %v2171 = vadd.f32 %v2170, %v1688
  %v2172 = vadd.f32 %v2171, %v1689
  %v2173 = vsel %vm474, %v1690, 0.0
  %v2174 = vadd.f32 %v2172, %v2173
  %2175 = vadd.xlane.f32.xlu0 %v2174
  %v2176 = vpop.xlane.xlu0 %2175
  %v2177 = vadd.f32 %v1691, %v1692
  %v2178 = vadd.f32 %v2177, %v1693
  %v2179 = vadd.f32 %v2178, %v1694
  %v2180 = vadd.f32 %v2179, %v1695
  %v2181 = vadd.f32 %v2180, %v1696
  %v2182 = vsel %vm474, %v1697, 0.0
  %v2183 = vadd.f32 %v2181, %v2182
  %2184 = vadd.xlane.f32.xlu0 %v2183
  %v2185 = vpop.xlane.xlu0 %2184
  %v2186 = vadd.f32 %v1698, %v1699
  %v2187 = vadd.f32 %v2186, %v1700
  %v2188 = vadd.f32 %v2187, %v1701
  %v2189 = vadd.f32 %v2188, %v1702
  %v2190 = vadd.f32 %v2189, %v1703
  %v2191 = vsel %vm474, %v1704, 0.0
  %v2192 = vadd.f32 %v2190, %v2191
  %2193 = vadd.xlane.f32.xlu0 %v2192
  %v2194 = vpop.xlane.xlu0 %2193
  %v2195 = vadd.f32 %v1705, %v1706
  %v2196 = vadd.f32 %v2195, %v1707
  %v2197 = vadd.f32 %v2196, %v1708
  %v2198 = vadd.f32 %v2197, %v1709
  %v2199 = vadd.f32 %v2198, %v1710
  %v2200 = vsel %vm474, %v1711, 0.0
  %v2201 = vadd.f32 %v2199, %v2200
  %2202 = vadd.xlane.f32.xlu0 %v2201
  %v2203 = vpop.xlane.xlu0 %2202
  %v2204 = vadd.f32 %v1712, %v1713
  %v2205 = vadd.f32 %v2204, %v1714
  %v2206 = vadd.f32 %v2205, %v1715
  %v2207 = vadd.f32 %v2206, %v1716
  %v2208 = vadd.f32 %v2207, %v1717
  %v2209 = vsel %vm474, %v1718, 0.0
  %v2210 = vadd.f32 %v2208, %v2209
  %2211 = vadd.xlane.f32.xlu0 %v2210
  %v2212 = vpop.xlane.xlu0 %2211
  %v2213 = vadd.f32 %v1719, %v1720
  %v2214 = vadd.f32 %v2213, %v1721
  %v2215 = vadd.f32 %v2214, %v1722
  %v2216 = vadd.f32 %v2215, %v1723
  %v2217 = vadd.f32 %v2216, %v1724
  %v2218 = vsel %vm474, %v1725, 0.0
  %v2219 = vadd.f32 %v2217, %v2218
  %2220 = vadd.xlane.f32.xlu0 %v2219
  %v2221 = vpop.xlane.xlu0 %2220
  %v2222 = vadd.f32 %v1726, %v1727
  %v2223 = vadd.f32 %v2222, %v1728
  %v2224 = vadd.f32 %v2223, %v1729
  %v2225 = vadd.f32 %v2224, %v1730
  %v2226 = vadd.f32 %v2225, %v1731
  %v2227 = vsel %vm474, %v1732, 0.0
  %v2228 = vadd.f32 %v2226, %v2227
  %2229 = vadd.xlane.f32.xlu0 %v2228
  %v2230 = vpop.xlane.xlu0 %2229
  %v2231 = vadd.f32 %v1733, %v1734
  %v2232 = vadd.f32 %v2231, %v1735
  %v2233 = vadd.f32 %v2232, %v1736
  %v2234 = vadd.f32 %v2233, %v1737
  %v2235 = vadd.f32 %v2234, %v1738
  %v2236 = vsel %vm474, %v1739, 0.0
  %v2237 = vadd.f32 %v2235, %v2236
  %2238 = vadd.xlane.f32.xlu0 %v2237
  %v2239 = vpop.xlane.xlu0 %2238
  %v2240 = vadd.f32 %v1740, %v1741
  %v2241 = vadd.f32 %v2240, %v1742
  %v2242 = vadd.f32 %v2241, %v1743
  %v2243 = vadd.f32 %v2242, %v1744
  %v2244 = vadd.f32 %v2243, %v1745
  %v2245 = vsel %vm474, %v1746, 0.0
  %v2246 = vadd.f32 %v2244, %v2245
  %2247 = vadd.xlane.f32.xlu0 %v2246
  %v2248 = vpop.xlane.xlu0 %2247
  %v2249 = vadd.f32 %v1747, %v1748
  %v2250 = vadd.f32 %v2249, %v1749
  %v2251 = vadd.f32 %v2250, %v1750
  %v2252 = vadd.f32 %v2251, %v1751
  %v2253 = vadd.f32 %v2252, %v1752
  %v2254 = vsel %vm474, %v1753, 0.0
  %v2255 = vadd.f32 %v2253, %v2254
  %2256 = vadd.xlane.f32.xlu0 %v2255
  %v2257 = vpop.xlane.xlu0 %2256
  %v2258 = vadd.f32 %v1754, %v1755
  %v2259 = vadd.f32 %v2258, %v1756
  %v2260 = vadd.f32 %v2259, %v1757
  %v2261 = vadd.f32 %v2260, %v1758
  %v2262 = vadd.f32 %v2261, %v1759
  %v2263 = vsel %vm474, %v1760, 0.0
  %v2264 = vadd.f32 %v2262, %v2263
  %2265 = vadd.xlane.f32.xlu0 %v2264
  %v2266 = vpop.xlane.xlu0 %2265
  %v2267 = vadd.f32 %v1761, %v1762
  %v2268 = vadd.f32 %v2267, %v1763
  %v2269 = vadd.f32 %v2268, %v1764
  %v2270 = vadd.f32 %v2269, %v1765
  %v2271 = vadd.f32 %v2270, %v1766
  %v2272 = vsel %vm474, %v1767, 0.0
  %v2273 = vadd.f32 %v2271, %v2272
  %2274 = vadd.xlane.f32.xlu0 %v2273
  %v2275 = vpop.xlane.xlu0 %2274
  %v2276 = vadd.f32 %v1768, %v1769
  %v2277 = vadd.f32 %v2276, %v1770
  %v2278 = vadd.f32 %v2277, %v1771
  %v2279 = vadd.f32 %v2278, %v1772
  %v2280 = vadd.f32 %v2279, %v1773
  %v2281 = vsel %vm474, %v1774, 0.0
  %v2282 = vadd.f32 %v2280, %v2281
  %2283 = vadd.xlane.f32.xlu0 %v2282
  %v2284 = vpop.xlane.xlu0 %2283
  %v2285 = vadd.f32 %v1775, %v1776
  %v2286 = vadd.f32 %v2285, %v1777
  %v2287 = vadd.f32 %v2286, %v1778
  %v2288 = vadd.f32 %v2287, %v1779
  %v2289 = vadd.f32 %v2288, %v1780
  %v2290 = vsel %vm474, %v1781, 0.0
  %v2291 = vadd.f32 %v2289, %v2290
  %2292 = vadd.xlane.f32.xlu0 %v2291
  %v2293 = vpop.xlane.xlu0 %2292
  %v2294 = vadd.f32 %v1782, %v1783
  %v2295 = vadd.f32 %v2294, %v1784
  %v2296 = vadd.f32 %v2295, %v1785
  %v2297 = vadd.f32 %v2296, %v1786
  %v2298 = vadd.f32 %v2297, %v1787
  %v2299 = vsel %vm474, %v1788, 0.0
  %v2300 = vadd.f32 %v2298, %v2299
  %2301 = vadd.xlane.f32.xlu0 %v2300
  %v2302 = vpop.xlane.xlu0 %2301
  %v2303 = vadd.f32 %v1789, %v1790
  %v2304 = vadd.f32 %v2303, %v1791
  %v2305 = vadd.f32 %v2304, %v1792
  %v2306 = vadd.f32 %v2305, %v1793
  %v2307 = vadd.f32 %v2306, %v1794
  %v2308 = vsel %vm474, %v1795, 0.0
  %v2309 = vadd.f32 %v2307, %v2308
  %2310 = vadd.xlane.f32.xlu0 %v2309
  %v2311 = vpop.xlane.xlu0 %2310
  %v2312 = vadd.f32 %v1796, %v1797
  %v2313 = vadd.f32 %v2312, %v1798
  %v2314 = vadd.f32 %v2313, %v1799
  %v2315 = vadd.f32 %v2314, %v1800
  %v2316 = vadd.f32 %v2315, %v1801
  %v2317 = vsel %vm474, %v1802, 0.0
  %v2318 = vadd.f32 %v2316, %v2317
  %2319 = vadd.xlane.f32.xlu0 %v2318
  %v2320 = vpop.xlane.xlu0 %2319
  %v2321 = vadd.f32 %v1803, %v1804
  %v2322 = vadd.f32 %v2321, %v1805
  %v2323 = vadd.f32 %v2322, %v1806
  %v2324 = vadd.f32 %v2323, %v1807
  %v2325 = vadd.f32 %v2324, %v1808
  %v2326 = vsel %vm474, %v1809, 0.0
  %v2327 = vadd.f32 %v2325, %v2326
  %2328 = vadd.xlane.f32.xlu0 %v2327
  %v2329 = vpop.xlane.xlu0 %2328
  %v2330 = vadd.f32 %v1810, %v1811
  %v2331 = vadd.f32 %v2330, %v1812
  %v2332 = vadd.f32 %v2331, %v1813
  %v2333 = vadd.f32 %v2332, %v1814
  %v2334 = vadd.f32 %v2333, %v1815
  %v2335 = vsel %vm474, %v1816, 0.0
  %v2336 = vadd.f32 %v2334, %v2335
  %2337 = vadd.xlane.f32.xlu0 %v2336
  %v2338 = vpop.xlane.xlu0 %2337
  %v2339 = vadd.f32 %v1817, %v1818
  %v2340 = vadd.f32 %v2339, %v1819
  %v2341 = vadd.f32 %v2340, %v1820
  %v2342 = vadd.f32 %v2341, %v1821
  %v2343 = vadd.f32 %v2342, %v1822
  %v2344 = vsel %vm474, %v1823, 0.0
  %v2345 = vadd.f32 %v2343, %v2344
  %2346 = vadd.xlane.f32.xlu0 %v2345
  %v2347 = vpop.xlane.xlu0 %2346
  %v2348 = vadd.f32 %v1824, %v1825
  %v2349 = vadd.f32 %v2348, %v1826
  %v2350 = vadd.f32 %v2349, %v1827
  %v2351 = vadd.f32 %v2350, %v1828
  %v2352 = vadd.f32 %v2351, %v1829
  %v2353 = vsel %vm474, %v1830, 0.0
  %v2354 = vadd.f32 %v2352, %v2353
  %2355 = vadd.xlane.f32.xlu0 %v2354
  %v2356 = vpop.xlane.xlu0 %2355
  %v2357 = vadd.f32 %v1831, %v1832
  %v2358 = vadd.f32 %v2357, %v1833
  %v2359 = vadd.f32 %v2358, %v1834
  %v2360 = vadd.f32 %v2359, %v1835
  %v2361 = vadd.f32 %v2360, %v1836
  %v2362 = vsel %vm474, %v1837, 0.0
  %v2363 = vadd.f32 %v2361, %v2362
  %2364 = vadd.xlane.f32.xlu0 %v2363
  %v2365 = vpop.xlane.xlu0 %2364
  %v2366 = vadd.f32 %v1838, %v1839
  %v2367 = vadd.f32 %v2366, %v1840
  %v2368 = vadd.f32 %v2367, %v1841
  %v2369 = vadd.f32 %v2368, %v1842
  %v2370 = vadd.f32 %v2369, %v1843
  %v2371 = vsel %vm474, %v1844, 0.0
  %v2372 = vadd.f32 %v2370, %v2371
  %2373 = vadd.xlane.f32.xlu0 %v2372
  %v2374 = vpop.xlane.xlu0 %2373
  %v2375 = vadd.f32 %v1845, %v1846
  %v2376 = vadd.f32 %v2375, %v1847
  %v2377 = vadd.f32 %v2376, %v1848
  %v2378 = vadd.f32 %v2377, %v1849
  %v2379 = vadd.f32 %v2378, %v1850
  %v2380 = vsel %vm474, %v1851, 0.0
  %v2381 = vadd.f32 %v2379, %v2380
  %2382 = vadd.xlane.f32.xlu0 %v2381
  %v2383 = vpop.xlane.xlu0 %2382
  %v2384 = vadd.f32 %v1852, %v1853
  %v2385 = vadd.f32 %v2384, %v1854
  %v2386 = vadd.f32 %v2385, %v1855
  %v2387 = vadd.f32 %v2386, %v1856
  %v2388 = vadd.f32 %v2387, %v1857
  %v2389 = vsel %vm474, %v1858, 0.0
  %v2390 = vadd.f32 %v2388, %v2389
  %2391 = vadd.xlane.f32.xlu0 %v2390
  %v2392 = vpop.xlane.xlu0 %2391
  %v2393 = vadd.f32 %v1859, %v1860
  %v2394 = vadd.f32 %v2393, %v1861
  %v2395 = vadd.f32 %v2394, %v1862
  %v2396 = vadd.f32 %v2395, %v1863
  %v2397 = vadd.f32 %v2396, %v1864
  %v2398 = vsel %vm474, %v1865, 0.0
  %v2399 = vadd.f32 %v2397, %v2398
  %2400 = vadd.xlane.f32.xlu0 %v2399
  %v2401 = vpop.xlane.xlu0 %2400
  %v2402 = vadd.f32 %v1866, %v1867
  %v2403 = vadd.f32 %v2402, %v1868
  %v2404 = vadd.f32 %v2403, %v1869
  %v2405 = vadd.f32 %v2404, %v1870
  %v2406 = vadd.f32 %v2405, %v1871
  %v2407 = vsel %vm474, %v1872, 0.0
  %v2408 = vadd.f32 %v2406, %v2407
  %2409 = vadd.xlane.f32.xlu0 %v2408
  %v2410 = vpop.xlane.xlu0 %2409
  %v2411 = vadd.f32 %v1873, %v1874
  %v2412 = vadd.f32 %v2411, %v1875
  %v2413 = vadd.f32 %v2412, %v1876
  %v2414 = vadd.f32 %v2413, %v1877
  %v2415 = vadd.f32 %v2414, %v1878
  %v2416 = vsel %vm474, %v1879, 0.0
  %v2417 = vadd.f32 %v2415, %v2416
  %2418 = vadd.xlane.f32.xlu0 %v2417
  %v2419 = vpop.xlane.xlu0 %2418
  %v2420 = vadd.f32 %v1880, %v1881
  %v2421 = vadd.f32 %v2420, %v1882
  %v2422 = vadd.f32 %v2421, %v1883
  %v2423 = vadd.f32 %v2422, %v1884
  %v2424 = vadd.f32 %v2423, %v1885
  %v2425 = vsel %vm474, %v1886, 0.0
  %v2426 = vadd.f32 %v2424, %v2425
  %2427 = vadd.xlane.f32.xlu0 %v2426
  %v2428 = vpop.xlane.xlu0 %2427
  %v2429 = vadd.f32 %v1887, %v1888
  %v2430 = vadd.f32 %v2429, %v1889
  %v2431 = vadd.f32 %v2430, %v1890
  %v2432 = vadd.f32 %v2431, %v1891
  %v2433 = vadd.f32 %v2432, %v1892
  %v2434 = vsel %vm474, %v1893, 0.0
  %v2435 = vadd.f32 %v2433, %v2434
  %2436 = vadd.xlane.f32.xlu0 %v2435
  %v2437 = vpop.xlane.xlu0 %2436
  %v2438 = vadd.f32 %v1894, %v1895
  %v2439 = vadd.f32 %v2438, %v1896
  %v2440 = vadd.f32 %v2439, %v1897
  %v2441 = vadd.f32 %v2440, %v1898
  %v2442 = vadd.f32 %v2441, %v1899
  %v2443 = vsel %vm474, %v1900, 0.0
  %v2444 = vadd.f32 %v2442, %v2443
  %2445 = vadd.xlane.f32.xlu0 %v2444
  %v2446 = vpop.xlane.xlu0 %2445
  %v2447 = vadd.f32 %v1901, %v1902
  %v2448 = vadd.f32 %v2447, %v1903
  %v2449 = vadd.f32 %v2448, %v1904
  %v2450 = vadd.f32 %v2449, %v1905
  %v2451 = vadd.f32 %v2450, %v1906
  %v2452 = vsel %vm474, %v1907, 0.0
  %v2453 = vadd.f32 %v2451, %v2452
  %2454 = vadd.xlane.f32.xlu0 %v2453
  %v2455 = vpop.xlane.xlu0 %2454
  %v2456 = vadd.f32 %v1908, %v1909
  %v2457 = vadd.f32 %v2456, %v1910
  %v2458 = vadd.f32 %v2457, %v1911
  %v2459 = vadd.f32 %v2458, %v1912
  %v2460 = vadd.f32 %v2459, %v1913
  %v2461 = vsel %vm474, %v1914, 0.0
  %v2462 = vadd.f32 %v2460, %v2461
  %2463 = vadd.xlane.f32.xlu0 %v2462
  %v2464 = vpop.xlane.xlu0 %2463
  %v2465 = vadd.f32 %v1915, %v1916
  %v2466 = vadd.f32 %v2465, %v1917
  %v2467 = vadd.f32 %v2466, %v1918
  %v2468 = vadd.f32 %v2467, %v1919
  %v2469 = vadd.f32 %v2468, %v1920
  %v2470 = vsel %vm474, %v1921, 0.0
  %v2471 = vadd.f32 %v2469, %v2470
  %2472 = vadd.xlane.f32.xlu0 %v2471
  %v2473 = vpop.xlane.xlu0 %2472
  %v2474 = vadd.f32 %v1922, %v1923
  %v2475 = vadd.f32 %v2474, %v1924
  %v2476 = vadd.f32 %v2475, %v1925
  %v2477 = vadd.f32 %v2476, %v1926
  %v2478 = vadd.f32 %v2477, %v1927
  %v2479 = vsel %vm474, %v1928, 0.0
  %v2480 = vadd.f32 %v2478, %v2479
  %2481 = vadd.xlane.f32.xlu0 %v2480
  %v2482 = vpop.xlane.xlu0 %2481
  %v2483 = vadd.f32 %v1929, %v1930
  %v2484 = vadd.f32 %v2483, %v1931
  %v2485 = vadd.f32 %v2484, %v1932
  %v2486 = vadd.f32 %v2485, %v1933
  %v2487 = vadd.f32 %v2486, %v1934
  %v2488 = vsel %vm474, %v1935, 0.0
  %v2489 = vadd.f32 %v2487, %v2488
  %2490 = vadd.xlane.f32.xlu0 %v2489
  %v2491 = vpop.xlane.xlu0 %2490
  %v2492 = vadd.f32 %v1936, %v1937
  %v2493 = vadd.f32 %v2492, %v1938
  %v2494 = vadd.f32 %v2493, %v1939
  %v2495 = vadd.f32 %v2494, %v1940
  %v2496 = vadd.f32 %v2495, %v1941
  %v2497 = vsel %vm474, %v1942, 0.0
  %v2498 = vadd.f32 %v2496, %v2497
  %2499 = vadd.xlane.f32.xlu0 %v2498
  %v2500 = vpop.xlane.xlu0 %2499
  %v2501 = vadd.f32 %v1943, %v1944
  %v2502 = vadd.f32 %v2501, %v1945
  %v2503 = vadd.f32 %v2502, %v1946
  %v2504 = vadd.f32 %v2503, %v1947
  %v2505 = vadd.f32 %v2504, %v1948
  %v2506 = vsel %vm474, %v1949, 0.0
  %v2507 = vadd.f32 %v2505, %v2506
  %2508 = vadd.xlane.f32.xlu0 %v2507
  %v2509 = vpop.xlane.xlu0 %2508
  %v2510 = vadd.f32 %v1950, %v1951
  %v2511 = vadd.f32 %v2510, %v1952
  %v2512 = vadd.f32 %v2511, %v1953
  %v2513 = vadd.f32 %v2512, %v1954
  %v2514 = vadd.f32 %v2513, %v1955
  %v2515 = vsel %vm474, %v1956, 0.0
  %v2516 = vadd.f32 %v2514, %v2515
  %2517 = vadd.xlane.f32.xlu0 %v2516
  %v2518 = vpop.xlane.xlu0 %2517
  %v2519 = vadd.f32 %v1957, %v1958
  %v2520 = vadd.f32 %v2519, %v1959
  %v2521 = vadd.f32 %v2520, %v1960
  %v2522 = vadd.f32 %v2521, %v1961
  %v2523 = vadd.f32 %v2522, %v1962
  %v2524 = vsel %vm474, %v1963, 0.0
  %v2525 = vadd.f32 %v2523, %v2524
  %2526 = vadd.xlane.f32.xlu0 %v2525
  %v2527 = vpop.xlane.xlu0 %2526
  %v2528 = vadd.f32 %v1964, %v1965
  %v2529 = vadd.f32 %v2528, %v1966
  %v2530 = vadd.f32 %v2529, %v1967
  %v2531 = vadd.f32 %v2530, %v1968
  %v2532 = vadd.f32 %v2531, %v1969
  %v2533 = vsel %vm474, %v1970, 0.0
  %v2534 = vadd.f32 %v2532, %v2533
  %2535 = vadd.xlane.f32.xlu0 %v2534
  %v2536 = vpop.xlane.xlu0 %2535
  %v2537 = vadd.f32 %v1971, %v1972
  %v2538 = vadd.f32 %v2537, %v1973
  %v2539 = vadd.f32 %v2538, %v1974
  %v2540 = vadd.f32 %v2539, %v1975
  %v2541 = vadd.f32 %v2540, %v1976
  %v2542 = vsel %vm474, %v1977, 0.0
  %v2543 = vadd.f32 %v2541, %v2542
  %2544 = vadd.xlane.f32.xlu0 %v2543
  %v2545 = vpop.xlane.xlu0 %2544
  %v2546 = vadd.f32 %v1978, %v1979
  %v2547 = vadd.f32 %v2546, %v1980
  %v2548 = vadd.f32 %v2547, %v1981
  %v2549 = vadd.f32 %v2548, %v1982
  %v2550 = vadd.f32 %v2549, %v1983
  %v2551 = vsel %vm474, %v1984, 0.0
  %v2552 = vadd.f32 %v2550, %v2551
  %2553 = vadd.xlane.f32.xlu0 %v2552
  %v2554 = vpop.xlane.xlu0 %2553
  %v2555 = vadd.f32 %v1985, %v1986
  %v2556 = vadd.f32 %v2555, %v1987
  %v2557 = vadd.f32 %v2556, %v1988
  %v2558 = vadd.f32 %v2557, %v1989
  %v2559 = vadd.f32 %v2558, %v1990
  %v2560 = vsel %vm474, %v1991, 0.0
  %v2561 = vadd.f32 %v2559, %v2560
  %2562 = vadd.xlane.f32.xlu0 %v2561
  %v2563 = vpop.xlane.xlu0 %2562
  %v2564 = vadd.f32 %v1992, %v1993
  %v2565 = vadd.f32 %v2564, %v1994
  %v2566 = vadd.f32 %v2565, %v1995
  %v2567 = vadd.f32 %v2566, %v1996
  %v2568 = vadd.f32 %v2567, %v1997
  %v2569 = vsel %vm474, %v1998, 0.0
  %v2570 = vadd.f32 %v2568, %v2569
  %2571 = vadd.xlane.f32.xlu0 %v2570
  %v2572 = vpop.xlane.xlu0 %2571
  %v2573 = vadd.f32 %v1999, %v2000
  %v2574 = vadd.f32 %v2573, %v2001
  %v2575 = vadd.f32 %v2574, %v2002
  %v2576 = vadd.f32 %v2575, %v2003
  %v2577 = vadd.f32 %v2576, %v2004
  %v2578 = vsel %vm474, %v2005, 0.0
  %v2579 = vadd.f32 %v2577, %v2578
  %2580 = vadd.xlane.f32.xlu0 %v2579
  %v2581 = vpop.xlane.xlu0 %2580
  %v2582 = vmul.f32 %v2014, 0.0012755102
  %v2583 = vmul.f32 %v2023, 0.0012755102
  %v2584 = vmul.f32 %v2032, 0.0012755102
  %v2585 = vmul.f32 %v2041, 0.0012755102
  %v2586 = vmul.f32 %v2050, 0.0012755102
  %v2587 = vmul.f32 %v2059, 0.0012755102
  %v2588 = vmul.f32 %v2068, 0.0012755102
  %v2589 = vmul.f32 %v2077, 0.0012755102
  %v2590 = vmul.f32 %v2086, 0.0012755102
  %v2591 = vmul.f32 %v2095, 0.0012755102
  %v2592 = vmul.f32 %v2104, 0.0012755102
  %v2593 = vmul.f32 %v2113, 0.0012755102
  %v2594 = vmul.f32 %v2122, 0.0012755102
  %v2595 = vmul.f32 %v2131, 0.0012755102
  %v2596 = vmul.f32 %v2140, 0.0012755102
  %v2597 = vmul.f32 %v2149, 0.0012755102
  %v2598 = vmul.f32 %v2158, 0.0012755102
  %v2599 = vmul.f32 %v2167, 0.0012755102
  %v2600 = vmul.f32 %v2176, 0.0012755102
  %v2601 = vmul.f32 %v2185, 0.0012755102
  %v2602 = vmul.f32 %v2194, 0.0012755102
  %v2603 = vmul.f32 %v2203, 0.0012755102
  %v2604 = vmul.f32 %v2212, 0.0012755102
  %v2605 = vmul.f32 %v2221, 0.0012755102
  %v2606 = vmul.f32 %v2230, 0.0012755102
  %v2607 = vmul.f32 %v2239, 0.0012755102
  %v2608 = vmul.f32 %v2248, 0.0012755102
  %v2609 = vmul.f32 %v2257, 0.0012755102
  %v2610 = vmul.f32 %v2266, 0.0012755102
  %v2611 = vmul.f32 %v2275, 0.0012755102
  %v2612 = vmul.f32 %v2284, 0.0012755102
  %v2613 = vmul.f32 %v2293, 0.0012755102
  %v2614 = vmul.f32 %v2302, 0.0012755102
  %v2615 = vmul.f32 %v2311, 0.0012755102
  %v2616 = vmul.f32 %v2320, 0.0012755102
  %v2617 = vmul.f32 %v2329, 0.0012755102
  %v2618 = vmul.f32 %v2338, 0.0012755102
  %v2619 = vmul.f32 %v2347, 0.0012755102
  %v2620 = vmul.f32 %v2356, 0.0012755102
  %v2621 = vmul.f32 %v2365, 0.0012755102
  %v2622 = vmul.f32 %v2374, 0.0012755102
  %v2623 = vmul.f32 %v2383, 0.0012755102
  %v2624 = vmul.f32 %v2392, 0.0012755102
  %v2625 = vmul.f32 %v2401, 0.0012755102
  %v2626 = vmul.f32 %v2410, 0.0012755102
  %v2627 = vmul.f32 %v2419, 0.0012755102
  %v2628 = vmul.f32 %v2428, 0.0012755102
  %v2629 = vmul.f32 %v2437, 0.0012755102
  %v2630 = vmul.f32 %v2446, 0.0012755102
  %v2631 = vmul.f32 %v2455, 0.0012755102
  %v2632 = vmul.f32 %v2464, 0.0012755102
  %v2633 = vmul.f32 %v2473, 0.0012755102
  %v2634 = vmul.f32 %v2482, 0.0012755102
  %v2635 = vmul.f32 %v2491, 0.0012755102
  %v2636 = vmul.f32 %v2500, 0.0012755102
  %v2637 = vmul.f32 %v2509, 0.0012755102
  %v2638 = vmul.f32 %v2518, 0.0012755102
  %v2639 = vmul.f32 %v2527, 0.0012755102
  %v2640 = vmul.f32 %v2536, 0.0012755102
  %v2641 = vmul.f32 %v2545, 0.0012755102
  %v2642 = vmul.f32 %v2554, 0.0012755102
  %v2643 = vmul.f32 %v2563, 0.0012755102
  %v2644 = vmul.f32 %v2572, 0.0012755102
  %v2645 = vmul.f32 %v2581, 0.0012755102
  %v2646 = vadd.f32 %v2582, 1e-05
  %v2647 = vadd.f32 %v2583, 1e-05
  %v2648 = vadd.f32 %v2584, 1e-05
  %v2649 = vadd.f32 %v2585, 1e-05
  %v2650 = vadd.f32 %v2586, 1e-05
  %v2651 = vadd.f32 %v2587, 1e-05
  %v2652 = vadd.f32 %v2588, 1e-05
  %v2653 = vadd.f32 %v2589, 1e-05
  %v2654 = vadd.f32 %v2590, 1e-05
  %v2655 = vadd.f32 %v2591, 1e-05
  %v2656 = vadd.f32 %v2592, 1e-05
  %v2657 = vadd.f32 %v2593, 1e-05
  %v2658 = vadd.f32 %v2594, 1e-05
  %v2659 = vadd.f32 %v2595, 1e-05
  %v2660 = vadd.f32 %v2596, 1e-05
  %v2661 = vadd.f32 %v2597, 1e-05
  %v2662 = vadd.f32 %v2598, 1e-05
  %v2663 = vadd.f32 %v2599, 1e-05
  %v2664 = vadd.f32 %v2600, 1e-05
  %v2665 = vadd.f32 %v2601, 1e-05
  %v2666 = vadd.f32 %v2602, 1e-05
  %v2667 = vadd.f32 %v2603, 1e-05
  %v2668 = vadd.f32 %v2604, 1e-05
  %v2669 = vadd.f32 %v2605, 1e-05
  %v2670 = vadd.f32 %v2606, 1e-05
  %v2671 = vadd.f32 %v2607, 1e-05
  %v2672 = vadd.f32 %v2608, 1e-05
  %v2673 = vadd.f32 %v2609, 1e-05
  %v2674 = vadd.f32 %v2610, 1e-05
  %v2675 = vadd.f32 %v2611, 1e-05
  %v2676 = vadd.f32 %v2612, 1e-05
  %v2677 = vadd.f32 %v2613, 1e-05
  %v2678 = vadd.f32 %v2614, 1e-05
  %v2679 = vadd.f32 %v2615, 1e-05
  %v2680 = vadd.f32 %v2616, 1e-05
  %v2681 = vadd.f32 %v2617, 1e-05
  %v2682 = vadd.f32 %v2618, 1e-05
  %v2683 = vadd.f32 %v2619, 1e-05
  %v2684 = vadd.f32 %v2620, 1e-05
  %v2685 = vadd.f32 %v2621, 1e-05
  %v2686 = vadd.f32 %v2622, 1e-05
  %v2687 = vadd.f32 %v2623, 1e-05
  %v2688 = vadd.f32 %v2624, 1e-05
  %v2689 = vadd.f32 %v2625, 1e-05
  %v2690 = vadd.f32 %v2626, 1e-05
  %v2691 = vadd.f32 %v2627, 1e-05
  %v2692 = vadd.f32 %v2628, 1e-05
  %v2693 = vadd.f32 %v2629, 1e-05
  %v2694 = vadd.f32 %v2630, 1e-05
  %v2695 = vadd.f32 %v2631, 1e-05
  %v2696 = vadd.f32 %v2632, 1e-05
  %v2697 = vadd.f32 %v2633, 1e-05
  %v2698 = vadd.f32 %v2634, 1e-05
  %v2699 = vadd.f32 %v2635, 1e-05
  %v2700 = vadd.f32 %v2636, 1e-05
  %v2701 = vadd.f32 %v2637, 1e-05
  %v2702 = vadd.f32 %v2638, 1e-05
  %v2703 = vadd.f32 %v2639, 1e-05
  %v2704 = vadd.f32 %v2640, 1e-05
  %v2705 = vadd.f32 %v2641, 1e-05
  %v2706 = vadd.f32 %v2642, 1e-05
  %v2707 = vadd.f32 %v2643, 1e-05
  %v2708 = vadd.f32 %v2644, 1e-05
  %v2709 = vadd.f32 %v2645, 1e-05
  %v2710 = vrsqrt.pop %v2646
  %v2711 = vrsqrt.pop %v2647
  %v2712 = vrsqrt.pop %v2648
  %v2713 = vrsqrt.pop %v2649
  %v2714 = vrsqrt.pop %v2650
  %v2715 = vrsqrt.pop %v2651
  %v2716 = vrsqrt.pop %v2652
  %v2717 = vrsqrt.pop %v2653
  %v2718 = vrsqrt.pop %v2654
  %v2719 = vrsqrt.pop %v2655
  %v2720 = vrsqrt.pop %v2656
  %v2721 = vrsqrt.pop %v2657
  %v2722 = vrsqrt.pop %v2658
  %v2723 = vrsqrt.pop %v2659
  %v2724 = vrsqrt.pop %v2660
  %v2725 = vrsqrt.pop %v2661
  %v2726 = vrsqrt.pop %v2662
  %v2727 = vrsqrt.pop %v2663
  %v2728 = vrsqrt.pop %v2664
  %v2729 = vrsqrt.pop %v2665
  %v2730 = vrsqrt.pop %v2666
  %v2731 = vrsqrt.pop %v2667
  %v2732 = vrsqrt.pop %v2668
  %v2733 = vrsqrt.pop %v2669
  %v2734 = vrsqrt.pop %v2670
  %v2735 = vrsqrt.pop %v2671
  %v2736 = vrsqrt.pop %v2672
  %v2737 = vrsqrt.pop %v2673
  %v2738 = vrsqrt.pop %v2674
  %v2739 = vrsqrt.pop %v2675
  %v2740 = vrsqrt.pop %v2676
  %v2741 = vrsqrt.pop %v2677
  %v2742 = vrsqrt.pop %v2678
  %v2743 = vrsqrt.pop %v2679
  %v2744 = vrsqrt.pop %v2680
  %v2745 = vrsqrt.pop %v2681
  %v2746 = vrsqrt.pop %v2682
  %v2747 = vrsqrt.pop %v2683
  %v2748 = vrsqrt.pop %v2684
  %v2749 = vrsqrt.pop %v2685
  %v2750 = vrsqrt.pop %v2686
  %v2751 = vrsqrt.pop %v2687
  %v2752 = vrsqrt.pop %v2688
  %v2753 = vrsqrt.pop %v2689
  %v2754 = vrsqrt.pop %v2690
  %v2755 = vrsqrt.pop %v2691
  %v2756 = vrsqrt.pop %v2692
  %v2757 = vrsqrt.pop %v2693
  %v2758 = vrsqrt.pop %v2694
  %v2759 = vrsqrt.pop %v2695
  %v2760 = vrsqrt.pop %v2696
  %v2761 = vrsqrt.pop %v2697
  %v2762 = vrsqrt.pop %v2698
  %v2763 = vrsqrt.pop %v2699
  %v2764 = vrsqrt.pop %v2700
  %v2765 = vrsqrt.pop %v2701
  %v2766 = vrsqrt.pop %v2702
  %v2767 = vrsqrt.pop %v2703
  %v2768 = vrsqrt.pop %v2704
  %v2769 = vrsqrt.pop %v2705
  %v2770 = vrsqrt.pop %v2706
  %v2771 = vrsqrt.pop %v2707
  %v2772 = vrsqrt.pop %v2708
  %v2773 = vrsqrt.pop %v2709
  %v2774 = vld [vmem:[%s2] sm:$0xff]
  %v2775 = vld [vmem:[%s2 + $0x8] sm:$0xff]
  %v2776 = vld [vmem:[%s2 + $0x10] sm:$0xff]
  %v2777 = vld [vmem:[%s2 + $0x18] sm:$0xff]
  %v2778 = vld [vmem:[%s2 + $0x20] sm:$0xff]
  %v2779 = vld [vmem:[%s2 + $0x28] sm:$0xff]
  %v2780 = vld [vmem:[%s2 + $0x30] sm:$0xff]
  %v2781 = vld [vmem:[%s2 + $0x38] sm:$0xff]
  %v2782 = vld [vmem:[%s2 + $0x40] sm:$0xff]
  %v2783 = vld [vmem:[%s2 + $0x48] sm:$0xff]
  %v2784 = vld [vmem:[%s2 + $0x50] sm:$0xff]
  %v2785 = vld [vmem:[%s2 + $0x58] sm:$0xff]
  %v2786 = vld [vmem:[%s2 + $0x60] sm:$0xff]
  %v2787 = vld [vmem:[%s2 + $0x68] sm:$0xff]
  %v2788 = vld [vmem:[%s2 + $0x70] sm:$0xff]
  %v2789 = vld [vmem:[%s2 + $0x78] sm:$0xff]
  %v2790 = vld [vmem:[%s2 + $0x80] sm:$0xff]
  %v2791 = vld [vmem:[%s2 + $0x88] sm:$0xff]
  %v2792 = vld [vmem:[%s2 + $0x90] sm:$0xff]
  %v2793 = vld [vmem:[%s2 + $0x98] sm:$0xff]
  %v2794 = vld [vmem:[%s2 + $0xa0] sm:$0xff]
  %v2795 = vld [vmem:[%s2 + $0xa8] sm:$0xff]
  %v2796 = vld [vmem:[%s2 + $0xb0] sm:$0xff]
  %v2797 = vld [vmem:[%s2 + $0xb8] sm:$0xff]
  %v2798 = vld [vmem:[%s2 + $0xc0] sm:$0xff]
  %v2799 = vld [vmem:[%s2 + $0xc8] sm:$0xff]
  %v2800 = vld [vmem:[%s2 + $0xd0] sm:$0xff]
  %v2801 = vld [vmem:[%s2 + $0xd8] sm:$0xff]
  %v2802 = vld [vmem:[%s2 + $0xe0] sm:$0xff]
  %v2803 = vld [vmem:[%s2 + $0xe8] sm:$0xff]
  %v2804 = vld [vmem:[%s2 + $0xf0] sm:$0xff]
  %v2805 = vld [vmem:[%s2 + $0xf8] sm:$0xff]
  %v2806 = vld [vmem:[%s2 + $0x100] sm:$0xff]
  %v2807 = vld [vmem:[%s2 + $0x108] sm:$0xff]
  %v2808 = vld [vmem:[%s2 + $0x110] sm:$0xff]
  %v2809 = vld [vmem:[%s2 + $0x118] sm:$0xff]
  %v2810 = vld [vmem:[%s2 + $0x120] sm:$0xff]
  %v2811 = vld [vmem:[%s2 + $0x128] sm:$0xff]
  %v2812 = vld [vmem:[%s2 + $0x130] sm:$0xff]
  %v2813 = vld [vmem:[%s2 + $0x138] sm:$0xff]
  %v2814 = vld [vmem:[%s2 + $0x140] sm:$0xff]
  %v2815 = vld [vmem:[%s2 + $0x148] sm:$0xff]
  %v2816 = vld [vmem:[%s2 + $0x150] sm:$0xff]
  %v2817 = vld [vmem:[%s2 + $0x158] sm:$0xff]
  %v2818 = vld [vmem:[%s2 + $0x160] sm:$0xff]
  %v2819 = vld [vmem:[%s2 + $0x168] sm:$0xff]
  %v2820 = vld [vmem:[%s2 + $0x170] sm:$0xff]
  %v2821 = vld [vmem:[%s2 + $0x178] sm:$0xff]
  %v2822 = vld [vmem:[%s2 + $0x180] sm:$0xff]
  %v2823 = vld [vmem:[%s2 + $0x188] sm:$0xff]
  %v2824 = vld [vmem:[%s2 + $0x190] sm:$0xff]
  %v2825 = vld [vmem:[%s2 + $0x198] sm:$0xff]
  %v2826 = vld [vmem:[%s2 + $0x1a0] sm:$0xff]
  %v2827 = vld [vmem:[%s2 + $0x1a8] sm:$0xff]
  %v2828 = vld [vmem:[%s2 + $0x1b0] sm:$0xff]
  %v2829 = vld [vmem:[%s2 + $0x1b8] sm:$0xff]
  %v2830 = vld [vmem:[%s2 + $0x1c0] sm:$0xff]
  %v2831 = vld [vmem:[%s2 + $0x1c8] sm:$0xff]
  %v2832 = vld [vmem:[%s2 + $0x1d0] sm:$0xff]
  %v2833 = vld [vmem:[%s2 + $0x1d8] sm:$0xff]
  %v2834 = vld [vmem:[%s2 + $0x1e0] sm:$0xff]
  %v2835 = vld [vmem:[%s2 + $0x1e8] sm:$0xff]
  %v2836 = vld [vmem:[%s2 + $0x1f0] sm:$0xff]
  %v2837 = vld [vmem:[%s2 + $0x1f8] sm:$0xff]
  %v2838 = vmul.f32 %v2774, %v2710
  %v2839 = vmul.f32 %v2775, %v2711
  %v2840 = vmul.f32 %v2776, %v2712
  %v2841 = vmul.f32 %v2777, %v2713
  %v2842 = vmul.f32 %v2778, %v2714
  %v2843 = vmul.f32 %v2779, %v2715
  %v2844 = vmul.f32 %v2780, %v2716
  %v2845 = vmul.f32 %v2781, %v2717
  %v2846 = vmul.f32 %v2782, %v2718
  %v2847 = vmul.f32 %v2783, %v2719
  %v2848 = vmul.f32 %v2784, %v2720
  %v2849 = vmul.f32 %v2785, %v2721
  %v2850 = vmul.f32 %v2786, %v2722
  %v2851 = vmul.f32 %v2787, %v2723
  %v2852 = vmul.f32 %v2788, %v2724
  %v2853 = vmul.f32 %v2789, %v2725
  %v2854 = vmul.f32 %v2790, %v2726
  %v2855 = vmul.f32 %v2791, %v2727
  %v2856 = vmul.f32 %v2792, %v2728
  %v2857 = vmul.f32 %v2793, %v2729
  %v2858 = vmul.f32 %v2794, %v2730
  %v2859 = vmul.f32 %v2795, %v2731
  %v2860 = vmul.f32 %v2796, %v2732
  %v2861 = vmul.f32 %v2797, %v2733
  %v2862 = vmul.f32 %v2798, %v2734
  %v2863 = vmul.f32 %v2799, %v2735
  %v2864 = vmul.f32 %v2800, %v2736
  %v2865 = vmul.f32 %v2801, %v2737
  %v2866 = vmul.f32 %v2802, %v2738
  %v2867 = vmul.f32 %v2803, %v2739
  %v2868 = vmul.f32 %v2804, %v2740
  %v2869 = vmul.f32 %v2805, %v2741
  %v2870 = vmul.f32 %v2806, %v2742
  %v2871 = vmul.f32 %v2807, %v2743
  %v2872 = vmul.f32 %v2808, %v2744
  %v2873 = vmul.f32 %v2809, %v2745
  %v2874 = vmul.f32 %v2810, %v2746
  %v2875 = vmul.f32 %v2811, %v2747
  %v2876 = vmul.f32 %v2812, %v2748
  %v2877 = vmul.f32 %v2813, %v2749
  %v2878 = vmul.f32 %v2814, %v2750
  %v2879 = vmul.f32 %v2815, %v2751
  %v2880 = vmul.f32 %v2816, %v2752
  %v2881 = vmul.f32 %v2817, %v2753
  %v2882 = vmul.f32 %v2818, %v2754
  %v2883 = vmul.f32 %v2819, %v2755
  %v2884 = vmul.f32 %v2820, %v2756
  %v2885 = vmul.f32 %v2821, %v2757
  %v2886 = vmul.f32 %v2822, %v2758
  %v2887 = vmul.f32 %v2823, %v2759
  %v2888 = vmul.f32 %v2824, %v2760
  %v2889 = vmul.f32 %v2825, %v2761
  %v2890 = vmul.f32 %v2826, %v2762
  %v2891 = vmul.f32 %v2827, %v2763
  %v2892 = vmul.f32 %v2828, %v2764
  %v2893 = vmul.f32 %v2829, %v2765
  %v2894 = vmul.f32 %v2830, %v2766
  %v2895 = vmul.f32 %v2831, %v2767
  %v2896 = vmul.f32 %v2832, %v2768
  %v2897 = vmul.f32 %v2833, %v2769
  %v2898 = vmul.f32 %v2834, %v2770
  %v2899 = vmul.f32 %v2835, %v2771
  %v2900 = vmul.f32 %v2836, %v2772
  %v2901 = vmul.f32 %v2837, %v2773
  %2903 = vset.pattern.permute.xlu0 0
  %2904 = vperm.xlu0 %2903, %v2838
  %v2905 = vpop.permute.xlu0 %2904
  %2908 = vset.pattern.permute.xlu0 0
  %2909 = vperm.xlu0 %2908, %v2839
  %v2910 = vpop.permute.xlu0 %2909
  %2913 = vset.pattern.permute.xlu0 0
  %2914 = vperm.xlu0 %2913, %v2840
  %v2915 = vpop.permute.xlu0 %2914
  %2918 = vset.pattern.permute.xlu0 0
  %2919 = vperm.xlu0 %2918, %v2841
  %v2920 = vpop.permute.xlu0 %2919
  %2923 = vset.pattern.permute.xlu0 0
  %2924 = vperm.xlu0 %2923, %v2842
  %v2925 = vpop.permute.xlu0 %2924
  %2928 = vset.pattern.permute.xlu0 0
  %2929 = vperm.xlu0 %2928, %v2843
  %v2930 = vpop.permute.xlu0 %2929
  %2933 = vset.pattern.permute.xlu0 0
  %2934 = vperm.xlu0 %2933, %v2844
  %v2935 = vpop.permute.xlu0 %2934
  %2938 = vset.pattern.permute.xlu0 0
  %2939 = vperm.xlu0 %2938, %v2845
  %v2940 = vpop.permute.xlu0 %2939
  %2943 = vset.pattern.permute.xlu0 0
  %2944 = vperm.xlu0 %2943, %v2846
  %v2945 = vpop.permute.xlu0 %2944
  %2948 = vset.pattern.permute.xlu0 0
  %2949 = vperm.xlu0 %2948, %v2847
  %v2950 = vpop.permute.xlu0 %2949
  %2953 = vset.pattern.permute.xlu0 0
  %2954 = vperm.xlu0 %2953, %v2848
  %v2955 = vpop.permute.xlu0 %2954
  %2958 = vset.pattern.permute.xlu0 0
  %2959 = vperm.xlu0 %2958, %v2849
  %v2960 = vpop.permute.xlu0 %2959
  %2963 = vset.pattern.permute.xlu0 0
  %2964 = vperm.xlu0 %2963, %v2850
  %v2965 = vpop.permute.xlu0 %2964
  %2968 = vset.pattern.permute.xlu0 0
  %2969 = vperm.xlu0 %2968, %v2851
  %v2970 = vpop.permute.xlu0 %2969
  %2973 = vset.pattern.permute.xlu0 0
  %2974 = vperm.xlu0 %2973, %v2852
  %v2975 = vpop.permute.xlu0 %2974
  %2978 = vset.pattern.permute.xlu0 0
  %2979 = vperm.xlu0 %2978, %v2853
  %v2980 = vpop.permute.xlu0 %2979
  %2983 = vset.pattern.permute.xlu0 0
  %2984 = vperm.xlu0 %2983, %v2854
  %v2985 = vpop.permute.xlu0 %2984
  %2988 = vset.pattern.permute.xlu0 0
  %2989 = vperm.xlu0 %2988, %v2855
  %v2990 = vpop.permute.xlu0 %2989
  %2993 = vset.pattern.permute.xlu0 0
  %2994 = vperm.xlu0 %2993, %v2856
  %v2995 = vpop.permute.xlu0 %2994
  %2998 = vset.pattern.permute.xlu0 0
  %2999 = vperm.xlu0 %2998, %v2857
  %v3000 = vpop.permute.xlu0 %2999
  %3003 = vset.pattern.permute.xlu0 0
  %3004 = vperm.xlu0 %3003, %v2858
  %v3005 = vpop.permute.xlu0 %3004
  %3008 = vset.pattern.permute.xlu0 0
  %3009 = vperm.xlu0 %3008, %v2859
  %v3010 = vpop.permute.xlu0 %3009
  %3013 = vset.pattern.permute.xlu0 0
  %3014 = vperm.xlu0 %3013, %v2860
  %v3015 = vpop.permute.xlu0 %3014
  %3018 = vset.pattern.permute.xlu0 0
  %3019 = vperm.xlu0 %3018, %v2861
  %v3020 = vpop.permute.xlu0 %3019
  %3023 = vset.pattern.permute.xlu0 0
  %3024 = vperm.xlu0 %3023, %v2862
  %v3025 = vpop.permute.xlu0 %3024
  %3028 = vset.pattern.permute.xlu0 0
  %3029 = vperm.xlu0 %3028, %v2863
  %v3030 = vpop.permute.xlu0 %3029
  %3033 = vset.pattern.permute.xlu0 0
  %3034 = vperm.xlu0 %3033, %v2864
  %v3035 = vpop.permute.xlu0 %3034
  %3038 = vset.pattern.permute.xlu0 0
  %3039 = vperm.xlu0 %3038, %v2865
  %v3040 = vpop.permute.xlu0 %3039
  %3043 = vset.pattern.permute.xlu0 0
  %3044 = vperm.xlu0 %3043, %v2866
  %v3045 = vpop.permute.xlu0 %3044
  %3048 = vset.pattern.permute.xlu0 0
  %3049 = vperm.xlu0 %3048, %v2867
  %v3050 = vpop.permute.xlu0 %3049
  %3053 = vset.pattern.permute.xlu0 0
  %3054 = vperm.xlu0 %3053, %v2868
  %v3055 = vpop.permute.xlu0 %3054
  %3058 = vset.pattern.permute.xlu0 0
  %3059 = vperm.xlu0 %3058, %v2869
  %v3060 = vpop.permute.xlu0 %3059
  %3063 = vset.pattern.permute.xlu0 0
  %3064 = vperm.xlu0 %3063, %v2870
  %v3065 = vpop.permute.xlu0 %3064
  %3068 = vset.pattern.permute.xlu0 0
  %3069 = vperm.xlu0 %3068, %v2871
  %v3070 = vpop.permute.xlu0 %3069
  %3073 = vset.pattern.permute.xlu0 0
  %3074 = vperm.xlu0 %3073, %v2872
  %v3075 = vpop.permute.xlu0 %3074
  %3078 = vset.pattern.permute.xlu0 0
  %3079 = vperm.xlu0 %3078, %v2873
  %v3080 = vpop.permute.xlu0 %3079
  %3083 = vset.pattern.permute.xlu0 0
  %3084 = vperm.xlu0 %3083, %v2874
  %v3085 = vpop.permute.xlu0 %3084
  %3088 = vset.pattern.permute.xlu0 0
  %3089 = vperm.xlu0 %3088, %v2875
  %v3090 = vpop.permute.xlu0 %3089
  %3093 = vset.pattern.permute.xlu0 0
  %3094 = vperm.xlu0 %3093, %v2876
  %v3095 = vpop.permute.xlu0 %3094
  %3098 = vset.pattern.permute.xlu0 0
  %3099 = vperm.xlu0 %3098, %v2877
  %v3100 = vpop.permute.xlu0 %3099
  %3103 = vset.pattern.permute.xlu0 0
  %3104 = vperm.xlu0 %3103, %v2878
  %v3105 = vpop.permute.xlu0 %3104
  %3108 = vset.pattern.permute.xlu0 0
  %3109 = vperm.xlu0 %3108, %v2879
  %v3110 = vpop.permute.xlu0 %3109
  %3113 = vset.pattern.permute.xlu0 0
  %3114 = vperm.xlu0 %3113, %v2880
  %v3115 = vpop.permute.xlu0 %3114
  %3118 = vset.pattern.permute.xlu0 0
  %3119 = vperm.xlu0 %3118, %v2881
  %v3120 = vpop.permute.xlu0 %3119
  %3123 = vset.pattern.permute.xlu0 0
  %3124 = vperm.xlu0 %3123, %v2882
  %v3125 = vpop.permute.xlu0 %3124
  %3128 = vset.pattern.permute.xlu0 0
  %3129 = vperm.xlu0 %3128, %v2883
  %v3130 = vpop.permute.xlu0 %3129
  %3133 = vset.pattern.permute.xlu0 0
  %3134 = vperm.xlu0 %3133, %v2884
  %v3135 = vpop.permute.xlu0 %3134
  %3138 = vset.pattern.permute.xlu0 0
  %3139 = vperm.xlu0 %3138, %v2885
  %v3140 = vpop.permute.xlu0 %3139
  %3143 = vset.pattern.permute.xlu0 0
  %3144 = vperm.xlu0 %3143, %v2886
  %v3145 = vpop.permute.xlu0 %3144
  %3148 = vset.pattern.permute.xlu0 0
  %3149 = vperm.xlu0 %3148, %v2887
  %v3150 = vpop.permute.xlu0 %3149
  %3153 = vset.pattern.permute.xlu0 0
  %3154 = vperm.xlu0 %3153, %v2888
  %v3155 = vpop.permute.xlu0 %3154
  %3158 = vset.pattern.permute.xlu0 0
  %3159 = vperm.xlu0 %3158, %v2889
  %v3160 = vpop.permute.xlu0 %3159
  %3163 = vset.pattern.permute.xlu0 0
  %3164 = vperm.xlu0 %3163, %v2890
  %v3165 = vpop.permute.xlu0 %3164
  %3168 = vset.pattern.permute.xlu0 0
  %3169 = vperm.xlu0 %3168, %v2891
  %v3170 = vpop.permute.xlu0 %3169
  %3173 = vset.pattern.permute.xlu0 0
  %3174 = vperm.xlu0 %3173, %v2892
  %v3175 = vpop.permute.xlu0 %3174
  %3178 = vset.pattern.permute.xlu0 0
  %3179 = vperm.xlu0 %3178, %v2893
  %v3180 = vpop.permute.xlu0 %3179
  %3183 = vset.pattern.permute.xlu0 0
  %3184 = vperm.xlu0 %3183, %v2894
  %v3185 = vpop.permute.xlu0 %3184
  %3188 = vset.pattern.permute.xlu0 0
  %3189 = vperm.xlu0 %3188, %v2895
  %v3190 = vpop.permute.xlu0 %3189
  %3193 = vset.pattern.permute.xlu0 0
  %3194 = vperm.xlu0 %3193, %v2896
  %v3195 = vpop.permute.xlu0 %3194
  %3198 = vset.pattern.permute.xlu0 0
  %3199 = vperm.xlu0 %3198, %v2897
  %v3200 = vpop.permute.xlu0 %3199
  %3203 = vset.pattern.permute.xlu0 0
  %3204 = vperm.xlu0 %3203, %v2898
  %v3205 = vpop.permute.xlu0 %3204
  %3208 = vset.pattern.permute.xlu0 0
  %3209 = vperm.xlu0 %3208, %v2899
  %v3210 = vpop.permute.xlu0 %3209
  %3213 = vset.pattern.permute.xlu0 0
  %3214 = vperm.xlu0 %3213, %v2900
  %v3215 = vpop.permute.xlu0 %3214
  %3218 = vset.pattern.permute.xlu0 0
  %3219 = vperm.xlu0 %3218, %v2901
  %v3220 = vpop.permute.xlu0 %3219
  %v3222 = vmul.f32 %v1110, %v2905
  %v3223 = vmul.f32 %v1111, %v2905
  %v3224 = vmul.f32 %v1112, %v2905
  %v3225 = vmul.f32 %v1113, %v2905
  %v3226 = vmul.f32 %v1114, %v2905
  %v3227 = vmul.f32 %v1115, %v2905
  %v3228 = vmul.f32 %v1116, %v2905
  %v3229 = vmul.f32 %v1117, %v2910
  %v3230 = vmul.f32 %v1118, %v2910
  %v3231 = vmul.f32 %v1119, %v2910
  %v3232 = vmul.f32 %v1120, %v2910
  %v3233 = vmul.f32 %v1121, %v2910
  %v3234 = vmul.f32 %v1122, %v2910
  %v3235 = vmul.f32 %v1123, %v2910
  %v3236 = vmul.f32 %v1124, %v2915
  %v3237 = vmul.f32 %v1125, %v2915
  %v3238 = vmul.f32 %v1126, %v2915
  %v3239 = vmul.f32 %v1127, %v2915
  %v3240 = vmul.f32 %v1128, %v2915
  %v3241 = vmul.f32 %v1129, %v2915
  %v3242 = vmul.f32 %v1130, %v2915
  %v3243 = vmul.f32 %v1131, %v2920
  %v3244 = vmul.f32 %v1132, %v2920
  %v3245 = vmul.f32 %v1133, %v2920
  %v3246 = vmul.f32 %v1134, %v2920
  %v3247 = vmul.f32 %v1135, %v2920
  %v3248 = vmul.f32 %v1136, %v2920
  %v3249 = vmul.f32 %v1137, %v2920
  %v3250 = vmul.f32 %v1138, %v2925
  %v3251 = vmul.f32 %v1139, %v2925
  %v3252 = vmul.f32 %v1140, %v2925
  %v3253 = vmul.f32 %v1141, %v2925
  %v3254 = vmul.f32 %v1142, %v2925
  %v3255 = vmul.f32 %v1143, %v2925
  %v3256 = vmul.f32 %v1144, %v2925
  %v3257 = vmul.f32 %v1145, %v2930
  %v3258 = vmul.f32 %v1146, %v2930
  %v3259 = vmul.f32 %v1147, %v2930
  %v3260 = vmul.f32 %v1148, %v2930
  %v3261 = vmul.f32 %v1149, %v2930
  %v3262 = vmul.f32 %v1150, %v2930
  %v3263 = vmul.f32 %v1151, %v2930
  %v3264 = vmul.f32 %v1152, %v2935
  %v3265 = vmul.f32 %v1153, %v2935
  %v3266 = vmul.f32 %v1154, %v2935
  %v3267 = vmul.f32 %v1155, %v2935
  %v3268 = vmul.f32 %v1156, %v2935
  %v3269 = vmul.f32 %v1157, %v2935
  %v3270 = vmul.f32 %v1158, %v2935
  %v3271 = vmul.f32 %v1159, %v2940
  %v3272 = vmul.f32 %v1160, %v2940
  %v3273 = vmul.f32 %v1161, %v2940
  %v3274 = vmul.f32 %v1162, %v2940
  %v3275 = vmul.f32 %v1163, %v2940
  %v3276 = vmul.f32 %v1164, %v2940
  %v3277 = vmul.f32 %v1165, %v2940
  %v3278 = vmul.f32 %v1166, %v2945
  %v3279 = vmul.f32 %v1167, %v2945
  %v3280 = vmul.f32 %v1168, %v2945
  %v3281 = vmul.f32 %v1169, %v2945
  %v3282 = vmul.f32 %v1170, %v2945
  %v3283 = vmul.f32 %v1171, %v2945
  %v3284 = vmul.f32 %v1172, %v2945
  %v3285 = vmul.f32 %v1173, %v2950
  %v3286 = vmul.f32 %v1174, %v2950
  %v3287 = vmul.f32 %v1175, %v2950
  %v3288 = vmul.f32 %v1176, %v2950
  %v3289 = vmul.f32 %v1177, %v2950
  %v3290 = vmul.f32 %v1178, %v2950
  %v3291 = vmul.f32 %v1179, %v2950
  %v3292 = vmul.f32 %v1180, %v2955
  %v3293 = vmul.f32 %v1181, %v2955
  %v3294 = vmul.f32 %v1182, %v2955
  %v3295 = vmul.f32 %v1183, %v2955
  %v3296 = vmul.f32 %v1184, %v2955
  %v3297 = vmul.f32 %v1185, %v2955
  %v3298 = vmul.f32 %v1186, %v2955
  %v3299 = vmul.f32 %v1187, %v2960
  %v3300 = vmul.f32 %v1188, %v2960
  %v3301 = vmul.f32 %v1189, %v2960
  %v3302 = vmul.f32 %v1190, %v2960
  %v3303 = vmul.f32 %v1191, %v2960
  %v3304 = vmul.f32 %v1192, %v2960
  %v3305 = vmul.f32 %v1193, %v2960
  %v3306 = vmul.f32 %v1194, %v2965
  %v3307 = vmul.f32 %v1195, %v2965
  %v3308 = vmul.f32 %v1196, %v2965
  %v3309 = vmul.f32 %v1197, %v2965
  %v3310 = vmul.f32 %v1198, %v2965
  %v3311 = vmul.f32 %v1199, %v2965
  %v3312 = vmul.f32 %v1200, %v2965
  %v3313 = vmul.f32 %v1201, %v2970
  %v3314 = vmul.f32 %v1202, %v2970
  %v3315 = vmul.f32 %v1203, %v2970
  %v3316 = vmul.f32 %v1204, %v2970
  %v3317 = vmul.f32 %v1205, %v2970
  %v3318 = vmul.f32 %v1206, %v2970
  %v3319 = vmul.f32 %v1207, %v2970
  %v3320 = vmul.f32 %v1208, %v2975
  %v3321 = vmul.f32 %v1209, %v2975
  %v3322 = vmul.f32 %v1210, %v2975
  %v3323 = vmul.f32 %v1211, %v2975
  %v3324 = vmul.f32 %v1212, %v2975
  %v3325 = vmul.f32 %v1213, %v2975
  %v3326 = vmul.f32 %v1214, %v2975
  %v3327 = vmul.f32 %v1215, %v2980
  %v3328 = vmul.f32 %v1216, %v2980
  %v3329 = vmul.f32 %v1217, %v2980
  %v3330 = vmul.f32 %v1218, %v2980
  %v3331 = vmul.f32 %v1219, %v2980
  %v3332 = vmul.f32 %v1220, %v2980
  %v3333 = vmul.f32 %v1221, %v2980
  %v3334 = vmul.f32 %v1222, %v2985
  %v3335 = vmul.f32 %v1223, %v2985
  %v3336 = vmul.f32 %v1224, %v2985
  %v3337 = vmul.f32 %v1225, %v2985
  %v3338 = vmul.f32 %v1226, %v2985
  %v3339 = vmul.f32 %v1227, %v2985
  %v3340 = vmul.f32 %v1228, %v2985
  %v3341 = vmul.f32 %v1229, %v2990
  %v3342 = vmul.f32 %v1230, %v2990
  %v3343 = vmul.f32 %v1231, %v2990
  %v3344 = vmul.f32 %v1232, %v2990
  %v3345 = vmul.f32 %v1233, %v2990
  %v3346 = vmul.f32 %v1234, %v2990
  %v3347 = vmul.f32 %v1235, %v2990
  %v3348 = vmul.f32 %v1236, %v2995
  %v3349 = vmul.f32 %v1237, %v2995
  %v3350 = vmul.f32 %v1238, %v2995
  %v3351 = vmul.f32 %v1239, %v2995
  %v3352 = vmul.f32 %v1240, %v2995
  %v3353 = vmul.f32 %v1241, %v2995
  %v3354 = vmul.f32 %v1242, %v2995
  %v3355 = vmul.f32 %v1243, %v3000
  %v3356 = vmul.f32 %v1244, %v3000
  %v3357 = vmul.f32 %v1245, %v3000
  %v3358 = vmul.f32 %v1246, %v3000
  %v3359 = vmul.f32 %v1247, %v3000
  %v3360 = vmul.f32 %v1248, %v3000
  %v3361 = vmul.f32 %v1249, %v3000
  %v3362 = vmul.f32 %v1250, %v3005
  %v3363 = vmul.f32 %v1251, %v3005
  %v3364 = vmul.f32 %v1252, %v3005
  %v3365 = vmul.f32 %v1253, %v3005
  %v3366 = vmul.f32 %v1254, %v3005
  %v3367 = vmul.f32 %v1255, %v3005
  %v3368 = vmul.f32 %v1256, %v3005
  %v3369 = vmul.f32 %v1257, %v3010
  %v3370 = vmul.f32 %v1258, %v3010
  %v3371 = vmul.f32 %v1259, %v3010
  %v3372 = vmul.f32 %v1260, %v3010
  %v3373 = vmul.f32 %v1261, %v3010
  %v3374 = vmul.f32 %v1262, %v3010
  %v3375 = vmul.f32 %v1263, %v3010
  %v3376 = vmul.f32 %v1264, %v3015
  %v3377 = vmul.f32 %v1265, %v3015
  %v3378 = vmul.f32 %v1266, %v3015
  %v3379 = vmul.f32 %v1267, %v3015
  %v3380 = vmul.f32 %v1268, %v3015
  %v3381 = vmul.f32 %v1269, %v3015
  %v3382 = vmul.f32 %v1270, %v3015
  %v3383 = vmul.f32 %v1271, %v3020
  %v3384 = vmul.f32 %v1272, %v3020
  %v3385 = vmul.f32 %v1273, %v3020
  %v3386 = vmul.f32 %v1274, %v3020
  %v3387 = vmul.f32 %v1275, %v3020
  %v3388 = vmul.f32 %v1276, %v3020
  %v3389 = vmul.f32 %v1277, %v3020
  %v3390 = vmul.f32 %v1278, %v3025
  %v3391 = vmul.f32 %v1279, %v3025
  %v3392 = vmul.f32 %v1280, %v3025
  %v3393 = vmul.f32 %v1281, %v3025
  %v3394 = vmul.f32 %v1282, %v3025
  %v3395 = vmul.f32 %v1283, %v3025
  %v3396 = vmul.f32 %v1284, %v3025
  %v3397 = vmul.f32 %v1285, %v3030
  %v3398 = vmul.f32 %v1286, %v3030
  %v3399 = vmul.f32 %v1287, %v3030
  %v3400 = vmul.f32 %v1288, %v3030
  %v3401 = vmul.f32 %v1289, %v3030
  %v3402 = vmul.f32 %v1290, %v3030
  %v3403 = vmul.f32 %v1291, %v3030
  %v3404 = vmul.f32 %v1292, %v3035
  %v3405 = vmul.f32 %v1293, %v3035
  %v3406 = vmul.f32 %v1294, %v3035
  %v3407 = vmul.f32 %v1295, %v3035
  %v3408 = vmul.f32 %v1296, %v3035
  %v3409 = vmul.f32 %v1297, %v3035
  %v3410 = vmul.f32 %v1298, %v3035
  %v3411 = vmul.f32 %v1299, %v3040
  %v3412 = vmul.f32 %v1300, %v3040
  %v3413 = vmul.f32 %v1301, %v3040
  %v3414 = vmul.f32 %v1302, %v3040
  %v3415 = vmul.f32 %v1303, %v3040
  %v3416 = vmul.f32 %v1304, %v3040
  %v3417 = vmul.f32 %v1305, %v3040
  %v3418 = vmul.f32 %v1306, %v3045
  %v3419 = vmul.f32 %v1307, %v3045
  %v3420 = vmul.f32 %v1308, %v3045
  %v3421 = vmul.f32 %v1309, %v3045
  %v3422 = vmul.f32 %v1310, %v3045
  %v3423 = vmul.f32 %v1311, %v3045
  %v3424 = vmul.f32 %v1312, %v3045
  %v3425 = vmul.f32 %v1313, %v3050
  %v3426 = vmul.f32 %v1314, %v3050
  %v3427 = vmul.f32 %v1315, %v3050
  %v3428 = vmul.f32 %v1316, %v3050
  %v3429 = vmul.f32 %v1317, %v3050
  %v3430 = vmul.f32 %v1318, %v3050
  %v3431 = vmul.f32 %v1319, %v3050
  %v3432 = vmul.f32 %v1320, %v3055
  %v3433 = vmul.f32 %v1321, %v3055
  %v3434 = vmul.f32 %v1322, %v3055
  %v3435 = vmul.f32 %v1323, %v3055
  %v3436 = vmul.f32 %v1324, %v3055
  %v3437 = vmul.f32 %v1325, %v3055
  %v3438 = vmul.f32 %v1326, %v3055
  %v3439 = vmul.f32 %v1327, %v3060
  %v3440 = vmul.f32 %v1328, %v3060
  %v3441 = vmul.f32 %v1329, %v3060
  %v3442 = vmul.f32 %v1330, %v3060
  %v3443 = vmul.f32 %v1331, %v3060
  %v3444 = vmul.f32 %v1332, %v3060
  %v3445 = vmul.f32 %v1333, %v3060
  %v3446 = vmul.f32 %v1334, %v3065
  %v3447 = vmul.f32 %v1335, %v3065
  %v3448 = vmul.f32 %v1336, %v3065
  %v3449 = vmul.f32 %v1337, %v3065
  %v3450 = vmul.f32 %v1338, %v3065
  %v3451 = vmul.f32 %v1339, %v3065
  %v3452 = vmul.f32 %v1340, %v3065
  %v3453 = vmul.f32 %v1341, %v3070
  %v3454 = vmul.f32 %v1342, %v3070
  %v3455 = vmul.f32 %v1343, %v3070
  %v3456 = vmul.f32 %v1344, %v3070
  %v3457 = vmul.f32 %v1345, %v3070
  %v3458 = vmul.f32 %v1346, %v3070
  %v3459 = vmul.f32 %v1347, %v3070
  %v3460 = vmul.f32 %v1348, %v3075
  %v3461 = vmul.f32 %v1349, %v3075
  %v3462 = vmul.f32 %v1350, %v3075
  %v3463 = vmul.f32 %v1351, %v3075
  %v3464 = vmul.f32 %v1352, %v3075
  %v3465 = vmul.f32 %v1353, %v3075
  %v3466 = vmul.f32 %v1354, %v3075
  %v3467 = vmul.f32 %v1355, %v3080
  %v3468 = vmul.f32 %v1356, %v3080
  %v3469 = vmul.f32 %v1357, %v3080
  %v3470 = vmul.f32 %v1358, %v3080
  %v3471 = vmul.f32 %v1359, %v3080
  %v3472 = vmul.f32 %v1360, %v3080
  %v3473 = vmul.f32 %v1361, %v3080
  %v3474 = vmul.f32 %v1362, %v3085
  %v3475 = vmul.f32 %v1363, %v3085
  %v3476 = vmul.f32 %v1364, %v3085
  %v3477 = vmul.f32 %v1365, %v3085
  %v3478 = vmul.f32 %v1366, %v3085
  %v3479 = vmul.f32 %v1367, %v3085
  %v3480 = vmul.f32 %v1368, %v3085
  %v3481 = vmul.f32 %v1369, %v3090
  %v3482 = vmul.f32 %v1370, %v3090
  %v3483 = vmul.f32 %v1371, %v3090
  %v3484 = vmul.f32 %v1372, %v3090
  %v3485 = vmul.f32 %v1373, %v3090
  %v3486 = vmul.f32 %v1374, %v3090
  %v3487 = vmul.f32 %v1375, %v3090
  %v3488 = vmul.f32 %v1376, %v3095
  %v3489 = vmul.f32 %v1377, %v3095
  %v3490 = vmul.f32 %v1378, %v3095
  %v3491 = vmul.f32 %v1379, %v3095
  %v3492 = vmul.f32 %v1380, %v3095
  %v3493 = vmul.f32 %v1381, %v3095
  %v3494 = vmul.f32 %v1382, %v3095
  %v3495 = vmul.f32 %v1383, %v3100
  %v3496 = vmul.f32 %v1384, %v3100
  %v3497 = vmul.f32 %v1385, %v3100
  %v3498 = vmul.f32 %v1386, %v3100
  %v3499 = vmul.f32 %v1387, %v3100
  %v3500 = vmul.f32 %v1388, %v3100
  %v3501 = vmul.f32 %v1389, %v3100
  %v3502 = vmul.f32 %v1390, %v3105
  %v3503 = vmul.f32 %v1391, %v3105
  %v3504 = vmul.f32 %v1392, %v3105
  %v3505 = vmul.f32 %v1393, %v3105
  %v3506 = vmul.f32 %v1394, %v3105
  %v3507 = vmul.f32 %v1395, %v3105
  %v3508 = vmul.f32 %v1396, %v3105
  %v3509 = vmul.f32 %v1397, %v3110
  %v3510 = vmul.f32 %v1398, %v3110
  %v3511 = vmul.f32 %v1399, %v3110
  %v3512 = vmul.f32 %v1400, %v3110
  %v3513 = vmul.f32 %v1401, %v3110
  %v3514 = vmul.f32 %v1402, %v3110
  %v3515 = vmul.f32 %v1403, %v3110
  %v3516 = vmul.f32 %v1404, %v3115
  %v3517 = vmul.f32 %v1405, %v3115
  %v3518 = vmul.f32 %v1406, %v3115
  %v3519 = vmul.f32 %v1407, %v3115
  %v3520 = vmul.f32 %v1408, %v3115
  %v3521 = vmul.f32 %v1409, %v3115
  %v3522 = vmul.f32 %v1410, %v3115
  %v3523 = vmul.f32 %v1411, %v3120
  %v3524 = vmul.f32 %v1412, %v3120
  %v3525 = vmul.f32 %v1413, %v3120
  %v3526 = vmul.f32 %v1414, %v3120
  %v3527 = vmul.f32 %v1415, %v3120
  %v3528 = vmul.f32 %v1416, %v3120
  %v3529 = vmul.f32 %v1417, %v3120
  %v3530 = vmul.f32 %v1418, %v3125
  %v3531 = vmul.f32 %v1419, %v3125
  %v3532 = vmul.f32 %v1420, %v3125
  %v3533 = vmul.f32 %v1421, %v3125
  %v3534 = vmul.f32 %v1422, %v3125
  %v3535 = vmul.f32 %v1423, %v3125
  %v3536 = vmul.f32 %v1424, %v3125
  %v3537 = vmul.f32 %v1425, %v3130
  %v3538 = vmul.f32 %v1426, %v3130
  %v3539 = vmul.f32 %v1427, %v3130
  %v3540 = vmul.f32 %v1428, %v3130
  %v3541 = vmul.f32 %v1429, %v3130
  %v3542 = vmul.f32 %v1430, %v3130
  %v3543 = vmul.f32 %v1431, %v3130
  %v3544 = vmul.f32 %v1432, %v3135
  %v3545 = vmul.f32 %v1433, %v3135
  %v3546 = vmul.f32 %v1434, %v3135
  %v3547 = vmul.f32 %v1435, %v3135
  %v3548 = vmul.f32 %v1436, %v3135
  %v3549 = vmul.f32 %v1437, %v3135
  %v3550 = vmul.f32 %v1438, %v3135
  %v3551 = vmul.f32 %v1439, %v3140
  %v3552 = vmul.f32 %v1440, %v3140
  %v3553 = vmul.f32 %v1441, %v3140
  %v3554 = vmul.f32 %v1442, %v3140
  %v3555 = vmul.f32 %v1443, %v3140
  %v3556 = vmul.f32 %v1444, %v3140
  %v3557 = vmul.f32 %v1445, %v3140
  %v3558 = vmul.f32 %v1446, %v3145
  %v3559 = vmul.f32 %v1447, %v3145
  %v3560 = vmul.f32 %v1448, %v3145
  %v3561 = vmul.f32 %v1449, %v3145
  %v3562 = vmul.f32 %v1450, %v3145
  %v3563 = vmul.f32 %v1451, %v3145
  %v3564 = vmul.f32 %v1452, %v3145
  %v3565 = vmul.f32 %v1453, %v3150
  %v3566 = vmul.f32 %v1454, %v3150
  %v3567 = vmul.f32 %v1455, %v3150
  %v3568 = vmul.f32 %v1456, %v3150
  %v3569 = vmul.f32 %v1457, %v3150
  %v3570 = vmul.f32 %v1458, %v3150
  %v3571 = vmul.f32 %v1459, %v3150
  %v3572 = vmul.f32 %v1460, %v3155
  %v3573 = vmul.f32 %v1461, %v3155
  %v3574 = vmul.f32 %v1462, %v3155
  %v3575 = vmul.f32 %v1463, %v3155
  %v3576 = vmul.f32 %v1464, %v3155
  %v3577 = vmul.f32 %v1465, %v3155
  %v3578 = vmul.f32 %v1466, %v3155
  %v3579 = vmul.f32 %v1467, %v3160
  %v3580 = vmul.f32 %v1468, %v3160
  %v3581 = vmul.f32 %v1469, %v3160
  %v3582 = vmul.f32 %v1470, %v3160
  %v3583 = vmul.f32 %v1471, %v3160
  %v3584 = vmul.f32 %v1472, %v3160
  %v3585 = vmul.f32 %v1473, %v3160
  %v3586 = vmul.f32 %v1474, %v3165
  %v3587 = vmul.f32 %v1475, %v3165
  %v3588 = vmul.f32 %v1476, %v3165
  %v3589 = vmul.f32 %v1477, %v3165
  %v3590 = vmul.f32 %v1478, %v3165
  %v3591 = vmul.f32 %v1479, %v3165
  %v3592 = vmul.f32 %v1480, %v3165
  %v3593 = vmul.f32 %v1481, %v3170
  %v3594 = vmul.f32 %v1482, %v3170
  %v3595 = vmul.f32 %v1483, %v3170
  %v3596 = vmul.f32 %v1484, %v3170
  %v3597 = vmul.f32 %v1485, %v3170
  %v3598 = vmul.f32 %v1486, %v3170
  %v3599 = vmul.f32 %v1487, %v3170
  %v3600 = vmul.f32 %v1488, %v3175
  %v3601 = vmul.f32 %v1489, %v3175
  %v3602 = vmul.f32 %v1490, %v3175
  %v3603 = vmul.f32 %v1491, %v3175
  %v3604 = vmul.f32 %v1492, %v3175
  %v3605 = vmul.f32 %v1493, %v3175
  %v3606 = vmul.f32 %v1494, %v3175
  %v3607 = vmul.f32 %v1495, %v3180
  %v3608 = vmul.f32 %v1496, %v3180
  %v3609 = vmul.f32 %v1497, %v3180
  %v3610 = vmul.f32 %v1498, %v3180
  %v3611 = vmul.f32 %v1499, %v3180
  %v3612 = vmul.f32 %v1500, %v3180
  %v3613 = vmul.f32 %v1501, %v3180
  %v3614 = vmul.f32 %v1502, %v3185
  %v3615 = vmul.f32 %v1503, %v3185
  %v3616 = vmul.f32 %v1504, %v3185
  %v3617 = vmul.f32 %v1505, %v3185
  %v3618 = vmul.f32 %v1506, %v3185
  %v3619 = vmul.f32 %v1507, %v3185
  %v3620 = vmul.f32 %v1508, %v3185
  %v3621 = vmul.f32 %v1509, %v3190
  %v3622 = vmul.f32 %v1510, %v3190
  %v3623 = vmul.f32 %v1511, %v3190
  %v3624 = vmul.f32 %v1512, %v3190
  %v3625 = vmul.f32 %v1513, %v3190
  %v3626 = vmul.f32 %v1514, %v3190
  %v3627 = vmul.f32 %v1515, %v3190
  %v3628 = vmul.f32 %v1516, %v3195
  %v3629 = vmul.f32 %v1517, %v3195
  %v3630 = vmul.f32 %v1518, %v3195
  %v3631 = vmul.f32 %v1519, %v3195
  %v3632 = vmul.f32 %v1520, %v3195
  %v3633 = vmul.f32 %v1521, %v3195
  %v3634 = vmul.f32 %v1522, %v3195
  %v3635 = vmul.f32 %v1523, %v3200
  %v3636 = vmul.f32 %v1524, %v3200
  %v3637 = vmul.f32 %v1525, %v3200
  %v3638 = vmul.f32 %v1526, %v3200
  %v3639 = vmul.f32 %v1527, %v3200
  %v3640 = vmul.f32 %v1528, %v3200
  %v3641 = vmul.f32 %v1529, %v3200
  %v3642 = vmul.f32 %v1530, %v3205
  %v3643 = vmul.f32 %v1531, %v3205
  %v3644 = vmul.f32 %v1532, %v3205
  %v3645 = vmul.f32 %v1533, %v3205
  %v3646 = vmul.f32 %v1534, %v3205
  %v3647 = vmul.f32 %v1535, %v3205
  %v3648 = vmul.f32 %v1536, %v3205
  %v3649 = vmul.f32 %v1537, %v3210
  %v3650 = vmul.f32 %v1538, %v3210
  %v3651 = vmul.f32 %v1539, %v3210
  %v3652 = vmul.f32 %v1540, %v3210
  %v3653 = vmul.f32 %v1541, %v3210
  %v3654 = vmul.f32 %v1542, %v3210
  %v3655 = vmul.f32 %v1543, %v3210
  %v3656 = vmul.f32 %v1544, %v3215
  %v3657 = vmul.f32 %v1545, %v3215
  %v3658 = vmul.f32 %v1546, %v3215
  %v3659 = vmul.f32 %v1547, %v3215
  %v3660 = vmul.f32 %v1548, %v3215
  %v3661 = vmul.f32 %v1549, %v3215
  %v3662 = vmul.f32 %v1550, %v3215
  %v3663 = vmul.f32 %v1551, %v3220
  %v3664 = vmul.f32 %v1552, %v3220
  %v3665 = vmul.f32 %v1553, %v3220
  %v3666 = vmul.f32 %v1554, %v3220
  %v3667 = vmul.f32 %v1555, %v3220
  %v3668 = vmul.f32 %v1556, %v3220
  %v3669 = vmul.f32 %v1557, %v3220
  %v3670 = vld [vmem:[%s3] sm:$0xff]
  %v3671 = vld [vmem:[%s3 + $0x8] sm:$0xff]
  %v3672 = vld [vmem:[%s3 + $0x10] sm:$0xff]
  %v3673 = vld [vmem:[%s3 + $0x18] sm:$0xff]
  %v3674 = vld [vmem:[%s3 + $0x20] sm:$0xff]
  %v3675 = vld [vmem:[%s3 + $0x28] sm:$0xff]
  %v3676 = vld [vmem:[%s3 + $0x30] sm:$0xff]
  %v3677 = vld [vmem:[%s3 + $0x38] sm:$0xff]
  %v3678 = vld [vmem:[%s3 + $0x40] sm:$0xff]
  %v3679 = vld [vmem:[%s3 + $0x48] sm:$0xff]
  %v3680 = vld [vmem:[%s3 + $0x50] sm:$0xff]
  %v3681 = vld [vmem:[%s3 + $0x58] sm:$0xff]
  %v3682 = vld [vmem:[%s3 + $0x60] sm:$0xff]
  %v3683 = vld [vmem:[%s3 + $0x68] sm:$0xff]
  %v3684 = vld [vmem:[%s3 + $0x70] sm:$0xff]
  %v3685 = vld [vmem:[%s3 + $0x78] sm:$0xff]
  %v3686 = vld [vmem:[%s3 + $0x80] sm:$0xff]
  %v3687 = vld [vmem:[%s3 + $0x88] sm:$0xff]
  %v3688 = vld [vmem:[%s3 + $0x90] sm:$0xff]
  %v3689 = vld [vmem:[%s3 + $0x98] sm:$0xff]
  %v3690 = vld [vmem:[%s3 + $0xa0] sm:$0xff]
  %v3691 = vld [vmem:[%s3 + $0xa8] sm:$0xff]
  %v3692 = vld [vmem:[%s3 + $0xb0] sm:$0xff]
  %v3693 = vld [vmem:[%s3 + $0xb8] sm:$0xff]
  %v3694 = vld [vmem:[%s3 + $0xc0] sm:$0xff]
  %v3695 = vld [vmem:[%s3 + $0xc8] sm:$0xff]
  %v3696 = vld [vmem:[%s3 + $0xd0] sm:$0xff]
  %v3697 = vld [vmem:[%s3 + $0xd8] sm:$0xff]
  %v3698 = vld [vmem:[%s3 + $0xe0] sm:$0xff]
  %v3699 = vld [vmem:[%s3 + $0xe8] sm:$0xff]
  %v3700 = vld [vmem:[%s3 + $0xf0] sm:$0xff]
  %v3701 = vld [vmem:[%s3 + $0xf8] sm:$0xff]
  %v3702 = vld [vmem:[%s3 + $0x100] sm:$0xff]
  %v3703 = vld [vmem:[%s3 + $0x108] sm:$0xff]
  %v3704 = vld [vmem:[%s3 + $0x110] sm:$0xff]
  %v3705 = vld [vmem:[%s3 + $0x118] sm:$0xff]
  %v3706 = vld [vmem:[%s3 + $0x120] sm:$0xff]
  %v3707 = vld [vmem:[%s3 + $0x128] sm:$0xff]
  %v3708 = vld [vmem:[%s3 + $0x130] sm:$0xff]
  %v3709 = vld [vmem:[%s3 + $0x138] sm:$0xff]
  %v3710 = vld [vmem:[%s3 + $0x140] sm:$0xff]
  %v3711 = vld [vmem:[%s3 + $0x148] sm:$0xff]
  %v3712 = vld [vmem:[%s3 + $0x150] sm:$0xff]
  %v3713 = vld [vmem:[%s3 + $0x158] sm:$0xff]
  %v3714 = vld [vmem:[%s3 + $0x160] sm:$0xff]
  %v3715 = vld [vmem:[%s3 + $0x168] sm:$0xff]
  %v3716 = vld [vmem:[%s3 + $0x170] sm:$0xff]
  %v3717 = vld [vmem:[%s3 + $0x178] sm:$0xff]
  %v3718 = vld [vmem:[%s3 + $0x180] sm:$0xff]
  %v3719 = vld [vmem:[%s3 + $0x188] sm:$0xff]
  %v3720 = vld [vmem:[%s3 + $0x190] sm:$0xff]
  %v3721 = vld [vmem:[%s3 + $0x198] sm:$0xff]
  %v3722 = vld [vmem:[%s3 + $0x1a0] sm:$0xff]
  %v3723 = vld [vmem:[%s3 + $0x1a8] sm:$0xff]
  %v3724 = vld [vmem:[%s3 + $0x1b0] sm:$0xff]
  %v3725 = vld [vmem:[%s3 + $0x1b8] sm:$0xff]
  %v3726 = vld [vmem:[%s3 + $0x1c0] sm:$0xff]
  %v3727 = vld [vmem:[%s3 + $0x1c8] sm:$0xff]
  %v3728 = vld [vmem:[%s3 + $0x1d0] sm:$0xff]
  %v3729 = vld [vmem:[%s3 + $0x1d8] sm:$0xff]
  %v3730 = vld [vmem:[%s3 + $0x1e0] sm:$0xff]
  %v3731 = vld [vmem:[%s3 + $0x1e8] sm:$0xff]
  %v3732 = vld [vmem:[%s3 + $0x1f0] sm:$0xff]
  %v3733 = vld [vmem:[%s3 + $0x1f8] sm:$0xff]
  %3735 = vset.pattern.permute.xlu0 0
  %3736 = vperm.xlu0 %3735, %v3670
  %v3737 = vpop.permute.xlu0 %3736
  %3740 = vset.pattern.permute.xlu0 0
  %3741 = vperm.xlu0 %3740, %v3671
  %v3742 = vpop.permute.xlu0 %3741
  %3745 = vset.pattern.permute.xlu0 0
  %3746 = vperm.xlu0 %3745, %v3672
  %v3747 = vpop.permute.xlu0 %3746
  %3750 = vset.pattern.permute.xlu0 0
  %3751 = vperm.xlu0 %3750, %v3673
  %v3752 = vpop.permute.xlu0 %3751
  %3755 = vset.pattern.permute.xlu0 0
  %3756 = vperm.xlu0 %3755, %v3674
  %v3757 = vpop.permute.xlu0 %3756
  %3760 = vset.pattern.permute.xlu0 0
  %3761 = vperm.xlu0 %3760, %v3675
  %v3762 = vpop.permute.xlu0 %3761
  %3765 = vset.pattern.permute.xlu0 0
  %3766 = vperm.xlu0 %3765, %v3676
  %v3767 = vpop.permute.xlu0 %3766
  %3770 = vset.pattern.permute.xlu0 0
  %3771 = vperm.xlu0 %3770, %v3677
  %v3772 = vpop.permute.xlu0 %3771
  %3775 = vset.pattern.permute.xlu0 0
  %3776 = vperm.xlu0 %3775, %v3678
  %v3777 = vpop.permute.xlu0 %3776
  %3780 = vset.pattern.permute.xlu0 0
  %3781 = vperm.xlu0 %3780, %v3679
  %v3782 = vpop.permute.xlu0 %3781
  %3785 = vset.pattern.permute.xlu0 0
  %3786 = vperm.xlu0 %3785, %v3680
  %v3787 = vpop.permute.xlu0 %3786
  %3790 = vset.pattern.permute.xlu0 0
  %3791 = vperm.xlu0 %3790, %v3681
  %v3792 = vpop.permute.xlu0 %3791
  %3795 = vset.pattern.permute.xlu0 0
  %3796 = vperm.xlu0 %3795, %v3682
  %v3797 = vpop.permute.xlu0 %3796
  %3800 = vset.pattern.permute.xlu0 0
  %3801 = vperm.xlu0 %3800, %v3683
  %v3802 = vpop.permute.xlu0 %3801
  %3805 = vset.pattern.permute.xlu0 0
  %3806 = vperm.xlu0 %3805, %v3684
  %v3807 = vpop.permute.xlu0 %3806
  %3810 = vset.pattern.permute.xlu0 0
  %3811 = vperm.xlu0 %3810, %v3685
  %v3812 = vpop.permute.xlu0 %3811
  %3815 = vset.pattern.permute.xlu0 0
  %3816 = vperm.xlu0 %3815, %v3686
  %v3817 = vpop.permute.xlu0 %3816
  %3820 = vset.pattern.permute.xlu0 0
  %3821 = vperm.xlu0 %3820, %v3687
  %v3822 = vpop.permute.xlu0 %3821
  %3825 = vset.pattern.permute.xlu0 0
  %3826 = vperm.xlu0 %3825, %v3688
  %v3827 = vpop.permute.xlu0 %3826
  %3830 = vset.pattern.permute.xlu0 0
  %3831 = vperm.xlu0 %3830, %v3689
  %v3832 = vpop.permute.xlu0 %3831
  %3835 = vset.pattern.permute.xlu0 0
  %3836 = vperm.xlu0 %3835, %v3690
  %v3837 = vpop.permute.xlu0 %3836
  %3840 = vset.pattern.permute.xlu0 0
  %3841 = vperm.xlu0 %3840, %v3691
  %v3842 = vpop.permute.xlu0 %3841
  %3845 = vset.pattern.permute.xlu0 0
  %3846 = vperm.xlu0 %3845, %v3692
  %v3847 = vpop.permute.xlu0 %3846
  %3850 = vset.pattern.permute.xlu0 0
  %3851 = vperm.xlu0 %3850, %v3693
  %v3852 = vpop.permute.xlu0 %3851
  %3855 = vset.pattern.permute.xlu0 0
  %3856 = vperm.xlu0 %3855, %v3694
  %v3857 = vpop.permute.xlu0 %3856
  %3860 = vset.pattern.permute.xlu0 0
  %3861 = vperm.xlu0 %3860, %v3695
  %v3862 = vpop.permute.xlu0 %3861
  %3865 = vset.pattern.permute.xlu0 0
  %3866 = vperm.xlu0 %3865, %v3696
  %v3867 = vpop.permute.xlu0 %3866
  %3870 = vset.pattern.permute.xlu0 0
  %3871 = vperm.xlu0 %3870, %v3697
  %v3872 = vpop.permute.xlu0 %3871
  %3875 = vset.pattern.permute.xlu0 0
  %3876 = vperm.xlu0 %3875, %v3698
  %v3877 = vpop.permute.xlu0 %3876
  %3880 = vset.pattern.permute.xlu0 0
  %3881 = vperm.xlu0 %3880, %v3699
  %v3882 = vpop.permute.xlu0 %3881
  %3885 = vset.pattern.permute.xlu0 0
  %3886 = vperm.xlu0 %3885, %v3700
  %v3887 = vpop.permute.xlu0 %3886
  %3890 = vset.pattern.permute.xlu0 0
  %3891 = vperm.xlu0 %3890, %v3701
  %v3892 = vpop.permute.xlu0 %3891
  %3895 = vset.pattern.permute.xlu0 0
  %3896 = vperm.xlu0 %3895, %v3702
  %v3897 = vpop.permute.xlu0 %3896
  %3900 = vset.pattern.permute.xlu0 0
  %3901 = vperm.xlu0 %3900, %v3703
  %v3902 = vpop.permute.xlu0 %3901
  %3905 = vset.pattern.permute.xlu0 0
  %3906 = vperm.xlu0 %3905, %v3704
  %v3907 = vpop.permute.xlu0 %3906
  %3910 = vset.pattern.permute.xlu0 0
  %3911 = vperm.xlu0 %3910, %v3705
  %v3912 = vpop.permute.xlu0 %3911
  %3915 = vset.pattern.permute.xlu0 0
  %3916 = vperm.xlu0 %3915, %v3706
  %v3917 = vpop.permute.xlu0 %3916
  %3920 = vset.pattern.permute.xlu0 0
  %3921 = vperm.xlu0 %3920, %v3707
  %v3922 = vpop.permute.xlu0 %3921
  %3925 = vset.pattern.permute.xlu0 0
  %3926 = vperm.xlu0 %3925, %v3708
  %v3927 = vpop.permute.xlu0 %3926
  %3930 = vset.pattern.permute.xlu0 0
  %3931 = vperm.xlu0 %3930, %v3709
  %v3932 = vpop.permute.xlu0 %3931
  %3935 = vset.pattern.permute.xlu0 0
  %3936 = vperm.xlu0 %3935, %v3710
  %v3937 = vpop.permute.xlu0 %3936
  %3940 = vset.pattern.permute.xlu0 0
  %3941 = vperm.xlu0 %3940, %v3711
  %v3942 = vpop.permute.xlu0 %3941
  %3945 = vset.pattern.permute.xlu0 0
  %3946 = vperm.xlu0 %3945, %v3712
  %v3947 = vpop.permute.xlu0 %3946
  %3950 = vset.pattern.permute.xlu0 0
  %3951 = vperm.xlu0 %3950, %v3713
  %v3952 = vpop.permute.xlu0 %3951
  %3955 = vset.pattern.permute.xlu0 0
  %3956 = vperm.xlu0 %3955, %v3714
  %v3957 = vpop.permute.xlu0 %3956
  %3960 = vset.pattern.permute.xlu0 0
  %3961 = vperm.xlu0 %3960, %v3715
  %v3962 = vpop.permute.xlu0 %3961
  %3965 = vset.pattern.permute.xlu0 0
  %3966 = vperm.xlu0 %3965, %v3716
  %v3967 = vpop.permute.xlu0 %3966
  %3970 = vset.pattern.permute.xlu0 0
  %3971 = vperm.xlu0 %3970, %v3717
  %v3972 = vpop.permute.xlu0 %3971
  %3975 = vset.pattern.permute.xlu0 0
  %3976 = vperm.xlu0 %3975, %v3718
  %v3977 = vpop.permute.xlu0 %3976
  %3980 = vset.pattern.permute.xlu0 0
  %3981 = vperm.xlu0 %3980, %v3719
  %v3982 = vpop.permute.xlu0 %3981
  %3985 = vset.pattern.permute.xlu0 0
  %3986 = vperm.xlu0 %3985, %v3720
  %v3987 = vpop.permute.xlu0 %3986
  %3990 = vset.pattern.permute.xlu0 0
  %3991 = vperm.xlu0 %3990, %v3721
  %v3992 = vpop.permute.xlu0 %3991
  %3995 = vset.pattern.permute.xlu0 0
  %3996 = vperm.xlu0 %3995, %v3722
  %v3997 = vpop.permute.xlu0 %3996
  %4000 = vset.pattern.permute.xlu0 0
  %4001 = vperm.xlu0 %4000, %v3723
  %v4002 = vpop.permute.xlu0 %4001
  %4005 = vset.pattern.permute.xlu0 0
  %4006 = vperm.xlu0 %4005, %v3724
  %v4007 = vpop.permute.xlu0 %4006
  %4010 = vset.pattern.permute.xlu0 0
  %4011 = vperm.xlu0 %4010, %v3725
  %v4012 = vpop.permute.xlu0 %4011
  %4015 = vset.pattern.permute.xlu0 0
  %4016 = vperm.xlu0 %4015, %v3726
  %v4017 = vpop.permute.xlu0 %4016
  %4020 = vset.pattern.permute.xlu0 0
  %4021 = vperm.xlu0 %4020, %v3727
  %v4022 = vpop.permute.xlu0 %4021
  %4025 = vset.pattern.permute.xlu0 0
  %4026 = vperm.xlu0 %4025, %v3728
  %v4027 = vpop.permute.xlu0 %4026
  %4030 = vset.pattern.permute.xlu0 0
  %4031 = vperm.xlu0 %4030, %v3729
  %v4032 = vpop.permute.xlu0 %4031
  %4035 = vset.pattern.permute.xlu0 0
  %4036 = vperm.xlu0 %4035, %v3730
  %v4037 = vpop.permute.xlu0 %4036
  %4040 = vset.pattern.permute.xlu0 0
  %4041 = vperm.xlu0 %4040, %v3731
  %v4042 = vpop.permute.xlu0 %4041
  %4045 = vset.pattern.permute.xlu0 0
  %4046 = vperm.xlu0 %4045, %v3732
  %v4047 = vpop.permute.xlu0 %4046
  %4050 = vset.pattern.permute.xlu0 0
  %4051 = vperm.xlu0 %4050, %v3733
  %v4052 = vpop.permute.xlu0 %4051
  %v4054 = vadd.f32 %v3222, %v3737
  %v4055 = vadd.f32 %v3223, %v3737
  %v4056 = vadd.f32 %v3224, %v3737
  %v4057 = vadd.f32 %v3225, %v3737
  %v4058 = vadd.f32 %v3226, %v3737
  %v4059 = vadd.f32 %v3227, %v3737
  %v4060 = vadd.f32 %v3228, %v3737
  %v4061 = vadd.f32 %v3229, %v3742
  %v4062 = vadd.f32 %v3230, %v3742
  %v4063 = vadd.f32 %v3231, %v3742
  %v4064 = vadd.f32 %v3232, %v3742
  %v4065 = vadd.f32 %v3233, %v3742
  %v4066 = vadd.f32 %v3234, %v3742
  %v4067 = vadd.f32 %v3235, %v3742
  %v4068 = vadd.f32 %v3236, %v3747
  %v4069 = vadd.f32 %v3237, %v3747
  %v4070 = vadd.f32 %v3238, %v3747
  %v4071 = vadd.f32 %v3239, %v3747
  %v4072 = vadd.f32 %v3240, %v3747
  %v4073 = vadd.f32 %v3241, %v3747
  %v4074 = vadd.f32 %v3242, %v3747
  %v4075 = vadd.f32 %v3243, %v3752
  %v4076 = vadd.f32 %v3244, %v3752
  %v4077 = vadd.f32 %v3245, %v3752
  %v4078 = vadd.f32 %v3246, %v3752
  %v4079 = vadd.f32 %v3247, %v3752
  %v4080 = vadd.f32 %v3248, %v3752
  %v4081 = vadd.f32 %v3249, %v3752
  %v4082 = vadd.f32 %v3250, %v3757
  %v4083 = vadd.f32 %v3251, %v3757
  %v4084 = vadd.f32 %v3252, %v3757
  %v4085 = vadd.f32 %v3253, %v3757
  %v4086 = vadd.f32 %v3254, %v3757
  %v4087 = vadd.f32 %v3255, %v3757
  %v4088 = vadd.f32 %v3256, %v3757
  %v4089 = vadd.f32 %v3257, %v3762
  %v4090 = vadd.f32 %v3258, %v3762
  %v4091 = vadd.f32 %v3259, %v3762
  %v4092 = vadd.f32 %v3260, %v3762
  %v4093 = vadd.f32 %v3261, %v3762
  %v4094 = vadd.f32 %v3262, %v3762
  %v4095 = vadd.f32 %v3263, %v3762
  %v4096 = vadd.f32 %v3264, %v3767
  %v4097 = vadd.f32 %v3265, %v3767
  %v4098 = vadd.f32 %v3266, %v3767
  %v4099 = vadd.f32 %v3267, %v3767
  %v4100 = vadd.f32 %v3268, %v3767
  %v4101 = vadd.f32 %v3269, %v3767
  %v4102 = vadd.f32 %v3270, %v3767
  %v4103 = vadd.f32 %v3271, %v3772
  %v4104 = vadd.f32 %v3272, %v3772
  %v4105 = vadd.f32 %v3273, %v3772
  %v4106 = vadd.f32 %v3274, %v3772
  %v4107 = vadd.f32 %v3275, %v3772
  %v4108 = vadd.f32 %v3276, %v3772
  %v4109 = vadd.f32 %v3277, %v3772
  %v4110 = vadd.f32 %v3278, %v3777
  %v4111 = vadd.f32 %v3279, %v3777
  %v4112 = vadd.f32 %v3280, %v3777
  %v4113 = vadd.f32 %v3281, %v3777
  %v4114 = vadd.f32 %v3282, %v3777
  %v4115 = vadd.f32 %v3283, %v3777
  %v4116 = vadd.f32 %v3284, %v3777
  %v4117 = vadd.f32 %v3285, %v3782
  %v4118 = vadd.f32 %v3286, %v3782
  %v4119 = vadd.f32 %v3287, %v3782
  %v4120 = vadd.f32 %v3288, %v3782
  %v4121 = vadd.f32 %v3289, %v3782
  %v4122 = vadd.f32 %v3290, %v3782
  %v4123 = vadd.f32 %v3291, %v3782
  %v4124 = vadd.f32 %v3292, %v3787
  %v4125 = vadd.f32 %v3293, %v3787
  %v4126 = vadd.f32 %v3294, %v3787
  %v4127 = vadd.f32 %v3295, %v3787
  %v4128 = vadd.f32 %v3296, %v3787
  %v4129 = vadd.f32 %v3297, %v3787
  %v4130 = vadd.f32 %v3298, %v3787
  %v4131 = vadd.f32 %v3299, %v3792
  %v4132 = vadd.f32 %v3300, %v3792
  %v4133 = vadd.f32 %v3301, %v3792
  %v4134 = vadd.f32 %v3302, %v3792
  %v4135 = vadd.f32 %v3303, %v3792
  %v4136 = vadd.f32 %v3304, %v3792
  %v4137 = vadd.f32 %v3305, %v3792
  %v4138 = vadd.f32 %v3306, %v3797
  %v4139 = vadd.f32 %v3307, %v3797
  %v4140 = vadd.f32 %v3308, %v3797
  %v4141 = vadd.f32 %v3309, %v3797
  %v4142 = vadd.f32 %v3310, %v3797
  %v4143 = vadd.f32 %v3311, %v3797
  %v4144 = vadd.f32 %v3312, %v3797
  %v4145 = vadd.f32 %v3313, %v3802
  %v4146 = vadd.f32 %v3314, %v3802
  %v4147 = vadd.f32 %v3315, %v3802
  %v4148 = vadd.f32 %v3316, %v3802
  %v4149 = vadd.f32 %v3317, %v3802
  %v4150 = vadd.f32 %v3318, %v3802
  %v4151 = vadd.f32 %v3319, %v3802
  %v4152 = vadd.f32 %v3320, %v3807
  %v4153 = vadd.f32 %v3321, %v3807
  %v4154 = vadd.f32 %v3322, %v3807
  %v4155 = vadd.f32 %v3323, %v3807
  %v4156 = vadd.f32 %v3324, %v3807
  %v4157 = vadd.f32 %v3325, %v3807
  %v4158 = vadd.f32 %v3326, %v3807
  %v4159 = vadd.f32 %v3327, %v3812
  %v4160 = vadd.f32 %v3328, %v3812
  %v4161 = vadd.f32 %v3329, %v3812
  %v4162 = vadd.f32 %v3330, %v3812
  %v4163 = vadd.f32 %v3331, %v3812
  %v4164 = vadd.f32 %v3332, %v3812
  %v4165 = vadd.f32 %v3333, %v3812
  %v4166 = vadd.f32 %v3334, %v3817
  %v4167 = vadd.f32 %v3335, %v3817
  %v4168 = vadd.f32 %v3336, %v3817
  %v4169 = vadd.f32 %v3337, %v3817
  %v4170 = vadd.f32 %v3338, %v3817
  %v4171 = vadd.f32 %v3339, %v3817
  %v4172 = vadd.f32 %v3340, %v3817
  %v4173 = vadd.f32 %v3341, %v3822
  %v4174 = vadd.f32 %v3342, %v3822
  %v4175 = vadd.f32 %v3343, %v3822
  %v4176 = vadd.f32 %v3344, %v3822
  %v4177 = vadd.f32 %v3345, %v3822
  %v4178 = vadd.f32 %v3346, %v3822
  %v4179 = vadd.f32 %v3347, %v3822
  %v4180 = vadd.f32 %v3348, %v3827
  %v4181 = vadd.f32 %v3349, %v3827
  %v4182 = vadd.f32 %v3350, %v3827
  %v4183 = vadd.f32 %v3351, %v3827
  %v4184 = vadd.f32 %v3352, %v3827
  %v4185 = vadd.f32 %v3353, %v3827
  %v4186 = vadd.f32 %v3354, %v3827
  %v4187 = vadd.f32 %v3355, %v3832
  %v4188 = vadd.f32 %v3356, %v3832
  %v4189 = vadd.f32 %v3357, %v3832
  %v4190 = vadd.f32 %v3358, %v3832
  %v4191 = vadd.f32 %v3359, %v3832
  %v4192 = vadd.f32 %v3360, %v3832
  %v4193 = vadd.f32 %v3361, %v3832
  %v4194 = vadd.f32 %v3362, %v3837
  %v4195 = vadd.f32 %v3363, %v3837
  %v4196 = vadd.f32 %v3364, %v3837
  %v4197 = vadd.f32 %v3365, %v3837
  %v4198 = vadd.f32 %v3366, %v3837
  %v4199 = vadd.f32 %v3367, %v3837
  %v4200 = vadd.f32 %v3368, %v3837
  %v4201 = vadd.f32 %v3369, %v3842
  %v4202 = vadd.f32 %v3370, %v3842
  %v4203 = vadd.f32 %v3371, %v3842
  %v4204 = vadd.f32 %v3372, %v3842
  %v4205 = vadd.f32 %v3373, %v3842
  %v4206 = vadd.f32 %v3374, %v3842
  %v4207 = vadd.f32 %v3375, %v3842
  %v4208 = vadd.f32 %v3376, %v3847
  %v4209 = vadd.f32 %v3377, %v3847
  %v4210 = vadd.f32 %v3378, %v3847
  %v4211 = vadd.f32 %v3379, %v3847
  %v4212 = vadd.f32 %v3380, %v3847
  %v4213 = vadd.f32 %v3381, %v3847
  %v4214 = vadd.f32 %v3382, %v3847
  %v4215 = vadd.f32 %v3383, %v3852
  %v4216 = vadd.f32 %v3384, %v3852
  %v4217 = vadd.f32 %v3385, %v3852
  %v4218 = vadd.f32 %v3386, %v3852
  %v4219 = vadd.f32 %v3387, %v3852
  %v4220 = vadd.f32 %v3388, %v3852
  %v4221 = vadd.f32 %v3389, %v3852
  %v4222 = vadd.f32 %v3390, %v3857
  %v4223 = vadd.f32 %v3391, %v3857
  %v4224 = vadd.f32 %v3392, %v3857
  %v4225 = vadd.f32 %v3393, %v3857
  %v4226 = vadd.f32 %v3394, %v3857
  %v4227 = vadd.f32 %v3395, %v3857
  %v4228 = vadd.f32 %v3396, %v3857
  %v4229 = vadd.f32 %v3397, %v3862
  %v4230 = vadd.f32 %v3398, %v3862
  %v4231 = vadd.f32 %v3399, %v3862
  %v4232 = vadd.f32 %v3400, %v3862
  %v4233 = vadd.f32 %v3401, %v3862
  %v4234 = vadd.f32 %v3402, %v3862
  %v4235 = vadd.f32 %v3403, %v3862
  %v4236 = vadd.f32 %v3404, %v3867
  %v4237 = vadd.f32 %v3405, %v3867
  %v4238 = vadd.f32 %v3406, %v3867
  %v4239 = vadd.f32 %v3407, %v3867
  %v4240 = vadd.f32 %v3408, %v3867
  %v4241 = vadd.f32 %v3409, %v3867
  %v4242 = vadd.f32 %v3410, %v3867
  %v4243 = vadd.f32 %v3411, %v3872
  %v4244 = vadd.f32 %v3412, %v3872
  %v4245 = vadd.f32 %v3413, %v3872
  %v4246 = vadd.f32 %v3414, %v3872
  %v4247 = vadd.f32 %v3415, %v3872
  %v4248 = vadd.f32 %v3416, %v3872
  %v4249 = vadd.f32 %v3417, %v3872
  %v4250 = vadd.f32 %v3418, %v3877
  %v4251 = vadd.f32 %v3419, %v3877
  %v4252 = vadd.f32 %v3420, %v3877
  %v4253 = vadd.f32 %v3421, %v3877
  %v4254 = vadd.f32 %v3422, %v3877
  %v4255 = vadd.f32 %v3423, %v3877
  %v4256 = vadd.f32 %v3424, %v3877
  %v4257 = vadd.f32 %v3425, %v3882
  %v4258 = vadd.f32 %v3426, %v3882
  %v4259 = vadd.f32 %v3427, %v3882
  %v4260 = vadd.f32 %v3428, %v3882
  %v4261 = vadd.f32 %v3429, %v3882
  %v4262 = vadd.f32 %v3430, %v3882
  %v4263 = vadd.f32 %v3431, %v3882
  %v4264 = vadd.f32 %v3432, %v3887
  %v4265 = vadd.f32 %v3433, %v3887
  %v4266 = vadd.f32 %v3434, %v3887
  %v4267 = vadd.f32 %v3435, %v3887
  %v4268 = vadd.f32 %v3436, %v3887
  %v4269 = vadd.f32 %v3437, %v3887
  %v4270 = vadd.f32 %v3438, %v3887
  %v4271 = vadd.f32 %v3439, %v3892
  %v4272 = vadd.f32 %v3440, %v3892
  %v4273 = vadd.f32 %v3441, %v3892
  %v4274 = vadd.f32 %v3442, %v3892
  %v4275 = vadd.f32 %v3443, %v3892
  %v4276 = vadd.f32 %v3444, %v3892
  %v4277 = vadd.f32 %v3445, %v3892
  %v4278 = vadd.f32 %v3446, %v3897
  %v4279 = vadd.f32 %v3447, %v3897
  %v4280 = vadd.f32 %v3448, %v3897
  %v4281 = vadd.f32 %v3449, %v3897
  %v4282 = vadd.f32 %v3450, %v3897
  %v4283 = vadd.f32 %v3451, %v3897
  %v4284 = vadd.f32 %v3452, %v3897
  %v4285 = vadd.f32 %v3453, %v3902
  %v4286 = vadd.f32 %v3454, %v3902
  %v4287 = vadd.f32 %v3455, %v3902
  %v4288 = vadd.f32 %v3456, %v3902
  %v4289 = vadd.f32 %v3457, %v3902
  %v4290 = vadd.f32 %v3458, %v3902
  %v4291 = vadd.f32 %v3459, %v3902
  %v4292 = vadd.f32 %v3460, %v3907
  %v4293 = vadd.f32 %v3461, %v3907
  %v4294 = vadd.f32 %v3462, %v3907
  %v4295 = vadd.f32 %v3463, %v3907
  %v4296 = vadd.f32 %v3464, %v3907
  %v4297 = vadd.f32 %v3465, %v3907
  %v4298 = vadd.f32 %v3466, %v3907
  %v4299 = vadd.f32 %v3467, %v3912
  %v4300 = vadd.f32 %v3468, %v3912
  %v4301 = vadd.f32 %v3469, %v3912
  %v4302 = vadd.f32 %v3470, %v3912
  %v4303 = vadd.f32 %v3471, %v3912
  %v4304 = vadd.f32 %v3472, %v3912
  %v4305 = vadd.f32 %v3473, %v3912
  %v4306 = vadd.f32 %v3474, %v3917
  %v4307 = vadd.f32 %v3475, %v3917
  %v4308 = vadd.f32 %v3476, %v3917
  %v4309 = vadd.f32 %v3477, %v3917
  %v4310 = vadd.f32 %v3478, %v3917
  %v4311 = vadd.f32 %v3479, %v3917
  %v4312 = vadd.f32 %v3480, %v3917
  %v4313 = vadd.f32 %v3481, %v3922
  %v4314 = vadd.f32 %v3482, %v3922
  %v4315 = vadd.f32 %v3483, %v3922
  %v4316 = vadd.f32 %v3484, %v3922
  %v4317 = vadd.f32 %v3485, %v3922
  %v4318 = vadd.f32 %v3486, %v3922
  %v4319 = vadd.f32 %v3487, %v3922
  %v4320 = vadd.f32 %v3488, %v3927
  %v4321 = vadd.f32 %v3489, %v3927
  %v4322 = vadd.f32 %v3490, %v3927
  %v4323 = vadd.f32 %v3491, %v3927
  %v4324 = vadd.f32 %v3492, %v3927
  %v4325 = vadd.f32 %v3493, %v3927
  %v4326 = vadd.f32 %v3494, %v3927
  %v4327 = vadd.f32 %v3495, %v3932
  %v4328 = vadd.f32 %v3496, %v3932
  %v4329 = vadd.f32 %v3497, %v3932
  %v4330 = vadd.f32 %v3498, %v3932
  %v4331 = vadd.f32 %v3499, %v3932
  %v4332 = vadd.f32 %v3500, %v3932
  %v4333 = vadd.f32 %v3501, %v3932
  %v4334 = vadd.f32 %v3502, %v3937
  %v4335 = vadd.f32 %v3503, %v3937
  %v4336 = vadd.f32 %v3504, %v3937
  %v4337 = vadd.f32 %v3505, %v3937
  %v4338 = vadd.f32 %v3506, %v3937
  %v4339 = vadd.f32 %v3507, %v3937
  %v4340 = vadd.f32 %v3508, %v3937
  %v4341 = vadd.f32 %v3509, %v3942
  %v4342 = vadd.f32 %v3510, %v3942
  %v4343 = vadd.f32 %v3511, %v3942
  %v4344 = vadd.f32 %v3512, %v3942
  %v4345 = vadd.f32 %v3513, %v3942
  %v4346 = vadd.f32 %v3514, %v3942
  %v4347 = vadd.f32 %v3515, %v3942
  %v4348 = vadd.f32 %v3516, %v3947
  %v4349 = vadd.f32 %v3517, %v3947
  %v4350 = vadd.f32 %v3518, %v3947
  %v4351 = vadd.f32 %v3519, %v3947
  %v4352 = vadd.f32 %v3520, %v3947
  %v4353 = vadd.f32 %v3521, %v3947
  %v4354 = vadd.f32 %v3522, %v3947
  %v4355 = vadd.f32 %v3523, %v3952
  %v4356 = vadd.f32 %v3524, %v3952
  %v4357 = vadd.f32 %v3525, %v3952
  %v4358 = vadd.f32 %v3526, %v3952
  %v4359 = vadd.f32 %v3527, %v3952
  %v4360 = vadd.f32 %v3528, %v3952
  %v4361 = vadd.f32 %v3529, %v3952
  %v4362 = vadd.f32 %v3530, %v3957
  %v4363 = vadd.f32 %v3531, %v3957
  %v4364 = vadd.f32 %v3532, %v3957
  %v4365 = vadd.f32 %v3533, %v3957
  %v4366 = vadd.f32 %v3534, %v3957
  %v4367 = vadd.f32 %v3535, %v3957
  %v4368 = vadd.f32 %v3536, %v3957
  %v4369 = vadd.f32 %v3537, %v3962
  %v4370 = vadd.f32 %v3538, %v3962
  %v4371 = vadd.f32 %v3539, %v3962
  %v4372 = vadd.f32 %v3540, %v3962
  %v4373 = vadd.f32 %v3541, %v3962
  %v4374 = vadd.f32 %v3542, %v3962
  %v4375 = vadd.f32 %v3543, %v3962
  %v4376 = vadd.f32 %v3544, %v3967
  %v4377 = vadd.f32 %v3545, %v3967
  %v4378 = vadd.f32 %v3546, %v3967
  %v4379 = vadd.f32 %v3547, %v3967
  %v4380 = vadd.f32 %v3548, %v3967
  %v4381 = vadd.f32 %v3549, %v3967
  %v4382 = vadd.f32 %v3550, %v3967
  %v4383 = vadd.f32 %v3551, %v3972
  %v4384 = vadd.f32 %v3552, %v3972
  %v4385 = vadd.f32 %v3553, %v3972
  %v4386 = vadd.f32 %v3554, %v3972
  %v4387 = vadd.f32 %v3555, %v3972
  %v4388 = vadd.f32 %v3556, %v3972
  %v4389 = vadd.f32 %v3557, %v3972
  %v4390 = vadd.f32 %v3558, %v3977
  %v4391 = vadd.f32 %v3559, %v3977
  %v4392 = vadd.f32 %v3560, %v3977
  %v4393 = vadd.f32 %v3561, %v3977
  %v4394 = vadd.f32 %v3562, %v3977
  %v4395 = vadd.f32 %v3563, %v3977
  %v4396 = vadd.f32 %v3564, %v3977
  %v4397 = vadd.f32 %v3565, %v3982
  %v4398 = vadd.f32 %v3566, %v3982
  %v4399 = vadd.f32 %v3567, %v3982
  %v4400 = vadd.f32 %v3568, %v3982
  %v4401 = vadd.f32 %v3569, %v3982
  %v4402 = vadd.f32 %v3570, %v3982
  %v4403 = vadd.f32 %v3571, %v3982
  %v4404 = vadd.f32 %v3572, %v3987
  %v4405 = vadd.f32 %v3573, %v3987
  %v4406 = vadd.f32 %v3574, %v3987
  %v4407 = vadd.f32 %v3575, %v3987
  %v4408 = vadd.f32 %v3576, %v3987
  %v4409 = vadd.f32 %v3577, %v3987
  %v4410 = vadd.f32 %v3578, %v3987
  %v4411 = vadd.f32 %v3579, %v3992
  %v4412 = vadd.f32 %v3580, %v3992
  %v4413 = vadd.f32 %v3581, %v3992
  %v4414 = vadd.f32 %v3582, %v3992
  %v4415 = vadd.f32 %v3583, %v3992
  %v4416 = vadd.f32 %v3584, %v3992
  %v4417 = vadd.f32 %v3585, %v3992
  %v4418 = vadd.f32 %v3586, %v3997
  %v4419 = vadd.f32 %v3587, %v3997
  %v4420 = vadd.f32 %v3588, %v3997
  %v4421 = vadd.f32 %v3589, %v3997
  %v4422 = vadd.f32 %v3590, %v3997
  %v4423 = vadd.f32 %v3591, %v3997
  %v4424 = vadd.f32 %v3592, %v3997
  %v4425 = vadd.f32 %v3593, %v4002
  %v4426 = vadd.f32 %v3594, %v4002
  %v4427 = vadd.f32 %v3595, %v4002
  %v4428 = vadd.f32 %v3596, %v4002
  %v4429 = vadd.f32 %v3597, %v4002
  %v4430 = vadd.f32 %v3598, %v4002
  %v4431 = vadd.f32 %v3599, %v4002
  %v4432 = vadd.f32 %v3600, %v4007
  %v4433 = vadd.f32 %v3601, %v4007
  %v4434 = vadd.f32 %v3602, %v4007
  %v4435 = vadd.f32 %v3603, %v4007
  %v4436 = vadd.f32 %v3604, %v4007
  %v4437 = vadd.f32 %v3605, %v4007
  %v4438 = vadd.f32 %v3606, %v4007
  %v4439 = vadd.f32 %v3607, %v4012
  %v4440 = vadd.f32 %v3608, %v4012
  %v4441 = vadd.f32 %v3609, %v4012
  %v4442 = vadd.f32 %v3610, %v4012
  %v4443 = vadd.f32 %v3611, %v4012
  %v4444 = vadd.f32 %v3612, %v4012
  %v4445 = vadd.f32 %v3613, %v4012
  %v4446 = vadd.f32 %v3614, %v4017
  %v4447 = vadd.f32 %v3615, %v4017
  %v4448 = vadd.f32 %v3616, %v4017
  %v4449 = vadd.f32 %v3617, %v4017
  %v4450 = vadd.f32 %v3618, %v4017
  %v4451 = vadd.f32 %v3619, %v4017
  %v4452 = vadd.f32 %v3620, %v4017
  %v4453 = vadd.f32 %v3621, %v4022
  %v4454 = vadd.f32 %v3622, %v4022
  %v4455 = vadd.f32 %v3623, %v4022
  %v4456 = vadd.f32 %v3624, %v4022
  %v4457 = vadd.f32 %v3625, %v4022
  %v4458 = vadd.f32 %v3626, %v4022
  %v4459 = vadd.f32 %v3627, %v4022
  %v4460 = vadd.f32 %v3628, %v4027
  %v4461 = vadd.f32 %v3629, %v4027
  %v4462 = vadd.f32 %v3630, %v4027
  %v4463 = vadd.f32 %v3631, %v4027
  %v4464 = vadd.f32 %v3632, %v4027
  %v4465 = vadd.f32 %v3633, %v4027
  %v4466 = vadd.f32 %v3634, %v4027
  %v4467 = vadd.f32 %v3635, %v4032
  %v4468 = vadd.f32 %v3636, %v4032
  %v4469 = vadd.f32 %v3637, %v4032
  %v4470 = vadd.f32 %v3638, %v4032
  %v4471 = vadd.f32 %v3639, %v4032
  %v4472 = vadd.f32 %v3640, %v4032
  %v4473 = vadd.f32 %v3641, %v4032
  %v4474 = vadd.f32 %v3642, %v4037
  %v4475 = vadd.f32 %v3643, %v4037
  %v4476 = vadd.f32 %v3644, %v4037
  %v4477 = vadd.f32 %v3645, %v4037
  %v4478 = vadd.f32 %v3646, %v4037
  %v4479 = vadd.f32 %v3647, %v4037
  %v4480 = vadd.f32 %v3648, %v4037
  %v4481 = vadd.f32 %v3649, %v4042
  %v4482 = vadd.f32 %v3650, %v4042
  %v4483 = vadd.f32 %v3651, %v4042
  %v4484 = vadd.f32 %v3652, %v4042
  %v4485 = vadd.f32 %v3653, %v4042
  %v4486 = vadd.f32 %v3654, %v4042
  %v4487 = vadd.f32 %v3655, %v4042
  %v4488 = vadd.f32 %v3656, %v4047
  %v4489 = vadd.f32 %v3657, %v4047
  %v4490 = vadd.f32 %v3658, %v4047
  %v4491 = vadd.f32 %v3659, %v4047
  %v4492 = vadd.f32 %v3660, %v4047
  %v4493 = vadd.f32 %v3661, %v4047
  %v4494 = vadd.f32 %v3662, %v4047
  %v4495 = vadd.f32 %v3663, %v4052
  %v4496 = vadd.f32 %v3664, %v4052
  %v4497 = vadd.f32 %v3665, %v4052
  %v4498 = vadd.f32 %v3666, %v4052
  %v4499 = vadd.f32 %v3667, %v4052
  %v4500 = vadd.f32 %v3668, %v4052
  %v4501 = vadd.f32 %v3669, %v4052
  %v4502 = vld [vmem:[%s1] sm:$0xff]
  %v4503 = vld [vmem:[%s1 + $0x8] sm:$0xff]
  %v4504 = vld [vmem:[%s1 + $0x10] sm:$0xff]
  %v4505 = vld [vmem:[%s1 + $0x18] sm:$0xff]
  %v4506 = vld [vmem:[%s1 + $0x20] sm:$0xff]
  %v4507 = vld [vmem:[%s1 + $0x28] sm:$0xff]
  %v4508 = vld [vmem:[%s1 + $0x30] sm:$0xff]
  %v4509 = vld [vmem:[%s1 + $0x38] sm:$0xff]
  %v4510 = vld [vmem:[%s1 + $0x40] sm:$0xff]
  %v4511 = vld [vmem:[%s1 + $0x48] sm:$0xff]
  %v4512 = vld [vmem:[%s1 + $0x50] sm:$0xff]
  %v4513 = vld [vmem:[%s1 + $0x58] sm:$0xff]
  %v4514 = vld [vmem:[%s1 + $0x60] sm:$0xff]
  %v4515 = vld [vmem:[%s1 + $0x68] sm:$0xff]
  %v4516 = vld [vmem:[%s1 + $0x70] sm:$0xff]
  %v4517 = vld [vmem:[%s1 + $0x78] sm:$0xff]
  %v4518 = vld [vmem:[%s1 + $0x80] sm:$0xff]
  %v4519 = vld [vmem:[%s1 + $0x88] sm:$0xff]
  %v4520 = vld [vmem:[%s1 + $0x90] sm:$0xff]
  %v4521 = vld [vmem:[%s1 + $0x98] sm:$0xff]
  %v4522 = vld [vmem:[%s1 + $0xa0] sm:$0xff]
  %v4523 = vld [vmem:[%s1 + $0xa8] sm:$0xff]
  %v4524 = vld [vmem:[%s1 + $0xb0] sm:$0xff]
  %v4525 = vld [vmem:[%s1 + $0xb8] sm:$0xff]
  %v4526 = vld [vmem:[%s1 + $0xc0] sm:$0xff]
  %v4527 = vld [vmem:[%s1 + $0xc8] sm:$0xff]
  %v4528 = vld [vmem:[%s1 + $0xd0] sm:$0xff]
  %v4529 = vld [vmem:[%s1 + $0xd8] sm:$0xff]
  %v4530 = vld [vmem:[%s1 + $0xe0] sm:$0xff]
  %v4531 = vld [vmem:[%s1 + $0xe8] sm:$0xff]
  %v4532 = vld [vmem:[%s1 + $0xf0] sm:$0xff]
  %v4533 = vld [vmem:[%s1 + $0xf8] sm:$0xff]
  %v4534 = vld [vmem:[%s1 + $0x100] sm:$0xff]
  %v4535 = vld [vmem:[%s1 + $0x108] sm:$0xff]
  %v4536 = vld [vmem:[%s1 + $0x110] sm:$0xff]
  %v4537 = vld [vmem:[%s1 + $0x118] sm:$0xff]
  %v4538 = vld [vmem:[%s1 + $0x120] sm:$0xff]
  %v4539 = vld [vmem:[%s1 + $0x128] sm:$0xff]
  %v4540 = vld [vmem:[%s1 + $0x130] sm:$0xff]
  %v4541 = vld [vmem:[%s1 + $0x138] sm:$0xff]
  %v4542 = vld [vmem:[%s1 + $0x140] sm:$0xff]
  %v4543 = vld [vmem:[%s1 + $0x148] sm:$0xff]
  %v4544 = vld [vmem:[%s1 + $0x150] sm:$0xff]
  %v4545 = vld [vmem:[%s1 + $0x158] sm:$0xff]
  %v4546 = vld [vmem:[%s1 + $0x160] sm:$0xff]
  %v4547 = vld [vmem:[%s1 + $0x168] sm:$0xff]
  %v4548 = vld [vmem:[%s1 + $0x170] sm:$0xff]
  %v4549 = vld [vmem:[%s1 + $0x178] sm:$0xff]
  %v4550 = vld [vmem:[%s1 + $0x180] sm:$0xff]
  %v4551 = vld [vmem:[%s1 + $0x188] sm:$0xff]
  %v4552 = vld [vmem:[%s1 + $0x190] sm:$0xff]
  %v4553 = vld [vmem:[%s1 + $0x198] sm:$0xff]
  %v4554 = vld [vmem:[%s1 + $0x1a0] sm:$0xff]
  %v4555 = vld [vmem:[%s1 + $0x1a8] sm:$0xff]
  %v4556 = vld [vmem:[%s1 + $0x1b0] sm:$0xff]
  %v4557 = vld [vmem:[%s1 + $0x1b8] sm:$0xff]
  %v4558 = vld [vmem:[%s1 + $0x1c0] sm:$0xff]
  %v4559 = vld [vmem:[%s1 + $0x1c8] sm:$0xff]
  %v4560 = vld [vmem:[%s1 + $0x1d0] sm:$0xff]
  %v4561 = vld [vmem:[%s1 + $0x1d8] sm:$0xff]
  %v4562 = vld [vmem:[%s1 + $0x1e0] sm:$0xff]
  %v4563 = vld [vmem:[%s1 + $0x1e8] sm:$0xff]
  %v4564 = vld [vmem:[%s1 + $0x1f0] sm:$0xff]
  %v4565 = vld [vmem:[%s1 + $0x1f8] sm:$0xff]
  %v4566 = vld [vmem:[%s1 + $0x200] sm:$0xff]
  %v4567 = vld [vmem:[%s1 + $0x208] sm:$0xff]
  %v4568 = vld [vmem:[%s1 + $0x210] sm:$0xff]
  %v4569 = vld [vmem:[%s1 + $0x218] sm:$0xff]
  %v4570 = vld [vmem:[%s1 + $0x220] sm:$0xff]
  %v4571 = vld [vmem:[%s1 + $0x228] sm:$0xff]
  %v4572 = vld [vmem:[%s1 + $0x230] sm:$0xff]
  %v4573 = vld [vmem:[%s1 + $0x238] sm:$0xff]
  %v4574 = vld [vmem:[%s1 + $0x240] sm:$0xff]
  %v4575 = vld [vmem:[%s1 + $0x248] sm:$0xff]
  %v4576 = vld [vmem:[%s1 + $0x250] sm:$0xff]
  %v4577 = vld [vmem:[%s1 + $0x258] sm:$0xff]
  %v4578 = vld [vmem:[%s1 + $0x260] sm:$0xff]
  %v4579 = vld [vmem:[%s1 + $0x268] sm:$0xff]
  %v4580 = vld [vmem:[%s1 + $0x270] sm:$0xff]
  %v4581 = vld [vmem:[%s1 + $0x278] sm:$0xff]
  %v4582 = vld [vmem:[%s1 + $0x280] sm:$0xff]
  %v4583 = vld [vmem:[%s1 + $0x288] sm:$0xff]
  %v4584 = vld [vmem:[%s1 + $0x290] sm:$0xff]
  %v4585 = vld [vmem:[%s1 + $0x298] sm:$0xff]
  %v4586 = vld [vmem:[%s1 + $0x2a0] sm:$0xff]
  %v4587 = vld [vmem:[%s1 + $0x2a8] sm:$0xff]
  %v4588 = vld [vmem:[%s1 + $0x2b0] sm:$0xff]
  %v4589 = vld [vmem:[%s1 + $0x2b8] sm:$0xff]
  %v4590 = vld [vmem:[%s1 + $0x2c0] sm:$0xff]
  %v4591 = vld [vmem:[%s1 + $0x2c8] sm:$0xff]
  %v4592 = vld [vmem:[%s1 + $0x2d0] sm:$0xff]
  %v4593 = vld [vmem:[%s1 + $0x2d8] sm:$0xff]
  %v4594 = vld [vmem:[%s1 + $0x2e0] sm:$0xff]
  %v4595 = vld [vmem:[%s1 + $0x2e8] sm:$0xff]
  %v4596 = vld [vmem:[%s1 + $0x2f0] sm:$0xff]
  %v4597 = vld [vmem:[%s1 + $0x2f8] sm:$0xff]
  %v4598 = vld [vmem:[%s1 + $0x300] sm:$0xff]
  %v4599 = vld [vmem:[%s1 + $0x308] sm:$0xff]
  %v4600 = vld [vmem:[%s1 + $0x310] sm:$0xff]
  %v4601 = vld [vmem:[%s1 + $0x318] sm:$0xff]
  %v4602 = vld [vmem:[%s1 + $0x320] sm:$0xff]
  %v4603 = vld [vmem:[%s1 + $0x328] sm:$0xff]
  %v4604 = vld [vmem:[%s1 + $0x330] sm:$0xff]
  %v4605 = vld [vmem:[%s1 + $0x338] sm:$0xff]
  %v4606 = vld [vmem:[%s1 + $0x340] sm:$0xff]
  %v4607 = vld [vmem:[%s1 + $0x348] sm:$0xff]
  %v4608 = vld [vmem:[%s1 + $0x350] sm:$0xff]
  %v4609 = vld [vmem:[%s1 + $0x358] sm:$0xff]
  %v4610 = vld [vmem:[%s1 + $0x360] sm:$0xff]
  %v4611 = vld [vmem:[%s1 + $0x368] sm:$0xff]
  %v4612 = vld [vmem:[%s1 + $0x370] sm:$0xff]
  %v4613 = vld [vmem:[%s1 + $0x378] sm:$0xff]
  %v4614 = vld [vmem:[%s1 + $0x380] sm:$0xff]
  %v4615 = vld [vmem:[%s1 + $0x388] sm:$0xff]
  %v4616 = vld [vmem:[%s1 + $0x390] sm:$0xff]
  %v4617 = vld [vmem:[%s1 + $0x398] sm:$0xff]
  %v4618 = vld [vmem:[%s1 + $0x3a0] sm:$0xff]
  %v4619 = vld [vmem:[%s1 + $0x3a8] sm:$0xff]
  %v4620 = vld [vmem:[%s1 + $0x3b0] sm:$0xff]
  %v4621 = vld [vmem:[%s1 + $0x3b8] sm:$0xff]
  %v4622 = vld [vmem:[%s1 + $0x3c0] sm:$0xff]
  %v4623 = vld [vmem:[%s1 + $0x3c8] sm:$0xff]
  %v4624 = vld [vmem:[%s1 + $0x3d0] sm:$0xff]
  %v4625 = vld [vmem:[%s1 + $0x3d8] sm:$0xff]
  %v4626 = vld [vmem:[%s1 + $0x3e0] sm:$0xff]
  %v4627 = vld [vmem:[%s1 + $0x3e8] sm:$0xff]
  %v4628 = vld [vmem:[%s1 + $0x3f0] sm:$0xff]
  %v4629 = vld [vmem:[%s1 + $0x3f8] sm:$0xff]
  %v4630 = vld [vmem:[%s1 + $0x400] sm:$0xff]
  %v4631 = vld [vmem:[%s1 + $0x408] sm:$0xff]
  %v4632 = vld [vmem:[%s1 + $0x410] sm:$0xff]
  %v4633 = vld [vmem:[%s1 + $0x418] sm:$0xff]
  %v4634 = vld [vmem:[%s1 + $0x420] sm:$0xff]
  %v4635 = vld [vmem:[%s1 + $0x428] sm:$0xff]
  %v4636 = vld [vmem:[%s1 + $0x430] sm:$0xff]
  %v4637 = vld [vmem:[%s1 + $0x438] sm:$0xff]
  %v4638 = vld [vmem:[%s1 + $0x440] sm:$0xff]
  %v4639 = vld [vmem:[%s1 + $0x448] sm:$0xff]
  %v4640 = vld [vmem:[%s1 + $0x450] sm:$0xff]
  %v4641 = vld [vmem:[%s1 + $0x458] sm:$0xff]
  %v4642 = vld [vmem:[%s1 + $0x460] sm:$0xff]
  %v4643 = vld [vmem:[%s1 + $0x468] sm:$0xff]
  %v4644 = vld [vmem:[%s1 + $0x470] sm:$0xff]
  %v4645 = vld [vmem:[%s1 + $0x478] sm:$0xff]
  %v4646 = vld [vmem:[%s1 + $0x480] sm:$0xff]
  %v4647 = vld [vmem:[%s1 + $0x488] sm:$0xff]
  %v4648 = vld [vmem:[%s1 + $0x490] sm:$0xff]
  %v4649 = vld [vmem:[%s1 + $0x498] sm:$0xff]
  %v4650 = vld [vmem:[%s1 + $0x4a0] sm:$0xff]
  %v4651 = vld [vmem:[%s1 + $0x4a8] sm:$0xff]
  %v4652 = vld [vmem:[%s1 + $0x4b0] sm:$0xff]
  %v4653 = vld [vmem:[%s1 + $0x4b8] sm:$0xff]
  %v4654 = vld [vmem:[%s1 + $0x4c0] sm:$0xff]
  %v4655 = vld [vmem:[%s1 + $0x4c8] sm:$0xff]
  %v4656 = vld [vmem:[%s1 + $0x4d0] sm:$0xff]
  %v4657 = vld [vmem:[%s1 + $0x4d8] sm:$0xff]
  %v4658 = vld [vmem:[%s1 + $0x4e0] sm:$0xff]
  %v4659 = vld [vmem:[%s1 + $0x4e8] sm:$0xff]
  %v4660 = vld [vmem:[%s1 + $0x4f0] sm:$0xff]
  %v4661 = vld [vmem:[%s1 + $0x4f8] sm:$0xff]
  %v4662 = vld [vmem:[%s1 + $0x500] sm:$0xff]
  %v4663 = vld [vmem:[%s1 + $0x508] sm:$0xff]
  %v4664 = vld [vmem:[%s1 + $0x510] sm:$0xff]
  %v4665 = vld [vmem:[%s1 + $0x518] sm:$0xff]
  %v4666 = vld [vmem:[%s1 + $0x520] sm:$0xff]
  %v4667 = vld [vmem:[%s1 + $0x528] sm:$0xff]
  %v4668 = vld [vmem:[%s1 + $0x530] sm:$0xff]
  %v4669 = vld [vmem:[%s1 + $0x538] sm:$0xff]
  %v4670 = vld [vmem:[%s1 + $0x540] sm:$0xff]
  %v4671 = vld [vmem:[%s1 + $0x548] sm:$0xff]
  %v4672 = vld [vmem:[%s1 + $0x550] sm:$0xff]
  %v4673 = vld [vmem:[%s1 + $0x558] sm:$0xff]
  %v4674 = vld [vmem:[%s1 + $0x560] sm:$0xff]
  %v4675 = vld [vmem:[%s1 + $0x568] sm:$0xff]
  %v4676 = vld [vmem:[%s1 + $0x570] sm:$0xff]
  %v4677 = vld [vmem:[%s1 + $0x578] sm:$0xff]
  %v4678 = vld [vmem:[%s1 + $0x580] sm:$0xff]
  %v4679 = vld [vmem:[%s1 + $0x588] sm:$0xff]
  %v4680 = vld [vmem:[%s1 + $0x590] sm:$0xff]
  %v4681 = vld [vmem:[%s1 + $0x598] sm:$0xff]
  %v4682 = vld [vmem:[%s1 + $0x5a0] sm:$0xff]
  %v4683 = vld [vmem:[%s1 + $0x5a8] sm:$0xff]
  %v4684 = vld [vmem:[%s1 + $0x5b0] sm:$0xff]
  %v4685 = vld [vmem:[%s1 + $0x5b8] sm:$0xff]
  %v4686 = vld [vmem:[%s1 + $0x5c0] sm:$0xff]
  %v4687 = vld [vmem:[%s1 + $0x5c8] sm:$0xff]
  %v4688 = vld [vmem:[%s1 + $0x5d0] sm:$0xff]
  %v4689 = vld [vmem:[%s1 + $0x5d8] sm:$0xff]
  %v4690 = vld [vmem:[%s1 + $0x5e0] sm:$0xff]
  %v4691 = vld [vmem:[%s1 + $0x5e8] sm:$0xff]
  %v4692 = vld [vmem:[%s1 + $0x5f0] sm:$0xff]
  %v4693 = vld [vmem:[%s1 + $0x5f8] sm:$0xff]
  %v4694 = vld [vmem:[%s1 + $0x600] sm:$0xff]
  %v4695 = vld [vmem:[%s1 + $0x608] sm:$0xff]
  %v4696 = vld [vmem:[%s1 + $0x610] sm:$0xff]
  %v4697 = vld [vmem:[%s1 + $0x618] sm:$0xff]
  %v4698 = vld [vmem:[%s1 + $0x620] sm:$0xff]
  %v4699 = vld [vmem:[%s1 + $0x628] sm:$0xff]
  %v4700 = vld [vmem:[%s1 + $0x630] sm:$0xff]
  %v4701 = vld [vmem:[%s1 + $0x638] sm:$0xff]
  %v4702 = vld [vmem:[%s1 + $0x640] sm:$0xff]
  %v4703 = vld [vmem:[%s1 + $0x648] sm:$0xff]
  %v4704 = vld [vmem:[%s1 + $0x650] sm:$0xff]
  %v4705 = vld [vmem:[%s1 + $0x658] sm:$0xff]
  %v4706 = vld [vmem:[%s1 + $0x660] sm:$0xff]
  %v4707 = vld [vmem:[%s1 + $0x668] sm:$0xff]
  %v4708 = vld [vmem:[%s1 + $0x670] sm:$0xff]
  %v4709 = vld [vmem:[%s1 + $0x678] sm:$0xff]
  %v4710 = vld [vmem:[%s1 + $0x680] sm:$0xff]
  %v4711 = vld [vmem:[%s1 + $0x688] sm:$0xff]
  %v4712 = vld [vmem:[%s1 + $0x690] sm:$0xff]
  %v4713 = vld [vmem:[%s1 + $0x698] sm:$0xff]
  %v4714 = vld [vmem:[%s1 + $0x6a0] sm:$0xff]
  %v4715 = vld [vmem:[%s1 + $0x6a8] sm:$0xff]
  %v4716 = vld [vmem:[%s1 + $0x6b0] sm:$0xff]
  %v4717 = vld [vmem:[%s1 + $0x6b8] sm:$0xff]
  %v4718 = vld [vmem:[%s1 + $0x6c0] sm:$0xff]
  %v4719 = vld [vmem:[%s1 + $0x6c8] sm:$0xff]
  %v4720 = vld [vmem:[%s1 + $0x6d0] sm:$0xff]
  %v4721 = vld [vmem:[%s1 + $0x6d8] sm:$0xff]
  %v4722 = vld [vmem:[%s1 + $0x6e0] sm:$0xff]
  %v4723 = vld [vmem:[%s1 + $0x6e8] sm:$0xff]
  %v4724 = vld [vmem:[%s1 + $0x6f0] sm:$0xff]
  %v4725 = vld [vmem:[%s1 + $0x6f8] sm:$0xff]
  %v4726 = vld [vmem:[%s1 + $0x700] sm:$0xff]
  %v4727 = vld [vmem:[%s1 + $0x708] sm:$0xff]
  %v4728 = vld [vmem:[%s1 + $0x710] sm:$0xff]
  %v4729 = vld [vmem:[%s1 + $0x718] sm:$0xff]
  %v4730 = vld [vmem:[%s1 + $0x720] sm:$0xff]
  %v4731 = vld [vmem:[%s1 + $0x728] sm:$0xff]
  %v4732 = vld [vmem:[%s1 + $0x730] sm:$0xff]
  %v4733 = vld [vmem:[%s1 + $0x738] sm:$0xff]
  %v4734 = vld [vmem:[%s1 + $0x740] sm:$0xff]
  %v4735 = vld [vmem:[%s1 + $0x748] sm:$0xff]
  %v4736 = vld [vmem:[%s1 + $0x750] sm:$0xff]
  %v4737 = vld [vmem:[%s1 + $0x758] sm:$0xff]
  %v4738 = vld [vmem:[%s1 + $0x760] sm:$0xff]
  %v4739 = vld [vmem:[%s1 + $0x768] sm:$0xff]
  %v4740 = vld [vmem:[%s1 + $0x770] sm:$0xff]
  %v4741 = vld [vmem:[%s1 + $0x778] sm:$0xff]
  %v4742 = vld [vmem:[%s1 + $0x780] sm:$0xff]
  %v4743 = vld [vmem:[%s1 + $0x788] sm:$0xff]
  %v4744 = vld [vmem:[%s1 + $0x790] sm:$0xff]
  %v4745 = vld [vmem:[%s1 + $0x798] sm:$0xff]
  %v4746 = vld [vmem:[%s1 + $0x7a0] sm:$0xff]
  %v4747 = vld [vmem:[%s1 + $0x7a8] sm:$0xff]
  %v4748 = vld [vmem:[%s1 + $0x7b0] sm:$0xff]
  %v4749 = vld [vmem:[%s1 + $0x7b8] sm:$0xff]
  %v4750 = vld [vmem:[%s1 + $0x7c0] sm:$0xff]
  %v4751 = vld [vmem:[%s1 + $0x7c8] sm:$0xff]
  %v4752 = vld [vmem:[%s1 + $0x7d0] sm:$0xff]
  %v4753 = vld [vmem:[%s1 + $0x7d8] sm:$0xff]
  %v4754 = vld [vmem:[%s1 + $0x7e0] sm:$0xff]
  %v4755 = vld [vmem:[%s1 + $0x7e8] sm:$0xff]
  %v4756 = vld [vmem:[%s1 + $0x7f0] sm:$0xff]
  %v4757 = vld [vmem:[%s1 + $0x7f8] sm:$0xff]
  %v4758 = vld [vmem:[%s1 + $0x800] sm:$0xff]
  %v4759 = vld [vmem:[%s1 + $0x808] sm:$0xff]
  %v4760 = vld [vmem:[%s1 + $0x810] sm:$0xff]
  %v4761 = vld [vmem:[%s1 + $0x818] sm:$0xff]
  %v4762 = vld [vmem:[%s1 + $0x820] sm:$0xff]
  %v4763 = vld [vmem:[%s1 + $0x828] sm:$0xff]
  %v4764 = vld [vmem:[%s1 + $0x830] sm:$0xff]
  %v4765 = vld [vmem:[%s1 + $0x838] sm:$0xff]
  %v4766 = vld [vmem:[%s1 + $0x840] sm:$0xff]
  %v4767 = vld [vmem:[%s1 + $0x848] sm:$0xff]
  %v4768 = vld [vmem:[%s1 + $0x850] sm:$0xff]
  %v4769 = vld [vmem:[%s1 + $0x858] sm:$0xff]
  %v4770 = vld [vmem:[%s1 + $0x860] sm:$0xff]
  %v4771 = vld [vmem:[%s1 + $0x868] sm:$0xff]
  %v4772 = vld [vmem:[%s1 + $0x870] sm:$0xff]
  %v4773 = vld [vmem:[%s1 + $0x878] sm:$0xff]
  %v4774 = vld [vmem:[%s1 + $0x880] sm:$0xff]
  %v4775 = vld [vmem:[%s1 + $0x888] sm:$0xff]
  %v4776 = vld [vmem:[%s1 + $0x890] sm:$0xff]
  %v4777 = vld [vmem:[%s1 + $0x898] sm:$0xff]
  %v4778 = vld [vmem:[%s1 + $0x8a0] sm:$0xff]
  %v4779 = vld [vmem:[%s1 + $0x8a8] sm:$0xff]
  %v4780 = vld [vmem:[%s1 + $0x8b0] sm:$0xff]
  %v4781 = vld [vmem:[%s1 + $0x8b8] sm:$0xff]
  %v4782 = vld [vmem:[%s1 + $0x8c0] sm:$0xff]
  %v4783 = vld [vmem:[%s1 + $0x8c8] sm:$0xff]
  %v4784 = vld [vmem:[%s1 + $0x8d0] sm:$0xff]
  %v4785 = vld [vmem:[%s1 + $0x8d8] sm:$0xff]
  %v4786 = vld [vmem:[%s1 + $0x8e0] sm:$0xff]
  %v4787 = vld [vmem:[%s1 + $0x8e8] sm:$0xff]
  %v4788 = vld [vmem:[%s1 + $0x8f0] sm:$0xff]
  %v4789 = vld [vmem:[%s1 + $0x8f8] sm:$0xff]
  %v4790 = vld [vmem:[%s1 + $0x900] sm:$0xff]
  %v4791 = vld [vmem:[%s1 + $0x908] sm:$0xff]
  %v4792 = vld [vmem:[%s1 + $0x910] sm:$0xff]
  %v4793 = vld [vmem:[%s1 + $0x918] sm:$0xff]
  %v4794 = vld [vmem:[%s1 + $0x920] sm:$0xff]
  %v4795 = vld [vmem:[%s1 + $0x928] sm:$0xff]
  %v4796 = vld [vmem:[%s1 + $0x930] sm:$0xff]
  %v4797 = vld [vmem:[%s1 + $0x938] sm:$0xff]
  %v4798 = vld [vmem:[%s1 + $0x940] sm:$0xff]
  %v4799 = vld [vmem:[%s1 + $0x948] sm:$0xff]
  %v4800 = vld [vmem:[%s1 + $0x950] sm:$0xff]
  %v4801 = vld [vmem:[%s1 + $0x958] sm:$0xff]
  %v4802 = vld [vmem:[%s1 + $0x960] sm:$0xff]
  %v4803 = vld [vmem:[%s1 + $0x968] sm:$0xff]
  %v4804 = vld [vmem:[%s1 + $0x970] sm:$0xff]
  %v4805 = vld [vmem:[%s1 + $0x978] sm:$0xff]
  %v4806 = vld [vmem:[%s1 + $0x980] sm:$0xff]
  %v4807 = vld [vmem:[%s1 + $0x988] sm:$0xff]
  %v4808 = vld [vmem:[%s1 + $0x990] sm:$0xff]
  %v4809 = vld [vmem:[%s1 + $0x998] sm:$0xff]
  %v4810 = vld [vmem:[%s1 + $0x9a0] sm:$0xff]
  %v4811 = vld [vmem:[%s1 + $0x9a8] sm:$0xff]
  %v4812 = vld [vmem:[%s1 + $0x9b0] sm:$0xff]
  %v4813 = vld [vmem:[%s1 + $0x9b8] sm:$0xff]
  %v4814 = vld [vmem:[%s1 + $0x9c0] sm:$0xff]
  %v4815 = vld [vmem:[%s1 + $0x9c8] sm:$0xff]
  %v4816 = vld [vmem:[%s1 + $0x9d0] sm:$0xff]
  %v4817 = vld [vmem:[%s1 + $0x9d8] sm:$0xff]
  %v4818 = vld [vmem:[%s1 + $0x9e0] sm:$0xff]
  %v4819 = vld [vmem:[%s1 + $0x9e8] sm:$0xff]
  %v4820 = vld [vmem:[%s1 + $0x9f0] sm:$0xff]
  %v4821 = vld [vmem:[%s1 + $0x9f8] sm:$0xff]
  %v4822 = vld [vmem:[%s1 + $0xa00] sm:$0xff]
  %v4823 = vld [vmem:[%s1 + $0xa08] sm:$0xff]
  %v4824 = vld [vmem:[%s1 + $0xa10] sm:$0xff]
  %v4825 = vld [vmem:[%s1 + $0xa18] sm:$0xff]
  %v4826 = vld [vmem:[%s1 + $0xa20] sm:$0xff]
  %v4827 = vld [vmem:[%s1 + $0xa28] sm:$0xff]
  %v4828 = vld [vmem:[%s1 + $0xa30] sm:$0xff]
  %v4829 = vld [vmem:[%s1 + $0xa38] sm:$0xff]
  %v4830 = vld [vmem:[%s1 + $0xa40] sm:$0xff]
  %v4831 = vld [vmem:[%s1 + $0xa48] sm:$0xff]
  %v4832 = vld [vmem:[%s1 + $0xa50] sm:$0xff]
  %v4833 = vld [vmem:[%s1 + $0xa58] sm:$0xff]
  %v4834 = vld [vmem:[%s1 + $0xa60] sm:$0xff]
  %v4835 = vld [vmem:[%s1 + $0xa68] sm:$0xff]
  %v4836 = vld [vmem:[%s1 + $0xa70] sm:$0xff]
  %v4837 = vld [vmem:[%s1 + $0xa78] sm:$0xff]
  %v4838 = vld [vmem:[%s1 + $0xa80] sm:$0xff]
  %v4839 = vld [vmem:[%s1 + $0xa88] sm:$0xff]
  %v4840 = vld [vmem:[%s1 + $0xa90] sm:$0xff]
  %v4841 = vld [vmem:[%s1 + $0xa98] sm:$0xff]
  %v4842 = vld [vmem:[%s1 + $0xaa0] sm:$0xff]
  %v4843 = vld [vmem:[%s1 + $0xaa8] sm:$0xff]
  %v4844 = vld [vmem:[%s1 + $0xab0] sm:$0xff]
  %v4845 = vld [vmem:[%s1 + $0xab8] sm:$0xff]
  %v4846 = vld [vmem:[%s1 + $0xac0] sm:$0xff]
  %v4847 = vld [vmem:[%s1 + $0xac8] sm:$0xff]
  %v4848 = vld [vmem:[%s1 + $0xad0] sm:$0xff]
  %v4849 = vld [vmem:[%s1 + $0xad8] sm:$0xff]
  %v4850 = vld [vmem:[%s1 + $0xae0] sm:$0xff]
  %v4851 = vld [vmem:[%s1 + $0xae8] sm:$0xff]
  %v4852 = vld [vmem:[%s1 + $0xaf0] sm:$0xff]
  %v4853 = vld [vmem:[%s1 + $0xaf8] sm:$0xff]
  %v4854 = vld [vmem:[%s1 + $0xb00] sm:$0xff]
  %v4855 = vld [vmem:[%s1 + $0xb08] sm:$0xff]
  %v4856 = vld [vmem:[%s1 + $0xb10] sm:$0xff]
  %v4857 = vld [vmem:[%s1 + $0xb18] sm:$0xff]
  %v4858 = vld [vmem:[%s1 + $0xb20] sm:$0xff]
  %v4859 = vld [vmem:[%s1 + $0xb28] sm:$0xff]
  %v4860 = vld [vmem:[%s1 + $0xb30] sm:$0xff]
  %v4861 = vld [vmem:[%s1 + $0xb38] sm:$0xff]
  %v4862 = vld [vmem:[%s1 + $0xb40] sm:$0xff]
  %v4863 = vld [vmem:[%s1 + $0xb48] sm:$0xff]
  %v4864 = vld [vmem:[%s1 + $0xb50] sm:$0xff]
  %v4865 = vld [vmem:[%s1 + $0xb58] sm:$0xff]
  %v4866 = vld [vmem:[%s1 + $0xb60] sm:$0xff]
  %v4867 = vld [vmem:[%s1 + $0xb68] sm:$0xff]
  %v4868 = vld [vmem:[%s1 + $0xb70] sm:$0xff]
  %v4869 = vld [vmem:[%s1 + $0xb78] sm:$0xff]
  %v4870 = vld [vmem:[%s1 + $0xb80] sm:$0xff]
  %v4871 = vld [vmem:[%s1 + $0xb88] sm:$0xff]
  %v4872 = vld [vmem:[%s1 + $0xb90] sm:$0xff]
  %v4873 = vld [vmem:[%s1 + $0xb98] sm:$0xff]
  %v4874 = vld [vmem:[%s1 + $0xba0] sm:$0xff]
  %v4875 = vld [vmem:[%s1 + $0xba8] sm:$0xff]
  %v4876 = vld [vmem:[%s1 + $0xbb0] sm:$0xff]
  %v4877 = vld [vmem:[%s1 + $0xbb8] sm:$0xff]
  %v4878 = vld [vmem:[%s1 + $0xbc0] sm:$0xff]
  %v4879 = vld [vmem:[%s1 + $0xbc8] sm:$0xff]
  %v4880 = vld [vmem:[%s1 + $0xbd0] sm:$0xff]
  %v4881 = vld [vmem:[%s1 + $0xbd8] sm:$0xff]
  %v4882 = vld [vmem:[%s1 + $0xbe0] sm:$0xff]
  %v4883 = vld [vmem:[%s1 + $0xbe8] sm:$0xff]
  %v4884 = vld [vmem:[%s1 + $0xbf0] sm:$0xff]
  %v4885 = vld [vmem:[%s1 + $0xbf8] sm:$0xff]
  %v4886 = vld [vmem:[%s1 + $0xc00] sm:$0xff]
  %v4887 = vld [vmem:[%s1 + $0xc08] sm:$0xff]
  %v4888 = vld [vmem:[%s1 + $0xc10] sm:$0xff]
  %v4889 = vld [vmem:[%s1 + $0xc18] sm:$0xff]
  %v4890 = vld [vmem:[%s1 + $0xc20] sm:$0xff]
  %v4891 = vld [vmem:[%s1 + $0xc28] sm:$0xff]
  %v4892 = vld [vmem:[%s1 + $0xc30] sm:$0xff]
  %v4893 = vld [vmem:[%s1 + $0xc38] sm:$0xff]
  %v4894 = vld [vmem:[%s1 + $0xc40] sm:$0xff]
  %v4895 = vld [vmem:[%s1 + $0xc48] sm:$0xff]
  %v4896 = vld [vmem:[%s1 + $0xc50] sm:$0xff]
  %v4897 = vld [vmem:[%s1 + $0xc58] sm:$0xff]
  %v4898 = vld [vmem:[%s1 + $0xc60] sm:$0xff]
  %v4899 = vld [vmem:[%s1 + $0xc68] sm:$0xff]
  %v4900 = vld [vmem:[%s1 + $0xc70] sm:$0xff]
  %v4901 = vld [vmem:[%s1 + $0xc78] sm:$0xff]
  %v4902 = vld [vmem:[%s1 + $0xc80] sm:$0xff]
  %v4903 = vld [vmem:[%s1 + $0xc88] sm:$0xff]
  %v4904 = vld [vmem:[%s1 + $0xc90] sm:$0xff]
  %v4905 = vld [vmem:[%s1 + $0xc98] sm:$0xff]
  %v4906 = vld [vmem:[%s1 + $0xca0] sm:$0xff]
  %v4907 = vld [vmem:[%s1 + $0xca8] sm:$0xff]
  %v4908 = vld [vmem:[%s1 + $0xcb0] sm:$0xff]
  %v4909 = vld [vmem:[%s1 + $0xcb8] sm:$0xff]
  %v4910 = vld [vmem:[%s1 + $0xcc0] sm:$0xff]
  %v4911 = vld [vmem:[%s1 + $0xcc8] sm:$0xff]
  %v4912 = vld [vmem:[%s1 + $0xcd0] sm:$0xff]
  %v4913 = vld [vmem:[%s1 + $0xcd8] sm:$0xff]
  %v4914 = vld [vmem:[%s1 + $0xce0] sm:$0xff]
  %v4915 = vld [vmem:[%s1 + $0xce8] sm:$0xff]
  %v4916 = vld [vmem:[%s1 + $0xcf0] sm:$0xff]
  %v4917 = vld [vmem:[%s1 + $0xcf8] sm:$0xff]
  %v4918 = vld [vmem:[%s1 + $0xd00] sm:$0xff]
  %v4919 = vld [vmem:[%s1 + $0xd08] sm:$0xff]
  %v4920 = vld [vmem:[%s1 + $0xd10] sm:$0xff]
  %v4921 = vld [vmem:[%s1 + $0xd18] sm:$0xff]
  %v4922 = vld [vmem:[%s1 + $0xd20] sm:$0xff]
  %v4923 = vld [vmem:[%s1 + $0xd28] sm:$0xff]
  %v4924 = vld [vmem:[%s1 + $0xd30] sm:$0xff]
  %v4925 = vld [vmem:[%s1 + $0xd38] sm:$0xff]
  %v4926 = vld [vmem:[%s1 + $0xd40] sm:$0xff]
  %v4927 = vld [vmem:[%s1 + $0xd48] sm:$0xff]
  %v4928 = vld [vmem:[%s1 + $0xd50] sm:$0xff]
  %v4929 = vld [vmem:[%s1 + $0xd58] sm:$0xff]
  %v4930 = vld [vmem:[%s1 + $0xd60] sm:$0xff]
  %v4931 = vld [vmem:[%s1 + $0xd68] sm:$0xff]
  %v4932 = vld [vmem:[%s1 + $0xd70] sm:$0xff]
  %v4933 = vld [vmem:[%s1 + $0xd78] sm:$0xff]
  %v4934 = vld [vmem:[%s1 + $0xd80] sm:$0xff]
  %v4935 = vld [vmem:[%s1 + $0xd88] sm:$0xff]
  %v4936 = vld [vmem:[%s1 + $0xd90] sm:$0xff]
  %v4937 = vld [vmem:[%s1 + $0xd98] sm:$0xff]
  %v4938 = vld [vmem:[%s1 + $0xda0] sm:$0xff]
  %v4939 = vld [vmem:[%s1 + $0xda8] sm:$0xff]
  %v4940 = vld [vmem:[%s1 + $0xdb0] sm:$0xff]
  %v4941 = vld [vmem:[%s1 + $0xdb8] sm:$0xff]
  %v4942 = vld [vmem:[%s1 + $0xdc0] sm:$0xff]
  %v4943 = vld [vmem:[%s1 + $0xdc8] sm:$0xff]
  %v4944 = vld [vmem:[%s1 + $0xdd0] sm:$0xff]
  %v4945 = vld [vmem:[%s1 + $0xdd8] sm:$0xff]
  %v4946 = vld [vmem:[%s1 + $0xde0] sm:$0xff]
  %v4947 = vld [vmem:[%s1 + $0xde8] sm:$0xff]
  %v4948 = vld [vmem:[%s1 + $0xdf0] sm:$0xff]
  %v4949 = vld [vmem:[%s1 + $0xdf8] sm:$0xff]
  %v4950 = vadd.f32 %v4054, %v4502
  %v4951 = vadd.f32 %v4055, %v4503
  %v4952 = vadd.f32 %v4056, %v4504
  %v4953 = vadd.f32 %v4057, %v4505
  %v4954 = vadd.f32 %v4058, %v4506
  %v4955 = vadd.f32 %v4059, %v4507
  %v4956 = vadd.f32 %v4060, %v4508
  %v4957 = vadd.f32 %v4061, %v4509
  %v4958 = vadd.f32 %v4062, %v4510
  %v4959 = vadd.f32 %v4063, %v4511
  %v4960 = vadd.f32 %v4064, %v4512
  %v4961 = vadd.f32 %v4065, %v4513
  %v4962 = vadd.f32 %v4066, %v4514
  %v4963 = vadd.f32 %v4067, %v4515
  %v4964 = vadd.f32 %v4068, %v4516
  %v4965 = vadd.f32 %v4069, %v4517
  %v4966 = vadd.f32 %v4070, %v4518
  %v4967 = vadd.f32 %v4071, %v4519
  %v4968 = vadd.f32 %v4072, %v4520
  %v4969 = vadd.f32 %v4073, %v4521
  %v4970 = vadd.f32 %v4074, %v4522
  %v4971 = vadd.f32 %v4075, %v4523
  %v4972 = vadd.f32 %v4076, %v4524
  %v4973 = vadd.f32 %v4077, %v4525
  %v4974 = vadd.f32 %v4078, %v4526
  %v4975 = vadd.f32 %v4079, %v4527
  %v4976 = vadd.f32 %v4080, %v4528
  %v4977 = vadd.f32 %v4081, %v4529
  %v4978 = vadd.f32 %v4082, %v4530
  %v4979 = vadd.f32 %v4083, %v4531
  %v4980 = vadd.f32 %v4084, %v4532
  %v4981 = vadd.f32 %v4085, %v4533
  %v4982 = vadd.f32 %v4086, %v4534
  %v4983 = vadd.f32 %v4087, %v4535
  %v4984 = vadd.f32 %v4088, %v4536
  %v4985 = vadd.f32 %v4089, %v4537
  %v4986 = vadd.f32 %v4090, %v4538
  %v4987 = vadd.f32 %v4091, %v4539
  %v4988 = vadd.f32 %v4092, %v4540
  %v4989 = vadd.f32 %v4093, %v4541
  %v4990 = vadd.f32 %v4094, %v4542
  %v4991 = vadd.f32 %v4095, %v4543
  %v4992 = vadd.f32 %v4096, %v4544
  %v4993 = vadd.f32 %v4097, %v4545
  %v4994 = vadd.f32 %v4098, %v4546
  %v4995 = vadd.f32 %v4099, %v4547
  %v4996 = vadd.f32 %v4100, %v4548
  %v4997 = vadd.f32 %v4101, %v4549
  %v4998 = vadd.f32 %v4102, %v4550
  %v4999 = vadd.f32 %v4103, %v4551
  %v5000 = vadd.f32 %v4104, %v4552
  %v5001 = vadd.f32 %v4105, %v4553
  %v5002 = vadd.f32 %v4106, %v4554
  %v5003 = vadd.f32 %v4107, %v4555
  %v5004 = vadd.f32 %v4108, %v4556
  %v5005 = vadd.f32 %v4109, %v4557
  %v5006 = vadd.f32 %v4110, %v4558
  %v5007 = vadd.f32 %v4111, %v4559
  %v5008 = vadd.f32 %v4112, %v4560
  %v5009 = vadd.f32 %v4113, %v4561
  %v5010 = vadd.f32 %v4114, %v4562
  %v5011 = vadd.f32 %v4115, %v4563
  %v5012 = vadd.f32 %v4116, %v4564
  %v5013 = vadd.f32 %v4117, %v4565
  %v5014 = vadd.f32 %v4118, %v4566
  %v5015 = vadd.f32 %v4119, %v4567
  %v5016 = vadd.f32 %v4120, %v4568
  %v5017 = vadd.f32 %v4121, %v4569
  %v5018 = vadd.f32 %v4122, %v4570
  %v5019 = vadd.f32 %v4123, %v4571
  %v5020 = vadd.f32 %v4124, %v4572
  %v5021 = vadd.f32 %v4125, %v4573
  %v5022 = vadd.f32 %v4126, %v4574
  %v5023 = vadd.f32 %v4127, %v4575
  %v5024 = vadd.f32 %v4128, %v4576
  %v5025 = vadd.f32 %v4129, %v4577
  %v5026 = vadd.f32 %v4130, %v4578
  %v5027 = vadd.f32 %v4131, %v4579
  %v5028 = vadd.f32 %v4132, %v4580
  %v5029 = vadd.f32 %v4133, %v4581
  %v5030 = vadd.f32 %v4134, %v4582
  %v5031 = vadd.f32 %v4135, %v4583
  %v5032 = vadd.f32 %v4136, %v4584
  %v5033 = vadd.f32 %v4137, %v4585
  %v5034 = vadd.f32 %v4138, %v4586
  %v5035 = vadd.f32 %v4139, %v4587
  %v5036 = vadd.f32 %v4140, %v4588
  %v5037 = vadd.f32 %v4141, %v4589
  %v5038 = vadd.f32 %v4142, %v4590
  %v5039 = vadd.f32 %v4143, %v4591
  %v5040 = vadd.f32 %v4144, %v4592
  %v5041 = vadd.f32 %v4145, %v4593
  %v5042 = vadd.f32 %v4146, %v4594
  %v5043 = vadd.f32 %v4147, %v4595
  %v5044 = vadd.f32 %v4148, %v4596
  %v5045 = vadd.f32 %v4149, %v4597
  %v5046 = vadd.f32 %v4150, %v4598
  %v5047 = vadd.f32 %v4151, %v4599
  %v5048 = vadd.f32 %v4152, %v4600
  %v5049 = vadd.f32 %v4153, %v4601
  %v5050 = vadd.f32 %v4154, %v4602
  %v5051 = vadd.f32 %v4155, %v4603
  %v5052 = vadd.f32 %v4156, %v4604
  %v5053 = vadd.f32 %v4157, %v4605
  %v5054 = vadd.f32 %v4158, %v4606
  %v5055 = vadd.f32 %v4159, %v4607
  %v5056 = vadd.f32 %v4160, %v4608
  %v5057 = vadd.f32 %v4161, %v4609
  %v5058 = vadd.f32 %v4162, %v4610
  %v5059 = vadd.f32 %v4163, %v4611
  %v5060 = vadd.f32 %v4164, %v4612
  %v5061 = vadd.f32 %v4165, %v4613
  %v5062 = vadd.f32 %v4166, %v4614
  %v5063 = vadd.f32 %v4167, %v4615
  %v5064 = vadd.f32 %v4168, %v4616
  %v5065 = vadd.f32 %v4169, %v4617
  %v5066 = vadd.f32 %v4170, %v4618
  %v5067 = vadd.f32 %v4171, %v4619
  %v5068 = vadd.f32 %v4172, %v4620
  %v5069 = vadd.f32 %v4173, %v4621
  %v5070 = vadd.f32 %v4174, %v4622
  %v5071 = vadd.f32 %v4175, %v4623
  %v5072 = vadd.f32 %v4176, %v4624
  %v5073 = vadd.f32 %v4177, %v4625
  %v5074 = vadd.f32 %v4178, %v4626
  %v5075 = vadd.f32 %v4179, %v4627
  %v5076 = vadd.f32 %v4180, %v4628
  %v5077 = vadd.f32 %v4181, %v4629
  %v5078 = vadd.f32 %v4182, %v4630
  %v5079 = vadd.f32 %v4183, %v4631
  %v5080 = vadd.f32 %v4184, %v4632
  %v5081 = vadd.f32 %v4185, %v4633
  %v5082 = vadd.f32 %v4186, %v4634
  %v5083 = vadd.f32 %v4187, %v4635
  %v5084 = vadd.f32 %v4188, %v4636
  %v5085 = vadd.f32 %v4189, %v4637
  %v5086 = vadd.f32 %v4190, %v4638
  %v5087 = vadd.f32 %v4191, %v4639
  %v5088 = vadd.f32 %v4192, %v4640
  %v5089 = vadd.f32 %v4193, %v4641
  %v5090 = vadd.f32 %v4194, %v4642
  %v5091 = vadd.f32 %v4195, %v4643
  %v5092 = vadd.f32 %v4196, %v4644
  %v5093 = vadd.f32 %v4197, %v4645
  %v5094 = vadd.f32 %v4198, %v4646
  %v5095 = vadd.f32 %v4199, %v4647
  %v5096 = vadd.f32 %v4200, %v4648
  %v5097 = vadd.f32 %v4201, %v4649
  %v5098 = vadd.f32 %v4202, %v4650
  %v5099 = vadd.f32 %v4203, %v4651
  %v5100 = vadd.f32 %v4204, %v4652
  %v5101 = vadd.f32 %v4205, %v4653
  %v5102 = vadd.f32 %v4206, %v4654
  %v5103 = vadd.f32 %v4207, %v4655
  %v5104 = vadd.f32 %v4208, %v4656
  %v5105 = vadd.f32 %v4209, %v4657
  %v5106 = vadd.f32 %v4210, %v4658
  %v5107 = vadd.f32 %v4211, %v4659
  %v5108 = vadd.f32 %v4212, %v4660
  %v5109 = vadd.f32 %v4213, %v4661
  %v5110 = vadd.f32 %v4214, %v4662
  %v5111 = vadd.f32 %v4215, %v4663
  %v5112 = vadd.f32 %v4216, %v4664
  %v5113 = vadd.f32 %v4217, %v4665
  %v5114 = vadd.f32 %v4218, %v4666
  %v5115 = vadd.f32 %v4219, %v4667
  %v5116 = vadd.f32 %v4220, %v4668
  %v5117 = vadd.f32 %v4221, %v4669
  %v5118 = vadd.f32 %v4222, %v4670
  %v5119 = vadd.f32 %v4223, %v4671
  %v5120 = vadd.f32 %v4224, %v4672
  %v5121 = vadd.f32 %v4225, %v4673
  %v5122 = vadd.f32 %v4226, %v4674
  %v5123 = vadd.f32 %v4227, %v4675
  %v5124 = vadd.f32 %v4228, %v4676
  %v5125 = vadd.f32 %v4229, %v4677
  %v5126 = vadd.f32 %v4230, %v4678
  %v5127 = vadd.f32 %v4231, %v4679
  %v5128 = vadd.f32 %v4232, %v4680
  %v5129 = vadd.f32 %v4233, %v4681
  %v5130 = vadd.f32 %v4234, %v4682
  %v5131 = vadd.f32 %v4235, %v4683
  %v5132 = vadd.f32 %v4236, %v4684
  %v5133 = vadd.f32 %v4237, %v4685
  %v5134 = vadd.f32 %v4238, %v4686
  %v5135 = vadd.f32 %v4239, %v4687
  %v5136 = vadd.f32 %v4240, %v4688
  %v5137 = vadd.f32 %v4241, %v4689
  %v5138 = vadd.f32 %v4242, %v4690
  %v5139 = vadd.f32 %v4243, %v4691
  %v5140 = vadd.f32 %v4244, %v4692
  %v5141 = vadd.f32 %v4245, %v4693
  %v5142 = vadd.f32 %v4246, %v4694
  %v5143 = vadd.f32 %v4247, %v4695
  %v5144 = vadd.f32 %v4248, %v4696
  %v5145 = vadd.f32 %v4249, %v4697
  %v5146 = vadd.f32 %v4250, %v4698
  %v5147 = vadd.f32 %v4251, %v4699
  %v5148 = vadd.f32 %v4252, %v4700
  %v5149 = vadd.f32 %v4253, %v4701
  %v5150 = vadd.f32 %v4254, %v4702
  %v5151 = vadd.f32 %v4255, %v4703
  %v5152 = vadd.f32 %v4256, %v4704
  %v5153 = vadd.f32 %v4257, %v4705
  %v5154 = vadd.f32 %v4258, %v4706
  %v5155 = vadd.f32 %v4259, %v4707
  %v5156 = vadd.f32 %v4260, %v4708
  %v5157 = vadd.f32 %v4261, %v4709
  %v5158 = vadd.f32 %v4262, %v4710
  %v5159 = vadd.f32 %v4263, %v4711
  %v5160 = vadd.f32 %v4264, %v4712
  %v5161 = vadd.f32 %v4265, %v4713
  %v5162 = vadd.f32 %v4266, %v4714
  %v5163 = vadd.f32 %v4267, %v4715
  %v5164 = vadd.f32 %v4268, %v4716
  %v5165 = vadd.f32 %v4269, %v4717
  %v5166 = vadd.f32 %v4270, %v4718
  %v5167 = vadd.f32 %v4271, %v4719
  %v5168 = vadd.f32 %v4272, %v4720
  %v5169 = vadd.f32 %v4273, %v4721
  %v5170 = vadd.f32 %v4274, %v4722
  %v5171 = vadd.f32 %v4275, %v4723
  %v5172 = vadd.f32 %v4276, %v4724
  %v5173 = vadd.f32 %v4277, %v4725
  %v5174 = vadd.f32 %v4278, %v4726
  %v5175 = vadd.f32 %v4279, %v4727
  %v5176 = vadd.f32 %v4280, %v4728
  %v5177 = vadd.f32 %v4281, %v4729
  %v5178 = vadd.f32 %v4282, %v4730
  %v5179 = vadd.f32 %v4283, %v4731
  %v5180 = vadd.f32 %v4284, %v4732
  %v5181 = vadd.f32 %v4285, %v4733
  %v5182 = vadd.f32 %v4286, %v4734
  %v5183 = vadd.f32 %v4287, %v4735
  %v5184 = vadd.f32 %v4288, %v4736
  %v5185 = vadd.f32 %v4289, %v4737
  %v5186 = vadd.f32 %v4290, %v4738
  %v5187 = vadd.f32 %v4291, %v4739
  %v5188 = vadd.f32 %v4292, %v4740
  %v5189 = vadd.f32 %v4293, %v4741
  %v5190 = vadd.f32 %v4294, %v4742
  %v5191 = vadd.f32 %v4295, %v4743
  %v5192 = vadd.f32 %v4296, %v4744
  %v5193 = vadd.f32 %v4297, %v4745
  %v5194 = vadd.f32 %v4298, %v4746
  %v5195 = vadd.f32 %v4299, %v4747
  %v5196 = vadd.f32 %v4300, %v4748
  %v5197 = vadd.f32 %v4301, %v4749
  %v5198 = vadd.f32 %v4302, %v4750
  %v5199 = vadd.f32 %v4303, %v4751
  %v5200 = vadd.f32 %v4304, %v4752
  %v5201 = vadd.f32 %v4305, %v4753
  %v5202 = vadd.f32 %v4306, %v4754
  %v5203 = vadd.f32 %v4307, %v4755
  %v5204 = vadd.f32 %v4308, %v4756
  %v5205 = vadd.f32 %v4309, %v4757
  %v5206 = vadd.f32 %v4310, %v4758
  %v5207 = vadd.f32 %v4311, %v4759
  %v5208 = vadd.f32 %v4312, %v4760
  %v5209 = vadd.f32 %v4313, %v4761
  %v5210 = vadd.f32 %v4314, %v4762
  %v5211 = vadd.f32 %v4315, %v4763
  %v5212 = vadd.f32 %v4316, %v4764
  %v5213 = vadd.f32 %v4317, %v4765
  %v5214 = vadd.f32 %v4318, %v4766
  %v5215 = vadd.f32 %v4319, %v4767
  %v5216 = vadd.f32 %v4320, %v4768
  %v5217 = vadd.f32 %v4321, %v4769
  %v5218 = vadd.f32 %v4322, %v4770
  %v5219 = vadd.f32 %v4323, %v4771
  %v5220 = vadd.f32 %v4324, %v4772
  %v5221 = vadd.f32 %v4325, %v4773
  %v5222 = vadd.f32 %v4326, %v4774
  %v5223 = vadd.f32 %v4327, %v4775
  %v5224 = vadd.f32 %v4328, %v4776
  %v5225 = vadd.f32 %v4329, %v4777
  %v5226 = vadd.f32 %v4330, %v4778
  %v5227 = vadd.f32 %v4331, %v4779
  %v5228 = vadd.f32 %v4332, %v4780
  %v5229 = vadd.f32 %v4333, %v4781
  %v5230 = vadd.f32 %v4334, %v4782
  %v5231 = vadd.f32 %v4335, %v4783
  %v5232 = vadd.f32 %v4336, %v4784
  %v5233 = vadd.f32 %v4337, %v4785
  %v5234 = vadd.f32 %v4338, %v4786
  %v5235 = vadd.f32 %v4339, %v4787
  %v5236 = vadd.f32 %v4340, %v4788
  %v5237 = vadd.f32 %v4341, %v4789
  %v5238 = vadd.f32 %v4342, %v4790
  %v5239 = vadd.f32 %v4343, %v4791
  %v5240 = vadd.f32 %v4344, %v4792
  %v5241 = vadd.f32 %v4345, %v4793
  %v5242 = vadd.f32 %v4346, %v4794
  %v5243 = vadd.f32 %v4347, %v4795
  %v5244 = vadd.f32 %v4348, %v4796
  %v5245 = vadd.f32 %v4349, %v4797
  %v5246 = vadd.f32 %v4350, %v4798
  %v5247 = vadd.f32 %v4351, %v4799
  %v5248 = vadd.f32 %v4352, %v4800
  %v5249 = vadd.f32 %v4353, %v4801
  %v5250 = vadd.f32 %v4354, %v4802
  %v5251 = vadd.f32 %v4355, %v4803
  %v5252 = vadd.f32 %v4356, %v4804
  %v5253 = vadd.f32 %v4357, %v4805
  %v5254 = vadd.f32 %v4358, %v4806
  %v5255 = vadd.f32 %v4359, %v4807
  %v5256 = vadd.f32 %v4360, %v4808
  %v5257 = vadd.f32 %v4361, %v4809
  %v5258 = vadd.f32 %v4362, %v4810
  %v5259 = vadd.f32 %v4363, %v4811
  %v5260 = vadd.f32 %v4364, %v4812
  %v5261 = vadd.f32 %v4365, %v4813
  %v5262 = vadd.f32 %v4366, %v4814
  %v5263 = vadd.f32 %v4367, %v4815
  %v5264 = vadd.f32 %v4368, %v4816
  %v5265 = vadd.f32 %v4369, %v4817
  %v5266 = vadd.f32 %v4370, %v4818
  %v5267 = vadd.f32 %v4371, %v4819
  %v5268 = vadd.f32 %v4372, %v4820
  %v5269 = vadd.f32 %v4373, %v4821
  %v5270 = vadd.f32 %v4374, %v4822
  %v5271 = vadd.f32 %v4375, %v4823
  %v5272 = vadd.f32 %v4376, %v4824
  %v5273 = vadd.f32 %v4377, %v4825
  %v5274 = vadd.f32 %v4378, %v4826
  %v5275 = vadd.f32 %v4379, %v4827
  %v5276 = vadd.f32 %v4380, %v4828
  %v5277 = vadd.f32 %v4381, %v4829
  %v5278 = vadd.f32 %v4382, %v4830
  %v5279 = vadd.f32 %v4383, %v4831
  %v5280 = vadd.f32 %v4384, %v4832
  %v5281 = vadd.f32 %v4385, %v4833
  %v5282 = vadd.f32 %v4386, %v4834
  %v5283 = vadd.f32 %v4387, %v4835
  %v5284 = vadd.f32 %v4388, %v4836
  %v5285 = vadd.f32 %v4389, %v4837
  %v5286 = vadd.f32 %v4390, %v4838
  %v5287 = vadd.f32 %v4391, %v4839
  %v5288 = vadd.f32 %v4392, %v4840
  %v5289 = vadd.f32 %v4393, %v4841
  %v5290 = vadd.f32 %v4394, %v4842
  %v5291 = vadd.f32 %v4395, %v4843
  %v5292 = vadd.f32 %v4396, %v4844
  %v5293 = vadd.f32 %v4397, %v4845
  %v5294 = vadd.f32 %v4398, %v4846
  %v5295 = vadd.f32 %v4399, %v4847
  %v5296 = vadd.f32 %v4400, %v4848
  %v5297 = vadd.f32 %v4401, %v4849
  %v5298 = vadd.f32 %v4402, %v4850
  %v5299 = vadd.f32 %v4403, %v4851
  %v5300 = vadd.f32 %v4404, %v4852
  %v5301 = vadd.f32 %v4405, %v4853
  %v5302 = vadd.f32 %v4406, %v4854
  %v5303 = vadd.f32 %v4407, %v4855
  %v5304 = vadd.f32 %v4408, %v4856
  %v5305 = vadd.f32 %v4409, %v4857
  %v5306 = vadd.f32 %v4410, %v4858
  %v5307 = vadd.f32 %v4411, %v4859
  %v5308 = vadd.f32 %v4412, %v4860
  %v5309 = vadd.f32 %v4413, %v4861
  %v5310 = vadd.f32 %v4414, %v4862
  %v5311 = vadd.f32 %v4415, %v4863
  %v5312 = vadd.f32 %v4416, %v4864
  %v5313 = vadd.f32 %v4417, %v4865
  %v5314 = vadd.f32 %v4418, %v4866
  %v5315 = vadd.f32 %v4419, %v4867
  %v5316 = vadd.f32 %v4420, %v4868
  %v5317 = vadd.f32 %v4421, %v4869
  %v5318 = vadd.f32 %v4422, %v4870
  %v5319 = vadd.f32 %v4423, %v4871
  %v5320 = vadd.f32 %v4424, %v4872
  %v5321 = vadd.f32 %v4425, %v4873
  %v5322 = vadd.f32 %v4426, %v4874
  %v5323 = vadd.f32 %v4427, %v4875
  %v5324 = vadd.f32 %v4428, %v4876
  %v5325 = vadd.f32 %v4429, %v4877
  %v5326 = vadd.f32 %v4430, %v4878
  %v5327 = vadd.f32 %v4431, %v4879
  %v5328 = vadd.f32 %v4432, %v4880
  %v5329 = vadd.f32 %v4433, %v4881
  %v5330 = vadd.f32 %v4434, %v4882
  %v5331 = vadd.f32 %v4435, %v4883
  %v5332 = vadd.f32 %v4436, %v4884
  %v5333 = vadd.f32 %v4437, %v4885
  %v5334 = vadd.f32 %v4438, %v4886
  %v5335 = vadd.f32 %v4439, %v4887
  %v5336 = vadd.f32 %v4440, %v4888
  %v5337 = vadd.f32 %v4441, %v4889
  %v5338 = vadd.f32 %v4442, %v4890
  %v5339 = vadd.f32 %v4443, %v4891
  %v5340 = vadd.f32 %v4444, %v4892
  %v5341 = vadd.f32 %v4445, %v4893
  %v5342 = vadd.f32 %v4446, %v4894
  %v5343 = vadd.f32 %v4447, %v4895
  %v5344 = vadd.f32 %v4448, %v4896
  %v5345 = vadd.f32 %v4449, %v4897
  %v5346 = vadd.f32 %v4450, %v4898
  %v5347 = vadd.f32 %v4451, %v4899
  %v5348 = vadd.f32 %v4452, %v4900
  %v5349 = vadd.f32 %v4453, %v4901
  %v5350 = vadd.f32 %v4454, %v4902
  %v5351 = vadd.f32 %v4455, %v4903
  %v5352 = vadd.f32 %v4456, %v4904
  %v5353 = vadd.f32 %v4457, %v4905
  %v5354 = vadd.f32 %v4458, %v4906
  %v5355 = vadd.f32 %v4459, %v4907
  %v5356 = vadd.f32 %v4460, %v4908
  %v5357 = vadd.f32 %v4461, %v4909
  %v5358 = vadd.f32 %v4462, %v4910
  %v5359 = vadd.f32 %v4463, %v4911
  %v5360 = vadd.f32 %v4464, %v4912
  %v5361 = vadd.f32 %v4465, %v4913
  %v5362 = vadd.f32 %v4466, %v4914
  %v5363 = vadd.f32 %v4467, %v4915
  %v5364 = vadd.f32 %v4468, %v4916
  %v5365 = vadd.f32 %v4469, %v4917
  %v5366 = vadd.f32 %v4470, %v4918
  %v5367 = vadd.f32 %v4471, %v4919
  %v5368 = vadd.f32 %v4472, %v4920
  %v5369 = vadd.f32 %v4473, %v4921
  %v5370 = vadd.f32 %v4474, %v4922
  %v5371 = vadd.f32 %v4475, %v4923
  %v5372 = vadd.f32 %v4476, %v4924
  %v5373 = vadd.f32 %v4477, %v4925
  %v5374 = vadd.f32 %v4478, %v4926
  %v5375 = vadd.f32 %v4479, %v4927
  %v5376 = vadd.f32 %v4480, %v4928
  %v5377 = vadd.f32 %v4481, %v4929
  %v5378 = vadd.f32 %v4482, %v4930
  %v5379 = vadd.f32 %v4483, %v4931
  %v5380 = vadd.f32 %v4484, %v4932
  %v5381 = vadd.f32 %v4485, %v4933
  %v5382 = vadd.f32 %v4486, %v4934
  %v5383 = vadd.f32 %v4487, %v4935
  %v5384 = vadd.f32 %v4488, %v4936
  %v5385 = vadd.f32 %v4489, %v4937
  %v5386 = vadd.f32 %v4490, %v4938
  %v5387 = vadd.f32 %v4491, %v4939
  %v5388 = vadd.f32 %v4492, %v4940
  %v5389 = vadd.f32 %v4493, %v4941
  %v5390 = vadd.f32 %v4494, %v4942
  %v5391 = vadd.f32 %v4495, %v4943
  %v5392 = vadd.f32 %v4496, %v4944
  %v5393 = vadd.f32 %v4497, %v4945
  %v5394 = vadd.f32 %v4498, %v4946
  %v5395 = vadd.f32 %v4499, %v4947
  %v5396 = vadd.f32 %v4500, %v4948
  %v5397 = vadd.f32 %v4501, %v4949
  %v5398 = vmax.f32 %v4950, 0.0
  %v5399 = vmax.f32 %v4951, 0.0
  %v5400 = vmax.f32 %v4952, 0.0
  %v5401 = vmax.f32 %v4953, 0.0
  %v5402 = vmax.f32 %v4954, 0.0
  %v5403 = vmax.f32 %v4955, 0.0
  %v5404 = vmax.f32 %v4956, 0.0
  %v5405 = vmax.f32 %v4957, 0.0
  %v5406 = vmax.f32 %v4958, 0.0
  %v5407 = vmax.f32 %v4959, 0.0
  %v5408 = vmax.f32 %v4960, 0.0
  %v5409 = vmax.f32 %v4961, 0.0
  %v5410 = vmax.f32 %v4962, 0.0
  %v5411 = vmax.f32 %v4963, 0.0
  %v5412 = vmax.f32 %v4964, 0.0
  %v5413 = vmax.f32 %v4965, 0.0
  %v5414 = vmax.f32 %v4966, 0.0
  %v5415 = vmax.f32 %v4967, 0.0
  %v5416 = vmax.f32 %v4968, 0.0
  %v5417 = vmax.f32 %v4969, 0.0
  %v5418 = vmax.f32 %v4970, 0.0
  %v5419 = vmax.f32 %v4971, 0.0
  %v5420 = vmax.f32 %v4972, 0.0
  %v5421 = vmax.f32 %v4973, 0.0
  %v5422 = vmax.f32 %v4974, 0.0
  %v5423 = vmax.f32 %v4975, 0.0
  %v5424 = vmax.f32 %v4976, 0.0
  %v5425 = vmax.f32 %v4977, 0.0
  %v5426 = vmax.f32 %v4978, 0.0
  %v5427 = vmax.f32 %v4979, 0.0
  %v5428 = vmax.f32 %v4980, 0.0
  %v5429 = vmax.f32 %v4981, 0.0
  %v5430 = vmax.f32 %v4982, 0.0
  %v5431 = vmax.f32 %v4983, 0.0
  %v5432 = vmax.f32 %v4984, 0.0
  %v5433 = vmax.f32 %v4985, 0.0
  %v5434 = vmax.f32 %v4986, 0.0
  %v5435 = vmax.f32 %v4987, 0.0
  %v5436 = vmax.f32 %v4988, 0.0
  %v5437 = vmax.f32 %v4989, 0.0
  %v5438 = vmax.f32 %v4990, 0.0
  %v5439 = vmax.f32 %v4991, 0.0
  %v5440 = vmax.f32 %v4992, 0.0
  %v5441 = vmax.f32 %v4993, 0.0
  %v5442 = vmax.f32 %v4994, 0.0
  %v5443 = vmax.f32 %v4995, 0.0
  %v5444 = vmax.f32 %v4996, 0.0
  %v5445 = vmax.f32 %v4997, 0.0
  %v5446 = vmax.f32 %v4998, 0.0
  %v5447 = vmax.f32 %v4999, 0.0
  %v5448 = vmax.f32 %v5000, 0.0
  %v5449 = vmax.f32 %v5001, 0.0
  %v5450 = vmax.f32 %v5002, 0.0
  %v5451 = vmax.f32 %v5003, 0.0
  %v5452 = vmax.f32 %v5004, 0.0
  %v5453 = vmax.f32 %v5005, 0.0
  %v5454 = vmax.f32 %v5006, 0.0
  %v5455 = vmax.f32 %v5007, 0.0
  %v5456 = vmax.f32 %v5008, 0.0
  %v5457 = vmax.f32 %v5009, 0.0
  %v5458 = vmax.f32 %v5010, 0.0
  %v5459 = vmax.f32 %v5011, 0.0
  %v5460 = vmax.f32 %v5012, 0.0
  %v5461 = vmax.f32 %v5013, 0.0
  %v5462 = vmax.f32 %v5014, 0.0
  %v5463 = vmax.f32 %v5015, 0.0
  %v5464 = vmax.f32 %v5016, 0.0
  %v5465 = vmax.f32 %v5017, 0.0
  %v5466 = vmax.f32 %v5018, 0.0
  %v5467 = vmax.f32 %v5019, 0.0
  %v5468 = vmax.f32 %v5020, 0.0
  %v5469 = vmax.f32 %v5021, 0.0
  %v5470 = vmax.f32 %v5022, 0.0
  %v5471 = vmax.f32 %v5023, 0.0
  %v5472 = vmax.f32 %v5024, 0.0
  %v5473 = vmax.f32 %v5025, 0.0
  %v5474 = vmax.f32 %v5026, 0.0
  %v5475 = vmax.f32 %v5027, 0.0
  %v5476 = vmax.f32 %v5028, 0.0
  %v5477 = vmax.f32 %v5029, 0.0
  %v5478 = vmax.f32 %v5030, 0.0
  %v5479 = vmax.f32 %v5031, 0.0
  %v5480 = vmax.f32 %v5032, 0.0
  %v5481 = vmax.f32 %v5033, 0.0
  %v5482 = vmax.f32 %v5034, 0.0
  %v5483 = vmax.f32 %v5035, 0.0
  %v5484 = vmax.f32 %v5036, 0.0
  %v5485 = vmax.f32 %v5037, 0.0
  %v5486 = vmax.f32 %v5038, 0.0
  %v5487 = vmax.f32 %v5039, 0.0
  %v5488 = vmax.f32 %v5040, 0.0
  %v5489 = vmax.f32 %v5041, 0.0
  %v5490 = vmax.f32 %v5042, 0.0
  %v5491 = vmax.f32 %v5043, 0.0
  %v5492 = vmax.f32 %v5044, 0.0
  %v5493 = vmax.f32 %v5045, 0.0
  %v5494 = vmax.f32 %v5046, 0.0
  %v5495 = vmax.f32 %v5047, 0.0
  %v5496 = vmax.f32 %v5048, 0.0
  %v5497 = vmax.f32 %v5049, 0.0
  %v5498 = vmax.f32 %v5050, 0.0
  %v5499 = vmax.f32 %v5051, 0.0
  %v5500 = vmax.f32 %v5052, 0.0
  %v5501 = vmax.f32 %v5053, 0.0
  %v5502 = vmax.f32 %v5054, 0.0
  %v5503 = vmax.f32 %v5055, 0.0
  %v5504 = vmax.f32 %v5056, 0.0
  %v5505 = vmax.f32 %v5057, 0.0
  %v5506 = vmax.f32 %v5058, 0.0
  %v5507 = vmax.f32 %v5059, 0.0
  %v5508 = vmax.f32 %v5060, 0.0
  %v5509 = vmax.f32 %v5061, 0.0
  %v5510 = vmax.f32 %v5062, 0.0
  %v5511 = vmax.f32 %v5063, 0.0
  %v5512 = vmax.f32 %v5064, 0.0
  %v5513 = vmax.f32 %v5065, 0.0
  %v5514 = vmax.f32 %v5066, 0.0
  %v5515 = vmax.f32 %v5067, 0.0
  %v5516 = vmax.f32 %v5068, 0.0
  %v5517 = vmax.f32 %v5069, 0.0
  %v5518 = vmax.f32 %v5070, 0.0
  %v5519 = vmax.f32 %v5071, 0.0
  %v5520 = vmax.f32 %v5072, 0.0
  %v5521 = vmax.f32 %v5073, 0.0
  %v5522 = vmax.f32 %v5074, 0.0
  %v5523 = vmax.f32 %v5075, 0.0
  %v5524 = vmax.f32 %v5076, 0.0
  %v5525 = vmax.f32 %v5077, 0.0
  %v5526 = vmax.f32 %v5078, 0.0
  %v5527 = vmax.f32 %v5079, 0.0
  %v5528 = vmax.f32 %v5080, 0.0
  %v5529 = vmax.f32 %v5081, 0.0
  %v5530 = vmax.f32 %v5082, 0.0
  %v5531 = vmax.f32 %v5083, 0.0
  %v5532 = vmax.f32 %v5084, 0.0
  %v5533 = vmax.f32 %v5085, 0.0
  %v5534 = vmax.f32 %v5086, 0.0
  %v5535 = vmax.f32 %v5087, 0.0
  %v5536 = vmax.f32 %v5088, 0.0
  %v5537 = vmax.f32 %v5089, 0.0
  %v5538 = vmax.f32 %v5090, 0.0
  %v5539 = vmax.f32 %v5091, 0.0
  %v5540 = vmax.f32 %v5092, 0.0
  %v5541 = vmax.f32 %v5093, 0.0
  %v5542 = vmax.f32 %v5094, 0.0
  %v5543 = vmax.f32 %v5095, 0.0
  %v5544 = vmax.f32 %v5096, 0.0
  %v5545 = vmax.f32 %v5097, 0.0
  %v5546 = vmax.f32 %v5098, 0.0
  %v5547 = vmax.f32 %v5099, 0.0
  %v5548 = vmax.f32 %v5100, 0.0
  %v5549 = vmax.f32 %v5101, 0.0
  %v5550 = vmax.f32 %v5102, 0.0
  %v5551 = vmax.f32 %v5103, 0.0
  %v5552 = vmax.f32 %v5104, 0.0
  %v5553 = vmax.f32 %v5105, 0.0
  %v5554 = vmax.f32 %v5106, 0.0
  %v5555 = vmax.f32 %v5107, 0.0
  %v5556 = vmax.f32 %v5108, 0.0
  %v5557 = vmax.f32 %v5109, 0.0
  %v5558 = vmax.f32 %v5110, 0.0
  %v5559 = vmax.f32 %v5111, 0.0
  %v5560 = vmax.f32 %v5112, 0.0
  %v5561 = vmax.f32 %v5113, 0.0
  %v5562 = vmax.f32 %v5114, 0.0
  %v5563 = vmax.f32 %v5115, 0.0
  %v5564 = vmax.f32 %v5116, 0.0
  %v5565 = vmax.f32 %v5117, 0.0
  %v5566 = vmax.f32 %v5118, 0.0
  %v5567 = vmax.f32 %v5119, 0.0
  %v5568 = vmax.f32 %v5120, 0.0
  %v5569 = vmax.f32 %v5121, 0.0
  %v5570 = vmax.f32 %v5122, 0.0
  %v5571 = vmax.f32 %v5123, 0.0
  %v5572 = vmax.f32 %v5124, 0.0
  %v5573 = vmax.f32 %v5125, 0.0
  %v5574 = vmax.f32 %v5126, 0.0
  %v5575 = vmax.f32 %v5127, 0.0
  %v5576 = vmax.f32 %v5128, 0.0
  %v5577 = vmax.f32 %v5129, 0.0
  %v5578 = vmax.f32 %v5130, 0.0
  %v5579 = vmax.f32 %v5131, 0.0
  %v5580 = vmax.f32 %v5132, 0.0
  %v5581 = vmax.f32 %v5133, 0.0
  %v5582 = vmax.f32 %v5134, 0.0
  %v5583 = vmax.f32 %v5135, 0.0
  %v5584 = vmax.f32 %v5136, 0.0
  %v5585 = vmax.f32 %v5137, 0.0
  %v5586 = vmax.f32 %v5138, 0.0
  %v5587 = vmax.f32 %v5139, 0.0
  %v5588 = vmax.f32 %v5140, 0.0
  %v5589 = vmax.f32 %v5141, 0.0
  %v5590 = vmax.f32 %v5142, 0.0
  %v5591 = vmax.f32 %v5143, 0.0
  %v5592 = vmax.f32 %v5144, 0.0
  %v5593 = vmax.f32 %v5145, 0.0
  %v5594 = vmax.f32 %v5146, 0.0
  %v5595 = vmax.f32 %v5147, 0.0
  %v5596 = vmax.f32 %v5148, 0.0
  %v5597 = vmax.f32 %v5149, 0.0
  %v5598 = vmax.f32 %v5150, 0.0
  %v5599 = vmax.f32 %v5151, 0.0
  %v5600 = vmax.f32 %v5152, 0.0
  %v5601 = vmax.f32 %v5153, 0.0
  %v5602 = vmax.f32 %v5154, 0.0
  %v5603 = vmax.f32 %v5155, 0.0
  %v5604 = vmax.f32 %v5156, 0.0
  %v5605 = vmax.f32 %v5157, 0.0
  %v5606 = vmax.f32 %v5158, 0.0
  %v5607 = vmax.f32 %v5159, 0.0
  %v5608 = vmax.f32 %v5160, 0.0
  %v5609 = vmax.f32 %v5161, 0.0
  %v5610 = vmax.f32 %v5162, 0.0
  %v5611 = vmax.f32 %v5163, 0.0
  %v5612 = vmax.f32 %v5164, 0.0
  %v5613 = vmax.f32 %v5165, 0.0
  %v5614 = vmax.f32 %v5166, 0.0
  %v5615 = vmax.f32 %v5167, 0.0
  %v5616 = vmax.f32 %v5168, 0.0
  %v5617 = vmax.f32 %v5169, 0.0
  %v5618 = vmax.f32 %v5170, 0.0
  %v5619 = vmax.f32 %v5171, 0.0
  %v5620 = vmax.f32 %v5172, 0.0
  %v5621 = vmax.f32 %v5173, 0.0
  %v5622 = vmax.f32 %v5174, 0.0
  %v5623 = vmax.f32 %v5175, 0.0
  %v5624 = vmax.f32 %v5176, 0.0
  %v5625 = vmax.f32 %v5177, 0.0
  %v5626 = vmax.f32 %v5178, 0.0
  %v5627 = vmax.f32 %v5179, 0.0
  %v5628 = vmax.f32 %v5180, 0.0
  %v5629 = vmax.f32 %v5181, 0.0
  %v5630 = vmax.f32 %v5182, 0.0
  %v5631 = vmax.f32 %v5183, 0.0
  %v5632 = vmax.f32 %v5184, 0.0
  %v5633 = vmax.f32 %v5185, 0.0
  %v5634 = vmax.f32 %v5186, 0.0
  %v5635 = vmax.f32 %v5187, 0.0
  %v5636 = vmax.f32 %v5188, 0.0
  %v5637 = vmax.f32 %v5189, 0.0
  %v5638 = vmax.f32 %v5190, 0.0
  %v5639 = vmax.f32 %v5191, 0.0
  %v5640 = vmax.f32 %v5192, 0.0
  %v5641 = vmax.f32 %v5193, 0.0
  %v5642 = vmax.f32 %v5194, 0.0
  %v5643 = vmax.f32 %v5195, 0.0
  %v5644 = vmax.f32 %v5196, 0.0
  %v5645 = vmax.f32 %v5197, 0.0
  %v5646 = vmax.f32 %v5198, 0.0
  %v5647 = vmax.f32 %v5199, 0.0
  %v5648 = vmax.f32 %v5200, 0.0
  %v5649 = vmax.f32 %v5201, 0.0
  %v5650 = vmax.f32 %v5202, 0.0
  %v5651 = vmax.f32 %v5203, 0.0
  %v5652 = vmax.f32 %v5204, 0.0
  %v5653 = vmax.f32 %v5205, 0.0
  %v5654 = vmax.f32 %v5206, 0.0
  %v5655 = vmax.f32 %v5207, 0.0
  %v5656 = vmax.f32 %v5208, 0.0
  %v5657 = vmax.f32 %v5209, 0.0
  %v5658 = vmax.f32 %v5210, 0.0
  %v5659 = vmax.f32 %v5211, 0.0
  %v5660 = vmax.f32 %v5212, 0.0
  %v5661 = vmax.f32 %v5213, 0.0
  %v5662 = vmax.f32 %v5214, 0.0
  %v5663 = vmax.f32 %v5215, 0.0
  %v5664 = vmax.f32 %v5216, 0.0
  %v5665 = vmax.f32 %v5217, 0.0
  %v5666 = vmax.f32 %v5218, 0.0
  %v5667 = vmax.f32 %v5219, 0.0
  %v5668 = vmax.f32 %v5220, 0.0
  %v5669 = vmax.f32 %v5221, 0.0
  %v5670 = vmax.f32 %v5222, 0.0
  %v5671 = vmax.f32 %v5223, 0.0
  %v5672 = vmax.f32 %v5224, 0.0
  %v5673 = vmax.f32 %v5225, 0.0
  %v5674 = vmax.f32 %v5226, 0.0
  %v5675 = vmax.f32 %v5227, 0.0
  %v5676 = vmax.f32 %v5228, 0.0
  %v5677 = vmax.f32 %v5229, 0.0
  %v5678 = vmax.f32 %v5230, 0.0
  %v5679 = vmax.f32 %v5231, 0.0
  %v5680 = vmax.f32 %v5232, 0.0
  %v5681 = vmax.f32 %v5233, 0.0
  %v5682 = vmax.f32 %v5234, 0.0
  %v5683 = vmax.f32 %v5235, 0.0
  %v5684 = vmax.f32 %v5236, 0.0
  %v5685 = vmax.f32 %v5237, 0.0
  %v5686 = vmax.f32 %v5238, 0.0
  %v5687 = vmax.f32 %v5239, 0.0
  %v5688 = vmax.f32 %v5240, 0.0
  %v5689 = vmax.f32 %v5241, 0.0
  %v5690 = vmax.f32 %v5242, 0.0
  %v5691 = vmax.f32 %v5243, 0.0
  %v5692 = vmax.f32 %v5244, 0.0
  %v5693 = vmax.f32 %v5245, 0.0
  %v5694 = vmax.f32 %v5246, 0.0
  %v5695 = vmax.f32 %v5247, 0.0
  %v5696 = vmax.f32 %v5248, 0.0
  %v5697 = vmax.f32 %v5249, 0.0
  %v5698 = vmax.f32 %v5250, 0.0
  %v5699 = vmax.f32 %v5251, 0.0
  %v5700 = vmax.f32 %v5252, 0.0
  %v5701 = vmax.f32 %v5253, 0.0
  %v5702 = vmax.f32 %v5254, 0.0
  %v5703 = vmax.f32 %v5255, 0.0
  %v5704 = vmax.f32 %v5256, 0.0
  %v5705 = vmax.f32 %v5257, 0.0
  %v5706 = vmax.f32 %v5258, 0.0
  %v5707 = vmax.f32 %v5259, 0.0
  %v5708 = vmax.f32 %v5260, 0.0
  %v5709 = vmax.f32 %v5261, 0.0
  %v5710 = vmax.f32 %v5262, 0.0
  %v5711 = vmax.f32 %v5263, 0.0
  %v5712 = vmax.f32 %v5264, 0.0
  %v5713 = vmax.f32 %v5265, 0.0
  %v5714 = vmax.f32 %v5266, 0.0
  %v5715 = vmax.f32 %v5267, 0.0
  %v5716 = vmax.f32 %v5268, 0.0
  %v5717 = vmax.f32 %v5269, 0.0
  %v5718 = vmax.f32 %v5270, 0.0
  %v5719 = vmax.f32 %v5271, 0.0
  %v5720 = vmax.f32 %v5272, 0.0
  %v5721 = vmax.f32 %v5273, 0.0
  %v5722 = vmax.f32 %v5274, 0.0
  %v5723 = vmax.f32 %v5275, 0.0
  %v5724 = vmax.f32 %v5276, 0.0
  %v5725 = vmax.f32 %v5277, 0.0
  %v5726 = vmax.f32 %v5278, 0.0
  %v5727 = vmax.f32 %v5279, 0.0
  %v5728 = vmax.f32 %v5280, 0.0
  %v5729 = vmax.f32 %v5281, 0.0
  %v5730 = vmax.f32 %v5282, 0.0
  %v5731 = vmax.f32 %v5283, 0.0
  %v5732 = vmax.f32 %v5284, 0.0
  %v5733 = vmax.f32 %v5285, 0.0
  %v5734 = vmax.f32 %v5286, 0.0
  %v5735 = vmax.f32 %v5287, 0.0
  %v5736 = vmax.f32 %v5288, 0.0
  %v5737 = vmax.f32 %v5289, 0.0
  %v5738 = vmax.f32 %v5290, 0.0
  %v5739 = vmax.f32 %v5291, 0.0
  %v5740 = vmax.f32 %v5292, 0.0
  %v5741 = vmax.f32 %v5293, 0.0
  %v5742 = vmax.f32 %v5294, 0.0
  %v5743 = vmax.f32 %v5295, 0.0
  %v5744 = vmax.f32 %v5296, 0.0
  %v5745 = vmax.f32 %v5297, 0.0
  %v5746 = vmax.f32 %v5298, 0.0
  %v5747 = vmax.f32 %v5299, 0.0
  %v5748 = vmax.f32 %v5300, 0.0
  %v5749 = vmax.f32 %v5301, 0.0
  %v5750 = vmax.f32 %v5302, 0.0
  %v5751 = vmax.f32 %v5303, 0.0
  %v5752 = vmax.f32 %v5304, 0.0
  %v5753 = vmax.f32 %v5305, 0.0
  %v5754 = vmax.f32 %v5306, 0.0
  %v5755 = vmax.f32 %v5307, 0.0
  %v5756 = vmax.f32 %v5308, 0.0
  %v5757 = vmax.f32 %v5309, 0.0
  %v5758 = vmax.f32 %v5310, 0.0
  %v5759 = vmax.f32 %v5311, 0.0
  %v5760 = vmax.f32 %v5312, 0.0
  %v5761 = vmax.f32 %v5313, 0.0
  %v5762 = vmax.f32 %v5314, 0.0
  %v5763 = vmax.f32 %v5315, 0.0
  %v5764 = vmax.f32 %v5316, 0.0
  %v5765 = vmax.f32 %v5317, 0.0
  %v5766 = vmax.f32 %v5318, 0.0
  %v5767 = vmax.f32 %v5319, 0.0
  %v5768 = vmax.f32 %v5320, 0.0
  %v5769 = vmax.f32 %v5321, 0.0
  %v5770 = vmax.f32 %v5322, 0.0
  %v5771 = vmax.f32 %v5323, 0.0
  %v5772 = vmax.f32 %v5324, 0.0
  %v5773 = vmax.f32 %v5325, 0.0
  %v5774 = vmax.f32 %v5326, 0.0
  %v5775 = vmax.f32 %v5327, 0.0
  %v5776 = vmax.f32 %v5328, 0.0
  %v5777 = vmax.f32 %v5329, 0.0
  %v5778 = vmax.f32 %v5330, 0.0
  %v5779 = vmax.f32 %v5331, 0.0
  %v5780 = vmax.f32 %v5332, 0.0
  %v5781 = vmax.f32 %v5333, 0.0
  %v5782 = vmax.f32 %v5334, 0.0
  %v5783 = vmax.f32 %v5335, 0.0
  %v5784 = vmax.f32 %v5336, 0.0
  %v5785 = vmax.f32 %v5337, 0.0
  %v5786 = vmax.f32 %v5338, 0.0
  %v5787 = vmax.f32 %v5339, 0.0
  %v5788 = vmax.f32 %v5340, 0.0
  %v5789 = vmax.f32 %v5341, 0.0
  %v5790 = vmax.f32 %v5342, 0.0
  %v5791 = vmax.f32 %v5343, 0.0
  %v5792 = vmax.f32 %v5344, 0.0
  %v5793 = vmax.f32 %v5345, 0.0
  %v5794 = vmax.f32 %v5346, 0.0
  %v5795 = vmax.f32 %v5347, 0.0
  %v5796 = vmax.f32 %v5348, 0.0
  %v5797 = vmax.f32 %v5349, 0.0
  %v5798 = vmax.f32 %v5350, 0.0
  %v5799 = vmax.f32 %v5351, 0.0
  %v5800 = vmax.f32 %v5352, 0.0
  %v5801 = vmax.f32 %v5353, 0.0
  %v5802 = vmax.f32 %v5354, 0.0
  %v5803 = vmax.f32 %v5355, 0.0
  %v5804 = vmax.f32 %v5356, 0.0
  %v5805 = vmax.f32 %v5357, 0.0
  %v5806 = vmax.f32 %v5358, 0.0
  %v5807 = vmax.f32 %v5359, 0.0
  %v5808 = vmax.f32 %v5360, 0.0
  %v5809 = vmax.f32 %v5361, 0.0
  %v5810 = vmax.f32 %v5362, 0.0
  %v5811 = vmax.f32 %v5363, 0.0
  %v5812 = vmax.f32 %v5364, 0.0
  %v5813 = vmax.f32 %v5365, 0.0
  %v5814 = vmax.f32 %v5366, 0.0
  %v5815 = vmax.f32 %v5367, 0.0
  %v5816 = vmax.f32 %v5368, 0.0
  %v5817 = vmax.f32 %v5369, 0.0
  %v5818 = vmax.f32 %v5370, 0.0
  %v5819 = vmax.f32 %v5371, 0.0
  %v5820 = vmax.f32 %v5372, 0.0
  %v5821 = vmax.f32 %v5373, 0.0
  %v5822 = vmax.f32 %v5374, 0.0
  %v5823 = vmax.f32 %v5375, 0.0
  %v5824 = vmax.f32 %v5376, 0.0
  %v5825 = vmax.f32 %v5377, 0.0
  %v5826 = vmax.f32 %v5378, 0.0
  %v5827 = vmax.f32 %v5379, 0.0
  %v5828 = vmax.f32 %v5380, 0.0
  %v5829 = vmax.f32 %v5381, 0.0
  %v5830 = vmax.f32 %v5382, 0.0
  %v5831 = vmax.f32 %v5383, 0.0
  %v5832 = vmax.f32 %v5384, 0.0
  %v5833 = vmax.f32 %v5385, 0.0
  %v5834 = vmax.f32 %v5386, 0.0
  %v5835 = vmax.f32 %v5387, 0.0
  %v5836 = vmax.f32 %v5388, 0.0
  %v5837 = vmax.f32 %v5389, 0.0
  %v5838 = vmax.f32 %v5390, 0.0
  %v5839 = vmax.f32 %v5391, 0.0
  %v5840 = vmax.f32 %v5392, 0.0
  %v5841 = vmax.f32 %v5393, 0.0
  %v5842 = vmax.f32 %v5394, 0.0
  %v5843 = vmax.f32 %v5395, 0.0
  %v5844 = vmax.f32 %v5396, 0.0
  %v5845 = vmax.f32 %v5397, 0.0
  %v5846 = vld [vmem:[%s4] sm:$0xff]
  %v5847 = vld [vmem:[%s4 + $0x8] sm:$0xff]
  %v5848 = vld [vmem:[%s4 + $0x10] sm:$0xff]
  %v5849 = vld [vmem:[%s4 + $0x18] sm:$0xff]
  %v5850 = vld [vmem:[%s4 + $0x20] sm:$0xff]
  %v5851 = vld [vmem:[%s4 + $0x28] sm:$0xff]
  %v5852 = vld [vmem:[%s4 + $0x30] sm:$0xff]
  %v5853 = vld [vmem:[%s4 + $0x38] sm:$0xff]
  %v5854 = vld [vmem:[%s4 + $0x40] sm:$0xff]
  %v5855 = vld [vmem:[%s4 + $0x48] sm:$0xff]
  %v5856 = vld [vmem:[%s4 + $0x50] sm:$0xff]
  %v5857 = vld [vmem:[%s4 + $0x58] sm:$0xff]
  %v5858 = vld [vmem:[%s4 + $0x60] sm:$0xff]
  %v5859 = vld [vmem:[%s4 + $0x68] sm:$0xff]
  %v5860 = vld [vmem:[%s4 + $0x70] sm:$0xff]
  %v5861 = vld [vmem:[%s4 + $0x78] sm:$0xff]
  %v5862 = vld [vmem:[%s4 + $0x80] sm:$0xff]
  %v5863 = vld [vmem:[%s4 + $0x88] sm:$0xff]
  %v5864 = vld [vmem:[%s4 + $0x90] sm:$0xff]
  %v5865 = vld [vmem:[%s4 + $0x98] sm:$0xff]
  %v5866 = vld [vmem:[%s4 + $0xa0] sm:$0xff]
  %v5867 = vld [vmem:[%s4 + $0xa8] sm:$0xff]
  %v5868 = vld [vmem:[%s4 + $0xb0] sm:$0xff]
  %v5869 = vld [vmem:[%s4 + $0xb8] sm:$0xff]
  %v5870 = vld [vmem:[%s4 + $0xc0] sm:$0xff]
  %v5871 = vld [vmem:[%s4 + $0xc8] sm:$0xff]
  %v5872 = vld [vmem:[%s4 + $0xd0] sm:$0xff]
  %v5873 = vld [vmem:[%s4 + $0xd8] sm:$0xff]
  %v5874 = vld [vmem:[%s4 + $0xe0] sm:$0xff]
  %v5875 = vld [vmem:[%s4 + $0xe8] sm:$0xff]
  %v5876 = vld [vmem:[%s4 + $0xf0] sm:$0xff]
  %v5877 = vld [vmem:[%s4 + $0xf8] sm:$0xff]
  %v5878 = vld [vmem:[%s4 + $0x100] sm:$0xff]
  %v5879 = vld [vmem:[%s4 + $0x108] sm:$0xff]
  %v5880 = vld [vmem:[%s4 + $0x110] sm:$0xff]
  %v5881 = vld [vmem:[%s4 + $0x118] sm:$0xff]
  %v5882 = vld [vmem:[%s4 + $0x120] sm:$0xff]
  %v5883 = vld [vmem:[%s4 + $0x128] sm:$0xff]
  %v5884 = vld [vmem:[%s4 + $0x130] sm:$0xff]
  %v5885 = vld [vmem:[%s4 + $0x138] sm:$0xff]
  %v5886 = vld [vmem:[%s4 + $0x140] sm:$0xff]
  %v5887 = vld [vmem:[%s4 + $0x148] sm:$0xff]
  %v5888 = vld [vmem:[%s4 + $0x150] sm:$0xff]
  %v5889 = vld [vmem:[%s4 + $0x158] sm:$0xff]
  %v5890 = vld [vmem:[%s4 + $0x160] sm:$0xff]
  %v5891 = vld [vmem:[%s4 + $0x168] sm:$0xff]
  %v5892 = vld [vmem:[%s4 + $0x170] sm:$0xff]
  %v5893 = vld [vmem:[%s4 + $0x178] sm:$0xff]
  %v5894 = vld [vmem:[%s4 + $0x180] sm:$0xff]
  %v5895 = vld [vmem:[%s4 + $0x188] sm:$0xff]
  %v5896 = vld [vmem:[%s4 + $0x190] sm:$0xff]
  %v5897 = vld [vmem:[%s4 + $0x198] sm:$0xff]
  %v5898 = vld [vmem:[%s4 + $0x1a0] sm:$0xff]
  %v5899 = vld [vmem:[%s4 + $0x1a8] sm:$0xff]
  %v5900 = vld [vmem:[%s4 + $0x1b0] sm:$0xff]
  %v5901 = vld [vmem:[%s4 + $0x1b8] sm:$0xff]
  %v5902 = vld [vmem:[%s4 + $0x1c0] sm:$0xff]
  %v5903 = vld [vmem:[%s4 + $0x1c8] sm:$0xff]
  %v5904 = vld [vmem:[%s4 + $0x1d0] sm:$0xff]
  %v5905 = vld [vmem:[%s4 + $0x1d8] sm:$0xff]
  %v5906 = vld [vmem:[%s4 + $0x1e0] sm:$0xff]
  %v5907 = vld [vmem:[%s4 + $0x1e8] sm:$0xff]
  %v5908 = vld [vmem:[%s4 + $0x1f0] sm:$0xff]
  %v5909 = vld [vmem:[%s4 + $0x1f8] sm:$0xff]
  %v5910 = vld [vmem:[%s4 + $0x200] sm:$0xff]
  %v5911 = vld [vmem:[%s4 + $0x208] sm:$0xff]
  %v5912 = vld [vmem:[%s4 + $0x210] sm:$0xff]
  %v5913 = vld [vmem:[%s4 + $0x218] sm:$0xff]
  %v5914 = vld [vmem:[%s4 + $0x220] sm:$0xff]
  %v5915 = vld [vmem:[%s4 + $0x228] sm:$0xff]
  %v5916 = vld [vmem:[%s4 + $0x230] sm:$0xff]
  %v5917 = vld [vmem:[%s4 + $0x238] sm:$0xff]
  %v5918 = vld [vmem:[%s4 + $0x240] sm:$0xff]
  %v5919 = vld [vmem:[%s4 + $0x248] sm:$0xff]
  %v5920 = vld [vmem:[%s4 + $0x250] sm:$0xff]
  %v5921 = vld [vmem:[%s4 + $0x258] sm:$0xff]
  %v5922 = vld [vmem:[%s4 + $0x260] sm:$0xff]
  %v5923 = vld [vmem:[%s4 + $0x268] sm:$0xff]
  %v5924 = vld [vmem:[%s4 + $0x270] sm:$0xff]
  %v5925 = vld [vmem:[%s4 + $0x278] sm:$0xff]
  %v5926 = vld [vmem:[%s4 + $0x280] sm:$0xff]
  %v5927 = vld [vmem:[%s4 + $0x288] sm:$0xff]
  %v5928 = vld [vmem:[%s4 + $0x290] sm:$0xff]
  %v5929 = vld [vmem:[%s4 + $0x298] sm:$0xff]
  %v5930 = vld [vmem:[%s4 + $0x2a0] sm:$0xff]
  %v5931 = vld [vmem:[%s4 + $0x2a8] sm:$0xff]
  %v5932 = vld [vmem:[%s4 + $0x2b0] sm:$0xff]
  %v5933 = vld [vmem:[%s4 + $0x2b8] sm:$0xff]
  %v5934 = vld [vmem:[%s4 + $0x2c0] sm:$0xff]
  %v5935 = vld [vmem:[%s4 + $0x2c8] sm:$0xff]
  %v5936 = vld [vmem:[%s4 + $0x2d0] sm:$0xff]
  %v5937 = vld [vmem:[%s4 + $0x2d8] sm:$0xff]
  %v5938 = vld [vmem:[%s4 + $0x2e0] sm:$0xff]
  %v5939 = vld [vmem:[%s4 + $0x2e8] sm:$0xff]
  %v5940 = vld [vmem:[%s4 + $0x2f0] sm:$0xff]
  %v5941 = vld [vmem:[%s4 + $0x2f8] sm:$0xff]
  %v5942 = vld [vmem:[%s4 + $0x300] sm:$0xff]
  %v5943 = vld [vmem:[%s4 + $0x308] sm:$0xff]
  %v5944 = vld [vmem:[%s4 + $0x310] sm:$0xff]
  %v5945 = vld [vmem:[%s4 + $0x318] sm:$0xff]
  %v5946 = vld [vmem:[%s4 + $0x320] sm:$0xff]
  %v5947 = vld [vmem:[%s4 + $0x328] sm:$0xff]
  %v5948 = vld [vmem:[%s4 + $0x330] sm:$0xff]
  %v5949 = vld [vmem:[%s4 + $0x338] sm:$0xff]
  %v5950 = vld [vmem:[%s4 + $0x340] sm:$0xff]
  %v5951 = vld [vmem:[%s4 + $0x348] sm:$0xff]
  %v5952 = vld [vmem:[%s4 + $0x350] sm:$0xff]
  %v5953 = vld [vmem:[%s4 + $0x358] sm:$0xff]
  %v5954 = vld [vmem:[%s4 + $0x360] sm:$0xff]
  %v5955 = vld [vmem:[%s4 + $0x368] sm:$0xff]
  %v5956 = vld [vmem:[%s4 + $0x370] sm:$0xff]
  %v5957 = vld [vmem:[%s4 + $0x378] sm:$0xff]
  %v5958 = vld [vmem:[%s4 + $0x380] sm:$0xff]
  %v5959 = vld [vmem:[%s4 + $0x388] sm:$0xff]
  %v5960 = vld [vmem:[%s4 + $0x390] sm:$0xff]
  %v5961 = vld [vmem:[%s4 + $0x398] sm:$0xff]
  %v5962 = vld [vmem:[%s4 + $0x3a0] sm:$0xff]
  %v5963 = vld [vmem:[%s4 + $0x3a8] sm:$0xff]
  %v5964 = vld [vmem:[%s4 + $0x3b0] sm:$0xff]
  %v5965 = vld [vmem:[%s4 + $0x3b8] sm:$0xff]
  %v5966 = vld [vmem:[%s4 + $0x3c0] sm:$0xff]
  %v5967 = vld [vmem:[%s4 + $0x3c8] sm:$0xff]
  %v5968 = vld [vmem:[%s4 + $0x3d0] sm:$0xff]
  %v5969 = vld [vmem:[%s4 + $0x3d8] sm:$0xff]
  %v5970 = vld [vmem:[%s4 + $0x3e0] sm:$0xff]
  %v5971 = vld [vmem:[%s4 + $0x3e8] sm:$0xff]
  %v5972 = vld [vmem:[%s4 + $0x3f0] sm:$0xff]
  %v5973 = vld [vmem:[%s4 + $0x3f8] sm:$0xff]
  %v5974 = vpack.c.bf16 %v5405, %v5398
  %v5975 = vpack.c.bf16 %v5406, %v5399
  %v5976 = vpack.c.bf16 %v5407, %v5400
  %v5977 = vpack.c.bf16 %v5408, %v5401
  %v5978 = vpack.c.bf16 %v5409, %v5402
  %v5979 = vpack.c.bf16 %v5410, %v5403
  %v5980 = vpack.c.bf16 %v5411, %v5404
  %v5981 = vpack.c.bf16 %v5419, %v5412
  %v5982 = vpack.c.bf16 %v5420, %v5413
  %v5983 = vpack.c.bf16 %v5421, %v5414
  %v5984 = vpack.c.bf16 %v5422, %v5415
  %v5985 = vpack.c.bf16 %v5423, %v5416
  %v5986 = vpack.c.bf16 %v5424, %v5417
  %v5987 = vpack.c.bf16 %v5425, %v5418
  %v5988 = vpack.c.bf16 %v5433, %v5426
  %v5989 = vpack.c.bf16 %v5434, %v5427
  %v5990 = vpack.c.bf16 %v5435, %v5428
  %v5991 = vpack.c.bf16 %v5436, %v5429
  %v5992 = vpack.c.bf16 %v5437, %v5430
  %v5993 = vpack.c.bf16 %v5438, %v5431
  %v5994 = vpack.c.bf16 %v5439, %v5432
  %v5995 = vpack.c.bf16 %v5447, %v5440
  %v5996 = vpack.c.bf16 %v5448, %v5441
  %v5997 = vpack.c.bf16 %v5449, %v5442
  %v5998 = vpack.c.bf16 %v5450, %v5443
  %v5999 = vpack.c.bf16 %v5451, %v5444
  %v6000 = vpack.c.bf16 %v5452, %v5445
  %v6001 = vpack.c.bf16 %v5453, %v5446
  %v6002 = vpack.c.bf16 %v5461, %v5454
  %v6003 = vpack.c.bf16 %v5462, %v5455
  %v6004 = vpack.c.bf16 %v5463, %v5456
  %v6005 = vpack.c.bf16 %v5464, %v5457
  %v6006 = vpack.c.bf16 %v5465, %v5458
  %v6007 = vpack.c.bf16 %v5466, %v5459
  %v6008 = vpack.c.bf16 %v5467, %v5460
  %v6009 = vpack.c.bf16 %v5475, %v5468
  %v6010 = vpack.c.bf16 %v5476, %v5469
  %v6011 = vpack.c.bf16 %v5477, %v5470
  %v6012 = vpack.c.bf16 %v5478, %v5471
  %v6013 = vpack.c.bf16 %v5479, %v5472
  %v6014 = vpack.c.bf16 %v5480, %v5473
  %v6015 = vpack.c.bf16 %v5481, %v5474
  %v6016 = vpack.c.bf16 %v5489, %v5482
  %v6017 = vpack.c.bf16 %v5490, %v5483
  %v6018 = vpack.c.bf16 %v5491, %v5484
  %v6019 = vpack.c.bf16 %v5492, %v5485
  %v6020 = vpack.c.bf16 %v5493, %v5486
  %v6021 = vpack.c.bf16 %v5494, %v5487
  %v6022 = vpack.c.bf16 %v5495, %v5488
  %v6023 = vpack.c.bf16 %v5503, %v5496
  %v6024 = vpack.c.bf16 %v5504, %v5497
  %v6025 = vpack.c.bf16 %v5505, %v5498
  %v6026 = vpack.c.bf16 %v5506, %v5499
  %v6027 = vpack.c.bf16 %v5507, %v5500
  %v6028 = vpack.c.bf16 %v5508, %v5501
  %v6029 = vpack.c.bf16 %v5509, %v5502
  %v6030 = vpack.c.bf16 %v5517, %v5510
  %v6031 = vpack.c.bf16 %v5518, %v5511
  %v6032 = vpack.c.bf16 %v5519, %v5512
  %v6033 = vpack.c.bf16 %v5520, %v5513
  %v6034 = vpack.c.bf16 %v5521, %v5514
  %v6035 = vpack.c.bf16 %v5522, %v5515
  %v6036 = vpack.c.bf16 %v5523, %v5516
  %v6037 = vpack.c.bf16 %v5531, %v5524
  %v6038 = vpack.c.bf16 %v5532, %v5525
  %v6039 = vpack.c.bf16 %v5533, %v5526
  %v6040 = vpack.c.bf16 %v5534, %v5527
  %v6041 = vpack.c.bf16 %v5535, %v5528
  %v6042 = vpack.c.bf16 %v5536, %v5529
  %v6043 = vpack.c.bf16 %v5537, %v5530
  %v6044 = vpack.c.bf16 %v5545, %v5538
  %v6045 = vpack.c.bf16 %v5546, %v5539
  %v6046 = vpack.c.bf16 %v5547, %v5540
  %v6047 = vpack.c.bf16 %v5548, %v5541
  %v6048 = vpack.c.bf16 %v5549, %v5542
  %v6049 = vpack.c.bf16 %v5550, %v5543
  %v6050 = vpack.c.bf16 %v5551, %v5544
  %v6051 = vpack.c.bf16 %v5559, %v5552
  %v6052 = vpack.c.bf16 %v5560, %v5553
  %v6053 = vpack.c.bf16 %v5561, %v5554
  %v6054 = vpack.c.bf16 %v5562, %v5555
  %v6055 = vpack.c.bf16 %v5563, %v5556
  %v6056 = vpack.c.bf16 %v5564, %v5557
  %v6057 = vpack.c.bf16 %v5565, %v5558
  %v6058 = vpack.c.bf16 %v5573, %v5566
  %v6059 = vpack.c.bf16 %v5574, %v5567
  %v6060 = vpack.c.bf16 %v5575, %v5568
  %v6061 = vpack.c.bf16 %v5576, %v5569
  %v6062 = vpack.c.bf16 %v5577, %v5570
  %v6063 = vpack.c.bf16 %v5578, %v5571
  %v6064 = vpack.c.bf16 %v5579, %v5572
  %v6065 = vpack.c.bf16 %v5587, %v5580
  %v6066 = vpack.c.bf16 %v5588, %v5581
  %v6067 = vpack.c.bf16 %v5589, %v5582
  %v6068 = vpack.c.bf16 %v5590, %v5583
  %v6069 = vpack.c.bf16 %v5591, %v5584
  %v6070 = vpack.c.bf16 %v5592, %v5585
  %v6071 = vpack.c.bf16 %v5593, %v5586
  %v6072 = vpack.c.bf16 %v5601, %v5594
  %v6073 = vpack.c.bf16 %v5602, %v5595
  %v6074 = vpack.c.bf16 %v5603, %v5596
  %v6075 = vpack.c.bf16 %v5604, %v5597
  %v6076 = vpack.c.bf16 %v5605, %v5598
  %v6077 = vpack.c.bf16 %v5606, %v5599
  %v6078 = vpack.c.bf16 %v5607, %v5600
  %v6079 = vpack.c.bf16 %v5615, %v5608
  %v6080 = vpack.c.bf16 %v5616, %v5609
  %v6081 = vpack.c.bf16 %v5617, %v5610
  %v6082 = vpack.c.bf16 %v5618, %v5611
  %v6083 = vpack.c.bf16 %v5619, %v5612
  %v6084 = vpack.c.bf16 %v5620, %v5613
  %v6085 = vpack.c.bf16 %v5621, %v5614
  %v6086 = vpack.c.bf16 %v5629, %v5622
  %v6087 = vpack.c.bf16 %v5630, %v5623
  %v6088 = vpack.c.bf16 %v5631, %v5624
  %v6089 = vpack.c.bf16 %v5632, %v5625
  %v6090 = vpack.c.bf16 %v5633, %v5626
  %v6091 = vpack.c.bf16 %v5634, %v5627
  %v6092 = vpack.c.bf16 %v5635, %v5628
  %v6093 = vpack.c.bf16 %v5643, %v5636
  %v6094 = vpack.c.bf16 %v5644, %v5637
  %v6095 = vpack.c.bf16 %v5645, %v5638
  %v6096 = vpack.c.bf16 %v5646, %v5639
  %v6097 = vpack.c.bf16 %v5647, %v5640
  %v6098 = vpack.c.bf16 %v5648, %v5641
  %v6099 = vpack.c.bf16 %v5649, %v5642
  %v6100 = vpack.c.bf16 %v5657, %v5650
  %v6101 = vpack.c.bf16 %v5658, %v5651
  %v6102 = vpack.c.bf16 %v5659, %v5652
  %v6103 = vpack.c.bf16 %v5660, %v5653
  %v6104 = vpack.c.bf16 %v5661, %v5654
  %v6105 = vpack.c.bf16 %v5662, %v5655
  %v6106 = vpack.c.bf16 %v5663, %v5656
  %v6107 = vpack.c.bf16 %v5671, %v5664
  %v6108 = vpack.c.bf16 %v5672, %v5665
  %v6109 = vpack.c.bf16 %v5673, %v5666
  %v6110 = vpack.c.bf16 %v5674, %v5667
  %v6111 = vpack.c.bf16 %v5675, %v5668
  %v6112 = vpack.c.bf16 %v5676, %v5669
  %v6113 = vpack.c.bf16 %v5677, %v5670
  %v6114 = vpack.c.bf16 %v5685, %v5678
  %v6115 = vpack.c.bf16 %v5686, %v5679
  %v6116 = vpack.c.bf16 %v5687, %v5680
  %v6117 = vpack.c.bf16 %v5688, %v5681
  %v6118 = vpack.c.bf16 %v5689, %v5682
  %v6119 = vpack.c.bf16 %v5690, %v5683
  %v6120 = vpack.c.bf16 %v5691, %v5684
  %v6121 = vpack.c.bf16 %v5699, %v5692
  %v6122 = vpack.c.bf16 %v5700, %v5693
  %v6123 = vpack.c.bf16 %v5701, %v5694
  %v6124 = vpack.c.bf16 %v5702, %v5695
  %v6125 = vpack.c.bf16 %v5703, %v5696
  %v6126 = vpack.c.bf16 %v5704, %v5697
  %v6127 = vpack.c.bf16 %v5705, %v5698
  %v6128 = vpack.c.bf16 %v5713, %v5706
  %v6129 = vpack.c.bf16 %v5714, %v5707
  %v6130 = vpack.c.bf16 %v5715, %v5708
  %v6131 = vpack.c.bf16 %v5716, %v5709
  %v6132 = vpack.c.bf16 %v5717, %v5710
  %v6133 = vpack.c.bf16 %v5718, %v5711
  %v6134 = vpack.c.bf16 %v5719, %v5712
  %v6135 = vpack.c.bf16 %v5727, %v5720
  %v6136 = vpack.c.bf16 %v5728, %v5721
  %v6137 = vpack.c.bf16 %v5729, %v5722
  %v6138 = vpack.c.bf16 %v5730, %v5723
  %v6139 = vpack.c.bf16 %v5731, %v5724
  %v6140 = vpack.c.bf16 %v5732, %v5725
  %v6141 = vpack.c.bf16 %v5733, %v5726
  %v6142 = vpack.c.bf16 %v5741, %v5734
  %v6143 = vpack.c.bf16 %v5742, %v5735
  %v6144 = vpack.c.bf16 %v5743, %v5736
  %v6145 = vpack.c.bf16 %v5744, %v5737
  %v6146 = vpack.c.bf16 %v5745, %v5738
  %v6147 = vpack.c.bf16 %v5746, %v5739
  %v6148 = vpack.c.bf16 %v5747, %v5740
  %v6149 = vpack.c.bf16 %v5755, %v5748
  %v6150 = vpack.c.bf16 %v5756, %v5749
  %v6151 = vpack.c.bf16 %v5757, %v5750
  %v6152 = vpack.c.bf16 %v5758, %v5751
  %v6153 = vpack.c.bf16 %v5759, %v5752
  %v6154 = vpack.c.bf16 %v5760, %v5753
  %v6155 = vpack.c.bf16 %v5761, %v5754
  %v6156 = vpack.c.bf16 %v5769, %v5762
  %v6157 = vpack.c.bf16 %v5770, %v5763
  %v6158 = vpack.c.bf16 %v5771, %v5764
  %v6159 = vpack.c.bf16 %v5772, %v5765
  %v6160 = vpack.c.bf16 %v5773, %v5766
  %v6161 = vpack.c.bf16 %v5774, %v5767
  %v6162 = vpack.c.bf16 %v5775, %v5768
  %v6163 = vpack.c.bf16 %v5783, %v5776
  %v6164 = vpack.c.bf16 %v5784, %v5777
  %v6165 = vpack.c.bf16 %v5785, %v5778
  %v6166 = vpack.c.bf16 %v5786, %v5779
  %v6167 = vpack.c.bf16 %v5787, %v5780
  %v6168 = vpack.c.bf16 %v5788, %v5781
  %v6169 = vpack.c.bf16 %v5789, %v5782
  %v6170 = vpack.c.bf16 %v5797, %v5790
  %v6171 = vpack.c.bf16 %v5798, %v5791
  %v6172 = vpack.c.bf16 %v5799, %v5792
  %v6173 = vpack.c.bf16 %v5800, %v5793
  %v6174 = vpack.c.bf16 %v5801, %v5794
  %v6175 = vpack.c.bf16 %v5802, %v5795
  %v6176 = vpack.c.bf16 %v5803, %v5796
  %v6177 = vpack.c.bf16 %v5811, %v5804
  %v6178 = vpack.c.bf16 %v5812, %v5805
  %v6179 = vpack.c.bf16 %v5813, %v5806
  %v6180 = vpack.c.bf16 %v5814, %v5807
  %v6181 = vpack.c.bf16 %v5815, %v5808
  %v6182 = vpack.c.bf16 %v5816, %v5809
  %v6183 = vpack.c.bf16 %v5817, %v5810
  %v6184 = vpack.c.bf16 %v5825, %v5818
  %v6185 = vpack.c.bf16 %v5826, %v5819
  %v6186 = vpack.c.bf16 %v5827, %v5820
  %v6187 = vpack.c.bf16 %v5828, %v5821
  %v6188 = vpack.c.bf16 %v5829, %v5822
  %v6189 = vpack.c.bf16 %v5830, %v5823
  %v6190 = vpack.c.bf16 %v5831, %v5824
  %v6191 = vpack.c.bf16 %v5839, %v5832
  %v6192 = vpack.c.bf16 %v5840, %v5833
  %v6193 = vpack.c.bf16 %v5841, %v5834
  %v6194 = vpack.c.bf16 %v5842, %v5835
  %v6195 = vpack.c.bf16 %v5843, %v5836
  %v6196 = vpack.c.bf16 %v5844, %v5837
  %v6197 = vpack.c.bf16 %v5845, %v5838
  %v6326 = vunpack.c.l.b16 %v5846
  %v6327 = vunpack.c.h.b16 %v5846
  %v6328 = vunpack.c.l.b16 %v5847
  %v6329 = vunpack.c.h.b16 %v5847
  %v6330 = vunpack.c.l.b16 %v5848
  %v6331 = vunpack.c.h.b16 %v5848
  %v6332 = vunpack.c.l.b16 %v5849
  %v6333 = vunpack.c.h.b16 %v5849
  %v6334 = vunpack.c.l.b16 %v5850
  %v6335 = vunpack.c.h.b16 %v5850
  %v6336 = vunpack.c.l.b16 %v5851
  %v6337 = vunpack.c.h.b16 %v5851
  %v6338 = vunpack.c.l.b16 %v5852
  %v6339 = vunpack.c.h.b16 %v5852
  %v6340 = vunpack.c.l.b16 %v5853
  %v6341 = vunpack.c.h.b16 %v5853
  %v6342 = vunpack.c.l.b16 %v5854
  %v6343 = vunpack.c.h.b16 %v5854
  %v6344 = vunpack.c.l.b16 %v5855
  %v6345 = vunpack.c.h.b16 %v5855
  %v6346 = vunpack.c.l.b16 %v5856
  %v6347 = vunpack.c.h.b16 %v5856
  %v6348 = vunpack.c.l.b16 %v5857
  %v6349 = vunpack.c.h.b16 %v5857
  %v6350 = vunpack.c.l.b16 %v5858
  %v6351 = vunpack.c.h.b16 %v5858
  %v6352 = vunpack.c.l.b16 %v5859
  %v6353 = vunpack.c.h.b16 %v5859
  %v6354 = vunpack.c.l.b16 %v5860
  %v6355 = vunpack.c.h.b16 %v5860
  %v6356 = vunpack.c.l.b16 %v5861
  %v6357 = vunpack.c.h.b16 %v5861
  %v6358 = vunpack.c.l.b16 %v5862
  %v6359 = vunpack.c.h.b16 %v5862
  %v6360 = vunpack.c.l.b16 %v5863
  %v6361 = vunpack.c.h.b16 %v5863
  %v6362 = vunpack.c.l.b16 %v5864
  %v6363 = vunpack.c.h.b16 %v5864
  %v6364 = vunpack.c.l.b16 %v5865
  %v6365 = vunpack.c.h.b16 %v5865
  %v6366 = vunpack.c.l.b16 %v5866
  %v6367 = vunpack.c.h.b16 %v5866
  %v6368 = vunpack.c.l.b16 %v5867
  %v6369 = vunpack.c.h.b16 %v5867
  %v6370 = vunpack.c.l.b16 %v5868
  %v6371 = vunpack.c.h.b16 %v5868
  %v6372 = vunpack.c.l.b16 %v5869
  %v6373 = vunpack.c.h.b16 %v5869
  %v6374 = vunpack.c.l.b16 %v5870
  %v6375 = vunpack.c.h.b16 %v5870
  %v6376 = vunpack.c.l.b16 %v5871
  %v6377 = vunpack.c.h.b16 %v5871
  %v6378 = vunpack.c.l.b16 %v5872
  %v6379 = vunpack.c.h.b16 %v5872
  %v6380 = vunpack.c.l.b16 %v5873
  %v6381 = vunpack.c.h.b16 %v5873
  %v6382 = vunpack.c.l.b16 %v5874
  %v6383 = vunpack.c.h.b16 %v5874
  %v6384 = vunpack.c.l.b16 %v5875
  %v6385 = vunpack.c.h.b16 %v5875
  %v6386 = vunpack.c.l.b16 %v5876
  %v6387 = vunpack.c.h.b16 %v5876
  %v6388 = vunpack.c.l.b16 %v5877
  %v6389 = vunpack.c.h.b16 %v5877
  %v6390 = vunpack.c.l.b16 %v5878
  %v6391 = vunpack.c.h.b16 %v5878
  %v6392 = vunpack.c.l.b16 %v5879
  %v6393 = vunpack.c.h.b16 %v5879
  %v6394 = vunpack.c.l.b16 %v5880
  %v6395 = vunpack.c.h.b16 %v5880
  %v6396 = vunpack.c.l.b16 %v5881
  %v6397 = vunpack.c.h.b16 %v5881
  %v6398 = vunpack.c.l.b16 %v5882
  %v6399 = vunpack.c.h.b16 %v5882
  %v6400 = vunpack.c.l.b16 %v5883
  %v6401 = vunpack.c.h.b16 %v5883
  %v6402 = vunpack.c.l.b16 %v5884
  %v6403 = vunpack.c.h.b16 %v5884
  %v6404 = vunpack.c.l.b16 %v5885
  %v6405 = vunpack.c.h.b16 %v5885
  %v6406 = vunpack.c.l.b16 %v5886
  %v6407 = vunpack.c.h.b16 %v5886
  %v6408 = vunpack.c.l.b16 %v5887
  %v6409 = vunpack.c.h.b16 %v5887
  %v6410 = vunpack.c.l.b16 %v5888
  %v6411 = vunpack.c.h.b16 %v5888
  %v6412 = vunpack.c.l.b16 %v5889
  %v6413 = vunpack.c.h.b16 %v5889
  %v6414 = vunpack.c.l.b16 %v5890
  %v6415 = vunpack.c.h.b16 %v5890
  %v6416 = vunpack.c.l.b16 %v5891
  %v6417 = vunpack.c.h.b16 %v5891
  %v6418 = vunpack.c.l.b16 %v5892
  %v6419 = vunpack.c.h.b16 %v5892
  %v6420 = vunpack.c.l.b16 %v5893
  %v6421 = vunpack.c.h.b16 %v5893
  %v6422 = vunpack.c.l.b16 %v5894
  %v6423 = vunpack.c.h.b16 %v5894
  %v6424 = vunpack.c.l.b16 %v5895
  %v6425 = vunpack.c.h.b16 %v5895
  %v6426 = vunpack.c.l.b16 %v5896
  %v6427 = vunpack.c.h.b16 %v5896
  %v6428 = vunpack.c.l.b16 %v5897
  %v6429 = vunpack.c.h.b16 %v5897
  %v6430 = vunpack.c.l.b16 %v5898
  %v6431 = vunpack.c.h.b16 %v5898
  %v6432 = vunpack.c.l.b16 %v5899
  %v6433 = vunpack.c.h.b16 %v5899
  %v6434 = vunpack.c.l.b16 %v5900
  %v6435 = vunpack.c.h.b16 %v5900
  %v6436 = vunpack.c.l.b16 %v5901
  %v6437 = vunpack.c.h.b16 %v5901
  %v6438 = vunpack.c.l.b16 %v5902
  %v6439 = vunpack.c.h.b16 %v5902
  %v6440 = vunpack.c.l.b16 %v5903
  %v6441 = vunpack.c.h.b16 %v5903
  %v6442 = vunpack.c.l.b16 %v5904
  %v6443 = vunpack.c.h.b16 %v5904
  %v6444 = vunpack.c.l.b16 %v5905
  %v6445 = vunpack.c.h.b16 %v5905
  %v6446 = vunpack.c.l.b16 %v5906
  %v6447 = vunpack.c.h.b16 %v5906
  %v6448 = vunpack.c.l.b16 %v5907
  %v6449 = vunpack.c.h.b16 %v5907
  %v6450 = vunpack.c.l.b16 %v5908
  %v6451 = vunpack.c.h.b16 %v5908
  %v6452 = vunpack.c.l.b16 %v5909
  %v6453 = vunpack.c.h.b16 %v5909
  %v6454 = vunpack.c.l.b16 %v5910
  %v6455 = vunpack.c.h.b16 %v5910
  %v6456 = vunpack.c.l.b16 %v5911
  %v6457 = vunpack.c.h.b16 %v5911
  %v6458 = vunpack.c.l.b16 %v5912
  %v6459 = vunpack.c.h.b16 %v5912
  %v6460 = vunpack.c.l.b16 %v5913
  %v6461 = vunpack.c.h.b16 %v5913
  %v6462 = vunpack.c.l.b16 %v5914
  %v6463 = vunpack.c.h.b16 %v5914
  %v6464 = vunpack.c.l.b16 %v5915
  %v6465 = vunpack.c.h.b16 %v5915
  %v6466 = vunpack.c.l.b16 %v5916
  %v6467 = vunpack.c.h.b16 %v5916
  %v6468 = vunpack.c.l.b16 %v5917
  %v6469 = vunpack.c.h.b16 %v5917
  %v6470 = vunpack.c.l.b16 %v5918
  %v6471 = vunpack.c.h.b16 %v5918
  %v6472 = vunpack.c.l.b16 %v5919
  %v6473 = vunpack.c.h.b16 %v5919
  %v6474 = vunpack.c.l.b16 %v5920
  %v6475 = vunpack.c.h.b16 %v5920
  %v6476 = vunpack.c.l.b16 %v5921
  %v6477 = vunpack.c.h.b16 %v5921
  %v6478 = vunpack.c.l.b16 %v5922
  %v6479 = vunpack.c.h.b16 %v5922
  %v6480 = vunpack.c.l.b16 %v5923
  %v6481 = vunpack.c.h.b16 %v5923
  %v6482 = vunpack.c.l.b16 %v5924
  %v6483 = vunpack.c.h.b16 %v5924
  %v6484 = vunpack.c.l.b16 %v5925
  %v6485 = vunpack.c.h.b16 %v5925
  %v6486 = vunpack.c.l.b16 %v5926
  %v6487 = vunpack.c.h.b16 %v5926
  %v6488 = vunpack.c.l.b16 %v5927
  %v6489 = vunpack.c.h.b16 %v5927
  %v6490 = vunpack.c.l.b16 %v5928
  %v6491 = vunpack.c.h.b16 %v5928
  %v6492 = vunpack.c.l.b16 %v5929
  %v6493 = vunpack.c.h.b16 %v5929
  %v6494 = vunpack.c.l.b16 %v5930
  %v6495 = vunpack.c.h.b16 %v5930
  %v6496 = vunpack.c.l.b16 %v5931
  %v6497 = vunpack.c.h.b16 %v5931
  %v6498 = vunpack.c.l.b16 %v5932
  %v6499 = vunpack.c.h.b16 %v5932
  %v6500 = vunpack.c.l.b16 %v5933
  %v6501 = vunpack.c.h.b16 %v5933
  %v6502 = vunpack.c.l.b16 %v5934
  %v6503 = vunpack.c.h.b16 %v5934
  %v6504 = vunpack.c.l.b16 %v5935
  %v6505 = vunpack.c.h.b16 %v5935
  %v6506 = vunpack.c.l.b16 %v5936
  %v6507 = vunpack.c.h.b16 %v5936
  %v6508 = vunpack.c.l.b16 %v5937
  %v6509 = vunpack.c.h.b16 %v5937
  %v6510 = vunpack.c.l.b16 %v5938
  %v6511 = vunpack.c.h.b16 %v5938
  %v6512 = vunpack.c.l.b16 %v5939
  %v6513 = vunpack.c.h.b16 %v5939
  %v6514 = vunpack.c.l.b16 %v5940
  %v6515 = vunpack.c.h.b16 %v5940
  %v6516 = vunpack.c.l.b16 %v5941
  %v6517 = vunpack.c.h.b16 %v5941
  %v6518 = vunpack.c.l.b16 %v5942
  %v6519 = vunpack.c.h.b16 %v5942
  %v6520 = vunpack.c.l.b16 %v5943
  %v6521 = vunpack.c.h.b16 %v5943
  %v6522 = vunpack.c.l.b16 %v5944
  %v6523 = vunpack.c.h.b16 %v5944
  %v6524 = vunpack.c.l.b16 %v5945
  %v6525 = vunpack.c.h.b16 %v5945
  %v6526 = vunpack.c.l.b16 %v5946
  %v6527 = vunpack.c.h.b16 %v5946
  %v6528 = vunpack.c.l.b16 %v5947
  %v6529 = vunpack.c.h.b16 %v5947
  %v6530 = vunpack.c.l.b16 %v5948
  %v6531 = vunpack.c.h.b16 %v5948
  %v6532 = vunpack.c.l.b16 %v5949
  %v6533 = vunpack.c.h.b16 %v5949
  %v6534 = vunpack.c.l.b16 %v5950
  %v6535 = vunpack.c.h.b16 %v5950
  %v6536 = vunpack.c.l.b16 %v5951
  %v6537 = vunpack.c.h.b16 %v5951
  %v6538 = vunpack.c.l.b16 %v5952
  %v6539 = vunpack.c.h.b16 %v5952
  %v6540 = vunpack.c.l.b16 %v5953
  %v6541 = vunpack.c.h.b16 %v5953
  %v6542 = vunpack.c.l.b16 %v5954
  %v6543 = vunpack.c.h.b16 %v5954
  %v6544 = vunpack.c.l.b16 %v5955
  %v6545 = vunpack.c.h.b16 %v5955
  %v6546 = vunpack.c.l.b16 %v5956
  %v6547 = vunpack.c.h.b16 %v5956
  %v6548 = vunpack.c.l.b16 %v5957
  %v6549 = vunpack.c.h.b16 %v5957
  %v6550 = vunpack.c.l.b16 %v5958
  %v6551 = vunpack.c.h.b16 %v5958
  %v6552 = vunpack.c.l.b16 %v5959
  %v6553 = vunpack.c.h.b16 %v5959
  %v6554 = vunpack.c.l.b16 %v5960
  %v6555 = vunpack.c.h.b16 %v5960
  %v6556 = vunpack.c.l.b16 %v5961
  %v6557 = vunpack.c.h.b16 %v5961
  %v6558 = vunpack.c.l.b16 %v5962
  %v6559 = vunpack.c.h.b16 %v5962
  %v6560 = vunpack.c.l.b16 %v5963
  %v6561 = vunpack.c.h.b16 %v5963
  %v6562 = vunpack.c.l.b16 %v5964
  %v6563 = vunpack.c.h.b16 %v5964
  %v6564 = vunpack.c.l.b16 %v5965
  %v6565 = vunpack.c.h.b16 %v5965
  %v6566 = vunpack.c.l.b16 %v5966
  %v6567 = vunpack.c.h.b16 %v5966
  %v6568 = vunpack.c.l.b16 %v5967
  %v6569 = vunpack.c.h.b16 %v5967
  %v6570 = vunpack.c.l.b16 %v5968
  %v6571 = vunpack.c.h.b16 %v5968
  %v6572 = vunpack.c.l.b16 %v5969
  %v6573 = vunpack.c.h.b16 %v5969
  %v6574 = vunpack.c.l.b16 %v5970
  %v6575 = vunpack.c.h.b16 %v5970
  %v6576 = vunpack.c.l.b16 %v5971
  %v6577 = vunpack.c.h.b16 %v5971
  %v6578 = vunpack.c.l.b16 %v5972
  %v6579 = vunpack.c.h.b16 %v5972
  %v6580 = vunpack.c.l.b16 %v5973
  %v6581 = vunpack.c.h.b16 %v5973
  %v6582 = vpack.c.b16 %v6330, %v6326
  %v6583 = vpack.c.b16 %v6331, %v6327
  %v6584 = vpack.c.b16 %v6332, %v6328
  %v6585 = vpack.c.b16 %v6333, %v6329
  %v6586 = vpack.c.b16 %v6338, %v6334
  %v6587 = vpack.c.b16 %v6339, %v6335
  %v6588 = vpack.c.b16 %v6340, %v6336
  %v6589 = vpack.c.b16 %v6341, %v6337
  %v6590 = vpack.c.b16 %v6346, %v6342
  %v6591 = vpack.c.b16 %v6347, %v6343
  %v6592 = vpack.c.b16 %v6348, %v6344
  %v6593 = vpack.c.b16 %v6349, %v6345
  %v6594 = vpack.c.b16 %v6354, %v6350
  %v6595 = vpack.c.b16 %v6355, %v6351
  %v6596 = vpack.c.b16 %v6356, %v6352
  %v6597 = vpack.c.b16 %v6357, %v6353
  %v6598 = vpack.c.b16 %v6362, %v6358
  %v6599 = vpack.c.b16 %v6363, %v6359
  %v6600 = vpack.c.b16 %v6364, %v6360
  %v6601 = vpack.c.b16 %v6365, %v6361
  %v6602 = vpack.c.b16 %v6370, %v6366
  %v6603 = vpack.c.b16 %v6371, %v6367
  %v6604 = vpack.c.b16 %v6372, %v6368
  %v6605 = vpack.c.b16 %v6373, %v6369
  %v6606 = vpack.c.b16 %v6378, %v6374
  %v6607 = vpack.c.b16 %v6379, %v6375
  %v6608 = vpack.c.b16 %v6380, %v6376
  %v6609 = vpack.c.b16 %v6381, %v6377
  %v6610 = vpack.c.b16 %v6386, %v6382
  %v6611 = vpack.c.b16 %v6387, %v6383
  %v6612 = vpack.c.b16 %v6388, %v6384
  %v6613 = vpack.c.b16 %v6389, %v6385
  %v6614 = vpack.c.b16 %v6394, %v6390
  %v6615 = vpack.c.b16 %v6395, %v6391
  %v6616 = vpack.c.b16 %v6396, %v6392
  %v6617 = vpack.c.b16 %v6397, %v6393
  %v6618 = vpack.c.b16 %v6402, %v6398
  %v6619 = vpack.c.b16 %v6403, %v6399
  %v6620 = vpack.c.b16 %v6404, %v6400
  %v6621 = vpack.c.b16 %v6405, %v6401
  %v6622 = vpack.c.b16 %v6410, %v6406
  %v6623 = vpack.c.b16 %v6411, %v6407
  %v6624 = vpack.c.b16 %v6412, %v6408
  %v6625 = vpack.c.b16 %v6413, %v6409
  %v6626 = vpack.c.b16 %v6418, %v6414
  %v6627 = vpack.c.b16 %v6419, %v6415
  %v6628 = vpack.c.b16 %v6420, %v6416
  %v6629 = vpack.c.b16 %v6421, %v6417
  %v6630 = vpack.c.b16 %v6426, %v6422
  %v6631 = vpack.c.b16 %v6427, %v6423
  %v6632 = vpack.c.b16 %v6428, %v6424
  %v6633 = vpack.c.b16 %v6429, %v6425
  %v6634 = vpack.c.b16 %v6434, %v6430
  %v6635 = vpack.c.b16 %v6435, %v6431
  %v6636 = vpack.c.b16 %v6436, %v6432
  %v6637 = vpack.c.b16 %v6437, %v6433
  %v6638 = vpack.c.b16 %v6442, %v6438
  %v6639 = vpack.c.b16 %v6443, %v6439
  %v6640 = vpack.c.b16 %v6444, %v6440
  %v6641 = vpack.c.b16 %v6445, %v6441
  %v6642 = vpack.c.b16 %v6450, %v6446
  %v6643 = vpack.c.b16 %v6451, %v6447
  %v6644 = vpack.c.b16 %v6452, %v6448
  %v6645 = vpack.c.b16 %v6453, %v6449
  %v6646 = vpack.c.b16 %v6458, %v6454
  %v6647 = vpack.c.b16 %v6459, %v6455
  %v6648 = vpack.c.b16 %v6460, %v6456
  %v6649 = vpack.c.b16 %v6461, %v6457
  %v6650 = vpack.c.b16 %v6466, %v6462
  %v6651 = vpack.c.b16 %v6467, %v6463
  %v6652 = vpack.c.b16 %v6468, %v6464
  %v6653 = vpack.c.b16 %v6469, %v6465
  %v6654 = vpack.c.b16 %v6474, %v6470
  %v6655 = vpack.c.b16 %v6475, %v6471
  %v6656 = vpack.c.b16 %v6476, %v6472
  %v6657 = vpack.c.b16 %v6477, %v6473
  %v6658 = vpack.c.b16 %v6482, %v6478
  %v6659 = vpack.c.b16 %v6483, %v6479
  %v6660 = vpack.c.b16 %v6484, %v6480
  %v6661 = vpack.c.b16 %v6485, %v6481
  %v6662 = vpack.c.b16 %v6490, %v6486
  %v6663 = vpack.c.b16 %v6491, %v6487
  %v6664 = vpack.c.b16 %v6492, %v6488
  %v6665 = vpack.c.b16 %v6493, %v6489
  %v6666 = vpack.c.b16 %v6498, %v6494
  %v6667 = vpack.c.b16 %v6499, %v6495
  %v6668 = vpack.c.b16 %v6500, %v6496
  %v6669 = vpack.c.b16 %v6501, %v6497
  %v6670 = vpack.c.b16 %v6506, %v6502
  %v6671 = vpack.c.b16 %v6507, %v6503
  %v6672 = vpack.c.b16 %v6508, %v6504
  %v6673 = vpack.c.b16 %v6509, %v6505
  %v6674 = vpack.c.b16 %v6514, %v6510
  %v6675 = vpack.c.b16 %v6515, %v6511
  %v6676 = vpack.c.b16 %v6516, %v6512
  %v6677 = vpack.c.b16 %v6517, %v6513
  %v6678 = vpack.c.b16 %v6522, %v6518
  %v6679 = vpack.c.b16 %v6523, %v6519
  %v6680 = vpack.c.b16 %v6524, %v6520
  %v6681 = vpack.c.b16 %v6525, %v6521
  %v6682 = vpack.c.b16 %v6530, %v6526
  %v6683 = vpack.c.b16 %v6531, %v6527
  %v6684 = vpack.c.b16 %v6532, %v6528
  %v6685 = vpack.c.b16 %v6533, %v6529
  %v6686 = vpack.c.b16 %v6538, %v6534
  %v6687 = vpack.c.b16 %v6539, %v6535
  %v6688 = vpack.c.b16 %v6540, %v6536
  %v6689 = vpack.c.b16 %v6541, %v6537
  %v6690 = vpack.c.b16 %v6546, %v6542
  %v6691 = vpack.c.b16 %v6547, %v6543
  %v6692 = vpack.c.b16 %v6548, %v6544
  %v6693 = vpack.c.b16 %v6549, %v6545
  %v6694 = vpack.c.b16 %v6554, %v6550
  %v6695 = vpack.c.b16 %v6555, %v6551
  %v6696 = vpack.c.b16 %v6556, %v6552
  %v6697 = vpack.c.b16 %v6557, %v6553
  %v6698 = vpack.c.b16 %v6562, %v6558
  %v6699 = vpack.c.b16 %v6563, %v6559
  %v6700 = vpack.c.b16 %v6564, %v6560
  %v6701 = vpack.c.b16 %v6565, %v6561
  %v6702 = vpack.c.b16 %v6570, %v6566
  %v6703 = vpack.c.b16 %v6571, %v6567
  %v6704 = vpack.c.b16 %v6572, %v6568
  %v6705 = vpack.c.b16 %v6573, %v6569
  %v6706 = vpack.c.b16 %v6578, %v6574
  %v6707 = vpack.c.b16 %v6579, %v6575
  %v6708 = vpack.c.b16 %v6580, %v6576
  %v6709 = vpack.c.b16 %v6581, %v6577
  %6838 = vmatprep.subr.bf16.mxu0 %v5975
  %6839 = vmatpush1.bf16.msra.mxu0 %v5974
  %6840 = vmatprep.subr.bf16.mxu0 %v5982
  %6841 = vmatpush1.bf16.msra.mxu0 %v5981
  %6842 = vmatprep.subr.bf16.mxu0 %v5989
  %6843 = vmatpush1.bf16.msra.mxu0 %v5988
  %6844 = vmatprep.subr.bf16.mxu0 %v5996
  %6845 = vmatpush1.bf16.msra.mxu0 %v5995
  %6846 = vmatprep.subr.bf16.mxu0 %v6003
  %6847 = vmatpush1.bf16.msra.mxu0 %v6002
  %6848 = vmatprep.subr.bf16.mxu0 %v6010
  %6849 = vmatpush1.bf16.msra.mxu0 %v6009
  %6850 = vmatprep.subr.bf16.mxu0 %v6017
  %6851 = vmatpush1.bf16.msra.mxu0 %v6016
  %6852 = vmatprep.subr.bf16.mxu0 %v6024
  %6853 = vmatpush1.bf16.msra.mxu0 %v6023
  %6854 = vmatprep.subr.bf16.mxu0 %v6031
  %6855 = vmatpush1.bf16.msra.mxu0 %v6030
  %6856 = vmatprep.subr.bf16.mxu0 %v6038
  %6857 = vmatpush1.bf16.msra.mxu0 %v6037
  %6858 = vmatprep.subr.bf16.mxu0 %v6045
  %6859 = vmatpush1.bf16.msra.mxu0 %v6044
  %6860 = vmatprep.subr.bf16.mxu0 %v6052
  %6861 = vmatpush1.bf16.msra.mxu0 %v6051
  %6862 = vmatprep.subr.bf16.mxu0 %v6059
  %6863 = vmatpush1.bf16.msra.mxu0 %v6058
  %6864 = vmatprep.subr.bf16.mxu0 %v6066
  %6865 = vmatpush1.bf16.msra.mxu0 %v6065
  %6866 = vmatprep.subr.bf16.mxu0 %v6073
  %6867 = vmatpush1.bf16.msra.mxu0 %v6072
  %6868 = vmatprep.subr.bf16.mxu0 %v6080
  %6869 = vmatpush1.bf16.msra.mxu0 %v6079
  %6870 = vmatprep.mubr.bf16.mxu0 %v6583
  %6871 = vmatmul.mubr.bf16.gmra.mrb[0].mxu0 %v6582
  %v6872 = vpop.f32.mrb[0].mxu0
  %v6873 = vadd.f32 0.0, %v6872
  %v6874 = vpop.f32.mrb[0].mxu0
  %v6875 = vadd.f32 0.0, %v6874
  %v6876 = vpop.f32.mrb[0].mxu0
  %v6877 = vadd.f32 0.0, %v6876
  %v6878 = vpop.f32.mrb[0].mxu0
  %v6879 = vadd.f32 0.0, %v6878
  %6880 = vmatprep.mubr.bf16.mxu0 %v6587
  %6881 = vmatmul.mubr.bf16.gmra.mrb[0].mxu0 %v6586
  %v6882 = vpop.f32.mrb[0].mxu0
  %v6883 = vadd.f32 0.0, %v6882
  %v6884 = vpop.f32.mrb[0].mxu0
  %v6885 = vadd.f32 0.0, %v6884
  %v6886 = vpop.f32.mrb[0].mxu0
  %v6887 = vadd.f32 0.0, %v6886
  %v6888 = vpop.f32.mrb[0].mxu0
  %v6889 = vadd.f32 0.0, %v6888
  %6890 = vmatprep.mubr.bf16.mxu0 %v6591
  %6891 = vmatmul.mubr.bf16.gmra.mrb[0].mxu0 %v6590
  %v6892 = vpop.f32.mrb[0].mxu0
  %v6893 = vadd.f32 0.0, %v6892
  %v6894 = vpop.f32.mrb[0].mxu0
  %v6895 = vadd.f32 0.0, %v6894
  %v6896 = vpop.f32.mrb[0].mxu0
  %v6897 = vadd.f32 0.0, %v6896
  %v6898 = vpop.f32.mrb[0].mxu0
  %v6899 = vadd.f32 0.0, %v6898
  %6900 = vmatprep.mubr.bf16.mxu0 %v6595
  %6901 = vmatmul.mubr.bf16.gmra.mrb[0].mxu0 %v6594
  %v6902 = vpop.f32.mrb[0].mxu0
  %v6903 = vadd.f32 0.0, %v6902
  %v6904 = vpop.f32.mrb[0].mxu0
  %v6905 = vadd.f32 0.0, %v6904
  %v6906 = vpop.f32.mrb[0].mxu0
  %v6907 = vadd.f32 0.0, %v6906
  %v6908 = vpop.f32.mrb[0].mxu0
  %v6909 = vadd.f32 0.0, %v6908
  %6910 = vmatprep.mubr.bf16.mxu0 %v6599
  %6911 = vmatmul.mubr.bf16.gmra.mrb[0].mxu0 %v6598
  %v6912 = vpop.f32.mrb[0].mxu0
  %v6913 = vadd.f32 0.0, %v6912
  %v6914 = vpop.f32.mrb[0].mxu0
  %v6915 = vadd.f32 0.0, %v6914
  %v6916 = vpop.f32.mrb[0].mxu0
  %v6917 = vadd.f32 0.0, %v6916
  %v6918 = vpop.f32.mrb[0].mxu0
  %v6919 = vadd.f32 0.0, %v6918
  %6920 = vmatprep.mubr.bf16.mxu0 %v6603
  %6921 = vmatmul.mubr.bf16.gmra.mrb[0].mxu0 %v6602
  %v6922 = vpop.f32.mrb[0].mxu0
  %v6923 = vadd.f32 0.0, %v6922
  %v6924 = vpop.f32.mrb[0].mxu0
  %v6925 = vadd.f32 0.0, %v6924
  %v6926 = vpop.f32.mrb[0].mxu0
  %v6927 = vadd.f32 0.0, %v6926
  %v6928 = vpop.f32.mrb[0].mxu0
  %v6929 = vadd.f32 0.0, %v6928
  %6930 = vmatprep.mubr.bf16.mxu0 %v6607
  %6931 = vmatmul.mubr.bf16.gmra.mrb[0].mxu0 %v6606
  %v6932 = vpop.f32.mrb[0].mxu0
  %v6933 = vadd.f32 0.0, %v6932
  %v6934 = vpop.f32.mrb[0].mxu0
  %v6935 = vadd.f32 0.0, %v6934
  %v6936 = vpop.f32.mrb[0].mxu0
  %v6937 = vadd.f32 0.0, %v6936
  %v6938 = vpop.f32.mrb[0].mxu0
  %v6939 = vadd.f32 0.0, %v6938
  %6940 = vmatprep.mubr.bf16.mxu0 %v6611
  %6941 = vmatmul.mubr.bf16.gmra.mrb[0].mxu0 %v6610
  %v6942 = vpop.f32.mrb[0].mxu0
  %v6943 = vadd.f32 0.0, %v6942
  %v6944 = vpop.f32.mrb[0].mxu0
  %v6945 = vadd.f32 0.0, %v6944
  %v6946 = vpop.f32.mrb[0].mxu0
  %v6947 = vadd.f32 0.0, %v6946
  %v6948 = vpop.f32.mrb[0].mxu0
  %v6949 = vadd.f32 0.0, %v6948
  %6950 = vmatprep.mubr.bf16.mxu0 %v6615
  %6951 = vmatmul.mubr.bf16.gmra.mrb[0].mxu0 %v6614
  %v6952 = vpop.f32.mrb[0].mxu0
  %v6953 = vadd.f32 0.0, %v6952
  %v6954 = vpop.f32.mrb[0].mxu0
  %v6955 = vadd.f32 0.0, %v6954
  %v6956 = vpop.f32.mrb[0].mxu0
  %v6957 = vadd.f32 0.0, %v6956
  %v6958 = vpop.f32.mrb[0].mxu0
  %v6959 = vadd.f32 0.0, %v6958
  %6960 = vmatprep.mubr.bf16.mxu0 %v6619
  %6961 = vmatmul.mubr.bf16.gmra.mrb[0].mxu0 %v6618
  %v6962 = vpop.f32.mrb[0].mxu0
  %v6963 = vadd.f32 0.0, %v6962
  %v6964 = vpop.f32.mrb[0].mxu0
  %v6965 = vadd.f32 0.0, %v6964
  %v6966 = vpop.f32.mrb[0].mxu0
  %v6967 = vadd.f32 0.0, %v6966
  %v6968 = vpop.f32.mrb[0].mxu0
  %v6969 = vadd.f32 0.0, %v6968
  %6970 = vmatprep.mubr.bf16.mxu0 %v6623
  %6971 = vmatmul.mubr.bf16.gmra.mrb[0].mxu0 %v6622
  %v6972 = vpop.f32.mrb[0].mxu0
  %v6973 = vadd.f32 0.0, %v6972
  %v6974 = vpop.f32.mrb[0].mxu0
  %v6975 = vadd.f32 0.0, %v6974
  %v6976 = vpop.f32.mrb[0].mxu0
  %v6977 = vadd.f32 0.0, %v6976
  %v6978 = vpop.f32.mrb[0].mxu0
  %v6979 = vadd.f32 0.0, %v6978
  %6980 = vmatprep.mubr.bf16.mxu0 %v6627
  %6981 = vmatmul.mubr.bf16.gmra.mrb[0].mxu0 %v6626
  %v6982 = vpop.f32.mrb[0].mxu0
  %v6983 = vadd.f32 0.0, %v6982
  %v6984 = vpop.f32.mrb[0].mxu0
  %v6985 = vadd.f32 0.0, %v6984
  %v6986 = vpop.f32.mrb[0].mxu0
  %v6987 = vadd.f32 0.0, %v6986
  %v6988 = vpop.f32.mrb[0].mxu0
  %v6989 = vadd.f32 0.0, %v6988
  %6990 = vmatprep.mubr.bf16.mxu0 %v6631
  %6991 = vmatmul.mubr.bf16.gmra.mrb[0].mxu0 %v6630
  %v6992 = vpop.f32.mrb[0].mxu0
  %v6993 = vadd.f32 0.0, %v6992
  %v6994 = vpop.f32.mrb[0].mxu0
  %v6995 = vadd.f32 0.0, %v6994
  %v6996 = vpop.f32.mrb[0].mxu0
  %v6997 = vadd.f32 0.0, %v6996
  %v6998 = vpop.f32.mrb[0].mxu0
  %v6999 = vadd.f32 0.0, %v6998
  %7000 = vmatprep.mubr.bf16.mxu0 %v6635
  %7001 = vmatmul.mubr.bf16.gmra.mrb[0].mxu0 %v6634
  %v7002 = vpop.f32.mrb[0].mxu0
  %v7003 = vadd.f32 0.0, %v7002
  %v7004 = vpop.f32.mrb[0].mxu0
  %v7005 = vadd.f32 0.0, %v7004
  %v7006 = vpop.f32.mrb[0].mxu0
  %v7007 = vadd.f32 0.0, %v7006
  %v7008 = vpop.f32.mrb[0].mxu0
  %v7009 = vadd.f32 0.0, %v7008
  %7010 = vmatprep.mubr.bf16.mxu0 %v6639
  %7011 = vmatmul.mubr.bf16.gmra.mrb[0].mxu0 %v6638
  %v7012 = vpop.f32.mrb[0].mxu0
  %v7013 = vadd.f32 0.0, %v7012
  %v7014 = vpop.f32.mrb[0].mxu0
  %v7015 = vadd.f32 0.0, %v7014
  %v7016 = vpop.f32.mrb[0].mxu0
  %v7017 = vadd.f32 0.0, %v7016
  %v7018 = vpop.f32.mrb[0].mxu0
  %v7019 = vadd.f32 0.0, %v7018
  %7020 = vmatprep.mubr.bf16.mxu0 %v6643
  %7021 = vmatmul.mubr.bf16.gmra.mrb[0].mxu0 %v6642
  %v7022 = vpop.f32.mrb[0].mxu0
  %v7023 = vadd.f32 0.0, %v7022
  %v7024 = vpop.f32.mrb[0].mxu0
  %v7025 = vadd.f32 0.0, %v7024
  %v7026 = vpop.f32.mrb[0].mxu0
  %v7027 = vadd.f32 0.0, %v7026
  %v7028 = vpop.f32.mrb[0].mxu0
  %v7029 = vadd.f32 0.0, %v7028
  %7030 = vmatprep.mubr.bf16.mxu0 %v6647
  %7031 = vmatmul.mubr.bf16.gmra.mrb[0].mxu0 %v6646
  %v7032 = vpop.f32.mrb[0].mxu0
  %v7033 = vadd.f32 0.0, %v7032
  %v7034 = vpop.f32.mrb[0].mxu0
  %v7035 = vadd.f32 0.0, %v7034
  %v7036 = vpop.f32.mrb[0].mxu0
  %v7037 = vadd.f32 0.0, %v7036
  %v7038 = vpop.f32.mrb[0].mxu0
  %v7039 = vadd.f32 0.0, %v7038
  %7040 = vmatprep.mubr.bf16.mxu0 %v6651
  %7041 = vmatmul.mubr.bf16.gmra.mrb[0].mxu0 %v6650
  %v7042 = vpop.f32.mrb[0].mxu0
  %v7043 = vadd.f32 0.0, %v7042
  %v7044 = vpop.f32.mrb[0].mxu0
  %v7045 = vadd.f32 0.0, %v7044
  %v7046 = vpop.f32.mrb[0].mxu0
  %v7047 = vadd.f32 0.0, %v7046
  %v7048 = vpop.f32.mrb[0].mxu0
  %v7049 = vadd.f32 0.0, %v7048
  %7050 = vmatprep.mubr.bf16.mxu0 %v6655
  %7051 = vmatmul.mubr.bf16.gmra.mrb[0].mxu0 %v6654
  %v7052 = vpop.f32.mrb[0].mxu0
  %v7053 = vadd.f32 0.0, %v7052
  %v7054 = vpop.f32.mrb[0].mxu0
  %v7055 = vadd.f32 0.0, %v7054
  %v7056 = vpop.f32.mrb[0].mxu0
  %v7057 = vadd.f32 0.0, %v7056
  %v7058 = vpop.f32.mrb[0].mxu0
  %v7059 = vadd.f32 0.0, %v7058
  %7060 = vmatprep.mubr.bf16.mxu0 %v6659
  %7061 = vmatmul.mubr.bf16.gmra.mrb[0].mxu0 %v6658
  %v7062 = vpop.f32.mrb[0].mxu0
  %v7063 = vadd.f32 0.0, %v7062
  %v7064 = vpop.f32.mrb[0].mxu0
  %v7065 = vadd.f32 0.0, %v7064
  %v7066 = vpop.f32.mrb[0].mxu0
  %v7067 = vadd.f32 0.0, %v7066
  %v7068 = vpop.f32.mrb[0].mxu0
  %v7069 = vadd.f32 0.0, %v7068
  %7070 = vmatprep.mubr.bf16.mxu0 %v6663
  %7071 = vmatmul.mubr.bf16.gmra.mrb[0].mxu0 %v6662
  %v7072 = vpop.f32.mrb[0].mxu0
  %v7073 = vadd.f32 0.0, %v7072
  %v7074 = vpop.f32.mrb[0].mxu0
  %v7075 = vadd.f32 0.0, %v7074
  %v7076 = vpop.f32.mrb[0].mxu0
  %v7077 = vadd.f32 0.0, %v7076
  %v7078 = vpop.f32.mrb[0].mxu0
  %v7079 = vadd.f32 0.0, %v7078
  %7080 = vmatprep.mubr.bf16.mxu0 %v6667
  %7081 = vmatmul.mubr.bf16.gmra.mrb[0].mxu0 %v6666
  %v7082 = vpop.f32.mrb[0].mxu0
  %v7083 = vadd.f32 0.0, %v7082
  %v7084 = vpop.f32.mrb[0].mxu0
  %v7085 = vadd.f32 0.0, %v7084
  %v7086 = vpop.f32.mrb[0].mxu0
  %v7087 = vadd.f32 0.0, %v7086
  %v7088 = vpop.f32.mrb[0].mxu0
  %v7089 = vadd.f32 0.0, %v7088
  %7090 = vmatprep.mubr.bf16.mxu0 %v6671
  %7091 = vmatmul.mubr.bf16.gmra.mrb[0].mxu0 %v6670
  %v7092 = vpop.f32.mrb[0].mxu0
  %v7093 = vadd.f32 0.0, %v7092
  %v7094 = vpop.f32.mrb[0].mxu0
  %v7095 = vadd.f32 0.0, %v7094
  %v7096 = vpop.f32.mrb[0].mxu0
  %v7097 = vadd.f32 0.0, %v7096
  %v7098 = vpop.f32.mrb[0].mxu0
  %v7099 = vadd.f32 0.0, %v7098
  %7100 = vmatprep.mubr.bf16.mxu0 %v6675
  %7101 = vmatmul.mubr.bf16.gmra.mrb[0].mxu0 %v6674
  %v7102 = vpop.f32.mrb[0].mxu0
  %v7103 = vadd.f32 0.0, %v7102
  %v7104 = vpop.f32.mrb[0].mxu0
  %v7105 = vadd.f32 0.0, %v7104
  %v7106 = vpop.f32.mrb[0].mxu0
  %v7107 = vadd.f32 0.0, %v7106
  %v7108 = vpop.f32.mrb[0].mxu0
  %v7109 = vadd.f32 0.0, %v7108
  %7110 = vmatprep.mubr.bf16.mxu0 %v6679
  %7111 = vmatmul.mubr.bf16.gmra.mrb[0].mxu0 %v6678
  %v7112 = vpop.f32.mrb[0].mxu0
  %v7113 = vadd.f32 0.0, %v7112
  %v7114 = vpop.f32.mrb[0].mxu0
  %v7115 = vadd.f32 0.0, %v7114
  %v7116 = vpop.f32.mrb[0].mxu0
  %v7117 = vadd.f32 0.0, %v7116
  %v7118 = vpop.f32.mrb[0].mxu0
  %v7119 = vadd.f32 0.0, %v7118
  %7120 = vmatprep.mubr.bf16.mxu0 %v6683
  %7121 = vmatmul.mubr.bf16.gmra.mrb[0].mxu0 %v6682
  %v7122 = vpop.f32.mrb[0].mxu0
  %v7123 = vadd.f32 0.0, %v7122
  %v7124 = vpop.f32.mrb[0].mxu0
  %v7125 = vadd.f32 0.0, %v7124
  %v7126 = vpop.f32.mrb[0].mxu0
  %v7127 = vadd.f32 0.0, %v7126
  %v7128 = vpop.f32.mrb[0].mxu0
  %v7129 = vadd.f32 0.0, %v7128
  %7130 = vmatprep.mubr.bf16.mxu0 %v6687
  %7131 = vmatmul.mubr.bf16.gmra.mrb[0].mxu0 %v6686
  %v7132 = vpop.f32.mrb[0].mxu0
  %v7133 = vadd.f32 0.0, %v7132
  %v7134 = vpop.f32.mrb[0].mxu0
  %v7135 = vadd.f32 0.0, %v7134
  %v7136 = vpop.f32.mrb[0].mxu0
  %v7137 = vadd.f32 0.0, %v7136
  %v7138 = vpop.f32.mrb[0].mxu0
  %v7139 = vadd.f32 0.0, %v7138
  %7140 = vmatprep.mubr.bf16.mxu0 %v6691
  %7141 = vmatmul.mubr.bf16.gmra.mrb[0].mxu0 %v6690
  %v7142 = vpop.f32.mrb[0].mxu0
  %v7143 = vadd.f32 0.0, %v7142
  %v7144 = vpop.f32.mrb[0].mxu0
  %v7145 = vadd.f32 0.0, %v7144
  %v7146 = vpop.f32.mrb[0].mxu0
  %v7147 = vadd.f32 0.0, %v7146
  %v7148 = vpop.f32.mrb[0].mxu0
  %v7149 = vadd.f32 0.0, %v7148
  %7150 = vmatprep.mubr.bf16.mxu0 %v6695
  %7151 = vmatmul.mubr.bf16.gmra.mrb[0].mxu0 %v6694
  %v7152 = vpop.f32.mrb[0].mxu0
  %v7153 = vadd.f32 0.0, %v7152
  %v7154 = vpop.f32.mrb[0].mxu0
  %v7155 = vadd.f32 0.0, %v7154
  %v7156 = vpop.f32.mrb[0].mxu0
  %v7157 = vadd.f32 0.0, %v7156
  %v7158 = vpop.f32.mrb[0].mxu0
  %v7159 = vadd.f32 0.0, %v7158
  %7160 = vmatprep.mubr.bf16.mxu0 %v6699
  %7161 = vmatmul.mubr.bf16.gmra.mrb[0].mxu0 %v6698
  %v7162 = vpop.f32.mrb[0].mxu0
  %v7163 = vadd.f32 0.0, %v7162
  %v7164 = vpop.f32.mrb[0].mxu0
  %v7165 = vadd.f32 0.0, %v7164
  %v7166 = vpop.f32.mrb[0].mxu0
  %v7167 = vadd.f32 0.0, %v7166
  %v7168 = vpop.f32.mrb[0].mxu0
  %v7169 = vadd.f32 0.0, %v7168
  %7170 = vmatprep.mubr.bf16.mxu0 %v6703
  %7171 = vmatmul.mubr.bf16.gmra.mrb[0].mxu0 %v6702
  %v7172 = vpop.f32.mrb[0].mxu0
  %v7173 = vadd.f32 0.0, %v7172
  %v7174 = vpop.f32.mrb[0].mxu0
  %v7175 = vadd.f32 0.0, %v7174
  %v7176 = vpop.f32.mrb[0].mxu0
  %v7177 = vadd.f32 0.0, %v7176
  %v7178 = vpop.f32.mrb[0].mxu0
  %v7179 = vadd.f32 0.0, %v7178
  %7180 = vmatprep.mubr.bf16.mxu0 %v6707
  %7181 = vmatmul.mubr.bf16.gmra.mrb[0].mxu0 %v6706
  %v7182 = vpop.f32.mrb[0].mxu0
  %v7183 = vadd.f32 0.0, %v7182
  %v7184 = vpop.f32.mrb[0].mxu0
  %v7185 = vadd.f32 0.0, %v7184
  %v7186 = vpop.f32.mrb[0].mxu0
  %v7187 = vadd.f32 0.0, %v7186
  %v7188 = vpop.f32.mrb[0].mxu0
  %v7189 = vadd.f32 0.0, %v7188
  %7190 = vdwg.mxu0
  %7191 = vmatprep.subr.bf16.mxu0 %v6087
  %7192 = vmatpush1.bf16.msra.mxu0 %v6086
  %7193 = vmatprep.subr.bf16.mxu0 %v6094
  %7194 = vmatpush1.bf16.msra.mxu0 %v6093
  %7195 = vmatprep.subr.bf16.mxu0 %v6101
  %7196 = vmatpush1.bf16.msra.mxu0 %v6100
  %7197 = vmatprep.subr.bf16.mxu0 %v6108
  %7198 = vmatpush1.bf16.msra.mxu0 %v6107
  %7199 = vmatprep.subr.bf16.mxu0 %v6115
  %7200 = vmatpush1.bf16.msra.mxu0 %v6114
  %7201 = vmatprep.subr.bf16.mxu0 %v6122
  %7202 = vmatpush1.bf16.msra.mxu0 %v6121
  %7203 = vmatprep.subr.bf16.mxu0 %v6129
  %7204 = vmatpush1.bf16.msra.mxu0 %v6128
  %7205 = vmatprep.subr.bf16.mxu0 %v6136
  %7206 = vmatpush1.bf16.msra.mxu0 %v6135
  %7207 = vmatprep.subr.bf16.mxu0 %v6143
  %7208 = vmatpush1.bf16.msra.mxu0 %v6142
  %7209 = vmatprep.subr.bf16.mxu0 %v6150
  %7210 = vmatpush1.bf16.msra.mxu0 %v6149
  %7211 = vmatprep.subr.bf16.mxu0 %v6157
  %7212 = vmatpush1.bf16.msra.mxu0 %v6156
  %7213 = vmatprep.subr.bf16.mxu0 %v6164
  %7214 = vmatpush1.bf16.msra.mxu0 %v6163
  %7215 = vmatprep.subr.bf16.mxu0 %v6171
  %7216 = vmatpush1.bf16.msra.mxu0 %v6170
  %7217 = vmatprep.subr.bf16.mxu0 %v6178
  %7218 = vmatpush1.bf16.msra.mxu0 %v6177
  %7219 = vmatprep.subr.bf16.mxu0 %v6185
  %7220 = vmatpush1.bf16.msra.mxu0 %v6184
  %7221 = vmatprep.subr.bf16.mxu0 %v6192
  %7222 = vmatpush1.bf16.msra.mxu0 %v6191
  %7223 = vmatprep.mubr.bf16.mxu0 %v6585
  %7224 = vmatmul.mubr.bf16.gmra.mrb[0].mxu0 %v6584
  %v7225 = vpop.f32.mrb[0].mxu0
  %v7226 = vadd.f32 %v6873, %v7225
  %v7227 = vpop.f32.mrb[0].mxu0
  %v7228 = vadd.f32 %v6875, %v7227
  %v7229 = vpop.f32.mrb[0].mxu0
  %v7230 = vadd.f32 %v6877, %v7229
  %v7231 = vpop.f32.mrb[0].mxu0
  %v7232 = vadd.f32 %v6879, %v7231
  %7233 = vmatprep.mubr.bf16.mxu0 %v6589
  %7234 = vmatmul.mubr.bf16.gmra.mrb[0].mxu0 %v6588
  %v7235 = vpop.f32.mrb[0].mxu0
  %v7236 = vadd.f32 %v6883, %v7235
  %v7237 = vpop.f32.mrb[0].mxu0
  %v7238 = vadd.f32 %v6885, %v7237
  %v7239 = vpop.f32.mrb[0].mxu0
  %v7240 = vadd.f32 %v6887, %v7239
  %v7241 = vpop.f32.mrb[0].mxu0
  %v7242 = vadd.f32 %v6889, %v7241
  %7243 = vmatprep.mubr.bf16.mxu0 %v6593
  %7244 = vmatmul.mubr.bf16.gmra.mrb[0].mxu0 %v6592
  %v7245 = vpop.f32.mrb[0].mxu0
  %v7246 = vadd.f32 %v6893, %v7245
  %v7247 = vpop.f32.mrb[0].mxu0
  %v7248 = vadd.f32 %v6895, %v7247
  %v7249 = vpop.f32.mrb[0].mxu0
  %v7250 = vadd.f32 %v6897, %v7249
  %v7251 = vpop.f32.mrb[0].mxu0
  %v7252 = vadd.f32 %v6899, %v7251
  %7253 = vmatprep.mubr.bf16.mxu0 %v6597
  %7254 = vmatmul.mubr.bf16.gmra.mrb[0].mxu0 %v6596
  %v7255 = vpop.f32.mrb[0].mxu0
  %v7256 = vadd.f32 %v6903, %v7255
  %v7257 = vpop.f32.mrb[0].mxu0
  %v7258 = vadd.f32 %v6905, %v7257
  %v7259 = vpop.f32.mrb[0].mxu0
  %v7260 = vadd.f32 %v6907, %v7259
  %v7261 = vpop.f32.mrb[0].mxu0
  %v7262 = vadd.f32 %v6909, %v7261
  %7263 = vmatprep.mubr.bf16.mxu0 %v6601
  %7264 = vmatmul.mubr.bf16.gmra.mrb[0].mxu0 %v6600
  %v7265 = vpop.f32.mrb[0].mxu0
  %v7266 = vadd.f32 %v6913, %v7265
  %v7267 = vpop.f32.mrb[0].mxu0
  %v7268 = vadd.f32 %v6915, %v7267
  %v7269 = vpop.f32.mrb[0].mxu0
  %v7270 = vadd.f32 %v6917, %v7269
  %v7271 = vpop.f32.mrb[0].mxu0
  %v7272 = vadd.f32 %v6919, %v7271
  %7273 = vmatprep.mubr.bf16.mxu0 %v6605
  %7274 = vmatmul.mubr.bf16.gmra.mrb[0].mxu0 %v6604
  %v7275 = vpop.f32.mrb[0].mxu0
  %v7276 = vadd.f32 %v6923, %v7275
  %v7277 = vpop.f32.mrb[0].mxu0
  %v7278 = vadd.f32 %v6925, %v7277
  %v7279 = vpop.f32.mrb[0].mxu0
  %v7280 = vadd.f32 %v6927, %v7279
  %v7281 = vpop.f32.mrb[0].mxu0
  %v7282 = vadd.f32 %v6929, %v7281
  %7283 = vmatprep.mubr.bf16.mxu0 %v6609
  %7284 = vmatmul.mubr.bf16.gmra.mrb[0].mxu0 %v6608
  %v7285 = vpop.f32.mrb[0].mxu0
  %v7286 = vadd.f32 %v6933, %v7285
  %v7287 = vpop.f32.mrb[0].mxu0
  %v7288 = vadd.f32 %v6935, %v7287
  %v7289 = vpop.f32.mrb[0].mxu0
  %v7290 = vadd.f32 %v6937, %v7289
  %v7291 = vpop.f32.mrb[0].mxu0
  %v7292 = vadd.f32 %v6939, %v7291
  %7293 = vmatprep.mubr.bf16.mxu0 %v6613
  %7294 = vmatmul.mubr.bf16.gmra.mrb[0].mxu0 %v6612
  %v7295 = vpop.f32.mrb[0].mxu0
  %v7296 = vadd.f32 %v6943, %v7295
  %v7297 = vpop.f32.mrb[0].mxu0
  %v7298 = vadd.f32 %v6945, %v7297
  %v7299 = vpop.f32.mrb[0].mxu0
  %v7300 = vadd.f32 %v6947, %v7299
  %v7301 = vpop.f32.mrb[0].mxu0
  %v7302 = vadd.f32 %v6949, %v7301
  %7303 = vmatprep.mubr.bf16.mxu0 %v6617
  %7304 = vmatmul.mubr.bf16.gmra.mrb[0].mxu0 %v6616
  %v7305 = vpop.f32.mrb[0].mxu0
  %v7306 = vadd.f32 %v6953, %v7305
  %v7307 = vpop.f32.mrb[0].mxu0
  %v7308 = vadd.f32 %v6955, %v7307
  %v7309 = vpop.f32.mrb[0].mxu0
  %v7310 = vadd.f32 %v6957, %v7309
  %v7311 = vpop.f32.mrb[0].mxu0
  %v7312 = vadd.f32 %v6959, %v7311
  %7313 = vmatprep.mubr.bf16.mxu0 %v6621
  %7314 = vmatmul.mubr.bf16.gmra.mrb[0].mxu0 %v6620
  %v7315 = vpop.f32.mrb[0].mxu0
  %v7316 = vadd.f32 %v6963, %v7315
  %v7317 = vpop.f32.mrb[0].mxu0
  %v7318 = vadd.f32 %v6965, %v7317
  %v7319 = vpop.f32.mrb[0].mxu0
  %v7320 = vadd.f32 %v6967, %v7319
  %v7321 = vpop.f32.mrb[0].mxu0
  %v7322 = vadd.f32 %v6969, %v7321
  %7323 = vmatprep.mubr.bf16.mxu0 %v6625
  %7324 = vmatmul.mubr.bf16.gmra.mrb[0].mxu0 %v6624
  %v7325 = vpop.f32.mrb[0].mxu0
  %v7326 = vadd.f32 %v6973, %v7325
  %v7327 = vpop.f32.mrb[0].mxu0
  %v7328 = vadd.f32 %v6975, %v7327
  %v7329 = vpop.f32.mrb[0].mxu0
  %v7330 = vadd.f32 %v6977, %v7329
  %v7331 = vpop.f32.mrb[0].mxu0
  %v7332 = vadd.f32 %v6979, %v7331
  %7333 = vmatprep.mubr.bf16.mxu0 %v6629
  %7334 = vmatmul.mubr.bf16.gmra.mrb[0].mxu0 %v6628
  %v7335 = vpop.f32.mrb[0].mxu0
  %v7336 = vadd.f32 %v6983, %v7335
  %v7337 = vpop.f32.mrb[0].mxu0
  %v7338 = vadd.f32 %v6985, %v7337
  %v7339 = vpop.f32.mrb[0].mxu0
  %v7340 = vadd.f32 %v6987, %v7339
  %v7341 = vpop.f32.mrb[0].mxu0
  %v7342 = vadd.f32 %v6989, %v7341
  %7343 = vmatprep.mubr.bf16.mxu0 %v6633
  %7344 = vmatmul.mubr.bf16.gmra.mrb[0].mxu0 %v6632
  %v7345 = vpop.f32.mrb[0].mxu0
  %v7346 = vadd.f32 %v6993, %v7345
  %v7347 = vpop.f32.mrb[0].mxu0
  %v7348 = vadd.f32 %v6995, %v7347
  %v7349 = vpop.f32.mrb[0].mxu0
  %v7350 = vadd.f32 %v6997, %v7349
  %v7351 = vpop.f32.mrb[0].mxu0
  %v7352 = vadd.f32 %v6999, %v7351
  %7353 = vmatprep.mubr.bf16.mxu0 %v6637
  %7354 = vmatmul.mubr.bf16.gmra.mrb[0].mxu0 %v6636
  %v7355 = vpop.f32.mrb[0].mxu0
  %v7356 = vadd.f32 %v7003, %v7355
  %v7357 = vpop.f32.mrb[0].mxu0
  %v7358 = vadd.f32 %v7005, %v7357
  %v7359 = vpop.f32.mrb[0].mxu0
  %v7360 = vadd.f32 %v7007, %v7359
  %v7361 = vpop.f32.mrb[0].mxu0
  %v7362 = vadd.f32 %v7009, %v7361
  %7363 = vmatprep.mubr.bf16.mxu0 %v6641
  %7364 = vmatmul.mubr.bf16.gmra.mrb[0].mxu0 %v6640
  %v7365 = vpop.f32.mrb[0].mxu0
  %v7366 = vadd.f32 %v7013, %v7365
  %v7367 = vpop.f32.mrb[0].mxu0
  %v7368 = vadd.f32 %v7015, %v7367
  %v7369 = vpop.f32.mrb[0].mxu0
  %v7370 = vadd.f32 %v7017, %v7369
  %v7371 = vpop.f32.mrb[0].mxu0
  %v7372 = vadd.f32 %v7019, %v7371
  %7373 = vmatprep.mubr.bf16.mxu0 %v6645
  %7374 = vmatmul.mubr.bf16.gmra.mrb[0].mxu0 %v6644
  %v7375 = vpop.f32.mrb[0].mxu0
  %v7376 = vadd.f32 %v7023, %v7375
  %v7377 = vpop.f32.mrb[0].mxu0
  %v7378 = vadd.f32 %v7025, %v7377
  %v7379 = vpop.f32.mrb[0].mxu0
  %v7380 = vadd.f32 %v7027, %v7379
  %v7381 = vpop.f32.mrb[0].mxu0
  %v7382 = vadd.f32 %v7029, %v7381
  %7383 = vmatprep.mubr.bf16.mxu0 %v6649
  %7384 = vmatmul.mubr.bf16.gmra.mrb[0].mxu0 %v6648
  %v7385 = vpop.f32.mrb[0].mxu0
  %v7386 = vadd.f32 %v7033, %v7385
  %v7387 = vpop.f32.mrb[0].mxu0
  %v7388 = vadd.f32 %v7035, %v7387
  %v7389 = vpop.f32.mrb[0].mxu0
  %v7390 = vadd.f32 %v7037, %v7389
  %v7391 = vpop.f32.mrb[0].mxu0
  %v7392 = vadd.f32 %v7039, %v7391
  %7393 = vmatprep.mubr.bf16.mxu0 %v6653
  %7394 = vmatmul.mubr.bf16.gmra.mrb[0].mxu0 %v6652
  %v7395 = vpop.f32.mrb[0].mxu0
  %v7396 = vadd.f32 %v7043, %v7395
  %v7397 = vpop.f32.mrb[0].mxu0
  %v7398 = vadd.f32 %v7045, %v7397
  %v7399 = vpop.f32.mrb[0].mxu0
  %v7400 = vadd.f32 %v7047, %v7399
  %v7401 = vpop.f32.mrb[0].mxu0
  %v7402 = vadd.f32 %v7049, %v7401
  %7403 = vmatprep.mubr.bf16.mxu0 %v6657
  %7404 = vmatmul.mubr.bf16.gmra.mrb[0].mxu0 %v6656
  %v7405 = vpop.f32.mrb[0].mxu0
  %v7406 = vadd.f32 %v7053, %v7405
  %v7407 = vpop.f32.mrb[0].mxu0
  %v7408 = vadd.f32 %v7055, %v7407
  %v7409 = vpop.f32.mrb[0].mxu0
  %v7410 = vadd.f32 %v7057, %v7409
  %v7411 = vpop.f32.mrb[0].mxu0
  %v7412 = vadd.f32 %v7059, %v7411
  %7413 = vmatprep.mubr.bf16.mxu0 %v6661
  %7414 = vmatmul.mubr.bf16.gmra.mrb[0].mxu0 %v6660
  %v7415 = vpop.f32.mrb[0].mxu0
  %v7416 = vadd.f32 %v7063, %v7415
  %v7417 = vpop.f32.mrb[0].mxu0
  %v7418 = vadd.f32 %v7065, %v7417
  %v7419 = vpop.f32.mrb[0].mxu0
  %v7420 = vadd.f32 %v7067, %v7419
  %v7421 = vpop.f32.mrb[0].mxu0
  %v7422 = vadd.f32 %v7069, %v7421
  %7423 = vmatprep.mubr.bf16.mxu0 %v6665
  %7424 = vmatmul.mubr.bf16.gmra.mrb[0].mxu0 %v6664
  %v7425 = vpop.f32.mrb[0].mxu0
  %v7426 = vadd.f32 %v7073, %v7425
  %v7427 = vpop.f32.mrb[0].mxu0
  %v7428 = vadd.f32 %v7075, %v7427
  %v7429 = vpop.f32.mrb[0].mxu0
  %v7430 = vadd.f32 %v7077, %v7429
  %v7431 = vpop.f32.mrb[0].mxu0
  %v7432 = vadd.f32 %v7079, %v7431
  %7433 = vmatprep.mubr.bf16.mxu0 %v6669
  %7434 = vmatmul.mubr.bf16.gmra.mrb[0].mxu0 %v6668
  %v7435 = vpop.f32.mrb[0].mxu0
  %v7436 = vadd.f32 %v7083, %v7435
  %v7437 = vpop.f32.mrb[0].mxu0
  %v7438 = vadd.f32 %v7085, %v7437
  %v7439 = vpop.f32.mrb[0].mxu0
  %v7440 = vadd.f32 %v7087, %v7439
  %v7441 = vpop.f32.mrb[0].mxu0
  %v7442 = vadd.f32 %v7089, %v7441
  %7443 = vmatprep.mubr.bf16.mxu0 %v6673
  %7444 = vmatmul.mubr.bf16.gmra.mrb[0].mxu0 %v6672
  %v7445 = vpop.f32.mrb[0].mxu0
  %v7446 = vadd.f32 %v7093, %v7445
  %v7447 = vpop.f32.mrb[0].mxu0
  %v7448 = vadd.f32 %v7095, %v7447
  %v7449 = vpop.f32.mrb[0].mxu0
  %v7450 = vadd.f32 %v7097, %v7449
  %v7451 = vpop.f32.mrb[0].mxu0
  %v7452 = vadd.f32 %v7099, %v7451
  %7453 = vmatprep.mubr.bf16.mxu0 %v6677
  %7454 = vmatmul.mubr.bf16.gmra.mrb[0].mxu0 %v6676
  %v7455 = vpop.f32.mrb[0].mxu0
  %v7456 = vadd.f32 %v7103, %v7455
  %v7457 = vpop.f32.mrb[0].mxu0
  %v7458 = vadd.f32 %v7105, %v7457
  %v7459 = vpop.f32.mrb[0].mxu0
  %v7460 = vadd.f32 %v7107, %v7459
  %v7461 = vpop.f32.mrb[0].mxu0
  %v7462 = vadd.f32 %v7109, %v7461
  %7463 = vmatprep.mubr.bf16.mxu0 %v6681
  %7464 = vmatmul.mubr.bf16.gmra.mrb[0].mxu0 %v6680
  %v7465 = vpop.f32.mrb[0].mxu0
  %v7466 = vadd.f32 %v7113, %v7465
  %v7467 = vpop.f32.mrb[0].mxu0
  %v7468 = vadd.f32 %v7115, %v7467
  %v7469 = vpop.f32.mrb[0].mxu0
  %v7470 = vadd.f32 %v7117, %v7469
  %v7471 = vpop.f32.mrb[0].mxu0
  %v7472 = vadd.f32 %v7119, %v7471
  %7473 = vmatprep.mubr.bf16.mxu0 %v6685
  %7474 = vmatmul.mubr.bf16.gmra.mrb[0].mxu0 %v6684
  %v7475 = vpop.f32.mrb[0].mxu0
  %v7476 = vadd.f32 %v7123, %v7475
  %v7477 = vpop.f32.mrb[0].mxu0
  %v7478 = vadd.f32 %v7125, %v7477
  %v7479 = vpop.f32.mrb[0].mxu0
  %v7480 = vadd.f32 %v7127, %v7479
  %v7481 = vpop.f32.mrb[0].mxu0
  %v7482 = vadd.f32 %v7129, %v7481
  %7483 = vmatprep.mubr.bf16.mxu0 %v6689
  %7484 = vmatmul.mubr.bf16.gmra.mrb[0].mxu0 %v6688
  %v7485 = vpop.f32.mrb[0].mxu0
  %v7486 = vadd.f32 %v7133, %v7485
  %v7487 = vpop.f32.mrb[0].mxu0
  %v7488 = vadd.f32 %v7135, %v7487
  %v7489 = vpop.f32.mrb[0].mxu0
  %v7490 = vadd.f32 %v7137, %v7489
  %v7491 = vpop.f32.mrb[0].mxu0
  %v7492 = vadd.f32 %v7139, %v7491
  %7493 = vmatprep.mubr.bf16.mxu0 %v6693
  %7494 = vmatmul.mubr.bf16.gmra.mrb[0].mxu0 %v6692
  %v7495 = vpop.f32.mrb[0].mxu0
  %v7496 = vadd.f32 %v7143, %v7495
  %v7497 = vpop.f32.mrb[0].mxu0
  %v7498 = vadd.f32 %v7145, %v7497
  %v7499 = vpop.f32.mrb[0].mxu0
  %v7500 = vadd.f32 %v7147, %v7499
  %v7501 = vpop.f32.mrb[0].mxu0
  %v7502 = vadd.f32 %v7149, %v7501
  %7503 = vmatprep.mubr.bf16.mxu0 %v6697
  %7504 = vmatmul.mubr.bf16.gmra.mrb[0].mxu0 %v6696
  %v7505 = vpop.f32.mrb[0].mxu0
  %v7506 = vadd.f32 %v7153, %v7505
  %v7507 = vpop.f32.mrb[0].mxu0
  %v7508 = vadd.f32 %v7155, %v7507
  %v7509 = vpop.f32.mrb[0].mxu0
  %v7510 = vadd.f32 %v7157, %v7509
  %v7511 = vpop.f32.mrb[0].mxu0
  %v7512 = vadd.f32 %v7159, %v7511
  %7513 = vmatprep.mubr.bf16.mxu0 %v6701
  %7514 = vmatmul.mubr.bf16.gmra.mrb[0].mxu0 %v6700
  %v7515 = vpop.f32.mrb[0].mxu0
  %v7516 = vadd.f32 %v7163, %v7515
  %v7517 = vpop.f32.mrb[0].mxu0
  %v7518 = vadd.f32 %v7165, %v7517
  %v7519 = vpop.f32.mrb[0].mxu0
  %v7520 = vadd.f32 %v7167, %v7519
  %v7521 = vpop.f32.mrb[0].mxu0
  %v7522 = vadd.f32 %v7169, %v7521
  %7523 = vmatprep.mubr.bf16.mxu0 %v6705
  %7524 = vmatmul.mubr.bf16.gmra.mrb[0].mxu0 %v6704
  %v7525 = vpop.f32.mrb[0].mxu0
  %v7526 = vadd.f32 %v7173, %v7525
  %v7527 = vpop.f32.mrb[0].mxu0
  %v7528 = vadd.f32 %v7175, %v7527
  %v7529 = vpop.f32.mrb[0].mxu0
  %v7530 = vadd.f32 %v7177, %v7529
  %v7531 = vpop.f32.mrb[0].mxu0
  %v7532 = vadd.f32 %v7179, %v7531
  %7533 = vmatprep.mubr.bf16.mxu0 %v6709
  %7534 = vmatmul.mubr.bf16.gmra.mrb[0].mxu0 %v6708
  %v7535 = vpop.f32.mrb[0].mxu0
  %v7536 = vadd.f32 %v7183, %v7535
  %v7537 = vpop.f32.mrb[0].mxu0
  %v7538 = vadd.f32 %v7185, %v7537
  %v7539 = vpop.f32.mrb[0].mxu0
  %v7540 = vadd.f32 %v7187, %v7539
  %v7541 = vpop.f32.mrb[0].mxu0
  %v7542 = vadd.f32 %v7189, %v7541
  %7543 = vdwg.mxu0
  %7544 = vmatprep.subr.bf16.mxu0 %v5977
  %7545 = vmatpush1.bf16.msra.mxu0 %v5976
  %7546 = vmatprep.subr.bf16.mxu0 %v5984
  %7547 = vmatpush1.bf16.msra.mxu0 %v5983
  %7548 = vmatprep.subr.bf16.mxu0 %v5991
  %7549 = vmatpush1.bf16.msra.mxu0 %v5990
  %7550 = vmatprep.subr.bf16.mxu0 %v5998
  %7551 = vmatpush1.bf16.msra.mxu0 %v5997
  %7552 = vmatprep.subr.bf16.mxu0 %v6005
  %7553 = vmatpush1.bf16.msra.mxu0 %v6004
  %7554 = vmatprep.subr.bf16.mxu0 %v6012
  %7555 = vmatpush1.bf16.msra.mxu0 %v6011
  %7556 = vmatprep.subr.bf16.mxu0 %v6019
  %7557 = vmatpush1.bf16.msra.mxu0 %v6018
  %7558 = vmatprep.subr.bf16.mxu0 %v6026
  %7559 = vmatpush1.bf16.msra.mxu0 %v6025
  %7560 = vmatprep.subr.bf16.mxu0 %v6033
  %7561 = vmatpush1.bf16.msra.mxu0 %v6032
  %7562 = vmatprep.subr.bf16.mxu0 %v6040
  %7563 = vmatpush1.bf16.msra.mxu0 %v6039
  %7564 = vmatprep.subr.bf16.mxu0 %v6047
  %7565 = vmatpush1.bf16.msra.mxu0 %v6046
  %7566 = vmatprep.subr.bf16.mxu0 %v6054
  %7567 = vmatpush1.bf16.msra.mxu0 %v6053
  %7568 = vmatprep.subr.bf16.mxu0 %v6061
  %7569 = vmatpush1.bf16.msra.mxu0 %v6060
  %7570 = vmatprep.subr.bf16.mxu0 %v6068
  %7571 = vmatpush1.bf16.msra.mxu0 %v6067
  %7572 = vmatprep.subr.bf16.mxu0 %v6075
  %7573 = vmatpush1.bf16.msra.mxu0 %v6074
  %7574 = vmatprep.subr.bf16.mxu0 %v6082
  %7575 = vmatpush1.bf16.msra.mxu0 %v6081
  %7576 = vmatprep.mubr.bf16.mxu0 %v6583
  %7577 = vmatmul.mubr.bf16.gmra.mrb[0].mxu0 %v6582
  %v7578 = vpop.f32.mrb[0].mxu0
  %v7579 = vadd.f32 0.0, %v7578
  %v7580 = vpop.f32.mrb[0].mxu0
  %v7581 = vadd.f32 0.0, %v7580
  %v7582 = vpop.f32.mrb[0].mxu0
  %v7583 = vadd.f32 0.0, %v7582
  %v7584 = vpop.f32.mrb[0].mxu0
  %v7585 = vadd.f32 0.0, %v7584
  %7586 = vmatprep.mubr.bf16.mxu0 %v6587
  %7587 = vmatmul.mubr.bf16.gmra.mrb[0].mxu0 %v6586
  %v7588 = vpop.f32.mrb[0].mxu0
  %v7589 = vadd.f32 0.0, %v7588
  %v7590 = vpop.f32.mrb[0].mxu0
  %v7591 = vadd.f32 0.0, %v7590
  %v7592 = vpop.f32.mrb[0].mxu0
  %v7593 = vadd.f32 0.0, %v7592
  %v7594 = vpop.f32.mrb[0].mxu0
  %v7595 = vadd.f32 0.0, %v7594
  %7596 = vmatprep.mubr.bf16.mxu0 %v6591
  %7597 = vmatmul.mubr.bf16.gmra.mrb[0].mxu0 %v6590
  %v7598 = vpop.f32.mrb[0].mxu0
  %v7599 = vadd.f32 0.0, %v7598
  %v7600 = vpop.f32.mrb[0].mxu0
  %v7601 = vadd.f32 0.0, %v7600
  %v7602 = vpop.f32.mrb[0].mxu0
  %v7603 = vadd.f32 0.0, %v7602
  %v7604 = vpop.f32.mrb[0].mxu0
  %v7605 = vadd.f32 0.0, %v7604
  %7606 = vmatprep.mubr.bf16.mxu0 %v6595
  %7607 = vmatmul.mubr.bf16.gmra.mrb[0].mxu0 %v6594
  %v7608 = vpop.f32.mrb[0].mxu0
  %v7609 = vadd.f32 0.0, %v7608
  %v7610 = vpop.f32.mrb[0].mxu0
  %v7611 = vadd.f32 0.0, %v7610
  %v7612 = vpop.f32.mrb[0].mxu0
  %v7613 = vadd.f32 0.0, %v7612
  %v7614 = vpop.f32.mrb[0].mxu0
  %v7615 = vadd.f32 0.0, %v7614
  %7616 = vmatprep.mubr.bf16.mxu0 %v6599
  %7617 = vmatmul.mubr.bf16.gmra.mrb[0].mxu0 %v6598
  %v7618 = vpop.f32.mrb[0].mxu0
  %v7619 = vadd.f32 0.0, %v7618
  %v7620 = vpop.f32.mrb[0].mxu0
  %v7621 = vadd.f32 0.0, %v7620
  %v7622 = vpop.f32.mrb[0].mxu0
  %v7623 = vadd.f32 0.0, %v7622
  %v7624 = vpop.f32.mrb[0].mxu0
  %v7625 = vadd.f32 0.0, %v7624
  %7626 = vmatprep.mubr.bf16.mxu0 %v6603
  %7627 = vmatmul.mubr.bf16.gmra.mrb[0].mxu0 %v6602
  %v7628 = vpop.f32.mrb[0].mxu0
  %v7629 = vadd.f32 0.0, %v7628
  %v7630 = vpop.f32.mrb[0].mxu0
  %v7631 = vadd.f32 0.0, %v7630
  %v7632 = vpop.f32.mrb[0].mxu0
  %v7633 = vadd.f32 0.0, %v7632
  %v7634 = vpop.f32.mrb[0].mxu0
  %v7635 = vadd.f32 0.0, %v7634
  %7636 = vmatprep.mubr.bf16.mxu0 %v6607
  %7637 = vmatmul.mubr.bf16.gmra.mrb[0].mxu0 %v6606
  %v7638 = vpop.f32.mrb[0].mxu0
  %v7639 = vadd.f32 0.0, %v7638
  %v7640 = vpop.f32.mrb[0].mxu0
  %v7641 = vadd.f32 0.0, %v7640
  %v7642 = vpop.f32.mrb[0].mxu0
  %v7643 = vadd.f32 0.0, %v7642
  %v7644 = vpop.f32.mrb[0].mxu0
  %v7645 = vadd.f32 0.0, %v7644
  %7646 = vmatprep.mubr.bf16.mxu0 %v6611
  %7647 = vmatmul.mubr.bf16.gmra.mrb[0].mxu0 %v6610
  %v7648 = vpop.f32.mrb[0].mxu0
  %v7649 = vadd.f32 0.0, %v7648
  %v7650 = vpop.f32.mrb[0].mxu0
  %v7651 = vadd.f32 0.0, %v7650
  %v7652 = vpop.f32.mrb[0].mxu0
  %v7653 = vadd.f32 0.0, %v7652
  %v7654 = vpop.f32.mrb[0].mxu0
  %v7655 = vadd.f32 0.0, %v7654
  %7656 = vmatprep.mubr.bf16.mxu0 %v6615
  %7657 = vmatmul.mubr.bf16.gmra.mrb[0].mxu0 %v6614
  %v7658 = vpop.f32.mrb[0].mxu0
  %v7659 = vadd.f32 0.0, %v7658
  %v7660 = vpop.f32.mrb[0].mxu0
  %v7661 = vadd.f32 0.0, %v7660
  %v7662 = vpop.f32.mrb[0].mxu0
  %v7663 = vadd.f32 0.0, %v7662
  %v7664 = vpop.f32.mrb[0].mxu0
  %v7665 = vadd.f32 0.0, %v7664
  %7666 = vmatprep.mubr.bf16.mxu0 %v6619
  %7667 = vmatmul.mubr.bf16.gmra.mrb[0].mxu0 %v6618
  %v7668 = vpop.f32.mrb[0].mxu0
  %v7669 = vadd.f32 0.0, %v7668
  %v7670 = vpop.f32.mrb[0].mxu0
  %v7671 = vadd.f32 0.0, %v7670
  %v7672 = vpop.f32.mrb[0].mxu0
  %v7673 = vadd.f32 0.0, %v7672
  %v7674 = vpop.f32.mrb[0].mxu0
  %v7675 = vadd.f32 0.0, %v7674
  %7676 = vmatprep.mubr.bf16.mxu0 %v6623
  %7677 = vmatmul.mubr.bf16.gmra.mrb[0].mxu0 %v6622
  %v7678 = vpop.f32.mrb[0].mxu0
  %v7679 = vadd.f32 0.0, %v7678
  %v7680 = vpop.f32.mrb[0].mxu0
  %v7681 = vadd.f32 0.0, %v7680
  %v7682 = vpop.f32.mrb[0].mxu0
  %v7683 = vadd.f32 0.0, %v7682
  %v7684 = vpop.f32.mrb[0].mxu0
  %v7685 = vadd.f32 0.0, %v7684
  %7686 = vmatprep.mubr.bf16.mxu0 %v6627
  %7687 = vmatmul.mubr.bf16.gmra.mrb[0].mxu0 %v6626
  %v7688 = vpop.f32.mrb[0].mxu0
  %v7689 = vadd.f32 0.0, %v7688
  %v7690 = vpop.f32.mrb[0].mxu0
  %v7691 = vadd.f32 0.0, %v7690
  %v7692 = vpop.f32.mrb[0].mxu0
  %v7693 = vadd.f32 0.0, %v7692
  %v7694 = vpop.f32.mrb[0].mxu0
  %v7695 = vadd.f32 0.0, %v7694
  %7696 = vmatprep.mubr.bf16.mxu0 %v6631
  %7697 = vmatmul.mubr.bf16.gmra.mrb[0].mxu0 %v6630
  %v7698 = vpop.f32.mrb[0].mxu0
  %v7699 = vadd.f32 0.0, %v7698
  %v7700 = vpop.f32.mrb[0].mxu0
  %v7701 = vadd.f32 0.0, %v7700
  %v7702 = vpop.f32.mrb[0].mxu0
  %v7703 = vadd.f32 0.0, %v7702
  %v7704 = vpop.f32.mrb[0].mxu0
  %v7705 = vadd.f32 0.0, %v7704
  %7706 = vmatprep.mubr.bf16.mxu0 %v6635
  %7707 = vmatmul.mubr.bf16.gmra.mrb[0].mxu0 %v6634
  %v7708 = vpop.f32.mrb[0].mxu0
  %v7709 = vadd.f32 0.0, %v7708
  %v7710 = vpop.f32.mrb[0].mxu0
  %v7711 = vadd.f32 0.0, %v7710
  %v7712 = vpop.f32.mrb[0].mxu0
  %v7713 = vadd.f32 0.0, %v7712
  %v7714 = vpop.f32.mrb[0].mxu0
  %v7715 = vadd.f32 0.0, %v7714
  %7716 = vmatprep.mubr.bf16.mxu0 %v6639
  %7717 = vmatmul.mubr.bf16.gmra.mrb[0].mxu0 %v6638
  %v7718 = vpop.f32.mrb[0].mxu0
  %v7719 = vadd.f32 0.0, %v7718
  %v7720 = vpop.f32.mrb[0].mxu0
  %v7721 = vadd.f32 0.0, %v7720
  %v7722 = vpop.f32.mrb[0].mxu0
  %v7723 = vadd.f32 0.0, %v7722
  %v7724 = vpop.f32.mrb[0].mxu0
  %v7725 = vadd.f32 0.0, %v7724
  %7726 = vmatprep.mubr.bf16.mxu0 %v6643
  %7727 = vmatmul.mubr.bf16.gmra.mrb[0].mxu0 %v6642
  %v7728 = vpop.f32.mrb[0].mxu0
  %v7729 = vadd.f32 0.0, %v7728
  %v7730 = vpop.f32.mrb[0].mxu0
  %v7731 = vadd.f32 0.0, %v7730
  %v7732 = vpop.f32.mrb[0].mxu0
  %v7733 = vadd.f32 0.0, %v7732
  %v7734 = vpop.f32.mrb[0].mxu0
  %v7735 = vadd.f32 0.0, %v7734
  %7736 = vmatprep.mubr.bf16.mxu0 %v6647
  %7737 = vmatmul.mubr.bf16.gmra.mrb[0].mxu0 %v6646
  %v7738 = vpop.f32.mrb[0].mxu0
  %v7739 = vadd.f32 0.0, %v7738
  %v7740 = vpop.f32.mrb[0].mxu0
  %v7741 = vadd.f32 0.0, %v7740
  %v7742 = vpop.f32.mrb[0].mxu0
  %v7743 = vadd.f32 0.0, %v7742
  %v7744 = vpop.f32.mrb[0].mxu0
  %v7745 = vadd.f32 0.0, %v7744
  %7746 = vmatprep.mubr.bf16.mxu0 %v6651
  %7747 = vmatmul.mubr.bf16.gmra.mrb[0].mxu0 %v6650
  %v7748 = vpop.f32.mrb[0].mxu0
  %v7749 = vadd.f32 0.0, %v7748
  %v7750 = vpop.f32.mrb[0].mxu0
  %v7751 = vadd.f32 0.0, %v7750
  %v7752 = vpop.f32.mrb[0].mxu0
  %v7753 = vadd.f32 0.0, %v7752
  %v7754 = vpop.f32.mrb[0].mxu0
  %v7755 = vadd.f32 0.0, %v7754
  %7756 = vmatprep.mubr.bf16.mxu0 %v6655
  %7757 = vmatmul.mubr.bf16.gmra.mrb[0].mxu0 %v6654
  %v7758 = vpop.f32.mrb[0].mxu0
  %v7759 = vadd.f32 0.0, %v7758
  %v7760 = vpop.f32.mrb[0].mxu0
  %v7761 = vadd.f32 0.0, %v7760
  %v7762 = vpop.f32.mrb[0].mxu0
  %v7763 = vadd.f32 0.0, %v7762
  %v7764 = vpop.f32.mrb[0].mxu0
  %v7765 = vadd.f32 0.0, %v7764
  %7766 = vmatprep.mubr.bf16.mxu0 %v6659
  %7767 = vmatmul.mubr.bf16.gmra.mrb[0].mxu0 %v6658
  %v7768 = vpop.f32.mrb[0].mxu0
  %v7769 = vadd.f32 0.0, %v7768
  %v7770 = vpop.f32.mrb[0].mxu0
  %v7771 = vadd.f32 0.0, %v7770
  %v7772 = vpop.f32.mrb[0].mxu0
  %v7773 = vadd.f32 0.0, %v7772
  %v7774 = vpop.f32.mrb[0].mxu0
  %v7775 = vadd.f32 0.0, %v7774
  %7776 = vmatprep.mubr.bf16.mxu0 %v6663
  %7777 = vmatmul.mubr.bf16.gmra.mrb[0].mxu0 %v6662
  %v7778 = vpop.f32.mrb[0].mxu0
  %v7779 = vadd.f32 0.0, %v7778
  %v7780 = vpop.f32.mrb[0].mxu0
  %v7781 = vadd.f32 0.0, %v7780
  %v7782 = vpop.f32.mrb[0].mxu0
  %v7783 = vadd.f32 0.0, %v7782
  %v7784 = vpop.f32.mrb[0].mxu0
  %v7785 = vadd.f32 0.0, %v7784
  %7786 = vmatprep.mubr.bf16.mxu0 %v6667
  %7787 = vmatmul.mubr.bf16.gmra.mrb[0].mxu0 %v6666
  %v7788 = vpop.f32.mrb[0].mxu0
  %v7789 = vadd.f32 0.0, %v7788
  %v7790 = vpop.f32.mrb[0].mxu0
  %v7791 = vadd.f32 0.0, %v7790
  %v7792 = vpop.f32.mrb[0].mxu0
  %v7793 = vadd.f32 0.0, %v7792
  %v7794 = vpop.f32.mrb[0].mxu0
  %v7795 = vadd.f32 0.0, %v7794
  %7796 = vmatprep.mubr.bf16.mxu0 %v6671
  %7797 = vmatmul.mubr.bf16.gmra.mrb[0].mxu0 %v6670
  %v7798 = vpop.f32.mrb[0].mxu0
  %v7799 = vadd.f32 0.0, %v7798
  %v7800 = vpop.f32.mrb[0].mxu0
  %v7801 = vadd.f32 0.0, %v7800
  %v7802 = vpop.f32.mrb[0].mxu0
  %v7803 = vadd.f32 0.0, %v7802
  %v7804 = vpop.f32.mrb[0].mxu0
  %v7805 = vadd.f32 0.0, %v7804
  %7806 = vmatprep.mubr.bf16.mxu0 %v6675
  %7807 = vmatmul.mubr.bf16.gmra.mrb[0].mxu0 %v6674
  %v7808 = vpop.f32.mrb[0].mxu0
  %v7809 = vadd.f32 0.0, %v7808
  %v7810 = vpop.f32.mrb[0].mxu0
  %v7811 = vadd.f32 0.0, %v7810
  %v7812 = vpop.f32.mrb[0].mxu0
  %v7813 = vadd.f32 0.0, %v7812
  %v7814 = vpop.f32.mrb[0].mxu0
  %v7815 = vadd.f32 0.0, %v7814
  %7816 = vmatprep.mubr.bf16.mxu0 %v6679
  %7817 = vmatmul.mubr.bf16.gmra.mrb[0].mxu0 %v6678
  %v7818 = vpop.f32.mrb[0].mxu0
  %v7819 = vadd.f32 0.0, %v7818
  %v7820 = vpop.f32.mrb[0].mxu0
  %v7821 = vadd.f32 0.0, %v7820
  %v7822 = vpop.f32.mrb[0].mxu0
  %v7823 = vadd.f32 0.0, %v7822
  %v7824 = vpop.f32.mrb[0].mxu0
  %v7825 = vadd.f32 0.0, %v7824
  %7826 = vmatprep.mubr.bf16.mxu0 %v6683
  %7827 = vmatmul.mubr.bf16.gmra.mrb[0].mxu0 %v6682
  %v7828 = vpop.f32.mrb[0].mxu0
  %v7829 = vadd.f32 0.0, %v7828
  %v7830 = vpop.f32.mrb[0].mxu0
  %v7831 = vadd.f32 0.0, %v7830
  %v7832 = vpop.f32.mrb[0].mxu0
  %v7833 = vadd.f32 0.0, %v7832
  %v7834 = vpop.f32.mrb[0].mxu0
  %v7835 = vadd.f32 0.0, %v7834
  %7836 = vmatprep.mubr.bf16.mxu0 %v6687
  %7837 = vmatmul.mubr.bf16.gmra.mrb[0].mxu0 %v6686
  %v7838 = vpop.f32.mrb[0].mxu0
  %v7839 = vadd.f32 0.0, %v7838
  %v7840 = vpop.f32.mrb[0].mxu0
  %v7841 = vadd.f32 0.0, %v7840
  %v7842 = vpop.f32.mrb[0].mxu0
  %v7843 = vadd.f32 0.0, %v7842
  %v7844 = vpop.f32.mrb[0].mxu0
  %v7845 = vadd.f32 0.0, %v7844
  %7846 = vmatprep.mubr.bf16.mxu0 %v6691
  %7847 = vmatmul.mubr.bf16.gmra.mrb[0].mxu0 %v6690
  %v7848 = vpop.f32.mrb[0].mxu0
  %v7849 = vadd.f32 0.0, %v7848
  %v7850 = vpop.f32.mrb[0].mxu0
  %v7851 = vadd.f32 0.0, %v7850
  %v7852 = vpop.f32.mrb[0].mxu0
  %v7853 = vadd.f32 0.0, %v7852
  %v7854 = vpop.f32.mrb[0].mxu0
  %v7855 = vadd.f32 0.0, %v7854
  %7856 = vmatprep.mubr.bf16.mxu0 %v6695
  %7857 = vmatmul.mubr.bf16.gmra.mrb[0].mxu0 %v6694
  %v7858 = vpop.f32.mrb[0].mxu0
  %v7859 = vadd.f32 0.0, %v7858
  %v7860 = vpop.f32.mrb[0].mxu0
  %v7861 = vadd.f32 0.0, %v7860
  %v7862 = vpop.f32.mrb[0].mxu0
  %v7863 = vadd.f32 0.0, %v7862
  %v7864 = vpop.f32.mrb[0].mxu0
  %v7865 = vadd.f32 0.0, %v7864
  %7866 = vmatprep.mubr.bf16.mxu0 %v6699
  %7867 = vmatmul.mubr.bf16.gmra.mrb[0].mxu0 %v6698
  %v7868 = vpop.f32.mrb[0].mxu0
  %v7869 = vadd.f32 0.0, %v7868
  %v7870 = vpop.f32.mrb[0].mxu0
  %v7871 = vadd.f32 0.0, %v7870
  %v7872 = vpop.f32.mrb[0].mxu0
  %v7873 = vadd.f32 0.0, %v7872
  %v7874 = vpop.f32.mrb[0].mxu0
  %v7875 = vadd.f32 0.0, %v7874
  %7876 = vmatprep.mubr.bf16.mxu0 %v6703
  %7877 = vmatmul.mubr.bf16.gmra.mrb[0].mxu0 %v6702
  %v7878 = vpop.f32.mrb[0].mxu0
  %v7879 = vadd.f32 0.0, %v7878
  %v7880 = vpop.f32.mrb[0].mxu0
  %v7881 = vadd.f32 0.0, %v7880
  %v7882 = vpop.f32.mrb[0].mxu0
  %v7883 = vadd.f32 0.0, %v7882
  %v7884 = vpop.f32.mrb[0].mxu0
  %v7885 = vadd.f32 0.0, %v7884
  %7886 = vmatprep.mubr.bf16.mxu0 %v6707
  %7887 = vmatmul.mubr.bf16.gmra.mrb[0].mxu0 %v6706
  %v7888 = vpop.f32.mrb[0].mxu0
  %v7889 = vadd.f32 0.0, %v7888
  %v7890 = vpop.f32.mrb[0].mxu0
  %v7891 = vadd.f32 0.0, %v7890
  %v7892 = vpop.f32.mrb[0].mxu0
  %v7893 = vadd.f32 0.0, %v7892
  %v7894 = vpop.f32.mrb[0].mxu0
  %v7895 = vadd.f32 0.0, %v7894
  %7896 = vdwg.mxu0
  %7897 = vmatprep.subr.bf16.mxu0 %v6089
  %7898 = vmatpush1.bf16.msra.mxu0 %v6088
  %7899 = vmatprep.subr.bf16.mxu0 %v6096
  %7900 = vmatpush1.bf16.msra.mxu0 %v6095
  %7901 = vmatprep.subr.bf16.mxu0 %v6103
  %7902 = vmatpush1.bf16.msra.mxu0 %v6102
  %7903 = vmatprep.subr.bf16.mxu0 %v6110
  %7904 = vmatpush1.bf16.msra.mxu0 %v6109
  %7905 = vmatprep.subr.bf16.mxu0 %v6117
  %7906 = vmatpush1.bf16.msra.mxu0 %v6116
  %7907 = vmatprep.subr.bf16.mxu0 %v6124
  %7908 = vmatpush1.bf16.msra.mxu0 %v6123
  %7909 = vmatprep.subr.bf16.mxu0 %v6131
  %7910 = vmatpush1.bf16.msra.mxu0 %v6130
  %7911 = vmatprep.subr.bf16.mxu0 %v6138
  %7912 = vmatpush1.bf16.msra.mxu0 %v6137
  %7913 = vmatprep.subr.bf16.mxu0 %v6145
  %7914 = vmatpush1.bf16.msra.mxu0 %v6144
  %7915 = vmatprep.subr.bf16.mxu0 %v6152
  %7916 = vmatpush1.bf16.msra.mxu0 %v6151
  %7917 = vmatprep.subr.bf16.mxu0 %v6159
  %7918 = vmatpush1.bf16.msra.mxu0 %v6158
  %7919 = vmatprep.subr.bf16.mxu0 %v6166
  %7920 = vmatpush1.bf16.msra.mxu0 %v6165
  %7921 = vmatprep.subr.bf16.mxu0 %v6173
  %7922 = vmatpush1.bf16.msra.mxu0 %v6172
  %7923 = vmatprep.subr.bf16.mxu0 %v6180
  %7924 = vmatpush1.bf16.msra.mxu0 %v6179
  %7925 = vmatprep.subr.bf16.mxu0 %v6187
  %7926 = vmatpush1.bf16.msra.mxu0 %v6186
  %7927 = vmatprep.subr.bf16.mxu0 %v6194
  %7928 = vmatpush1.bf16.msra.mxu0 %v6193
  %7929 = vmatprep.mubr.bf16.mxu0 %v6585
  %7930 = vmatmul.mubr.bf16.gmra.mrb[0].mxu0 %v6584
  %v7931 = vpop.f32.mrb[0].mxu0
  %v7932 = vadd.f32 %v7579, %v7931
  %v7933 = vpop.f32.mrb[0].mxu0
  %v7934 = vadd.f32 %v7581, %v7933
  %v7935 = vpop.f32.mrb[0].mxu0
  %v7936 = vadd.f32 %v7583, %v7935
  %v7937 = vpop.f32.mrb[0].mxu0
  %v7938 = vadd.f32 %v7585, %v7937
  %7939 = vmatprep.mubr.bf16.mxu0 %v6589
  %7940 = vmatmul.mubr.bf16.gmra.mrb[0].mxu0 %v6588
  %v7941 = vpop.f32.mrb[0].mxu0
  %v7942 = vadd.f32 %v7589, %v7941
  %v7943 = vpop.f32.mrb[0].mxu0
  %v7944 = vadd.f32 %v7591, %v7943
  %v7945 = vpop.f32.mrb[0].mxu0
  %v7946 = vadd.f32 %v7593, %v7945
  %v7947 = vpop.f32.mrb[0].mxu0
  %v7948 = vadd.f32 %v7595, %v7947
  %7949 = vmatprep.mubr.bf16.mxu0 %v6593
  %7950 = vmatmul.mubr.bf16.gmra.mrb[0].mxu0 %v6592
  %v7951 = vpop.f32.mrb[0].mxu0
  %v7952 = vadd.f32 %v7599, %v7951
  %v7953 = vpop.f32.mrb[0].mxu0
  %v7954 = vadd.f32 %v7601, %v7953
  %v7955 = vpop.f32.mrb[0].mxu0
  %v7956 = vadd.f32 %v7603, %v7955
  %v7957 = vpop.f32.mrb[0].mxu0
  %v7958 = vadd.f32 %v7605, %v7957
  %7959 = vmatprep.mubr.bf16.mxu0 %v6597
  %7960 = vmatmul.mubr.bf16.gmra.mrb[0].mxu0 %v6596
  %v7961 = vpop.f32.mrb[0].mxu0
  %v7962 = vadd.f32 %v7609, %v7961
  %v7963 = vpop.f32.mrb[0].mxu0
  %v7964 = vadd.f32 %v7611, %v7963
  %v7965 = vpop.f32.mrb[0].mxu0
  %v7966 = vadd.f32 %v7613, %v7965
  %v7967 = vpop.f32.mrb[0].mxu0
  %v7968 = vadd.f32 %v7615, %v7967
  %7969 = vmatprep.mubr.bf16.mxu0 %v6601
  %7970 = vmatmul.mubr.bf16.gmra.mrb[0].mxu0 %v6600
  %v7971 = vpop.f32.mrb[0].mxu0
  %v7972 = vadd.f32 %v7619, %v7971
  %v7973 = vpop.f32.mrb[0].mxu0
  %v7974 = vadd.f32 %v7621, %v7973
  %v7975 = vpop.f32.mrb[0].mxu0
  %v7976 = vadd.f32 %v7623, %v7975
  %v7977 = vpop.f32.mrb[0].mxu0
  %v7978 = vadd.f32 %v7625, %v7977
  %7979 = vmatprep.mubr.bf16.mxu0 %v6605
  %7980 = vmatmul.mubr.bf16.gmra.mrb[0].mxu0 %v6604
  %v7981 = vpop.f32.mrb[0].mxu0
  %v7982 = vadd.f32 %v7629, %v7981
  %v7983 = vpop.f32.mrb[0].mxu0
  %v7984 = vadd.f32 %v7631, %v7983
  %v7985 = vpop.f32.mrb[0].mxu0
  %v7986 = vadd.f32 %v7633, %v7985
  %v7987 = vpop.f32.mrb[0].mxu0
  %v7988 = vadd.f32 %v7635, %v7987
  %7989 = vmatprep.mubr.bf16.mxu0 %v6609
  %7990 = vmatmul.mubr.bf16.gmra.mrb[0].mxu0 %v6608
  %v7991 = vpop.f32.mrb[0].mxu0
  %v7992 = vadd.f32 %v7639, %v7991
  %v7993 = vpop.f32.mrb[0].mxu0
  %v7994 = vadd.f32 %v7641, %v7993
  %v7995 = vpop.f32.mrb[0].mxu0
  %v7996 = vadd.f32 %v7643, %v7995
  %v7997 = vpop.f32.mrb[0].mxu0
  %v7998 = vadd.f32 %v7645, %v7997
  %7999 = vmatprep.mubr.bf16.mxu0 %v6613
  %8000 = vmatmul.mubr.bf16.gmra.mrb[0].mxu0 %v6612
  %v8001 = vpop.f32.mrb[0].mxu0
  %v8002 = vadd.f32 %v7649, %v8001
  %v8003 = vpop.f32.mrb[0].mxu0
  %v8004 = vadd.f32 %v7651, %v8003
  %v8005 = vpop.f32.mrb[0].mxu0
  %v8006 = vadd.f32 %v7653, %v8005
  %v8007 = vpop.f32.mrb[0].mxu0
  %v8008 = vadd.f32 %v7655, %v8007
  %8009 = vmatprep.mubr.bf16.mxu0 %v6617
  %8010 = vmatmul.mubr.bf16.gmra.mrb[0].mxu0 %v6616
  %v8011 = vpop.f32.mrb[0].mxu0
  %v8012 = vadd.f32 %v7659, %v8011
  %v8013 = vpop.f32.mrb[0].mxu0
  %v8014 = vadd.f32 %v7661, %v8013
  %v8015 = vpop.f32.mrb[0].mxu0
  %v8016 = vadd.f32 %v7663, %v8015
  %v8017 = vpop.f32.mrb[0].mxu0
  %v8018 = vadd.f32 %v7665, %v8017
  %8019 = vmatprep.mubr.bf16.mxu0 %v6621
  %8020 = vmatmul.mubr.bf16.gmra.mrb[0].mxu0 %v6620
  %v8021 = vpop.f32.mrb[0].mxu0
  %v8022 = vadd.f32 %v7669, %v8021
  %v8023 = vpop.f32.mrb[0].mxu0
  %v8024 = vadd.f32 %v7671, %v8023
  %v8025 = vpop.f32.mrb[0].mxu0
  %v8026 = vadd.f32 %v7673, %v8025
  %v8027 = vpop.f32.mrb[0].mxu0
  %v8028 = vadd.f32 %v7675, %v8027
  %8029 = vmatprep.mubr.bf16.mxu0 %v6625
  %8030 = vmatmul.mubr.bf16.gmra.mrb[0].mxu0 %v6624
  %v8031 = vpop.f32.mrb[0].mxu0
  %v8032 = vadd.f32 %v7679, %v8031
  %v8033 = vpop.f32.mrb[0].mxu0
  %v8034 = vadd.f32 %v7681, %v8033
  %v8035 = vpop.f32.mrb[0].mxu0
  %v8036 = vadd.f32 %v7683, %v8035
  %v8037 = vpop.f32.mrb[0].mxu0
  %v8038 = vadd.f32 %v7685, %v8037
  %8039 = vmatprep.mubr.bf16.mxu0 %v6629
  %8040 = vmatmul.mubr.bf16.gmra.mrb[0].mxu0 %v6628
  %v8041 = vpop.f32.mrb[0].mxu0
  %v8042 = vadd.f32 %v7689, %v8041
  %v8043 = vpop.f32.mrb[0].mxu0
  %v8044 = vadd.f32 %v7691, %v8043
  %v8045 = vpop.f32.mrb[0].mxu0
  %v8046 = vadd.f32 %v7693, %v8045
  %v8047 = vpop.f32.mrb[0].mxu0
  %v8048 = vadd.f32 %v7695, %v8047
  %8049 = vmatprep.mubr.bf16.mxu0 %v6633
  %8050 = vmatmul.mubr.bf16.gmra.mrb[0].mxu0 %v6632
  %v8051 = vpop.f32.mrb[0].mxu0
  %v8052 = vadd.f32 %v7699, %v8051
  %v8053 = vpop.f32.mrb[0].mxu0
  %v8054 = vadd.f32 %v7701, %v8053
  %v8055 = vpop.f32.mrb[0].mxu0
  %v8056 = vadd.f32 %v7703, %v8055
  %v8057 = vpop.f32.mrb[0].mxu0
  %v8058 = vadd.f32 %v7705, %v8057
  %8059 = vmatprep.mubr.bf16.mxu0 %v6637
  %8060 = vmatmul.mubr.bf16.gmra.mrb[0].mxu0 %v6636
  %v8061 = vpop.f32.mrb[0].mxu0
  %v8062 = vadd.f32 %v7709, %v8061
  %v8063 = vpop.f32.mrb[0].mxu0
  %v8064 = vadd.f32 %v7711, %v8063
  %v8065 = vpop.f32.mrb[0].mxu0
  %v8066 = vadd.f32 %v7713, %v8065
  %v8067 = vpop.f32.mrb[0].mxu0
  %v8068 = vadd.f32 %v7715, %v8067
  %8069 = vmatprep.mubr.bf16.mxu0 %v6641
  %8070 = vmatmul.mubr.bf16.gmra.mrb[0].mxu0 %v6640
  %v8071 = vpop.f32.mrb[0].mxu0
  %v8072 = vadd.f32 %v7719, %v8071
  %v8073 = vpop.f32.mrb[0].mxu0
  %v8074 = vadd.f32 %v7721, %v8073
  %v8075 = vpop.f32.mrb[0].mxu0
  %v8076 = vadd.f32 %v7723, %v8075
  %v8077 = vpop.f32.mrb[0].mxu0
  %v8078 = vadd.f32 %v7725, %v8077
  %8079 = vmatprep.mubr.bf16.mxu0 %v6645
  %8080 = vmatmul.mubr.bf16.gmra.mrb[0].mxu0 %v6644
  %v8081 = vpop.f32.mrb[0].mxu0
  %v8082 = vadd.f32 %v7729, %v8081
  %v8083 = vpop.f32.mrb[0].mxu0
  %v8084 = vadd.f32 %v7731, %v8083
  %v8085 = vpop.f32.mrb[0].mxu0
  %v8086 = vadd.f32 %v7733, %v8085
  %v8087 = vpop.f32.mrb[0].mxu0
  %v8088 = vadd.f32 %v7735, %v8087
  %8089 = vmatprep.mubr.bf16.mxu0 %v6649
  %8090 = vmatmul.mubr.bf16.gmra.mrb[0].mxu0 %v6648
  %v8091 = vpop.f32.mrb[0].mxu0
  %v8092 = vadd.f32 %v7739, %v8091
  %v8093 = vpop.f32.mrb[0].mxu0
  %v8094 = vadd.f32 %v7741, %v8093
  %v8095 = vpop.f32.mrb[0].mxu0
  %v8096 = vadd.f32 %v7743, %v8095
  %v8097 = vpop.f32.mrb[0].mxu0
  %v8098 = vadd.f32 %v7745, %v8097
  %8099 = vmatprep.mubr.bf16.mxu0 %v6653
  %8100 = vmatmul.mubr.bf16.gmra.mrb[0].mxu0 %v6652
  %v8101 = vpop.f32.mrb[0].mxu0
  %v8102 = vadd.f32 %v7749, %v8101
  %v8103 = vpop.f32.mrb[0].mxu0
  %v8104 = vadd.f32 %v7751, %v8103
  %v8105 = vpop.f32.mrb[0].mxu0
  %v8106 = vadd.f32 %v7753, %v8105
  %v8107 = vpop.f32.mrb[0].mxu0
  %v8108 = vadd.f32 %v7755, %v8107
  %8109 = vmatprep.mubr.bf16.mxu0 %v6657
  %8110 = vmatmul.mubr.bf16.gmra.mrb[0].mxu0 %v6656
  %v8111 = vpop.f32.mrb[0].mxu0
  %v8112 = vadd.f32 %v7759, %v8111
  %v8113 = vpop.f32.mrb[0].mxu0
  %v8114 = vadd.f32 %v7761, %v8113
  %v8115 = vpop.f32.mrb[0].mxu0
  %v8116 = vadd.f32 %v7763, %v8115
  %v8117 = vpop.f32.mrb[0].mxu0
  %v8118 = vadd.f32 %v7765, %v8117
  %8119 = vmatprep.mubr.bf16.mxu0 %v6661
  %8120 = vmatmul.mubr.bf16.gmra.mrb[0].mxu0 %v6660
  %v8121 = vpop.f32.mrb[0].mxu0
  %v8122 = vadd.f32 %v7769, %v8121
  %v8123 = vpop.f32.mrb[0].mxu0
  %v8124 = vadd.f32 %v7771, %v8123
  %v8125 = vpop.f32.mrb[0].mxu0
  %v8126 = vadd.f32 %v7773, %v8125
  %v8127 = vpop.f32.mrb[0].mxu0
  %v8128 = vadd.f32 %v7775, %v8127
  %8129 = vmatprep.mubr.bf16.mxu0 %v6665
  %8130 = vmatmul.mubr.bf16.gmra.mrb[0].mxu0 %v6664
  %v8131 = vpop.f32.mrb[0].mxu0
  %v8132 = vadd.f32 %v7779, %v8131
  %v8133 = vpop.f32.mrb[0].mxu0
  %v8134 = vadd.f32 %v7781, %v8133
  %v8135 = vpop.f32.mrb[0].mxu0
  %v8136 = vadd.f32 %v7783, %v8135
  %v8137 = vpop.f32.mrb[0].mxu0
  %v8138 = vadd.f32 %v7785, %v8137
  %8139 = vmatprep.mubr.bf16.mxu0 %v6669
  %8140 = vmatmul.mubr.bf16.gmra.mrb[0].mxu0 %v6668
  %v8141 = vpop.f32.mrb[0].mxu0
  %v8142 = vadd.f32 %v7789, %v8141
  %v8143 = vpop.f32.mrb[0].mxu0
  %v8144 = vadd.f32 %v7791, %v8143
  %v8145 = vpop.f32.mrb[0].mxu0
  %v8146 = vadd.f32 %v7793, %v8145
  %v8147 = vpop.f32.mrb[0].mxu0
  %v8148 = vadd.f32 %v7795, %v8147
  %8149 = vmatprep.mubr.bf16.mxu0 %v6673
  %8150 = vmatmul.mubr.bf16.gmra.mrb[0].mxu0 %v6672
  %v8151 = vpop.f32.mrb[0].mxu0
  %v8152 = vadd.f32 %v7799, %v8151
  %v8153 = vpop.f32.mrb[0].mxu0
  %v8154 = vadd.f32 %v7801, %v8153
  %v8155 = vpop.f32.mrb[0].mxu0
  %v8156 = vadd.f32 %v7803, %v8155
  %v8157 = vpop.f32.mrb[0].mxu0
  %v8158 = vadd.f32 %v7805, %v8157
  %8159 = vmatprep.mubr.bf16.mxu0 %v6677
  %8160 = vmatmul.mubr.bf16.gmra.mrb[0].mxu0 %v6676
  %v8161 = vpop.f32.mrb[0].mxu0
  %v8162 = vadd.f32 %v7809, %v8161
  %v8163 = vpop.f32.mrb[0].mxu0
  %v8164 = vadd.f32 %v7811, %v8163
  %v8165 = vpop.f32.mrb[0].mxu0
  %v8166 = vadd.f32 %v7813, %v8165
  %v8167 = vpop.f32.mrb[0].mxu0
  %v8168 = vadd.f32 %v7815, %v8167
  %8169 = vmatprep.mubr.bf16.mxu0 %v6681
  %8170 = vmatmul.mubr.bf16.gmra.mrb[0].mxu0 %v6680
  %v8171 = vpop.f32.mrb[0].mxu0
  %v8172 = vadd.f32 %v7819, %v8171
  %v8173 = vpop.f32.mrb[0].mxu0
  %v8174 = vadd.f32 %v7821, %v8173
  %v8175 = vpop.f32.mrb[0].mxu0
  %v8176 = vadd.f32 %v7823, %v8175
  %v8177 = vpop.f32.mrb[0].mxu0
  %v8178 = vadd.f32 %v7825, %v8177
  %8179 = vmatprep.mubr.bf16.mxu0 %v6685
  %8180 = vmatmul.mubr.bf16.gmra.mrb[0].mxu0 %v6684
  %v8181 = vpop.f32.mrb[0].mxu0
  %v8182 = vadd.f32 %v7829, %v8181
  %v8183 = vpop.f32.mrb[0].mxu0
  %v8184 = vadd.f32 %v7831, %v8183
  %v8185 = vpop.f32.mrb[0].mxu0
  %v8186 = vadd.f32 %v7833, %v8185
  %v8187 = vpop.f32.mrb[0].mxu0
  %v8188 = vadd.f32 %v7835, %v8187
  %8189 = vmatprep.mubr.bf16.mxu0 %v6689
  %8190 = vmatmul.mubr.bf16.gmra.mrb[0].mxu0 %v6688
  %v8191 = vpop.f32.mrb[0].mxu0
  %v8192 = vadd.f32 %v7839, %v8191
  %v8193 = vpop.f32.mrb[0].mxu0
  %v8194 = vadd.f32 %v7841, %v8193
  %v8195 = vpop.f32.mrb[0].mxu0
  %v8196 = vadd.f32 %v7843, %v8195
  %v8197 = vpop.f32.mrb[0].mxu0
  %v8198 = vadd.f32 %v7845, %v8197
  %8199 = vmatprep.mubr.bf16.mxu0 %v6693
  %8200 = vmatmul.mubr.bf16.gmra.mrb[0].mxu0 %v6692
  %v8201 = vpop.f32.mrb[0].mxu0
  %v8202 = vadd.f32 %v7849, %v8201
  %v8203 = vpop.f32.mrb[0].mxu0
  %v8204 = vadd.f32 %v7851, %v8203
  %v8205 = vpop.f32.mrb[0].mxu0
  %v8206 = vadd.f32 %v7853, %v8205
  %v8207 = vpop.f32.mrb[0].mxu0
  %v8208 = vadd.f32 %v7855, %v8207
  %8209 = vmatprep.mubr.bf16.mxu0 %v6697
  %8210 = vmatmul.mubr.bf16.gmra.mrb[0].mxu0 %v6696
  %v8211 = vpop.f32.mrb[0].mxu0
  %v8212 = vadd.f32 %v7859, %v8211
  %v8213 = vpop.f32.mrb[0].mxu0
  %v8214 = vadd.f32 %v7861, %v8213
  %v8215 = vpop.f32.mrb[0].mxu0
  %v8216 = vadd.f32 %v7863, %v8215
  %v8217 = vpop.f32.mrb[0].mxu0
  %v8218 = vadd.f32 %v7865, %v8217
  %8219 = vmatprep.mubr.bf16.mxu0 %v6701
  %8220 = vmatmul.mubr.bf16.gmra.mrb[0].mxu0 %v6700
  %v8221 = vpop.f32.mrb[0].mxu0
  %v8222 = vadd.f32 %v7869, %v8221
  %v8223 = vpop.f32.mrb[0].mxu0
  %v8224 = vadd.f32 %v7871, %v8223
  %v8225 = vpop.f32.mrb[0].mxu0
  %v8226 = vadd.f32 %v7873, %v8225
  %v8227 = vpop.f32.mrb[0].mxu0
  %v8228 = vadd.f32 %v7875, %v8227
  %8229 = vmatprep.mubr.bf16.mxu0 %v6705
  %8230 = vmatmul.mubr.bf16.gmra.mrb[0].mxu0 %v6704
  %v8231 = vpop.f32.mrb[0].mxu0
  %v8232 = vadd.f32 %v7879, %v8231
  %v8233 = vpop.f32.mrb[0].mxu0
  %v8234 = vadd.f32 %v7881, %v8233
  %v8235 = vpop.f32.mrb[0].mxu0
  %v8236 = vadd.f32 %v7883, %v8235
  %v8237 = vpop.f32.mrb[0].mxu0
  %v8238 = vadd.f32 %v7885, %v8237
  %8239 = vmatprep.mubr.bf16.mxu0 %v6709
  %8240 = vmatmul.mubr.bf16.gmra.mrb[0].mxu0 %v6708
  %v8241 = vpop.f32.mrb[0].mxu0
  %v8242 = vadd.f32 %v7889, %v8241
  %v8243 = vpop.f32.mrb[0].mxu0
  %v8244 = vadd.f32 %v7891, %v8243
  %v8245 = vpop.f32.mrb[0].mxu0
  %v8246 = vadd.f32 %v7893, %v8245
  %v8247 = vpop.f32.mrb[0].mxu0
  %v8248 = vadd.f32 %v7895, %v8247
  %8249 = vdwg.mxu0
  %8250 = vmatprep.subr.bf16.mxu0 %v5979
  %8251 = vmatpush1.bf16.msra.mxu0 %v5978
  %8252 = vmatprep.subr.bf16.mxu0 %v5986
  %8253 = vmatpush1.bf16.msra.mxu0 %v5985
  %8254 = vmatprep.subr.bf16.mxu0 %v5993
  %8255 = vmatpush1.bf16.msra.mxu0 %v5992
  %8256 = vmatprep.subr.bf16.mxu0 %v6000
  %8257 = vmatpush1.bf16.msra.mxu0 %v5999
  %8258 = vmatprep.subr.bf16.mxu0 %v6007
  %8259 = vmatpush1.bf16.msra.mxu0 %v6006
  %8260 = vmatprep.subr.bf16.mxu0 %v6014
  %8261 = vmatpush1.bf16.msra.mxu0 %v6013
  %8262 = vmatprep.subr.bf16.mxu0 %v6021
  %8263 = vmatpush1.bf16.msra.mxu0 %v6020
  %8264 = vmatprep.subr.bf16.mxu0 %v6028
  %8265 = vmatpush1.bf16.msra.mxu0 %v6027
  %8266 = vmatprep.subr.bf16.mxu0 %v6035
  %8267 = vmatpush1.bf16.msra.mxu0 %v6034
  %8268 = vmatprep.subr.bf16.mxu0 %v6042
  %8269 = vmatpush1.bf16.msra.mxu0 %v6041
  %8270 = vmatprep.subr.bf16.mxu0 %v6049
  %8271 = vmatpush1.bf16.msra.mxu0 %v6048
  %8272 = vmatprep.subr.bf16.mxu0 %v6056
  %8273 = vmatpush1.bf16.msra.mxu0 %v6055
  %8274 = vmatprep.subr.bf16.mxu0 %v6063
  %8275 = vmatpush1.bf16.msra.mxu0 %v6062
  %8276 = vmatprep.subr.bf16.mxu0 %v6070
  %8277 = vmatpush1.bf16.msra.mxu0 %v6069
  %8278 = vmatprep.subr.bf16.mxu0 %v6077
  %8279 = vmatpush1.bf16.msra.mxu0 %v6076
  %8280 = vmatprep.subr.bf16.mxu0 %v6084
  %8281 = vmatpush1.bf16.msra.mxu0 %v6083
  %8282 = vmatprep.mubr.bf16.mxu0 %v6583
  %8283 = vmatmul.mubr.bf16.gmra.mrb[0].mxu0 %v6582
  %v8284 = vpop.f32.mrb[0].mxu0
  %v8285 = vadd.f32 0.0, %v8284
  %v8286 = vpop.f32.mrb[0].mxu0
  %v8287 = vadd.f32 0.0, %v8286
  %v8288 = vpop.f32.mrb[0].mxu0
  %v8289 = vadd.f32 0.0, %v8288
  %v8290 = vpop.f32.mrb[0].mxu0
  %v8291 = vadd.f32 0.0, %v8290
  %8292 = vmatprep.mubr.bf16.mxu0 %v6587
  %8293 = vmatmul.mubr.bf16.gmra.mrb[0].mxu0 %v6586
  %v8294 = vpop.f32.mrb[0].mxu0
  %v8295 = vadd.f32 0.0, %v8294
  %v8296 = vpop.f32.mrb[0].mxu0
  %v8297 = vadd.f32 0.0, %v8296
  %v8298 = vpop.f32.mrb[0].mxu0
  %v8299 = vadd.f32 0.0, %v8298
  %v8300 = vpop.f32.mrb[0].mxu0
  %v8301 = vadd.f32 0.0, %v8300
  %8302 = vmatprep.mubr.bf16.mxu0 %v6591
  %8303 = vmatmul.mubr.bf16.gmra.mrb[0].mxu0 %v6590
  %v8304 = vpop.f32.mrb[0].mxu0
  %v8305 = vadd.f32 0.0, %v8304
  %v8306 = vpop.f32.mrb[0].mxu0
  %v8307 = vadd.f32 0.0, %v8306
  %v8308 = vpop.f32.mrb[0].mxu0
  %v8309 = vadd.f32 0.0, %v8308
  %v8310 = vpop.f32.mrb[0].mxu0
  %v8311 = vadd.f32 0.0, %v8310
  %8312 = vmatprep.mubr.bf16.mxu0 %v6595
  %8313 = vmatmul.mubr.bf16.gmra.mrb[0].mxu0 %v6594
  %v8314 = vpop.f32.mrb[0].mxu0
  %v8315 = vadd.f32 0.0, %v8314
  %v8316 = vpop.f32.mrb[0].mxu0
  %v8317 = vadd.f32 0.0, %v8316
  %v8318 = vpop.f32.mrb[0].mxu0
  %v8319 = vadd.f32 0.0, %v8318
  %v8320 = vpop.f32.mrb[0].mxu0
  %v8321 = vadd.f32 0.0, %v8320
  %8322 = vmatprep.mubr.bf16.mxu0 %v6599
  %8323 = vmatmul.mubr.bf16.gmra.mrb[0].mxu0 %v6598
  %v8324 = vpop.f32.mrb[0].mxu0
  %v8325 = vadd.f32 0.0, %v8324
  %v8326 = vpop.f32.mrb[0].mxu0
  %v8327 = vadd.f32 0.0, %v8326
  %v8328 = vpop.f32.mrb[0].mxu0
  %v8329 = vadd.f32 0.0, %v8328
  %v8330 = vpop.f32.mrb[0].mxu0
  %v8331 = vadd.f32 0.0, %v8330
  %8332 = vmatprep.mubr.bf16.mxu0 %v6603
  %8333 = vmatmul.mubr.bf16.gmra.mrb[0].mxu0 %v6602
  %v8334 = vpop.f32.mrb[0].mxu0
  %v8335 = vadd.f32 0.0, %v8334
  %v8336 = vpop.f32.mrb[0].mxu0
  %v8337 = vadd.f32 0.0, %v8336
  %v8338 = vpop.f32.mrb[0].mxu0
  %v8339 = vadd.f32 0.0, %v8338
  %v8340 = vpop.f32.mrb[0].mxu0
  %v8341 = vadd.f32 0.0, %v8340
  %8342 = vmatprep.mubr.bf16.mxu0 %v6607
  %8343 = vmatmul.mubr.bf16.gmra.mrb[0].mxu0 %v6606
  %v8344 = vpop.f32.mrb[0].mxu0
  %v8345 = vadd.f32 0.0, %v8344
  %v8346 = vpop.f32.mrb[0].mxu0
  %v8347 = vadd.f32 0.0, %v8346
  %v8348 = vpop.f32.mrb[0].mxu0
  %v8349 = vadd.f32 0.0, %v8348
  %v8350 = vpop.f32.mrb[0].mxu0
  %v8351 = vadd.f32 0.0, %v8350
  %8352 = vmatprep.mubr.bf16.mxu0 %v6611
  %8353 = vmatmul.mubr.bf16.gmra.mrb[0].mxu0 %v6610
  %v8354 = vpop.f32.mrb[0].mxu0
  %v8355 = vadd.f32 0.0, %v8354
  %v8356 = vpop.f32.mrb[0].mxu0
  %v8357 = vadd.f32 0.0, %v8356
  %v8358 = vpop.f32.mrb[0].mxu0
  %v8359 = vadd.f32 0.0, %v8358
  %v8360 = vpop.f32.mrb[0].mxu0
  %v8361 = vadd.f32 0.0, %v8360
  %8362 = vmatprep.mubr.bf16.mxu0 %v6615
  %8363 = vmatmul.mubr.bf16.gmra.mrb[0].mxu0 %v6614
  %v8364 = vpop.f32.mrb[0].mxu0
  %v8365 = vadd.f32 0.0, %v8364
  %v8366 = vpop.f32.mrb[0].mxu0
  %v8367 = vadd.f32 0.0, %v8366
  %v8368 = vpop.f32.mrb[0].mxu0
  %v8369 = vadd.f32 0.0, %v8368
  %v8370 = vpop.f32.mrb[0].mxu0
  %v8371 = vadd.f32 0.0, %v8370
  %8372 = vmatprep.mubr.bf16.mxu0 %v6619
  %8373 = vmatmul.mubr.bf16.gmra.mrb[0].mxu0 %v6618
  %v8374 = vpop.f32.mrb[0].mxu0
  %v8375 = vadd.f32 0.0, %v8374
  %v8376 = vpop.f32.mrb[0].mxu0
  %v8377 = vadd.f32 0.0, %v8376
  %v8378 = vpop.f32.mrb[0].mxu0
  %v8379 = vadd.f32 0.0, %v8378
  %v8380 = vpop.f32.mrb[0].mxu0
  %v8381 = vadd.f32 0.0, %v8380
  %8382 = vmatprep.mubr.bf16.mxu0 %v6623
  %8383 = vmatmul.mubr.bf16.gmra.mrb[0].mxu0 %v6622
  %v8384 = vpop.f32.mrb[0].mxu0
  %v8385 = vadd.f32 0.0, %v8384
  %v8386 = vpop.f32.mrb[0].mxu0
  %v8387 = vadd.f32 0.0, %v8386
  %v8388 = vpop.f32.mrb[0].mxu0
  %v8389 = vadd.f32 0.0, %v8388
  %v8390 = vpop.f32.mrb[0].mxu0
  %v8391 = vadd.f32 0.0, %v8390
  %8392 = vmatprep.mubr.bf16.mxu0 %v6627
  %8393 = vmatmul.mubr.bf16.gmra.mrb[0].mxu0 %v6626
  %v8394 = vpop.f32.mrb[0].mxu0
  %v8395 = vadd.f32 0.0, %v8394
  %v8396 = vpop.f32.mrb[0].mxu0
  %v8397 = vadd.f32 0.0, %v8396
  %v8398 = vpop.f32.mrb[0].mxu0
  %v8399 = vadd.f32 0.0, %v8398
  %v8400 = vpop.f32.mrb[0].mxu0
  %v8401 = vadd.f32 0.0, %v8400
  %8402 = vmatprep.mubr.bf16.mxu0 %v6631
  %8403 = vmatmul.mubr.bf16.gmra.mrb[0].mxu0 %v6630
  %v8404 = vpop.f32.mrb[0].mxu0
  %v8405 = vadd.f32 0.0, %v8404
  %v8406 = vpop.f32.mrb[0].mxu0
  %v8407 = vadd.f32 0.0, %v8406
  %v8408 = vpop.f32.mrb[0].mxu0
  %v8409 = vadd.f32 0.0, %v8408
  %v8410 = vpop.f32.mrb[0].mxu0
  %v8411 = vadd.f32 0.0, %v8410
  %8412 = vmatprep.mubr.bf16.mxu0 %v6635
  %8413 = vmatmul.mubr.bf16.gmra.mrb[0].mxu0 %v6634
  %v8414 = vpop.f32.mrb[0].mxu0
  %v8415 = vadd.f32 0.0, %v8414
  %v8416 = vpop.f32.mrb[0].mxu0
  %v8417 = vadd.f32 0.0, %v8416
  %v8418 = vpop.f32.mrb[0].mxu0
  %v8419 = vadd.f32 0.0, %v8418
  %v8420 = vpop.f32.mrb[0].mxu0
  %v8421 = vadd.f32 0.0, %v8420
  %8422 = vmatprep.mubr.bf16.mxu0 %v6639
  %8423 = vmatmul.mubr.bf16.gmra.mrb[0].mxu0 %v6638
  %v8424 = vpop.f32.mrb[0].mxu0
  %v8425 = vadd.f32 0.0, %v8424
  %v8426 = vpop.f32.mrb[0].mxu0
  %v8427 = vadd.f32 0.0, %v8426
  %v8428 = vpop.f32.mrb[0].mxu0
  %v8429 = vadd.f32 0.0, %v8428
  %v8430 = vpop.f32.mrb[0].mxu0
  %v8431 = vadd.f32 0.0, %v8430
  %8432 = vmatprep.mubr.bf16.mxu0 %v6643
  %8433 = vmatmul.mubr.bf16.gmra.mrb[0].mxu0 %v6642
  %v8434 = vpop.f32.mrb[0].mxu0
  %v8435 = vadd.f32 0.0, %v8434
  %v8436 = vpop.f32.mrb[0].mxu0
  %v8437 = vadd.f32 0.0, %v8436
  %v8438 = vpop.f32.mrb[0].mxu0
  %v8439 = vadd.f32 0.0, %v8438
  %v8440 = vpop.f32.mrb[0].mxu0
  %v8441 = vadd.f32 0.0, %v8440
  %8442 = vmatprep.mubr.bf16.mxu0 %v6647
  %8443 = vmatmul.mubr.bf16.gmra.mrb[0].mxu0 %v6646
  %v8444 = vpop.f32.mrb[0].mxu0
  %v8445 = vadd.f32 0.0, %v8444
  %v8446 = vpop.f32.mrb[0].mxu0
  %v8447 = vadd.f32 0.0, %v8446
  %v8448 = vpop.f32.mrb[0].mxu0
  %v8449 = vadd.f32 0.0, %v8448
  %v8450 = vpop.f32.mrb[0].mxu0
  %v8451 = vadd.f32 0.0, %v8450
  %8452 = vmatprep.mubr.bf16.mxu0 %v6651
  %8453 = vmatmul.mubr.bf16.gmra.mrb[0].mxu0 %v6650
  %v8454 = vpop.f32.mrb[0].mxu0
  %v8455 = vadd.f32 0.0, %v8454
  %v8456 = vpop.f32.mrb[0].mxu0
  %v8457 = vadd.f32 0.0, %v8456
  %v8458 = vpop.f32.mrb[0].mxu0
  %v8459 = vadd.f32 0.0, %v8458
  %v8460 = vpop.f32.mrb[0].mxu0
  %v8461 = vadd.f32 0.0, %v8460
  %8462 = vmatprep.mubr.bf16.mxu0 %v6655
  %8463 = vmatmul.mubr.bf16.gmra.mrb[0].mxu0 %v6654
  %v8464 = vpop.f32.mrb[0].mxu0
  %v8465 = vadd.f32 0.0, %v8464
  %v8466 = vpop.f32.mrb[0].mxu0
  %v8467 = vadd.f32 0.0, %v8466
  %v8468 = vpop.f32.mrb[0].mxu0
  %v8469 = vadd.f32 0.0, %v8468
  %v8470 = vpop.f32.mrb[0].mxu0
  %v8471 = vadd.f32 0.0, %v8470
  %8472 = vmatprep.mubr.bf16.mxu0 %v6659
  %8473 = vmatmul.mubr.bf16.gmra.mrb[0].mxu0 %v6658
  %v8474 = vpop.f32.mrb[0].mxu0
  %v8475 = vadd.f32 0.0, %v8474
  %v8476 = vpop.f32.mrb[0].mxu0
  %v8477 = vadd.f32 0.0, %v8476
  %v8478 = vpop.f32.mrb[0].mxu0
  %v8479 = vadd.f32 0.0, %v8478
  %v8480 = vpop.f32.mrb[0].mxu0
  %v8481 = vadd.f32 0.0, %v8480
  %8482 = vmatprep.mubr.bf16.mxu0 %v6663
  %8483 = vmatmul.mubr.bf16.gmra.mrb[0].mxu0 %v6662
  %v8484 = vpop.f32.mrb[0].mxu0
  %v8485 = vadd.f32 0.0, %v8484
  %v8486 = vpop.f32.mrb[0].mxu0
  %v8487 = vadd.f32 0.0, %v8486
  %v8488 = vpop.f32.mrb[0].mxu0
  %v8489 = vadd.f32 0.0, %v8488
  %v8490 = vpop.f32.mrb[0].mxu0
  %v8491 = vadd.f32 0.0, %v8490
  %8492 = vmatprep.mubr.bf16.mxu0 %v6667
  %8493 = vmatmul.mubr.bf16.gmra.mrb[0].mxu0 %v6666
  %v8494 = vpop.f32.mrb[0].mxu0
  %v8495 = vadd.f32 0.0, %v8494
  %v8496 = vpop.f32.mrb[0].mxu0
  %v8497 = vadd.f32 0.0, %v8496
  %v8498 = vpop.f32.mrb[0].mxu0
  %v8499 = vadd.f32 0.0, %v8498
  %v8500 = vpop.f32.mrb[0].mxu0
  %v8501 = vadd.f32 0.0, %v8500
  %8502 = vmatprep.mubr.bf16.mxu0 %v6671
  %8503 = vmatmul.mubr.bf16.gmra.mrb[0].mxu0 %v6670
  %v8504 = vpop.f32.mrb[0].mxu0
  %v8505 = vadd.f32 0.0, %v8504
  %v8506 = vpop.f32.mrb[0].mxu0
  %v8507 = vadd.f32 0.0, %v8506
  %v8508 = vpop.f32.mrb[0].mxu0
  %v8509 = vadd.f32 0.0, %v8508
  %v8510 = vpop.f32.mrb[0].mxu0
  %v8511 = vadd.f32 0.0, %v8510
  %8512 = vmatprep.mubr.bf16.mxu0 %v6675
  %8513 = vmatmul.mubr.bf16.gmra.mrb[0].mxu0 %v6674
  %v8514 = vpop.f32.mrb[0].mxu0
  %v8515 = vadd.f32 0.0, %v8514
  %v8516 = vpop.f32.mrb[0].mxu0
  %v8517 = vadd.f32 0.0, %v8516
  %v8518 = vpop.f32.mrb[0].mxu0
  %v8519 = vadd.f32 0.0, %v8518
  %v8520 = vpop.f32.mrb[0].mxu0
  %v8521 = vadd.f32 0.0, %v8520
  %8522 = vmatprep.mubr.bf16.mxu0 %v6679
  %8523 = vmatmul.mubr.bf16.gmra.mrb[0].mxu0 %v6678
  %v8524 = vpop.f32.mrb[0].mxu0
  %v8525 = vadd.f32 0.0, %v8524
  %v8526 = vpop.f32.mrb[0].mxu0
  %v8527 = vadd.f32 0.0, %v8526
  %v8528 = vpop.f32.mrb[0].mxu0
  %v8529 = vadd.f32 0.0, %v8528
  %v8530 = vpop.f32.mrb[0].mxu0
  %v8531 = vadd.f32 0.0, %v8530
  %8532 = vmatprep.mubr.bf16.mxu0 %v6683
  %8533 = vmatmul.mubr.bf16.gmra.mrb[0].mxu0 %v6682
  %v8534 = vpop.f32.mrb[0].mxu0
  %v8535 = vadd.f32 0.0, %v8534
  %v8536 = vpop.f32.mrb[0].mxu0
  %v8537 = vadd.f32 0.0, %v8536
  %v8538 = vpop.f32.mrb[0].mxu0
  %v8539 = vadd.f32 0.0, %v8538
  %v8540 = vpop.f32.mrb[0].mxu0
  %v8541 = vadd.f32 0.0, %v8540
  %8542 = vmatprep.mubr.bf16.mxu0 %v6687
  %8543 = vmatmul.mubr.bf16.gmra.mrb[0].mxu0 %v6686
  %v8544 = vpop.f32.mrb[0].mxu0
  %v8545 = vadd.f32 0.0, %v8544
  %v8546 = vpop.f32.mrb[0].mxu0
  %v8547 = vadd.f32 0.0, %v8546
  %v8548 = vpop.f32.mrb[0].mxu0
  %v8549 = vadd.f32 0.0, %v8548
  %v8550 = vpop.f32.mrb[0].mxu0
  %v8551 = vadd.f32 0.0, %v8550
  %8552 = vmatprep.mubr.bf16.mxu0 %v6691
  %8553 = vmatmul.mubr.bf16.gmra.mrb[0].mxu0 %v6690
  %v8554 = vpop.f32.mrb[0].mxu0
  %v8555 = vadd.f32 0.0, %v8554
  %v8556 = vpop.f32.mrb[0].mxu0
  %v8557 = vadd.f32 0.0, %v8556
  %v8558 = vpop.f32.mrb[0].mxu0
  %v8559 = vadd.f32 0.0, %v8558
  %v8560 = vpop.f32.mrb[0].mxu0
  %v8561 = vadd.f32 0.0, %v8560
  %8562 = vmatprep.mubr.bf16.mxu0 %v6695
  %8563 = vmatmul.mubr.bf16.gmra.mrb[0].mxu0 %v6694
  %v8564 = vpop.f32.mrb[0].mxu0
  %v8565 = vadd.f32 0.0, %v8564
  %v8566 = vpop.f32.mrb[0].mxu0
  %v8567 = vadd.f32 0.0, %v8566
  %v8568 = vpop.f32.mrb[0].mxu0
  %v8569 = vadd.f32 0.0, %v8568
  %v8570 = vpop.f32.mrb[0].mxu0
  %v8571 = vadd.f32 0.0, %v8570
  %8572 = vmatprep.mubr.bf16.mxu0 %v6699
  %8573 = vmatmul.mubr.bf16.gmra.mrb[0].mxu0 %v6698
  %v8574 = vpop.f32.mrb[0].mxu0
  %v8575 = vadd.f32 0.0, %v8574
  %v8576 = vpop.f32.mrb[0].mxu0
  %v8577 = vadd.f32 0.0, %v8576
  %v8578 = vpop.f32.mrb[0].mxu0
  %v8579 = vadd.f32 0.0, %v8578
  %v8580 = vpop.f32.mrb[0].mxu0
  %v8581 = vadd.f32 0.0, %v8580
  %8582 = vmatprep.mubr.bf16.mxu0 %v6703
  %8583 = vmatmul.mubr.bf16.gmra.mrb[0].mxu0 %v6702
  %v8584 = vpop.f32.mrb[0].mxu0
  %v8585 = vadd.f32 0.0, %v8584
  %v8586 = vpop.f32.mrb[0].mxu0
  %v8587 = vadd.f32 0.0, %v8586
  %v8588 = vpop.f32.mrb[0].mxu0
  %v8589 = vadd.f32 0.0, %v8588
  %v8590 = vpop.f32.mrb[0].mxu0
  %v8591 = vadd.f32 0.0, %v8590
  %8592 = vmatprep.mubr.bf16.mxu0 %v6707
  %8593 = vmatmul.mubr.bf16.gmra.mrb[0].mxu0 %v6706
  %v8594 = vpop.f32.mrb[0].mxu0
  %v8595 = vadd.f32 0.0, %v8594
  %v8596 = vpop.f32.mrb[0].mxu0
  %v8597 = vadd.f32 0.0, %v8596
  %v8598 = vpop.f32.mrb[0].mxu0
  %v8599 = vadd.f32 0.0, %v8598
  %v8600 = vpop.f32.mrb[0].mxu0
  %v8601 = vadd.f32 0.0, %v8600
  %8602 = vdwg.mxu0
  %8603 = vmatprep.subr.bf16.mxu0 %v6091
  %8604 = vmatpush1.bf16.msra.mxu0 %v6090
  %8605 = vmatprep.subr.bf16.mxu0 %v6098
  %8606 = vmatpush1.bf16.msra.mxu0 %v6097
  %8607 = vmatprep.subr.bf16.mxu0 %v6105
  %8608 = vmatpush1.bf16.msra.mxu0 %v6104
  %8609 = vmatprep.subr.bf16.mxu0 %v6112
  %8610 = vmatpush1.bf16.msra.mxu0 %v6111
  %8611 = vmatprep.subr.bf16.mxu0 %v6119
  %8612 = vmatpush1.bf16.msra.mxu0 %v6118
  %8613 = vmatprep.subr.bf16.mxu0 %v6126
  %8614 = vmatpush1.bf16.msra.mxu0 %v6125
  %8615 = vmatprep.subr.bf16.mxu0 %v6133
  %8616 = vmatpush1.bf16.msra.mxu0 %v6132
  %8617 = vmatprep.subr.bf16.mxu0 %v6140
  %8618 = vmatpush1.bf16.msra.mxu0 %v6139
  %8619 = vmatprep.subr.bf16.mxu0 %v6147
  %8620 = vmatpush1.bf16.msra.mxu0 %v6146
  %8621 = vmatprep.subr.bf16.mxu0 %v6154
  %8622 = vmatpush1.bf16.msra.mxu0 %v6153
  %8623 = vmatprep.subr.bf16.mxu0 %v6161
  %8624 = vmatpush1.bf16.msra.mxu0 %v6160
  %8625 = vmatprep.subr.bf16.mxu0 %v6168
  %8626 = vmatpush1.bf16.msra.mxu0 %v6167
  %8627 = vmatprep.subr.bf16.mxu0 %v6175
  %8628 = vmatpush1.bf16.msra.mxu0 %v6174
  %8629 = vmatprep.subr.bf16.mxu0 %v6182
  %8630 = vmatpush1.bf16.msra.mxu0 %v6181
  %8631 = vmatprep.subr.bf16.mxu0 %v6189
  %8632 = vmatpush1.bf16.msra.mxu0 %v6188
  %8633 = vmatprep.subr.bf16.mxu0 %v6196
  %8634 = vmatpush1.bf16.msra.mxu0 %v6195
  %8635 = vmatprep.mubr.bf16.mxu0 %v6585
  %8636 = vmatmul.mubr.bf16.gmra.mrb[0].mxu0 %v6584
  %v8637 = vpop.f32.mrb[0].mxu0
  %v8638 = vadd.f32 %v8285, %v8637
  %v8639 = vpop.f32.mrb[0].mxu0
  %v8640 = vadd.f32 %v8287, %v8639
  %v8641 = vpop.f32.mrb[0].mxu0
  %v8642 = vadd.f32 %v8289, %v8641
  %v8643 = vpop.f32.mrb[0].mxu0
  %v8644 = vadd.f32 %v8291, %v8643
  %8645 = vmatprep.mubr.bf16.mxu0 %v6589
  %8646 = vmatmul.mubr.bf16.gmra.mrb[0].mxu0 %v6588
  %v8647 = vpop.f32.mrb[0].mxu0
  %v8648 = vadd.f32 %v8295, %v8647
  %v8649 = vpop.f32.mrb[0].mxu0
  %v8650 = vadd.f32 %v8297, %v8649
  %v8651 = vpop.f32.mrb[0].mxu0
  %v8652 = vadd.f32 %v8299, %v8651
  %v8653 = vpop.f32.mrb[0].mxu0
  %v8654 = vadd.f32 %v8301, %v8653
  %8655 = vmatprep.mubr.bf16.mxu0 %v6593
  %8656 = vmatmul.mubr.bf16.gmra.mrb[0].mxu0 %v6592
  %v8657 = vpop.f32.mrb[0].mxu0
  %v8658 = vadd.f32 %v8305, %v8657
  %v8659 = vpop.f32.mrb[0].mxu0
  %v8660 = vadd.f32 %v8307, %v8659
  %v8661 = vpop.f32.mrb[0].mxu0
  %v8662 = vadd.f32 %v8309, %v8661
  %v8663 = vpop.f32.mrb[0].mxu0
  %v8664 = vadd.f32 %v8311, %v8663
  %8665 = vmatprep.mubr.bf16.mxu0 %v6597
  %8666 = vmatmul.mubr.bf16.gmra.mrb[0].mxu0 %v6596
  %v8667 = vpop.f32.mrb[0].mxu0
  %v8668 = vadd.f32 %v8315, %v8667
  %v8669 = vpop.f32.mrb[0].mxu0
  %v8670 = vadd.f32 %v8317, %v8669
  %v8671 = vpop.f32.mrb[0].mxu0
  %v8672 = vadd.f32 %v8319, %v8671
  %v8673 = vpop.f32.mrb[0].mxu0
  %v8674 = vadd.f32 %v8321, %v8673
  %8675 = vmatprep.mubr.bf16.mxu0 %v6601
  %8676 = vmatmul.mubr.bf16.gmra.mrb[0].mxu0 %v6600
  %v8677 = vpop.f32.mrb[0].mxu0
  %v8678 = vadd.f32 %v8325, %v8677
  %v8679 = vpop.f32.mrb[0].mxu0
  %v8680 = vadd.f32 %v8327, %v8679
  %v8681 = vpop.f32.mrb[0].mxu0
  %v8682 = vadd.f32 %v8329, %v8681
  %v8683 = vpop.f32.mrb[0].mxu0
  %v8684 = vadd.f32 %v8331, %v8683
  %8685 = vmatprep.mubr.bf16.mxu0 %v6605
  %8686 = vmatmul.mubr.bf16.gmra.mrb[0].mxu0 %v6604
  %v8687 = vpop.f32.mrb[0].mxu0
  %v8688 = vadd.f32 %v8335, %v8687
  %v8689 = vpop.f32.mrb[0].mxu0
  %v8690 = vadd.f32 %v8337, %v8689
  %v8691 = vpop.f32.mrb[0].mxu0
  %v8692 = vadd.f32 %v8339, %v8691
  %v8693 = vpop.f32.mrb[0].mxu0
  %v8694 = vadd.f32 %v8341, %v8693
  %8695 = vmatprep.mubr.bf16.mxu0 %v6609
  %8696 = vmatmul.mubr.bf16.gmra.mrb[0].mxu0 %v6608
  %v8697 = vpop.f32.mrb[0].mxu0
  %v8698 = vadd.f32 %v8345, %v8697
  %v8699 = vpop.f32.mrb[0].mxu0
  %v8700 = vadd.f32 %v8347, %v8699
  %v8701 = vpop.f32.mrb[0].mxu0
  %v8702 = vadd.f32 %v8349, %v8701
  %v8703 = vpop.f32.mrb[0].mxu0
  %v8704 = vadd.f32 %v8351, %v8703
  %8705 = vmatprep.mubr.bf16.mxu0 %v6613
  %8706 = vmatmul.mubr.bf16.gmra.mrb[0].mxu0 %v6612
  %v8707 = vpop.f32.mrb[0].mxu0
  %v8708 = vadd.f32 %v8355, %v8707
  %v8709 = vpop.f32.mrb[0].mxu0
  %v8710 = vadd.f32 %v8357, %v8709
  %v8711 = vpop.f32.mrb[0].mxu0
  %v8712 = vadd.f32 %v8359, %v8711
  %v8713 = vpop.f32.mrb[0].mxu0
  %v8714 = vadd.f32 %v8361, %v8713
  %8715 = vmatprep.mubr.bf16.mxu0 %v6617
  %8716 = vmatmul.mubr.bf16.gmra.mrb[0].mxu0 %v6616
  %v8717 = vpop.f32.mrb[0].mxu0
  %v8718 = vadd.f32 %v8365, %v8717
  %v8719 = vpop.f32.mrb[0].mxu0
  %v8720 = vadd.f32 %v8367, %v8719
  %v8721 = vpop.f32.mrb[0].mxu0
  %v8722 = vadd.f32 %v8369, %v8721
  %v8723 = vpop.f32.mrb[0].mxu0
  %v8724 = vadd.f32 %v8371, %v8723
  %8725 = vmatprep.mubr.bf16.mxu0 %v6621
  %8726 = vmatmul.mubr.bf16.gmra.mrb[0].mxu0 %v6620
  %v8727 = vpop.f32.mrb[0].mxu0
  %v8728 = vadd.f32 %v8375, %v8727
  %v8729 = vpop.f32.mrb[0].mxu0
  %v8730 = vadd.f32 %v8377, %v8729
  %v8731 = vpop.f32.mrb[0].mxu0
  %v8732 = vadd.f32 %v8379, %v8731
  %v8733 = vpop.f32.mrb[0].mxu0
  %v8734 = vadd.f32 %v8381, %v8733
  %8735 = vmatprep.mubr.bf16.mxu0 %v6625
  %8736 = vmatmul.mubr.bf16.gmra.mrb[0].mxu0 %v6624
  %v8737 = vpop.f32.mrb[0].mxu0
  %v8738 = vadd.f32 %v8385, %v8737
  %v8739 = vpop.f32.mrb[0].mxu0
  %v8740 = vadd.f32 %v8387, %v8739
  %v8741 = vpop.f32.mrb[0].mxu0
  %v8742 = vadd.f32 %v8389, %v8741
  %v8743 = vpop.f32.mrb[0].mxu0
  %v8744 = vadd.f32 %v8391, %v8743
  %8745 = vmatprep.mubr.bf16.mxu0 %v6629
  %8746 = vmatmul.mubr.bf16.gmra.mrb[0].mxu0 %v6628
  %v8747 = vpop.f32.mrb[0].mxu0
  %v8748 = vadd.f32 %v8395, %v8747
  %v8749 = vpop.f32.mrb[0].mxu0
  %v8750 = vadd.f32 %v8397, %v8749
  %v8751 = vpop.f32.mrb[0].mxu0
  %v8752 = vadd.f32 %v8399, %v8751
  %v8753 = vpop.f32.mrb[0].mxu0
  %v8754 = vadd.f32 %v8401, %v8753
  %8755 = vmatprep.mubr.bf16.mxu0 %v6633
  %8756 = vmatmul.mubr.bf16.gmra.mrb[0].mxu0 %v6632
  %v8757 = vpop.f32.mrb[0].mxu0
  %v8758 = vadd.f32 %v8405, %v8757
  %v8759 = vpop.f32.mrb[0].mxu0
  %v8760 = vadd.f32 %v8407, %v8759
  %v8761 = vpop.f32.mrb[0].mxu0
  %v8762 = vadd.f32 %v8409, %v8761
  %v8763 = vpop.f32.mrb[0].mxu0
  %v8764 = vadd.f32 %v8411, %v8763
  %8765 = vmatprep.mubr.bf16.mxu0 %v6637
  %8766 = vmatmul.mubr.bf16.gmra.mrb[0].mxu0 %v6636
  %v8767 = vpop.f32.mrb[0].mxu0
  %v8768 = vadd.f32 %v8415, %v8767
  %v8769 = vpop.f32.mrb[0].mxu0
  %v8770 = vadd.f32 %v8417, %v8769
  %v8771 = vpop.f32.mrb[0].mxu0
  %v8772 = vadd.f32 %v8419, %v8771
  %v8773 = vpop.f32.mrb[0].mxu0
  %v8774 = vadd.f32 %v8421, %v8773
  %8775 = vmatprep.mubr.bf16.mxu0 %v6641
  %8776 = vmatmul.mubr.bf16.gmra.mrb[0].mxu0 %v6640
  %v8777 = vpop.f32.mrb[0].mxu0
  %v8778 = vadd.f32 %v8425, %v8777
  %v8779 = vpop.f32.mrb[0].mxu0
  %v8780 = vadd.f32 %v8427, %v8779
  %v8781 = vpop.f32.mrb[0].mxu0
  %v8782 = vadd.f32 %v8429, %v8781
  %v8783 = vpop.f32.mrb[0].mxu0
  %v8784 = vadd.f32 %v8431, %v8783
  %8785 = vmatprep.mubr.bf16.mxu0 %v6645
  %8786 = vmatmul.mubr.bf16.gmra.mrb[0].mxu0 %v6644
  %v8787 = vpop.f32.mrb[0].mxu0
  %v8788 = vadd.f32 %v8435, %v8787
  %v8789 = vpop.f32.mrb[0].mxu0
  %v8790 = vadd.f32 %v8437, %v8789
  %v8791 = vpop.f32.mrb[0].mxu0
  %v8792 = vadd.f32 %v8439, %v8791
  %v8793 = vpop.f32.mrb[0].mxu0
  %v8794 = vadd.f32 %v8441, %v8793
  %8795 = vmatprep.mubr.bf16.mxu0 %v6649
  %8796 = vmatmul.mubr.bf16.gmra.mrb[0].mxu0 %v6648
  %v8797 = vpop.f32.mrb[0].mxu0
  %v8798 = vadd.f32 %v8445, %v8797
  %v8799 = vpop.f32.mrb[0].mxu0
  %v8800 = vadd.f32 %v8447, %v8799
  %v8801 = vpop.f32.mrb[0].mxu0
  %v8802 = vadd.f32 %v8449, %v8801
  %v8803 = vpop.f32.mrb[0].mxu0
  %v8804 = vadd.f32 %v8451, %v8803
  %8805 = vmatprep.mubr.bf16.mxu0 %v6653
  %8806 = vmatmul.mubr.bf16.gmra.mrb[0].mxu0 %v6652
  %v8807 = vpop.f32.mrb[0].mxu0
  %v8808 = vadd.f32 %v8455, %v8807
  %v8809 = vpop.f32.mrb[0].mxu0
  %v8810 = vadd.f32 %v8457, %v8809
  %v8811 = vpop.f32.mrb[0].mxu0
  %v8812 = vadd.f32 %v8459, %v8811
  %v8813 = vpop.f32.mrb[0].mxu0
  %v8814 = vadd.f32 %v8461, %v8813
  %8815 = vmatprep.mubr.bf16.mxu0 %v6657
  %8816 = vmatmul.mubr.bf16.gmra.mrb[0].mxu0 %v6656
  %v8817 = vpop.f32.mrb[0].mxu0
  %v8818 = vadd.f32 %v8465, %v8817
  %v8819 = vpop.f32.mrb[0].mxu0
  %v8820 = vadd.f32 %v8467, %v8819
  %v8821 = vpop.f32.mrb[0].mxu0
  %v8822 = vadd.f32 %v8469, %v8821
  %v8823 = vpop.f32.mrb[0].mxu0
  %v8824 = vadd.f32 %v8471, %v8823
  %8825 = vmatprep.mubr.bf16.mxu0 %v6661
  %8826 = vmatmul.mubr.bf16.gmra.mrb[0].mxu0 %v6660
  %v8827 = vpop.f32.mrb[0].mxu0
  %v8828 = vadd.f32 %v8475, %v8827
  %v8829 = vpop.f32.mrb[0].mxu0
  %v8830 = vadd.f32 %v8477, %v8829
  %v8831 = vpop.f32.mrb[0].mxu0
  %v8832 = vadd.f32 %v8479, %v8831
  %v8833 = vpop.f32.mrb[0].mxu0
  %v8834 = vadd.f32 %v8481, %v8833
  %8835 = vmatprep.mubr.bf16.mxu0 %v6665
  %8836 = vmatmul.mubr.bf16.gmra.mrb[0].mxu0 %v6664
  %v8837 = vpop.f32.mrb[0].mxu0
  %v8838 = vadd.f32 %v8485, %v8837
  %v8839 = vpop.f32.mrb[0].mxu0
  %v8840 = vadd.f32 %v8487, %v8839
  %v8841 = vpop.f32.mrb[0].mxu0
  %v8842 = vadd.f32 %v8489, %v8841
  %v8843 = vpop.f32.mrb[0].mxu0
  %v8844 = vadd.f32 %v8491, %v8843
  %8845 = vmatprep.mubr.bf16.mxu0 %v6669
  %8846 = vmatmul.mubr.bf16.gmra.mrb[0].mxu0 %v6668
  %v8847 = vpop.f32.mrb[0].mxu0
  %v8848 = vadd.f32 %v8495, %v8847
  %v8849 = vpop.f32.mrb[0].mxu0
  %v8850 = vadd.f32 %v8497, %v8849
  %v8851 = vpop.f32.mrb[0].mxu0
  %v8852 = vadd.f32 %v8499, %v8851
  %v8853 = vpop.f32.mrb[0].mxu0
  %v8854 = vadd.f32 %v8501, %v8853
  %8855 = vmatprep.mubr.bf16.mxu0 %v6673
  %8856 = vmatmul.mubr.bf16.gmra.mrb[0].mxu0 %v6672
  %v8857 = vpop.f32.mrb[0].mxu0
  %v8858 = vadd.f32 %v8505, %v8857
  %v8859 = vpop.f32.mrb[0].mxu0
  %v8860 = vadd.f32 %v8507, %v8859
  %v8861 = vpop.f32.mrb[0].mxu0
  %v8862 = vadd.f32 %v8509, %v8861
  %v8863 = vpop.f32.mrb[0].mxu0
  %v8864 = vadd.f32 %v8511, %v8863
  %8865 = vmatprep.mubr.bf16.mxu0 %v6677
  %8866 = vmatmul.mubr.bf16.gmra.mrb[0].mxu0 %v6676
  %v8867 = vpop.f32.mrb[0].mxu0
  %v8868 = vadd.f32 %v8515, %v8867
  %v8869 = vpop.f32.mrb[0].mxu0
  %v8870 = vadd.f32 %v8517, %v8869
  %v8871 = vpop.f32.mrb[0].mxu0
  %v8872 = vadd.f32 %v8519, %v8871
  %v8873 = vpop.f32.mrb[0].mxu0
  %v8874 = vadd.f32 %v8521, %v8873
  %8875 = vmatprep.mubr.bf16.mxu0 %v6681
  %8876 = vmatmul.mubr.bf16.gmra.mrb[0].mxu0 %v6680
  %v8877 = vpop.f32.mrb[0].mxu0
  %v8878 = vadd.f32 %v8525, %v8877
  %v8879 = vpop.f32.mrb[0].mxu0
  %v8880 = vadd.f32 %v8527, %v8879
  %v8881 = vpop.f32.mrb[0].mxu0
  %v8882 = vadd.f32 %v8529, %v8881
  %v8883 = vpop.f32.mrb[0].mxu0
  %v8884 = vadd.f32 %v8531, %v8883
  %8885 = vmatprep.mubr.bf16.mxu0 %v6685
  %8886 = vmatmul.mubr.bf16.gmra.mrb[0].mxu0 %v6684
  %v8887 = vpop.f32.mrb[0].mxu0
  %v8888 = vadd.f32 %v8535, %v8887
  %v8889 = vpop.f32.mrb[0].mxu0
  %v8890 = vadd.f32 %v8537, %v8889
  %v8891 = vpop.f32.mrb[0].mxu0
  %v8892 = vadd.f32 %v8539, %v8891
  %v8893 = vpop.f32.mrb[0].mxu0
  %v8894 = vadd.f32 %v8541, %v8893
  %8895 = vmatprep.mubr.bf16.mxu0 %v6689
  %8896 = vmatmul.mubr.bf16.gmra.mrb[0].mxu0 %v6688
  %v8897 = vpop.f32.mrb[0].mxu0
  %v8898 = vadd.f32 %v8545, %v8897
  %v8899 = vpop.f32.mrb[0].mxu0
  %v8900 = vadd.f32 %v8547, %v8899
  %v8901 = vpop.f32.mrb[0].mxu0
  %v8902 = vadd.f32 %v8549, %v8901
  %v8903 = vpop.f32.mrb[0].mxu0
  %v8904 = vadd.f32 %v8551, %v8903
  %8905 = vmatprep.mubr.bf16.mxu0 %v6693
  %8906 = vmatmul.mubr.bf16.gmra.mrb[0].mxu0 %v6692
  %v8907 = vpop.f32.mrb[0].mxu0
  %v8908 = vadd.f32 %v8555, %v8907
  %v8909 = vpop.f32.mrb[0].mxu0
  %v8910 = vadd.f32 %v8557, %v8909
  %v8911 = vpop.f32.mrb[0].mxu0
  %v8912 = vadd.f32 %v8559, %v8911
  %v8913 = vpop.f32.mrb[0].mxu0
  %v8914 = vadd.f32 %v8561, %v8913
  %8915 = vmatprep.mubr.bf16.mxu0 %v6697
  %8916 = vmatmul.mubr.bf16.gmra.mrb[0].mxu0 %v6696
  %v8917 = vpop.f32.mrb[0].mxu0
  %v8918 = vadd.f32 %v8565, %v8917
  %v8919 = vpop.f32.mrb[0].mxu0
  %v8920 = vadd.f32 %v8567, %v8919
  %v8921 = vpop.f32.mrb[0].mxu0
  %v8922 = vadd.f32 %v8569, %v8921
  %v8923 = vpop.f32.mrb[0].mxu0
  %v8924 = vadd.f32 %v8571, %v8923
  %8925 = vmatprep.mubr.bf16.mxu0 %v6701
  %8926 = vmatmul.mubr.bf16.gmra.mrb[0].mxu0 %v6700
  %v8927 = vpop.f32.mrb[0].mxu0
  %v8928 = vadd.f32 %v8575, %v8927
  %v8929 = vpop.f32.mrb[0].mxu0
  %v8930 = vadd.f32 %v8577, %v8929
  %v8931 = vpop.f32.mrb[0].mxu0
  %v8932 = vadd.f32 %v8579, %v8931
  %v8933 = vpop.f32.mrb[0].mxu0
  %v8934 = vadd.f32 %v8581, %v8933
  %8935 = vmatprep.mubr.bf16.mxu0 %v6705
  %8936 = vmatmul.mubr.bf16.gmra.mrb[0].mxu0 %v6704
  %v8937 = vpop.f32.mrb[0].mxu0
  %v8938 = vadd.f32 %v8585, %v8937
  %v8939 = vpop.f32.mrb[0].mxu0
  %v8940 = vadd.f32 %v8587, %v8939
  %v8941 = vpop.f32.mrb[0].mxu0
  %v8942 = vadd.f32 %v8589, %v8941
  %v8943 = vpop.f32.mrb[0].mxu0
  %v8944 = vadd.f32 %v8591, %v8943
  %8945 = vmatprep.mubr.bf16.mxu0 %v6709
  %8946 = vmatmul.mubr.bf16.gmra.mrb[0].mxu0 %v6708
  %v8947 = vpop.f32.mrb[0].mxu0
  %v8948 = vadd.f32 %v8595, %v8947
  %v8949 = vpop.f32.mrb[0].mxu0
  %v8950 = vadd.f32 %v8597, %v8949
  %v8951 = vpop.f32.mrb[0].mxu0
  %v8952 = vadd.f32 %v8599, %v8951
  %v8953 = vpop.f32.mrb[0].mxu0
  %v8954 = vadd.f32 %v8601, %v8953
  %8955 = vdwg.mxu0
  %8956 = vmatprep.subr.bf16.mxu0 0
  %8957 = vmatpush1.bf16.msra.mxu0 %v5980
  %8958 = vmatprep.subr.bf16.mxu0 0
  %8959 = vmatpush1.bf16.msra.mxu0 %v5987
  %8960 = vmatprep.subr.bf16.mxu0 0
  %8961 = vmatpush1.bf16.msra.mxu0 %v5994
  %8962 = vmatprep.subr.bf16.mxu0 0
  %8963 = vmatpush1.bf16.msra.mxu0 %v6001
  %8964 = vmatprep.subr.bf16.mxu0 0
  %8965 = vmatpush1.bf16.msra.mxu0 %v6008
  %8966 = vmatprep.subr.bf16.mxu0 0
  %8967 = vmatpush1.bf16.msra.mxu0 %v6015
  %8968 = vmatprep.subr.bf16.mxu0 0
  %8969 = vmatpush1.bf16.msra.mxu0 %v6022
  %8970 = vmatprep.subr.bf16.mxu0 0
  %8971 = vmatpush1.bf16.msra.mxu0 %v6029
  %8972 = vmatprep.subr.bf16.mxu0 0
  %8973 = vmatpush1.bf16.msra.mxu0 %v6036
  %8974 = vmatprep.subr.bf16.mxu0 0
  %8975 = vmatpush1.bf16.msra.mxu0 %v6043
  %8976 = vmatprep.subr.bf16.mxu0 0
  %8977 = vmatpush1.bf16.msra.mxu0 %v6050
  %8978 = vmatprep.subr.bf16.mxu0 0
  %8979 = vmatpush1.bf16.msra.mxu0 %v6057
  %8980 = vmatprep.subr.bf16.mxu0 0
  %8981 = vmatpush1.bf16.msra.mxu0 %v6064
  %8982 = vmatprep.subr.bf16.mxu0 0
  %8983 = vmatpush1.bf16.msra.mxu0 %v6071
  %8984 = vmatprep.subr.bf16.mxu0 0
  %8985 = vmatpush1.bf16.msra.mxu0 %v6078
  %8986 = vmatprep.subr.bf16.mxu0 0
  %8987 = vmatpush1.bf16.msra.mxu0 %v6085
  %8988 = vmatprep.mubr.bf16.mxu0 %v6583
  %8989 = vmatmul.mubr.bf16.gmra.mrb[0].mxu0 %v6582
  %v8990 = vpop.f32.mrb[0].mxu0
  %v8991 = vadd.f32 0.0, %v8990
  %v8992 = vpop.f32.mrb[0].mxu0
  %v8993 = vpop.f32.mrb[0].mxu0
  %v8994 = vadd.f32 0.0, %v8993
  %v8995 = vpop.f32.mrb[0].mxu0
  %8996 = vmatprep.mubr.bf16.mxu0 %v6587
  %8997 = vmatmul.mubr.bf16.gmra.mrb[0].mxu0 %v6586
  %v8998 = vpop.f32.mrb[0].mxu0
  %v8999 = vadd.f32 0.0, %v8998
  %v9000 = vpop.f32.mrb[0].mxu0
  %v9001 = vpop.f32.mrb[0].mxu0
  %v9002 = vadd.f32 0.0, %v9001
  %v9003 = vpop.f32.mrb[0].mxu0
  %9004 = vmatprep.mubr.bf16.mxu0 %v6591
  %9005 = vmatmul.mubr.bf16.gmra.mrb[0].mxu0 %v6590
  %v9006 = vpop.f32.mrb[0].mxu0
  %v9007 = vadd.f32 0.0, %v9006
  %v9008 = vpop.f32.mrb[0].mxu0
  %v9009 = vpop.f32.mrb[0].mxu0
  %v9010 = vadd.f32 0.0, %v9009
  %v9011 = vpop.f32.mrb[0].mxu0
  %9012 = vmatprep.mubr.bf16.mxu0 %v6595
  %9013 = vmatmul.mubr.bf16.gmra.mrb[0].mxu0 %v6594
  %v9014 = vpop.f32.mrb[0].mxu0
  %v9015 = vadd.f32 0.0, %v9014
  %v9016 = vpop.f32.mrb[0].mxu0
  %v9017 = vpop.f32.mrb[0].mxu0
  %v9018 = vadd.f32 0.0, %v9017
  %v9019 = vpop.f32.mrb[0].mxu0
  %9020 = vmatprep.mubr.bf16.mxu0 %v6599
  %9021 = vmatmul.mubr.bf16.gmra.mrb[0].mxu0 %v6598
  %v9022 = vpop.f32.mrb[0].mxu0
  %v9023 = vadd.f32 0.0, %v9022
  %v9024 = vpop.f32.mrb[0].mxu0
  %v9025 = vpop.f32.mrb[0].mxu0
  %v9026 = vadd.f32 0.0, %v9025
  %v9027 = vpop.f32.mrb[0].mxu0
  %9028 = vmatprep.mubr.bf16.mxu0 %v6603
  %9029 = vmatmul.mubr.bf16.gmra.mrb[0].mxu0 %v6602
  %v9030 = vpop.f32.mrb[0].mxu0
  %v9031 = vadd.f32 0.0, %v9030
  %v9032 = vpop.f32.mrb[0].mxu0
  %v9033 = vpop.f32.mrb[0].mxu0
  %v9034 = vadd.f32 0.0, %v9033
  %v9035 = vpop.f32.mrb[0].mxu0
  %9036 = vmatprep.mubr.bf16.mxu0 %v6607
  %9037 = vmatmul.mubr.bf16.gmra.mrb[0].mxu0 %v6606
  %v9038 = vpop.f32.mrb[0].mxu0
  %v9039 = vadd.f32 0.0, %v9038
  %v9040 = vpop.f32.mrb[0].mxu0
  %v9041 = vpop.f32.mrb[0].mxu0
  %v9042 = vadd.f32 0.0, %v9041
  %v9043 = vpop.f32.mrb[0].mxu0
  %9044 = vmatprep.mubr.bf16.mxu0 %v6611
  %9045 = vmatmul.mubr.bf16.gmra.mrb[0].mxu0 %v6610
  %v9046 = vpop.f32.mrb[0].mxu0
  %v9047 = vadd.f32 0.0, %v9046
  %v9048 = vpop.f32.mrb[0].mxu0
  %v9049 = vpop.f32.mrb[0].mxu0
  %v9050 = vadd.f32 0.0, %v9049
  %v9051 = vpop.f32.mrb[0].mxu0
  %9052 = vmatprep.mubr.bf16.mxu0 %v6615
  %9053 = vmatmul.mubr.bf16.gmra.mrb[0].mxu0 %v6614
  %v9054 = vpop.f32.mrb[0].mxu0
  %v9055 = vadd.f32 0.0, %v9054
  %v9056 = vpop.f32.mrb[0].mxu0
  %v9057 = vpop.f32.mrb[0].mxu0
  %v9058 = vadd.f32 0.0, %v9057
  %v9059 = vpop.f32.mrb[0].mxu0
  %9060 = vmatprep.mubr.bf16.mxu0 %v6619
  %9061 = vmatmul.mubr.bf16.gmra.mrb[0].mxu0 %v6618
  %v9062 = vpop.f32.mrb[0].mxu0
  %v9063 = vadd.f32 0.0, %v9062
  %v9064 = vpop.f32.mrb[0].mxu0
  %v9065 = vpop.f32.mrb[0].mxu0
  %v9066 = vadd.f32 0.0, %v9065
  %v9067 = vpop.f32.mrb[0].mxu0
  %9068 = vmatprep.mubr.bf16.mxu0 %v6623
  %9069 = vmatmul.mubr.bf16.gmra.mrb[0].mxu0 %v6622
  %v9070 = vpop.f32.mrb[0].mxu0
  %v9071 = vadd.f32 0.0, %v9070
  %v9072 = vpop.f32.mrb[0].mxu0
  %v9073 = vpop.f32.mrb[0].mxu0
  %v9074 = vadd.f32 0.0, %v9073
  %v9075 = vpop.f32.mrb[0].mxu0
  %9076 = vmatprep.mubr.bf16.mxu0 %v6627
  %9077 = vmatmul.mubr.bf16.gmra.mrb[0].mxu0 %v6626
  %v9078 = vpop.f32.mrb[0].mxu0
  %v9079 = vadd.f32 0.0, %v9078
  %v9080 = vpop.f32.mrb[0].mxu0
  %v9081 = vpop.f32.mrb[0].mxu0
  %v9082 = vadd.f32 0.0, %v9081
  %v9083 = vpop.f32.mrb[0].mxu0
  %9084 = vmatprep.mubr.bf16.mxu0 %v6631
  %9085 = vmatmul.mubr.bf16.gmra.mrb[0].mxu0 %v6630
  %v9086 = vpop.f32.mrb[0].mxu0
  %v9087 = vadd.f32 0.0, %v9086
  %v9088 = vpop.f32.mrb[0].mxu0
  %v9089 = vpop.f32.mrb[0].mxu0
  %v9090 = vadd.f32 0.0, %v9089
  %v9091 = vpop.f32.mrb[0].mxu0
  %9092 = vmatprep.mubr.bf16.mxu0 %v6635
  %9093 = vmatmul.mubr.bf16.gmra.mrb[0].mxu0 %v6634
  %v9094 = vpop.f32.mrb[0].mxu0
  %v9095 = vadd.f32 0.0, %v9094
  %v9096 = vpop.f32.mrb[0].mxu0
  %v9097 = vpop.f32.mrb[0].mxu0
  %v9098 = vadd.f32 0.0, %v9097
  %v9099 = vpop.f32.mrb[0].mxu0
  %9100 = vmatprep.mubr.bf16.mxu0 %v6639
  %9101 = vmatmul.mubr.bf16.gmra.mrb[0].mxu0 %v6638
  %v9102 = vpop.f32.mrb[0].mxu0
  %v9103 = vadd.f32 0.0, %v9102
  %v9104 = vpop.f32.mrb[0].mxu0
  %v9105 = vpop.f32.mrb[0].mxu0
  %v9106 = vadd.f32 0.0, %v9105
  %v9107 = vpop.f32.mrb[0].mxu0
  %9108 = vmatprep.mubr.bf16.mxu0 %v6643
  %9109 = vmatmul.mubr.bf16.gmra.mrb[0].mxu0 %v6642
  %v9110 = vpop.f32.mrb[0].mxu0
  %v9111 = vadd.f32 0.0, %v9110
  %v9112 = vpop.f32.mrb[0].mxu0
  %v9113 = vpop.f32.mrb[0].mxu0
  %v9114 = vadd.f32 0.0, %v9113
  %v9115 = vpop.f32.mrb[0].mxu0
  %9116 = vmatprep.mubr.bf16.mxu0 %v6647
  %9117 = vmatmul.mubr.bf16.gmra.mrb[0].mxu0 %v6646
  %v9118 = vpop.f32.mrb[0].mxu0
  %v9119 = vadd.f32 0.0, %v9118
  %v9120 = vpop.f32.mrb[0].mxu0
  %v9121 = vpop.f32.mrb[0].mxu0
  %v9122 = vadd.f32 0.0, %v9121
  %v9123 = vpop.f32.mrb[0].mxu0
  %9124 = vmatprep.mubr.bf16.mxu0 %v6651
  %9125 = vmatmul.mubr.bf16.gmra.mrb[0].mxu0 %v6650
  %v9126 = vpop.f32.mrb[0].mxu0
  %v9127 = vadd.f32 0.0, %v9126
  %v9128 = vpop.f32.mrb[0].mxu0
  %v9129 = vpop.f32.mrb[0].mxu0
  %v9130 = vadd.f32 0.0, %v9129
  %v9131 = vpop.f32.mrb[0].mxu0
  %9132 = vmatprep.mubr.bf16.mxu0 %v6655
  %9133 = vmatmul.mubr.bf16.gmra.mrb[0].mxu0 %v6654
  %v9134 = vpop.f32.mrb[0].mxu0
  %v9135 = vadd.f32 0.0, %v9134
  %v9136 = vpop.f32.mrb[0].mxu0
  %v9137 = vpop.f32.mrb[0].mxu0
  %v9138 = vadd.f32 0.0, %v9137
  %v9139 = vpop.f32.mrb[0].mxu0
  %9140 = vmatprep.mubr.bf16.mxu0 %v6659
  %9141 = vmatmul.mubr.bf16.gmra.mrb[0].mxu0 %v6658
  %v9142 = vpop.f32.mrb[0].mxu0
  %v9143 = vadd.f32 0.0, %v9142
  %v9144 = vpop.f32.mrb[0].mxu0
  %v9145 = vpop.f32.mrb[0].mxu0
  %v9146 = vadd.f32 0.0, %v9145
  %v9147 = vpop.f32.mrb[0].mxu0
  %9148 = vmatprep.mubr.bf16.mxu0 %v6663
  %9149 = vmatmul.mubr.bf16.gmra.mrb[0].mxu0 %v6662
  %v9150 = vpop.f32.mrb[0].mxu0
  %v9151 = vadd.f32 0.0, %v9150
  %v9152 = vpop.f32.mrb[0].mxu0
  %v9153 = vpop.f32.mrb[0].mxu0
  %v9154 = vadd.f32 0.0, %v9153
  %v9155 = vpop.f32.mrb[0].mxu0
  %9156 = vmatprep.mubr.bf16.mxu0 %v6667
  %9157 = vmatmul.mubr.bf16.gmra.mrb[0].mxu0 %v6666
  %v9158 = vpop.f32.mrb[0].mxu0
  %v9159 = vadd.f32 0.0, %v9158
  %v9160 = vpop.f32.mrb[0].mxu0
  %v9161 = vpop.f32.mrb[0].mxu0
  %v9162 = vadd.f32 0.0, %v9161
  %v9163 = vpop.f32.mrb[0].mxu0
  %9164 = vmatprep.mubr.bf16.mxu0 %v6671
  %9165 = vmatmul.mubr.bf16.gmra.mrb[0].mxu0 %v6670
  %v9166 = vpop.f32.mrb[0].mxu0
  %v9167 = vadd.f32 0.0, %v9166
  %v9168 = vpop.f32.mrb[0].mxu0
  %v9169 = vpop.f32.mrb[0].mxu0
  %v9170 = vadd.f32 0.0, %v9169
  %v9171 = vpop.f32.mrb[0].mxu0
  %9172 = vmatprep.mubr.bf16.mxu0 %v6675
  %9173 = vmatmul.mubr.bf16.gmra.mrb[0].mxu0 %v6674
  %v9174 = vpop.f32.mrb[0].mxu0
  %v9175 = vadd.f32 0.0, %v9174
  %v9176 = vpop.f32.mrb[0].mxu0
  %v9177 = vpop.f32.mrb[0].mxu0
  %v9178 = vadd.f32 0.0, %v9177
  %v9179 = vpop.f32.mrb[0].mxu0
  %9180 = vmatprep.mubr.bf16.mxu0 %v6679
  %9181 = vmatmul.mubr.bf16.gmra.mrb[0].mxu0 %v6678
  %v9182 = vpop.f32.mrb[0].mxu0
  %v9183 = vadd.f32 0.0, %v9182
  %v9184 = vpop.f32.mrb[0].mxu0
  %v9185 = vpop.f32.mrb[0].mxu0
  %v9186 = vadd.f32 0.0, %v9185
  %v9187 = vpop.f32.mrb[0].mxu0
  %9188 = vmatprep.mubr.bf16.mxu0 %v6683
  %9189 = vmatmul.mubr.bf16.gmra.mrb[0].mxu0 %v6682
  %v9190 = vpop.f32.mrb[0].mxu0
  %v9191 = vadd.f32 0.0, %v9190
  %v9192 = vpop.f32.mrb[0].mxu0
  %v9193 = vpop.f32.mrb[0].mxu0
  %v9194 = vadd.f32 0.0, %v9193
  %v9195 = vpop.f32.mrb[0].mxu0
  %9196 = vmatprep.mubr.bf16.mxu0 %v6687
  %9197 = vmatmul.mubr.bf16.gmra.mrb[0].mxu0 %v6686
  %v9198 = vpop.f32.mrb[0].mxu0
  %v9199 = vadd.f32 0.0, %v9198
  %v9200 = vpop.f32.mrb[0].mxu0
  %v9201 = vpop.f32.mrb[0].mxu0
  %v9202 = vadd.f32 0.0, %v9201
  %v9203 = vpop.f32.mrb[0].mxu0
  %9204 = vmatprep.mubr.bf16.mxu0 %v6691
  %9205 = vmatmul.mubr.bf16.gmra.mrb[0].mxu0 %v6690
  %v9206 = vpop.f32.mrb[0].mxu0
  %v9207 = vadd.f32 0.0, %v9206
  %v9208 = vpop.f32.mrb[0].mxu0
  %v9209 = vpop.f32.mrb[0].mxu0
  %v9210 = vadd.f32 0.0, %v9209
  %v9211 = vpop.f32.mrb[0].mxu0
  %9212 = vmatprep.mubr.bf16.mxu0 %v6695
  %9213 = vmatmul.mubr.bf16.gmra.mrb[0].mxu0 %v6694
  %v9214 = vpop.f32.mrb[0].mxu0
  %v9215 = vadd.f32 0.0, %v9214
  %v9216 = vpop.f32.mrb[0].mxu0
  %v9217 = vpop.f32.mrb[0].mxu0
  %v9218 = vadd.f32 0.0, %v9217
  %v9219 = vpop.f32.mrb[0].mxu0
  %9220 = vmatprep.mubr.bf16.mxu0 %v6699
  %9221 = vmatmul.mubr.bf16.gmra.mrb[0].mxu0 %v6698
  %v9222 = vpop.f32.mrb[0].mxu0
  %v9223 = vadd.f32 0.0, %v9222
  %v9224 = vpop.f32.mrb[0].mxu0
  %v9225 = vpop.f32.mrb[0].mxu0
  %v9226 = vadd.f32 0.0, %v9225
  %v9227 = vpop.f32.mrb[0].mxu0
  %9228 = vmatprep.mubr.bf16.mxu0 %v6703
  %9229 = vmatmul.mubr.bf16.gmra.mrb[0].mxu0 %v6702
  %v9230 = vpop.f32.mrb[0].mxu0
  %v9231 = vadd.f32 0.0, %v9230
  %v9232 = vpop.f32.mrb[0].mxu0
  %v9233 = vpop.f32.mrb[0].mxu0
  %v9234 = vadd.f32 0.0, %v9233
  %v9235 = vpop.f32.mrb[0].mxu0
  %9236 = vmatprep.mubr.bf16.mxu0 %v6707
  %9237 = vmatmul.mubr.bf16.gmra.mrb[0].mxu0 %v6706
  %v9238 = vpop.f32.mrb[0].mxu0
  %v9239 = vadd.f32 0.0, %v9238
  %v9240 = vpop.f32.mrb[0].mxu0
  %v9241 = vpop.f32.mrb[0].mxu0
  %v9242 = vadd.f32 0.0, %v9241
  %v9243 = vpop.f32.mrb[0].mxu0
  %9244 = vdwg.mxu0
  %9245 = vmatprep.subr.bf16.mxu0 0
  %9246 = vmatpush1.bf16.msra.mxu0 %v6092
  %9247 = vmatprep.subr.bf16.mxu0 0
  %9248 = vmatpush1.bf16.msra.mxu0 %v6099
  %9249 = vmatprep.subr.bf16.mxu0 0
  %9250 = vmatpush1.bf16.msra.mxu0 %v6106
  %9251 = vmatprep.subr.bf16.mxu0 0
  %9252 = vmatpush1.bf16.msra.mxu0 %v6113
  %9253 = vmatprep.subr.bf16.mxu0 0
  %9254 = vmatpush1.bf16.msra.mxu0 %v6120
  %9255 = vmatprep.subr.bf16.mxu0 0
  %9256 = vmatpush1.bf16.msra.mxu0 %v6127
  %9257 = vmatprep.subr.bf16.mxu0 0
  %9258 = vmatpush1.bf16.msra.mxu0 %v6134
  %9259 = vmatprep.subr.bf16.mxu0 0
  %9260 = vmatpush1.bf16.msra.mxu0 %v6141
  %9261 = vmatprep.subr.bf16.mxu0 0
  %9262 = vmatpush1.bf16.msra.mxu0 %v6148
  %9263 = vmatprep.subr.bf16.mxu0 0
  %9264 = vmatpush1.bf16.msra.mxu0 %v6155
  %9265 = vmatprep.subr.bf16.mxu0 0
  %9266 = vmatpush1.bf16.msra.mxu0 %v6162
  %9267 = vmatprep.subr.bf16.mxu0 0
  %9268 = vmatpush1.bf16.msra.mxu0 %v6169
  %9269 = vmatprep.subr.bf16.mxu0 0
  %9270 = vmatpush1.bf16.msra.mxu0 %v6176
  %9271 = vmatprep.subr.bf16.mxu0 0
  %9272 = vmatpush1.bf16.msra.mxu0 %v6183
  %9273 = vmatprep.subr.bf16.mxu0 0
  %9274 = vmatpush1.bf16.msra.mxu0 %v6190
  %9275 = vmatprep.subr.bf16.mxu0 0
  %9276 = vmatpush1.bf16.msra.mxu0 %v6197
  %9277 = vmatprep.mubr.bf16.mxu0 %v6585
  %9278 = vmatmul.mubr.bf16.gmra.mrb[0].mxu0 %v6584
  %v9279 = vpop.f32.mrb[0].mxu0
  %v9280 = vadd.f32 %v8991, %v9279
  %v9281 = vpop.f32.mrb[0].mxu0
  %v9282 = vpop.f32.mrb[0].mxu0
  %v9283 = vadd.f32 %v8994, %v9282
  %v9284 = vpop.f32.mrb[0].mxu0
  %9285 = vmatprep.mubr.bf16.mxu0 %v6589
  %9286 = vmatmul.mubr.bf16.gmra.mrb[0].mxu0 %v6588
  %v9287 = vpop.f32.mrb[0].mxu0
  %v9288 = vadd.f32 %v8999, %v9287
  %v9289 = vpop.f32.mrb[0].mxu0
  %v9290 = vpop.f32.mrb[0].mxu0
  %v9291 = vadd.f32 %v9002, %v9290
  %v9292 = vpop.f32.mrb[0].mxu0
  %9293 = vmatprep.mubr.bf16.mxu0 %v6593
  %9294 = vmatmul.mubr.bf16.gmra.mrb[0].mxu0 %v6592
  %v9295 = vpop.f32.mrb[0].mxu0
  %v9296 = vadd.f32 %v9007, %v9295
  %v9297 = vpop.f32.mrb[0].mxu0
  %v9298 = vpop.f32.mrb[0].mxu0
  %v9299 = vadd.f32 %v9010, %v9298
  %v9300 = vpop.f32.mrb[0].mxu0
  %9301 = vmatprep.mubr.bf16.mxu0 %v6597
  %9302 = vmatmul.mubr.bf16.gmra.mrb[0].mxu0 %v6596
  %v9303 = vpop.f32.mrb[0].mxu0
  %v9304 = vadd.f32 %v9015, %v9303
  %v9305 = vpop.f32.mrb[0].mxu0
  %v9306 = vpop.f32.mrb[0].mxu0
  %v9307 = vadd.f32 %v9018, %v9306
  %v9308 = vpop.f32.mrb[0].mxu0
  %9309 = vmatprep.mubr.bf16.mxu0 %v6601
  %9310 = vmatmul.mubr.bf16.gmra.mrb[0].mxu0 %v6600
  %v9311 = vpop.f32.mrb[0].mxu0
  %v9312 = vadd.f32 %v9023, %v9311
  %v9313 = vpop.f32.mrb[0].mxu0
  %v9314 = vpop.f32.mrb[0].mxu0
  %v9315 = vadd.f32 %v9026, %v9314
  %v9316 = vpop.f32.mrb[0].mxu0
  %9317 = vmatprep.mubr.bf16.mxu0 %v6605
  %9318 = vmatmul.mubr.bf16.gmra.mrb[0].mxu0 %v6604
  %v9319 = vpop.f32.mrb[0].mxu0
  %v9320 = vadd.f32 %v9031, %v9319
  %v9321 = vpop.f32.mrb[0].mxu0
  %v9322 = vpop.f32.mrb[0].mxu0
  %v9323 = vadd.f32 %v9034, %v9322
  %v9324 = vpop.f32.mrb[0].mxu0
  %9325 = vmatprep.mubr.bf16.mxu0 %v6609
  %9326 = vmatmul.mubr.bf16.gmra.mrb[0].mxu0 %v6608
  %v9327 = vpop.f32.mrb[0].mxu0
  %v9328 = vadd.f32 %v9039, %v9327
  %v9329 = vpop.f32.mrb[0].mxu0
  %v9330 = vpop.f32.mrb[0].mxu0
  %v9331 = vadd.f32 %v9042, %v9330
  %v9332 = vpop.f32.mrb[0].mxu0
  %9333 = vmatprep.mubr.bf16.mxu0 %v6613
  %9334 = vmatmul.mubr.bf16.gmra.mrb[0].mxu0 %v6612
  %v9335 = vpop.f32.mrb[0].mxu0
  %v9336 = vadd.f32 %v9047, %v9335
  %v9337 = vpop.f32.mrb[0].mxu0
  %v9338 = vpop.f32.mrb[0].mxu0
  %v9339 = vadd.f32 %v9050, %v9338
  %v9340 = vpop.f32.mrb[0].mxu0
  %9341 = vmatprep.mubr.bf16.mxu0 %v6617
  %9342 = vmatmul.mubr.bf16.gmra.mrb[0].mxu0 %v6616
  %v9343 = vpop.f32.mrb[0].mxu0
  %v9344 = vadd.f32 %v9055, %v9343
  %v9345 = vpop.f32.mrb[0].mxu0
  %v9346 = vpop.f32.mrb[0].mxu0
  %v9347 = vadd.f32 %v9058, %v9346
  %v9348 = vpop.f32.mrb[0].mxu0
  %9349 = vmatprep.mubr.bf16.mxu0 %v6621
  %9350 = vmatmul.mubr.bf16.gmra.mrb[0].mxu0 %v6620
  %v9351 = vpop.f32.mrb[0].mxu0
  %v9352 = vadd.f32 %v9063, %v9351
  %v9353 = vpop.f32.mrb[0].mxu0
  %v9354 = vpop.f32.mrb[0].mxu0
  %v9355 = vadd.f32 %v9066, %v9354
  %v9356 = vpop.f32.mrb[0].mxu0
  %9357 = vmatprep.mubr.bf16.mxu0 %v6625
  %9358 = vmatmul.mubr.bf16.gmra.mrb[0].mxu0 %v6624
  %v9359 = vpop.f32.mrb[0].mxu0
  %v9360 = vadd.f32 %v9071, %v9359
  %v9361 = vpop.f32.mrb[0].mxu0
  %v9362 = vpop.f32.mrb[0].mxu0
  %v9363 = vadd.f32 %v9074, %v9362
  %v9364 = vpop.f32.mrb[0].mxu0
  %9365 = vmatprep.mubr.bf16.mxu0 %v6629
  %9366 = vmatmul.mubr.bf16.gmra.mrb[0].mxu0 %v6628
  %v9367 = vpop.f32.mrb[0].mxu0
  %v9368 = vadd.f32 %v9079, %v9367
  %v9369 = vpop.f32.mrb[0].mxu0
  %v9370 = vpop.f32.mrb[0].mxu0
  %v9371 = vadd.f32 %v9082, %v9370
  %v9372 = vpop.f32.mrb[0].mxu0
  %9373 = vmatprep.mubr.bf16.mxu0 %v6633
  %9374 = vmatmul.mubr.bf16.gmra.mrb[0].mxu0 %v6632
  %v9375 = vpop.f32.mrb[0].mxu0
  %v9376 = vadd.f32 %v9087, %v9375
  %v9377 = vpop.f32.mrb[0].mxu0
  %v9378 = vpop.f32.mrb[0].mxu0
  %v9379 = vadd.f32 %v9090, %v9378
  %v9380 = vpop.f32.mrb[0].mxu0
  %9381 = vmatprep.mubr.bf16.mxu0 %v6637
  %9382 = vmatmul.mubr.bf16.gmra.mrb[0].mxu0 %v6636
  %v9383 = vpop.f32.mrb[0].mxu0
  %v9384 = vadd.f32 %v9095, %v9383
  %v9385 = vpop.f32.mrb[0].mxu0
  %v9386 = vpop.f32.mrb[0].mxu0
  %v9387 = vadd.f32 %v9098, %v9386
  %v9388 = vpop.f32.mrb[0].mxu0
  %9389 = vmatprep.mubr.bf16.mxu0 %v6641
  %9390 = vmatmul.mubr.bf16.gmra.mrb[0].mxu0 %v6640
  %v9391 = vpop.f32.mrb[0].mxu0
  %v9392 = vadd.f32 %v9103, %v9391
  %v9393 = vpop.f32.mrb[0].mxu0
  %v9394 = vpop.f32.mrb[0].mxu0
  %v9395 = vadd.f32 %v9106, %v9394
  %v9396 = vpop.f32.mrb[0].mxu0
  %9397 = vmatprep.mubr.bf16.mxu0 %v6645
  %9398 = vmatmul.mubr.bf16.gmra.mrb[0].mxu0 %v6644
  %v9399 = vpop.f32.mrb[0].mxu0
  %v9400 = vadd.f32 %v9111, %v9399
  %v9401 = vpop.f32.mrb[0].mxu0
  %v9402 = vpop.f32.mrb[0].mxu0
  %v9403 = vadd.f32 %v9114, %v9402
  %v9404 = vpop.f32.mrb[0].mxu0
  %9405 = vmatprep.mubr.bf16.mxu0 %v6649
  %9406 = vmatmul.mubr.bf16.gmra.mrb[0].mxu0 %v6648
  %v9407 = vpop.f32.mrb[0].mxu0
  %v9408 = vadd.f32 %v9119, %v9407
  %v9409 = vpop.f32.mrb[0].mxu0
  %v9410 = vpop.f32.mrb[0].mxu0
  %v9411 = vadd.f32 %v9122, %v9410
  %v9412 = vpop.f32.mrb[0].mxu0
  %9413 = vmatprep.mubr.bf16.mxu0 %v6653
  %9414 = vmatmul.mubr.bf16.gmra.mrb[0].mxu0 %v6652
  %v9415 = vpop.f32.mrb[0].mxu0
  %v9416 = vadd.f32 %v9127, %v9415
  %v9417 = vpop.f32.mrb[0].mxu0
  %v9418 = vpop.f32.mrb[0].mxu0
  %v9419 = vadd.f32 %v9130, %v9418
  %v9420 = vpop.f32.mrb[0].mxu0
  %9421 = vmatprep.mubr.bf16.mxu0 %v6657
  %9422 = vmatmul.mubr.bf16.gmra.mrb[0].mxu0 %v6656
  %v9423 = vpop.f32.mrb[0].mxu0
  %v9424 = vadd.f32 %v9135, %v9423
  %v9425 = vpop.f32.mrb[0].mxu0
  %v9426 = vpop.f32.mrb[0].mxu0
  %v9427 = vadd.f32 %v9138, %v9426
  %v9428 = vpop.f32.mrb[0].mxu0
  %9429 = vmatprep.mubr.bf16.mxu0 %v6661
  %9430 = vmatmul.mubr.bf16.gmra.mrb[0].mxu0 %v6660
  %v9431 = vpop.f32.mrb[0].mxu0
  %v9432 = vadd.f32 %v9143, %v9431
  %v9433 = vpop.f32.mrb[0].mxu0
  %v9434 = vpop.f32.mrb[0].mxu0
  %v9435 = vadd.f32 %v9146, %v9434
  %v9436 = vpop.f32.mrb[0].mxu0
  %9437 = vmatprep.mubr.bf16.mxu0 %v6665
  %9438 = vmatmul.mubr.bf16.gmra.mrb[0].mxu0 %v6664
  %v9439 = vpop.f32.mrb[0].mxu0
  %v9440 = vadd.f32 %v9151, %v9439
  %v9441 = vpop.f32.mrb[0].mxu0
  %v9442 = vpop.f32.mrb[0].mxu0
  %v9443 = vadd.f32 %v9154, %v9442
  %v9444 = vpop.f32.mrb[0].mxu0
  %9445 = vmatprep.mubr.bf16.mxu0 %v6669
  %9446 = vmatmul.mubr.bf16.gmra.mrb[0].mxu0 %v6668
  %v9447 = vpop.f32.mrb[0].mxu0
  %v9448 = vadd.f32 %v9159, %v9447
  %v9449 = vpop.f32.mrb[0].mxu0
  %v9450 = vpop.f32.mrb[0].mxu0
  %v9451 = vadd.f32 %v9162, %v9450
  %v9452 = vpop.f32.mrb[0].mxu0
  %9453 = vmatprep.mubr.bf16.mxu0 %v6673
  %9454 = vmatmul.mubr.bf16.gmra.mrb[0].mxu0 %v6672
  %v9455 = vpop.f32.mrb[0].mxu0
  %v9456 = vadd.f32 %v9167, %v9455
  %v9457 = vpop.f32.mrb[0].mxu0
  %v9458 = vpop.f32.mrb[0].mxu0
  %v9459 = vadd.f32 %v9170, %v9458
  %v9460 = vpop.f32.mrb[0].mxu0
  %9461 = vmatprep.mubr.bf16.mxu0 %v6677
  %9462 = vmatmul.mubr.bf16.gmra.mrb[0].mxu0 %v6676
  %v9463 = vpop.f32.mrb[0].mxu0
  %v9464 = vadd.f32 %v9175, %v9463
  %v9465 = vpop.f32.mrb[0].mxu0
  %v9466 = vpop.f32.mrb[0].mxu0
  %v9467 = vadd.f32 %v9178, %v9466
  %v9468 = vpop.f32.mrb[0].mxu0
  %9469 = vmatprep.mubr.bf16.mxu0 %v6681
  %9470 = vmatmul.mubr.bf16.gmra.mrb[0].mxu0 %v6680
  %v9471 = vpop.f32.mrb[0].mxu0
  %v9472 = vadd.f32 %v9183, %v9471
  %v9473 = vpop.f32.mrb[0].mxu0
  %v9474 = vpop.f32.mrb[0].mxu0
  %v9475 = vadd.f32 %v9186, %v9474
  %v9476 = vpop.f32.mrb[0].mxu0
  %9477 = vmatprep.mubr.bf16.mxu0 %v6685
  %9478 = vmatmul.mubr.bf16.gmra.mrb[0].mxu0 %v6684
  %v9479 = vpop.f32.mrb[0].mxu0
  %v9480 = vadd.f32 %v9191, %v9479
  %v9481 = vpop.f32.mrb[0].mxu0
  %v9482 = vpop.f32.mrb[0].mxu0
  %v9483 = vadd.f32 %v9194, %v9482
  %v9484 = vpop.f32.mrb[0].mxu0
  %9485 = vmatprep.mubr.bf16.mxu0 %v6689
  %9486 = vmatmul.mubr.bf16.gmra.mrb[0].mxu0 %v6688
  %v9487 = vpop.f32.mrb[0].mxu0
  %v9488 = vadd.f32 %v9199, %v9487
  %v9489 = vpop.f32.mrb[0].mxu0
  %v9490 = vpop.f32.mrb[0].mxu0
  %v9491 = vadd.f32 %v9202, %v9490
  %v9492 = vpop.f32.mrb[0].mxu0
  %9493 = vmatprep.mubr.bf16.mxu0 %v6693
  %9494 = vmatmul.mubr.bf16.gmra.mrb[0].mxu0 %v6692
  %v9495 = vpop.f32.mrb[0].mxu0
  %v9496 = vadd.f32 %v9207, %v9495
  %v9497 = vpop.f32.mrb[0].mxu0
  %v9498 = vpop.f32.mrb[0].mxu0
  %v9499 = vadd.f32 %v9210, %v9498
  %v9500 = vpop.f32.mrb[0].mxu0
  %9501 = vmatprep.mubr.bf16.mxu0 %v6697
  %9502 = vmatmul.mubr.bf16.gmra.mrb[0].mxu0 %v6696
  %v9503 = vpop.f32.mrb[0].mxu0
  %v9504 = vadd.f32 %v9215, %v9503
  %v9505 = vpop.f32.mrb[0].mxu0
  %v9506 = vpop.f32.mrb[0].mxu0
  %v9507 = vadd.f32 %v9218, %v9506
  %v9508 = vpop.f32.mrb[0].mxu0
  %9509 = vmatprep.mubr.bf16.mxu0 %v6701
  %9510 = vmatmul.mubr.bf16.gmra.mrb[0].mxu0 %v6700
  %v9511 = vpop.f32.mrb[0].mxu0
  %v9512 = vadd.f32 %v9223, %v9511
  %v9513 = vpop.f32.mrb[0].mxu0
  %v9514 = vpop.f32.mrb[0].mxu0
  %v9515 = vadd.f32 %v9226, %v9514
  %v9516 = vpop.f32.mrb[0].mxu0
  %9517 = vmatprep.mubr.bf16.mxu0 %v6705
  %9518 = vmatmul.mubr.bf16.gmra.mrb[0].mxu0 %v6704
  %v9519 = vpop.f32.mrb[0].mxu0
  %v9520 = vadd.f32 %v9231, %v9519
  %v9521 = vpop.f32.mrb[0].mxu0
  %v9522 = vpop.f32.mrb[0].mxu0
  %v9523 = vadd.f32 %v9234, %v9522
  %v9524 = vpop.f32.mrb[0].mxu0
  %9525 = vmatprep.mubr.bf16.mxu0 %v6709
  %9526 = vmatmul.mubr.bf16.gmra.mrb[0].mxu0 %v6708
  %v9527 = vpop.f32.mrb[0].mxu0
  %v9528 = vadd.f32 %v9239, %v9527
  %v9529 = vpop.f32.mrb[0].mxu0
  %v9530 = vpop.f32.mrb[0].mxu0
  %v9531 = vadd.f32 %v9242, %v9530
  %v9532 = vpop.f32.mrb[0].mxu0
  %9533 = vdwg.mxu0
  %9534 = vst [vmem:[%s5] sm:$0xff] %v7226
  %9535 = vst [vmem:[%s5 + $0x8] sm:$0xff] %v7228
  %9536 = vst [vmem:[%s5 + $0x10] sm:$0xff] %v7932
  %9537 = vst [vmem:[%s5 + $0x18] sm:$0xff] %v7934
  %9538 = vst [vmem:[%s5 + $0x20] sm:$0xff] %v8638
  %9539 = vst [vmem:[%s5 + $0x28] sm:$0xff] %v8640
  %9540 = vst.msk [vmem:[%s5 + $0x30] sm:$0xff] %vm474, %v9280
  %9541 = vst [vmem:[%s5 + $0x38] sm:$0xff] %v7230
  %9542 = vst [vmem:[%s5 + $0x40] sm:$0xff] %v7232
  %9543 = vst [vmem:[%s5 + $0x48] sm:$0xff] %v7936
  %9544 = vst [vmem:[%s5 + $0x50] sm:$0xff] %v7938
  %9545 = vst [vmem:[%s5 + $0x58] sm:$0xff] %v8642
  %9546 = vst [vmem:[%s5 + $0x60] sm:$0xff] %v8644
  %9547 = vst.msk [vmem:[%s5 + $0x68] sm:$0xff] %vm474, %v9283
  %9548 = vst [vmem:[%s5 + $0x70] sm:$0xff] %v7236
  %9549 = vst [vmem:[%s5 + $0x78] sm:$0xff] %v7238
  %9550 = vst [vmem:[%s5 + $0x80] sm:$0xff] %v7942
  %9551 = vst [vmem:[%s5 + $0x88] sm:$0xff] %v7944
  %9552 = vst [vmem:[%s5 + $0x90] sm:$0xff] %v8648
  %9553 = vst [vmem:[%s5 + $0x98] sm:$0xff] %v8650
  %9554 = vst.msk [vmem:[%s5 + $0xa0] sm:$0xff] %vm474, %v9288
  %9555 = vst [vmem:[%s5 + $0xa8] sm:$0xff] %v7240
  %9556 = vst [vmem:[%s5 + $0xb0] sm:$0xff] %v7242
  %9557 = vst [vmem:[%s5 + $0xb8] sm:$0xff] %v7946
  %9558 = vst [vmem:[%s5 + $0xc0] sm:$0xff] %v7948
  %9559 = vst [vmem:[%s5 + $0xc8] sm:$0xff] %v8652
  %9560 = vst [vmem:[%s5 + $0xd0] sm:$0xff] %v8654
  %9561 = vst.msk [vmem:[%s5 + $0xd8] sm:$0xff] %vm474, %v9291
  %9562 = vst [vmem:[%s5 + $0xe0] sm:$0xff] %v7246
  %9563 = vst [vmem:[%s5 + $0xe8] sm:$0xff] %v7248
  %9564 = vst [vmem:[%s5 + $0xf0] sm:$0xff] %v7952
  %9565 = vst [vmem:[%s5 + $0xf8] sm:$0xff] %v7954
  %9566 = vst [vmem:[%s5 + $0x100] sm:$0xff] %v8658
  %9567 = vst [vmem:[%s5 + $0x108] sm:$0xff] %v8660
  %9568 = vst.msk [vmem:[%s5 + $0x110] sm:$0xff] %vm474, %v9296
  %9569 = vst [vmem:[%s5 + $0x118] sm:$0xff] %v7250
  %9570 = vst [vmem:[%s5 + $0x120] sm:$0xff] %v7252
  %9571 = vst [vmem:[%s5 + $0x128] sm:$0xff] %v7956
  %9572 = vst [vmem:[%s5 + $0x130] sm:$0xff] %v7958
  %9573 = vst [vmem:[%s5 + $0x138] sm:$0xff] %v8662
  %9574 = vst [vmem:[%s5 + $0x140] sm:$0xff] %v8664
  %9575 = vst.msk [vmem:[%s5 + $0x148] sm:$0xff] %vm474, %v9299
  %9576 = vst [vmem:[%s5 + $0x150] sm:$0xff] %v7256
  %9577 = vst [vmem:[%s5 + $0x158] sm:$0xff] %v7258
  %9578 = vst [vmem:[%s5 + $0x160] sm:$0xff] %v7962
  %9579 = vst [vmem:[%s5 + $0x168] sm:$0xff] %v7964
  %9580 = vst [vmem:[%s5 + $0x170] sm:$0xff] %v8668
  %9581 = vst [vmem:[%s5 + $0x178] sm:$0xff] %v8670
  %9582 = vst.msk [vmem:[%s5 + $0x180] sm:$0xff] %vm474, %v9304
  %9583 = vst [vmem:[%s5 + $0x188] sm:$0xff] %v7260
  %9584 = vst [vmem:[%s5 + $0x190] sm:$0xff] %v7262
  %9585 = vst [vmem:[%s5 + $0x198] sm:$0xff] %v7966
  %9586 = vst [vmem:[%s5 + $0x1a0] sm:$0xff] %v7968
  %9587 = vst [vmem:[%s5 + $0x1a8] sm:$0xff] %v8672
  %9588 = vst [vmem:[%s5 + $0x1b0] sm:$0xff] %v8674
  %9589 = vst.msk [vmem:[%s5 + $0x1b8] sm:$0xff] %vm474, %v9307
  %9590 = vst [vmem:[%s5 + $0x1c0] sm:$0xff] %v7266
  %9591 = vst [vmem:[%s5 + $0x1c8] sm:$0xff] %v7268
  %9592 = vst [vmem:[%s5 + $0x1d0] sm:$0xff] %v7972
  %9593 = vst [vmem:[%s5 + $0x1d8] sm:$0xff] %v7974
  %9594 = vst [vmem:[%s5 + $0x1e0] sm:$0xff] %v8678
  %9595 = vst [vmem:[%s5 + $0x1e8] sm:$0xff] %v8680
  %9596 = vst.msk [vmem:[%s5 + $0x1f0] sm:$0xff] %vm474, %v9312
  %9597 = vst [vmem:[%s5 + $0x1f8] sm:$0xff] %v7270
  %9598 = vst [vmem:[%s5 + $0x200] sm:$0xff] %v7272
  %9599 = vst [vmem:[%s5 + $0x208] sm:$0xff] %v7976
  %9600 = vst [vmem:[%s5 + $0x210] sm:$0xff] %v7978
  %9601 = vst [vmem:[%s5 + $0x218] sm:$0xff] %v8682
  %9602 = vst [vmem:[%s5 + $0x220] sm:$0xff] %v8684
  %9603 = vst.msk [vmem:[%s5 + $0x228] sm:$0xff] %vm474, %v9315
  %9604 = vst [vmem:[%s5 + $0x230] sm:$0xff] %v7276
  %9605 = vst [vmem:[%s5 + $0x238] sm:$0xff] %v7278
  %9606 = vst [vmem:[%s5 + $0x240] sm:$0xff] %v7982
  %9607 = vst [vmem:[%s5 + $0x248] sm:$0xff] %v7984
  %9608 = vst [vmem:[%s5 + $0x250] sm:$0xff] %v8688
  %9609 = vst [vmem:[%s5 + $0x258] sm:$0xff] %v8690
  %9610 = vst.msk [vmem:[%s5 + $0x260] sm:$0xff] %vm474, %v9320
  %9611 = vst [vmem:[%s5 + $0x268] sm:$0xff] %v7280
  %9612 = vst [vmem:[%s5 + $0x270] sm:$0xff] %v7282
  %9613 = vst [vmem:[%s5 + $0x278] sm:$0xff] %v7986
  %9614 = vst [vmem:[%s5 + $0x280] sm:$0xff] %v7988
  %9615 = vst [vmem:[%s5 + $0x288] sm:$0xff] %v8692
  %9616 = vst [vmem:[%s5 + $0x290] sm:$0xff] %v8694
  %9617 = vst.msk [vmem:[%s5 + $0x298] sm:$0xff] %vm474, %v9323
  %9618 = vst [vmem:[%s5 + $0x2a0] sm:$0xff] %v7286
  %9619 = vst [vmem:[%s5 + $0x2a8] sm:$0xff] %v7288
  %9620 = vst [vmem:[%s5 + $0x2b0] sm:$0xff] %v7992
  %9621 = vst [vmem:[%s5 + $0x2b8] sm:$0xff] %v7994
  %9622 = vst [vmem:[%s5 + $0x2c0] sm:$0xff] %v8698
  %9623 = vst [vmem:[%s5 + $0x2c8] sm:$0xff] %v8700
  %9624 = vst.msk [vmem:[%s5 + $0x2d0] sm:$0xff] %vm474, %v9328
  %9625 = vst [vmem:[%s5 + $0x2d8] sm:$0xff] %v7290
  %9626 = vst [vmem:[%s5 + $0x2e0] sm:$0xff] %v7292
  %9627 = vst [vmem:[%s5 + $0x2e8] sm:$0xff] %v7996
  %9628 = vst [vmem:[%s5 + $0x2f0] sm:$0xff] %v7998
  %9629 = vst [vmem:[%s5 + $0x2f8] sm:$0xff] %v8702
  %9630 = vst [vmem:[%s5 + $0x300] sm:$0xff] %v8704
  %9631 = vst.msk [vmem:[%s5 + $0x308] sm:$0xff] %vm474, %v9331
  %9632 = vst [vmem:[%s5 + $0x310] sm:$0xff] %v7296
  %9633 = vst [vmem:[%s5 + $0x318] sm:$0xff] %v7298
  %9634 = vst [vmem:[%s5 + $0x320] sm:$0xff] %v8002
  %9635 = vst [vmem:[%s5 + $0x328] sm:$0xff] %v8004
  %9636 = vst [vmem:[%s5 + $0x330] sm:$0xff] %v8708
  %9637 = vst [vmem:[%s5 + $0x338] sm:$0xff] %v8710
  %9638 = vst.msk [vmem:[%s5 + $0x340] sm:$0xff] %vm474, %v9336
  %9639 = vst [vmem:[%s5 + $0x348] sm:$0xff] %v7300
  %9640 = vst [vmem:[%s5 + $0x350] sm:$0xff] %v7302
  %9641 = vst [vmem:[%s5 + $0x358] sm:$0xff] %v8006
  %9642 = vst [vmem:[%s5 + $0x360] sm:$0xff] %v8008
  %9643 = vst [vmem:[%s5 + $0x368] sm:$0xff] %v8712
  %9644 = vst [vmem:[%s5 + $0x370] sm:$0xff] %v8714
  %9645 = vst.msk [vmem:[%s5 + $0x378] sm:$0xff] %vm474, %v9339
  %9646 = vst [vmem:[%s5 + $0x380] sm:$0xff] %v7306
  %9647 = vst [vmem:[%s5 + $0x388] sm:$0xff] %v7308
  %9648 = vst [vmem:[%s5 + $0x390] sm:$0xff] %v8012
  %9649 = vst [vmem:[%s5 + $0x398] sm:$0xff] %v8014
  %9650 = vst [vmem:[%s5 + $0x3a0] sm:$0xff] %v8718
  %9651 = vst [vmem:[%s5 + $0x3a8] sm:$0xff] %v8720
  %9652 = vst.msk [vmem:[%s5 + $0x3b0] sm:$0xff] %vm474, %v9344
  %9653 = vst [vmem:[%s5 + $0x3b8] sm:$0xff] %v7310
  %9654 = vst [vmem:[%s5 + $0x3c0] sm:$0xff] %v7312
  %9655 = vst [vmem:[%s5 + $0x3c8] sm:$0xff] %v8016
  %9656 = vst [vmem:[%s5 + $0x3d0] sm:$0xff] %v8018
  %9657 = vst [vmem:[%s5 + $0x3d8] sm:$0xff] %v8722
  %9658 = vst [vmem:[%s5 + $0x3e0] sm:$0xff] %v8724
  %9659 = vst.msk [vmem:[%s5 + $0x3e8] sm:$0xff] %vm474, %v9347
  %9660 = vst [vmem:[%s5 + $0x3f0] sm:$0xff] %v7316
  %9661 = vst [vmem:[%s5 + $0x3f8] sm:$0xff] %v7318
  %9662 = vst [vmem:[%s5 + $0x400] sm:$0xff] %v8022
  %9663 = vst [vmem:[%s5 + $0x408] sm:$0xff] %v8024
  %9664 = vst [vmem:[%s5 + $0x410] sm:$0xff] %v8728
  %9665 = vst [vmem:[%s5 + $0x418] sm:$0xff] %v8730
  %9666 = vst.msk [vmem:[%s5 + $0x420] sm:$0xff] %vm474, %v9352
  %9667 = vst [vmem:[%s5 + $0x428] sm:$0xff] %v7320
  %9668 = vst [vmem:[%s5 + $0x430] sm:$0xff] %v7322
  %9669 = vst [vmem:[%s5 + $0x438] sm:$0xff] %v8026
  %9670 = vst [vmem:[%s5 + $0x440] sm:$0xff] %v8028
  %9671 = vst [vmem:[%s5 + $0x448] sm:$0xff] %v8732
  %9672 = vst [vmem:[%s5 + $0x450] sm:$0xff] %v8734
  %9673 = vst.msk [vmem:[%s5 + $0x458] sm:$0xff] %vm474, %v9355
  %9674 = vst [vmem:[%s5 + $0x460] sm:$0xff] %v7326
  %9675 = vst [vmem:[%s5 + $0x468] sm:$0xff] %v7328
  %9676 = vst [vmem:[%s5 + $0x470] sm:$0xff] %v8032
  %9677 = vst [vmem:[%s5 + $0x478] sm:$0xff] %v8034
  %9678 = vst [vmem:[%s5 + $0x480] sm:$0xff] %v8738
  %9679 = vst [vmem:[%s5 + $0x488] sm:$0xff] %v8740
  %9680 = vst.msk [vmem:[%s5 + $0x490] sm:$0xff] %vm474, %v9360
  %9681 = vst [vmem:[%s5 + $0x498] sm:$0xff] %v7330
  %9682 = vst [vmem:[%s5 + $0x4a0] sm:$0xff] %v7332
  %9683 = vst [vmem:[%s5 + $0x4a8] sm:$0xff] %v8036
  %9684 = vst [vmem:[%s5 + $0x4b0] sm:$0xff] %v8038
  %9685 = vst [vmem:[%s5 + $0x4b8] sm:$0xff] %v8742
  %9686 = vst [vmem:[%s5 + $0x4c0] sm:$0xff] %v8744
  %9687 = vst.msk [vmem:[%s5 + $0x4c8] sm:$0xff] %vm474, %v9363
  %9688 = vst [vmem:[%s5 + $0x4d0] sm:$0xff] %v7336
  %9689 = vst [vmem:[%s5 + $0x4d8] sm:$0xff] %v7338
  %9690 = vst [vmem:[%s5 + $0x4e0] sm:$0xff] %v8042
  %9691 = vst [vmem:[%s5 + $0x4e8] sm:$0xff] %v8044
  %9692 = vst [vmem:[%s5 + $0x4f0] sm:$0xff] %v8748
  %9693 = vst [vmem:[%s5 + $0x4f8] sm:$0xff] %v8750
  %9694 = vst.msk [vmem:[%s5 + $0x500] sm:$0xff] %vm474, %v9368
  %9695 = vst [vmem:[%s5 + $0x508] sm:$0xff] %v7340
  %9696 = vst [vmem:[%s5 + $0x510] sm:$0xff] %v7342
  %9697 = vst [vmem:[%s5 + $0x518] sm:$0xff] %v8046
  %9698 = vst [vmem:[%s5 + $0x520] sm:$0xff] %v8048
  %9699 = vst [vmem:[%s5 + $0x528] sm:$0xff] %v8752
  %9700 = vst [vmem:[%s5 + $0x530] sm:$0xff] %v8754
  %9701 = vst.msk [vmem:[%s5 + $0x538] sm:$0xff] %vm474, %v9371
  %9702 = vst [vmem:[%s5 + $0x540] sm:$0xff] %v7346
  %9703 = vst [vmem:[%s5 + $0x548] sm:$0xff] %v7348
  %9704 = vst [vmem:[%s5 + $0x550] sm:$0xff] %v8052
  %9705 = vst [vmem:[%s5 + $0x558] sm:$0xff] %v8054
  %9706 = vst [vmem:[%s5 + $0x560] sm:$0xff] %v8758
  %9707 = vst [vmem:[%s5 + $0x568] sm:$0xff] %v8760
  %9708 = vst.msk [vmem:[%s5 + $0x570] sm:$0xff] %vm474, %v9376
  %9709 = vst [vmem:[%s5 + $0x578] sm:$0xff] %v7350
  %9710 = vst [vmem:[%s5 + $0x580] sm:$0xff] %v7352
  %9711 = vst [vmem:[%s5 + $0x588] sm:$0xff] %v8056
  %9712 = vst [vmem:[%s5 + $0x590] sm:$0xff] %v8058
  %9713 = vst [vmem:[%s5 + $0x598] sm:$0xff] %v8762
  %9714 = vst [vmem:[%s5 + $0x5a0] sm:$0xff] %v8764
  %9715 = vst.msk [vmem:[%s5 + $0x5a8] sm:$0xff] %vm474, %v9379
  %9716 = vst [vmem:[%s5 + $0x5b0] sm:$0xff] %v7356
  %9717 = vst [vmem:[%s5 + $0x5b8] sm:$0xff] %v7358
  %9718 = vst [vmem:[%s5 + $0x5c0] sm:$0xff] %v8062
  %9719 = vst [vmem:[%s5 + $0x5c8] sm:$0xff] %v8064
  %9720 = vst [vmem:[%s5 + $0x5d0] sm:$0xff] %v8768
  %9721 = vst [vmem:[%s5 + $0x5d8] sm:$0xff] %v8770
  %9722 = vst.msk [vmem:[%s5 + $0x5e0] sm:$0xff] %vm474, %v9384
  %9723 = vst [vmem:[%s5 + $0x5e8] sm:$0xff] %v7360
  %9724 = vst [vmem:[%s5 + $0x5f0] sm:$0xff] %v7362
  %9725 = vst [vmem:[%s5 + $0x5f8] sm:$0xff] %v8066
  %9726 = vst [vmem:[%s5 + $0x600] sm:$0xff] %v8068
  %9727 = vst [vmem:[%s5 + $0x608] sm:$0xff] %v8772
  %9728 = vst [vmem:[%s5 + $0x610] sm:$0xff] %v8774
  %9729 = vst.msk [vmem:[%s5 + $0x618] sm:$0xff] %vm474, %v9387
  %9730 = vst [vmem:[%s5 + $0x620] sm:$0xff] %v7366
  %9731 = vst [vmem:[%s5 + $0x628] sm:$0xff] %v7368
  %9732 = vst [vmem:[%s5 + $0x630] sm:$0xff] %v8072
  %9733 = vst [vmem:[%s5 + $0x638] sm:$0xff] %v8074
  %9734 = vst [vmem:[%s5 + $0x640] sm:$0xff] %v8778
  %9735 = vst [vmem:[%s5 + $0x648] sm:$0xff] %v8780
  %9736 = vst.msk [vmem:[%s5 + $0x650] sm:$0xff] %vm474, %v9392
  %9737 = vst [vmem:[%s5 + $0x658] sm:$0xff] %v7370
  %9738 = vst [vmem:[%s5 + $0x660] sm:$0xff] %v7372
  %9739 = vst [vmem:[%s5 + $0x668] sm:$0xff] %v8076
  %9740 = vst [vmem:[%s5 + $0x670] sm:$0xff] %v8078
  %9741 = vst [vmem:[%s5 + $0x678] sm:$0xff] %v8782
  %9742 = vst [vmem:[%s5 + $0x680] sm:$0xff] %v8784
  %9743 = vst.msk [vmem:[%s5 + $0x688] sm:$0xff] %vm474, %v9395
  %9744 = vst [vmem:[%s5 + $0x690] sm:$0xff] %v7376
  %9745 = vst [vmem:[%s5 + $0x698] sm:$0xff] %v7378
  %9746 = vst [vmem:[%s5 + $0x6a0] sm:$0xff] %v8082
  %9747 = vst [vmem:[%s5 + $0x6a8] sm:$0xff] %v8084
  %9748 = vst [vmem:[%s5 + $0x6b0] sm:$0xff] %v8788
  %9749 = vst [vmem:[%s5 + $0x6b8] sm:$0xff] %v8790
  %9750 = vst.msk [vmem:[%s5 + $0x6c0] sm:$0xff] %vm474, %v9400
  %9751 = vst [vmem:[%s5 + $0x6c8] sm:$0xff] %v7380
  %9752 = vst [vmem:[%s5 + $0x6d0] sm:$0xff] %v7382
  %9753 = vst [vmem:[%s5 + $0x6d8] sm:$0xff] %v8086
  %9754 = vst [vmem:[%s5 + $0x6e0] sm:$0xff] %v8088
  %9755 = vst [vmem:[%s5 + $0x6e8] sm:$0xff] %v8792
  %9756 = vst [vmem:[%s5 + $0x6f0] sm:$0xff] %v8794
  %9757 = vst.msk [vmem:[%s5 + $0x6f8] sm:$0xff] %vm474, %v9403
  %9758 = vst [vmem:[%s5 + $0x700] sm:$0xff] %v7386
  %9759 = vst [vmem:[%s5 + $0x708] sm:$0xff] %v7388
  %9760 = vst [vmem:[%s5 + $0x710] sm:$0xff] %v8092
  %9761 = vst [vmem:[%s5 + $0x718] sm:$0xff] %v8094
  %9762 = vst [vmem:[%s5 + $0x720] sm:$0xff] %v8798
  %9763 = vst [vmem:[%s5 + $0x728] sm:$0xff] %v8800
  %9764 = vst.msk [vmem:[%s5 + $0x730] sm:$0xff] %vm474, %v9408
  %9765 = vst [vmem:[%s5 + $0x738] sm:$0xff] %v7390
  %9766 = vst [vmem:[%s5 + $0x740] sm:$0xff] %v7392
  %9767 = vst [vmem:[%s5 + $0x748] sm:$0xff] %v8096
  %9768 = vst [vmem:[%s5 + $0x750] sm:$0xff] %v8098
  %9769 = vst [vmem:[%s5 + $0x758] sm:$0xff] %v8802
  %9770 = vst [vmem:[%s5 + $0x760] sm:$0xff] %v8804
  %9771 = vst.msk [vmem:[%s5 + $0x768] sm:$0xff] %vm474, %v9411
  %9772 = vst [vmem:[%s5 + $0x770] sm:$0xff] %v7396
  %9773 = vst [vmem:[%s5 + $0x778] sm:$0xff] %v7398
  %9774 = vst [vmem:[%s5 + $0x780] sm:$0xff] %v8102
  %9775 = vst [vmem:[%s5 + $0x788] sm:$0xff] %v8104
  %9776 = vst [vmem:[%s5 + $0x790] sm:$0xff] %v8808
  %9777 = vst [vmem:[%s5 + $0x798] sm:$0xff] %v8810
  %9778 = vst.msk [vmem:[%s5 + $0x7a0] sm:$0xff] %vm474, %v9416
  %9779 = vst [vmem:[%s5 + $0x7a8] sm:$0xff] %v7400
  %9780 = vst [vmem:[%s5 + $0x7b0] sm:$0xff] %v7402
  %9781 = vst [vmem:[%s5 + $0x7b8] sm:$0xff] %v8106
  %9782 = vst [vmem:[%s5 + $0x7c0] sm:$0xff] %v8108
  %9783 = vst [vmem:[%s5 + $0x7c8] sm:$0xff] %v8812
  %9784 = vst [vmem:[%s5 + $0x7d0] sm:$0xff] %v8814
  %9785 = vst.msk [vmem:[%s5 + $0x7d8] sm:$0xff] %vm474, %v9419
  %9786 = vst [vmem:[%s5 + $0x7e0] sm:$0xff] %v7406
  %9787 = vst [vmem:[%s5 + $0x7e8] sm:$0xff] %v7408
  %9788 = vst [vmem:[%s5 + $0x7f0] sm:$0xff] %v8112
  %9789 = vst [vmem:[%s5 + $0x7f8] sm:$0xff] %v8114
  %9790 = vst [vmem:[%s5 + $0x800] sm:$0xff] %v8818
  %9791 = vst [vmem:[%s5 + $0x808] sm:$0xff] %v8820
  %9792 = vst.msk [vmem:[%s5 + $0x810] sm:$0xff] %vm474, %v9424
  %9793 = vst [vmem:[%s5 + $0x818] sm:$0xff] %v7410
  %9794 = vst [vmem:[%s5 + $0x820] sm:$0xff] %v7412
  %9795 = vst [vmem:[%s5 + $0x828] sm:$0xff] %v8116
  %9796 = vst [vmem:[%s5 + $0x830] sm:$0xff] %v8118
  %9797 = vst [vmem:[%s5 + $0x838] sm:$0xff] %v8822
  %9798 = vst [vmem:[%s5 + $0x840] sm:$0xff] %v8824
  %9799 = vst.msk [vmem:[%s5 + $0x848] sm:$0xff] %vm474, %v9427
  %9800 = vst [vmem:[%s5 + $0x850] sm:$0xff] %v7416
  %9801 = vst [vmem:[%s5 + $0x858] sm:$0xff] %v7418
  %9802 = vst [vmem:[%s5 + $0x860] sm:$0xff] %v8122
  %9803 = vst [vmem:[%s5 + $0x868] sm:$0xff] %v8124
  %9804 = vst [vmem:[%s5 + $0x870] sm:$0xff] %v8828
  %9805 = vst [vmem:[%s5 + $0x878] sm:$0xff] %v8830
  %9806 = vst.msk [vmem:[%s5 + $0x880] sm:$0xff] %vm474, %v9432
  %9807 = vst [vmem:[%s5 + $0x888] sm:$0xff] %v7420
  %9808 = vst [vmem:[%s5 + $0x890] sm:$0xff] %v7422
  %9809 = vst [vmem:[%s5 + $0x898] sm:$0xff] %v8126
  %9810 = vst [vmem:[%s5 + $0x8a0] sm:$0xff] %v8128
  %9811 = vst [vmem:[%s5 + $0x8a8] sm:$0xff] %v8832
  %9812 = vst [vmem:[%s5 + $0x8b0] sm:$0xff] %v8834
  %9813 = vst.msk [vmem:[%s5 + $0x8b8] sm:$0xff] %vm474, %v9435
  %9814 = vst [vmem:[%s5 + $0x8c0] sm:$0xff] %v7426
  %9815 = vst [vmem:[%s5 + $0x8c8] sm:$0xff] %v7428
  %9816 = vst [vmem:[%s5 + $0x8d0] sm:$0xff] %v8132
  %9817 = vst [vmem:[%s5 + $0x8d8] sm:$0xff] %v8134
  %9818 = vst [vmem:[%s5 + $0x8e0] sm:$0xff] %v8838
  %9819 = vst [vmem:[%s5 + $0x8e8] sm:$0xff] %v8840
  %9820 = vst.msk [vmem:[%s5 + $0x8f0] sm:$0xff] %vm474, %v9440
  %9821 = vst [vmem:[%s5 + $0x8f8] sm:$0xff] %v7430
  %9822 = vst [vmem:[%s5 + $0x900] sm:$0xff] %v7432
  %9823 = vst [vmem:[%s5 + $0x908] sm:$0xff] %v8136
  %9824 = vst [vmem:[%s5 + $0x910] sm:$0xff] %v8138
  %9825 = vst [vmem:[%s5 + $0x918] sm:$0xff] %v8842
  %9826 = vst [vmem:[%s5 + $0x920] sm:$0xff] %v8844
  %9827 = vst.msk [vmem:[%s5 + $0x928] sm:$0xff] %vm474, %v9443
  %9828 = vst [vmem:[%s5 + $0x930] sm:$0xff] %v7436
  %9829 = vst [vmem:[%s5 + $0x938] sm:$0xff] %v7438
  %9830 = vst [vmem:[%s5 + $0x940] sm:$0xff] %v8142
  %9831 = vst [vmem:[%s5 + $0x948] sm:$0xff] %v8144
  %9832 = vst [vmem:[%s5 + $0x950] sm:$0xff] %v8848
  %9833 = vst [vmem:[%s5 + $0x958] sm:$0xff] %v8850
  %9834 = vst.msk [vmem:[%s5 + $0x960] sm:$0xff] %vm474, %v9448
  %9835 = vst [vmem:[%s5 + $0x968] sm:$0xff] %v7440
  %9836 = vst [vmem:[%s5 + $0x970] sm:$0xff] %v7442
  %9837 = vst [vmem:[%s5 + $0x978] sm:$0xff] %v8146
  %9838 = vst [vmem:[%s5 + $0x980] sm:$0xff] %v8148
  %9839 = vst [vmem:[%s5 + $0x988] sm:$0xff] %v8852
  %9840 = vst [vmem:[%s5 + $0x990] sm:$0xff] %v8854
  %9841 = vst.msk [vmem:[%s5 + $0x998] sm:$0xff] %vm474, %v9451
  %9842 = vst [vmem:[%s5 + $0x9a0] sm:$0xff] %v7446
  %9843 = vst [vmem:[%s5 + $0x9a8] sm:$0xff] %v7448
  %9844 = vst [vmem:[%s5 + $0x9b0] sm:$0xff] %v8152
  %9845 = vst [vmem:[%s5 + $0x9b8] sm:$0xff] %v8154
  %9846 = vst [vmem:[%s5 + $0x9c0] sm:$0xff] %v8858
  %9847 = vst [vmem:[%s5 + $0x9c8] sm:$0xff] %v8860
  %9848 = vst.msk [vmem:[%s5 + $0x9d0] sm:$0xff] %vm474, %v9456
  %9849 = vst [vmem:[%s5 + $0x9d8] sm:$0xff] %v7450
  %9850 = vst [vmem:[%s5 + $0x9e0] sm:$0xff] %v7452
  %9851 = vst [vmem:[%s5 + $0x9e8] sm:$0xff] %v8156
  %9852 = vst [vmem:[%s5 + $0x9f0] sm:$0xff] %v8158
  %9853 = vst [vmem:[%s5 + $0x9f8] sm:$0xff] %v8862
  %9854 = vst [vmem:[%s5 + $0xa00] sm:$0xff] %v8864
  %9855 = vst.msk [vmem:[%s5 + $0xa08] sm:$0xff] %vm474, %v9459
  %9856 = vst [vmem:[%s5 + $0xa10] sm:$0xff] %v7456
  %9857 = vst [vmem:[%s5 + $0xa18] sm:$0xff] %v7458
  %9858 = vst [vmem:[%s5 + $0xa20] sm:$0xff] %v8162
  %9859 = vst [vmem:[%s5 + $0xa28] sm:$0xff] %v8164
  %9860 = vst [vmem:[%s5 + $0xa30] sm:$0xff] %v8868
  %9861 = vst [vmem:[%s5 + $0xa38] sm:$0xff] %v8870
  %9862 = vst.msk [vmem:[%s5 + $0xa40] sm:$0xff] %vm474, %v9464
  %9863 = vst [vmem:[%s5 + $0xa48] sm:$0xff] %v7460
  %9864 = vst [vmem:[%s5 + $0xa50] sm:$0xff] %v7462
  %9865 = vst [vmem:[%s5 + $0xa58] sm:$0xff] %v8166
  %9866 = vst [vmem:[%s5 + $0xa60] sm:$0xff] %v8168
  %9867 = vst [vmem:[%s5 + $0xa68] sm:$0xff] %v8872
  %9868 = vst [vmem:[%s5 + $0xa70] sm:$0xff] %v8874
  %9869 = vst.msk [vmem:[%s5 + $0xa78] sm:$0xff] %vm474, %v9467
  %9870 = vst [vmem:[%s5 + $0xa80] sm:$0xff] %v7466
  %9871 = vst [vmem:[%s5 + $0xa88] sm:$0xff] %v7468
  %9872 = vst [vmem:[%s5 + $0xa90] sm:$0xff] %v8172
  %9873 = vst [vmem:[%s5 + $0xa98] sm:$0xff] %v8174
  %9874 = vst [vmem:[%s5 + $0xaa0] sm:$0xff] %v8878
  %9875 = vst [vmem:[%s5 + $0xaa8] sm:$0xff] %v8880
  %9876 = vst.msk [vmem:[%s5 + $0xab0] sm:$0xff] %vm474, %v9472
  %9877 = vst [vmem:[%s5 + $0xab8] sm:$0xff] %v7470
  %9878 = vst [vmem:[%s5 + $0xac0] sm:$0xff] %v7472
  %9879 = vst [vmem:[%s5 + $0xac8] sm:$0xff] %v8176
  %9880 = vst [vmem:[%s5 + $0xad0] sm:$0xff] %v8178
  %9881 = vst [vmem:[%s5 + $0xad8] sm:$0xff] %v8882
  %9882 = vst [vmem:[%s5 + $0xae0] sm:$0xff] %v8884
  %9883 = vst.msk [vmem:[%s5 + $0xae8] sm:$0xff] %vm474, %v9475
  %9884 = vst [vmem:[%s5 + $0xaf0] sm:$0xff] %v7476
  %9885 = vst [vmem:[%s5 + $0xaf8] sm:$0xff] %v7478
  %9886 = vst [vmem:[%s5 + $0xb00] sm:$0xff] %v8182
  %9887 = vst [vmem:[%s5 + $0xb08] sm:$0xff] %v8184
  %9888 = vst [vmem:[%s5 + $0xb10] sm:$0xff] %v8888
  %9889 = vst [vmem:[%s5 + $0xb18] sm:$0xff] %v8890
  %9890 = vst.msk [vmem:[%s5 + $0xb20] sm:$0xff] %vm474, %v9480
  %9891 = vst [vmem:[%s5 + $0xb28] sm:$0xff] %v7480
  %9892 = vst [vmem:[%s5 + $0xb30] sm:$0xff] %v7482
  %9893 = vst [vmem:[%s5 + $0xb38] sm:$0xff] %v8186
  %9894 = vst [vmem:[%s5 + $0xb40] sm:$0xff] %v8188
  %9895 = vst [vmem:[%s5 + $0xb48] sm:$0xff] %v8892
  %9896 = vst [vmem:[%s5 + $0xb50] sm:$0xff] %v8894
  %9897 = vst.msk [vmem:[%s5 + $0xb58] sm:$0xff] %vm474, %v9483
  %9898 = vst [vmem:[%s5 + $0xb60] sm:$0xff] %v7486
  %9899 = vst [vmem:[%s5 + $0xb68] sm:$0xff] %v7488
  %9900 = vst [vmem:[%s5 + $0xb70] sm:$0xff] %v8192
  %9901 = vst [vmem:[%s5 + $0xb78] sm:$0xff] %v8194
  %9902 = vst [vmem:[%s5 + $0xb80] sm:$0xff] %v8898
  %9903 = vst [vmem:[%s5 + $0xb88] sm:$0xff] %v8900
  %9904 = vst.msk [vmem:[%s5 + $0xb90] sm:$0xff] %vm474, %v9488
  %9905 = vst [vmem:[%s5 + $0xb98] sm:$0xff] %v7490
  %9906 = vst [vmem:[%s5 + $0xba0] sm:$0xff] %v7492
  %9907 = vst [vmem:[%s5 + $0xba8] sm:$0xff] %v8196
  %9908 = vst [vmem:[%s5 + $0xbb0] sm:$0xff] %v8198
  %9909 = vst [vmem:[%s5 + $0xbb8] sm:$0xff] %v8902
  %9910 = vst [vmem:[%s5 + $0xbc0] sm:$0xff] %v8904
  %9911 = vst.msk [vmem:[%s5 + $0xbc8] sm:$0xff] %vm474, %v9491
  %9912 = vst [vmem:[%s5 + $0xbd0] sm:$0xff] %v7496
  %9913 = vst [vmem:[%s5 + $0xbd8] sm:$0xff] %v7498
  %9914 = vst [vmem:[%s5 + $0xbe0] sm:$0xff] %v8202
  %9915 = vst [vmem:[%s5 + $0xbe8] sm:$0xff] %v8204
  %9916 = vst [vmem:[%s5 + $0xbf0] sm:$0xff] %v8908
  %9917 = vst [vmem:[%s5 + $0xbf8] sm:$0xff] %v8910
  %9918 = vst.msk [vmem:[%s5 + $0xc00] sm:$0xff] %vm474, %v9496
  %9919 = vst [vmem:[%s5 + $0xc08] sm:$0xff] %v7500
  %9920 = vst [vmem:[%s5 + $0xc10] sm:$0xff] %v7502
  %9921 = vst [vmem:[%s5 + $0xc18] sm:$0xff] %v8206
  %9922 = vst [vmem:[%s5 + $0xc20] sm:$0xff] %v8208
  %9923 = vst [vmem:[%s5 + $0xc28] sm:$0xff] %v8912
  %9924 = vst [vmem:[%s5 + $0xc30] sm:$0xff] %v8914
  %9925 = vst.msk [vmem:[%s5 + $0xc38] sm:$0xff] %vm474, %v9499
  %9926 = vst [vmem:[%s5 + $0xc40] sm:$0xff] %v7506
  %9927 = vst [vmem:[%s5 + $0xc48] sm:$0xff] %v7508
  %9928 = vst [vmem:[%s5 + $0xc50] sm:$0xff] %v8212
  %9929 = vst [vmem:[%s5 + $0xc58] sm:$0xff] %v8214
  %9930 = vst [vmem:[%s5 + $0xc60] sm:$0xff] %v8918
  %9931 = vst [vmem:[%s5 + $0xc68] sm:$0xff] %v8920
  %9932 = vst.msk [vmem:[%s5 + $0xc70] sm:$0xff] %vm474, %v9504
  %9933 = vst [vmem:[%s5 + $0xc78] sm:$0xff] %v7510
  %9934 = vst [vmem:[%s5 + $0xc80] sm:$0xff] %v7512
  %9935 = vst [vmem:[%s5 + $0xc88] sm:$0xff] %v8216
  %9936 = vst [vmem:[%s5 + $0xc90] sm:$0xff] %v8218
  %9937 = vst [vmem:[%s5 + $0xc98] sm:$0xff] %v8922
  %9938 = vst [vmem:[%s5 + $0xca0] sm:$0xff] %v8924
  %9939 = vst.msk [vmem:[%s5 + $0xca8] sm:$0xff] %vm474, %v9507
  %9940 = vst [vmem:[%s5 + $0xcb0] sm:$0xff] %v7516
  %9941 = vst [vmem:[%s5 + $0xcb8] sm:$0xff] %v7518
  %9942 = vst [vmem:[%s5 + $0xcc0] sm:$0xff] %v8222
  %9943 = vst [vmem:[%s5 + $0xcc8] sm:$0xff] %v8224
  %9944 = vst [vmem:[%s5 + $0xcd0] sm:$0xff] %v8928
  %9945 = vst [vmem:[%s5 + $0xcd8] sm:$0xff] %v8930
  %9946 = vst.msk [vmem:[%s5 + $0xce0] sm:$0xff] %vm474, %v9512
  %9947 = vst [vmem:[%s5 + $0xce8] sm:$0xff] %v7520
  %9948 = vst [vmem:[%s5 + $0xcf0] sm:$0xff] %v7522
  %9949 = vst [vmem:[%s5 + $0xcf8] sm:$0xff] %v8226
  %9950 = vst [vmem:[%s5 + $0xd00] sm:$0xff] %v8228
  %9951 = vst [vmem:[%s5 + $0xd08] sm:$0xff] %v8932
  %9952 = vst [vmem:[%s5 + $0xd10] sm:$0xff] %v8934
  %9953 = vst.msk [vmem:[%s5 + $0xd18] sm:$0xff] %vm474, %v9515
  %9954 = vst [vmem:[%s5 + $0xd20] sm:$0xff] %v7526
  %9955 = vst [vmem:[%s5 + $0xd28] sm:$0xff] %v7528
  %9956 = vst [vmem:[%s5 + $0xd30] sm:$0xff] %v8232
  %9957 = vst [vmem:[%s5 + $0xd38] sm:$0xff] %v8234
  %9958 = vst [vmem:[%s5 + $0xd40] sm:$0xff] %v8938
  %9959 = vst [vmem:[%s5 + $0xd48] sm:$0xff] %v8940
  %9960 = vst.msk [vmem:[%s5 + $0xd50] sm:$0xff] %vm474, %v9520
  %9961 = vst [vmem:[%s5 + $0xd58] sm:$0xff] %v7530
  %9962 = vst [vmem:[%s5 + $0xd60] sm:$0xff] %v7532
  %9963 = vst [vmem:[%s5 + $0xd68] sm:$0xff] %v8236
  %9964 = vst [vmem:[%s5 + $0xd70] sm:$0xff] %v8238
  %9965 = vst [vmem:[%s5 + $0xd78] sm:$0xff] %v8942
  %9966 = vst [vmem:[%s5 + $0xd80] sm:$0xff] %v8944
  %9967 = vst.msk [vmem:[%s5 + $0xd88] sm:$0xff] %vm474, %v9523
  %9968 = vst [vmem:[%s5 + $0xd90] sm:$0xff] %v7536
  %9969 = vst [vmem:[%s5 + $0xd98] sm:$0xff] %v7538
  %9970 = vst [vmem:[%s5 + $0xda0] sm:$0xff] %v8242
  %9971 = vst [vmem:[%s5 + $0xda8] sm:$0xff] %v8244
  %9972 = vst [vmem:[%s5 + $0xdb0] sm:$0xff] %v8948
  %9973 = vst [vmem:[%s5 + $0xdb8] sm:$0xff] %v8950
  %9974 = vst.msk [vmem:[%s5 + $0xdc0] sm:$0xff] %vm474, %v9528
  %9975 = vst [vmem:[%s5 + $0xdc8] sm:$0xff] %v7540
  %9976 = vst [vmem:[%s5 + $0xdd0] sm:$0xff] %v7542
  %9977 = vst [vmem:[%s5 + $0xdd8] sm:$0xff] %v8246
  %9978 = vst [vmem:[%s5 + $0xde0] sm:$0xff] %v8248
  %9979 = vst [vmem:[%s5 + $0xde8] sm:$0xff] %v8952
  %9980 = vst [vmem:[%s5 + $0xdf0] sm:$0xff] %v8954
  %9981 = vst.msk [vmem:[%s5 + $0xdf8] sm:$0xff] %vm474, %v9531
  // Predicated region
  $region22: #{fused_forward.1} parent=0 // pred_check
    _
  $region23: #{fused_forward.1} parent=0 // pred_check_branch
    %9983 = sbr.rel (0) target = $region25
  $region24: #{fused_forward.1} parent=0 // pred_region
    _
  $region25: #{fused_forward.1} parent=0 // pred_fallthru
    _
  // Predicated region
  $region26: #{fused_forward.1} parent=0 // pred_check
    _
  $region27: #{fused_forward.1} parent=0 // pred_check_branch
    %9985 = sbr.rel (0) target = $region29
  $region28: #{fused_forward.1} parent=0 // pred_region
    _
  $region29: #{fused_forward.1} parent=0 // pred_fallthru
    _

</llo_original>
